<compile_context>
chip_gen: v6e
topology: v6e:2x2x1
jax: 0.10.0
libtpu: 0.0.40
codegen_flags: <defaults>
</compile_context>

<pallas_src>
import math
import functools

import numpy as np
import jax
import jax.numpy as jnp
from jax import lax
from jax.experimental import pallas as pl
from jax.experimental.pallas import tpu as pltpu

LANES = 128
NEG_INF = -1e30
# TODO(synk): the reference TransformerEncoder definition is not included; we
# assume GPT-style causal self-attention in the encoder (flip to False for a
# bidirectional encoder — pack-time change only).
ENCODER_CAUSAL = True


# ----------------------------------------------------------------------------
# Slab packer: many tiny params -> one lane-dense [rows, 128] array.
# ----------------------------------------------------------------------------

def _round_up(n, m):
    return (n + m - 1) // m * m


class _SlabPacker:
    """Packs 1-D / 2-D params into one [rows, 128] slab.

    Every entry starts at an `align`-row offset so all in-kernel reads are
    static, tile-aligned ref slices.
    """

    def __init__(self, dtype, align):
        self.dtype = dtype
        self.align = align
        self.chunks = []
        self.off = 0
        self.meta = {}

    def add(self, name, arr):
        arr = np.asarray(arr, dtype=np.float32)
        if arr.ndim == 1:
            arr = arr[None, :]
        r, c = arr.shape
        assert c <= LANES, name
        rp = _round_up(r, self.align)
        buf = np.zeros((rp, LANES), np.float32)
        buf[:r, :c] = arr
        self.meta[name] = (self.off, r, c)
        self.chunks.append(buf)
        self.off += rp

    def finalize(self):
        slab = np.concatenate(self.chunks, axis=0)
        return jnp.asarray(slab, dtype=self.dtype), self.meta


# ----------------------------------------------------------------------------
# Fused forward kernel (single invocation, no grid, whole batch folded).
# ----------------------------------------------------------------------------

def _mdt_fused_kernel(states_ref, actions_ref, goals_ref, sinemb_ref,
                      wslab_ref, vslab_ref, pred_ref, embt_ref,
                      *, wmeta, vmeta, cfg):
    f32, bf16 = jnp.float32, jnp.bfloat16
    H = cfg["n_heads"]

    def wt(name):                         # bf16 weight block [din, dout]
        off, r, c = wmeta[name]
        return wslab_ref[off:off + r, 0:c]

    def vec(name):                        # f32 bias / LN / pos / mask block
        off, r, c = vmeta[name]
        return vslab_ref[off:off + r, 0:c]

    def mm(x_bf, name):                   # bf16 x bf16 -> f32 accumulation (MXU)
        return jnp.dot(x_bf, wt(name), preferred_element_type=f32)

    def linear(x_bf, prefix, act=None):
        y = mm(x_bf, prefix + "_w") + vec(prefix + "_b")
        if act == "gelu":
            # TODO(synk): tanh approximation of GELU (PyTorch nn.GELU default is erf).
            c0 = math.sqrt(2.0 / math.pi)
            y = 0.5 * y * (1.0 + jnp.tanh(c0 * (y + 0.044715 * y * y * y)))
        elif act == "mish":
            sp = jnp.maximum(y, 0.0) + jnp.log(1.0 + jnp.exp(-jnp.abs(y)))
            y = y * jnp.tanh(sp)
        return y                           # f32

    def layernorm(x_bf, prefix):
        x = x_bf.astype(f32)
        mu = jnp.mean(x, axis=-1, keepdims=True)
        xc = x - mu
        var = jnp.mean(xc * xc, axis=-1, keepdims=True)
        y = xc * lax.rsqrt(var + 1e-5) * vec(prefix + "_g") + vec(prefix + "_b")
        return y.astype(bf16)

    def softmax(s):
        s = s - jnp.max(s, axis=-1, keepdims=True)
        e = jnp.exp(s)
        return e * pl.reciprocal(jnp.sum(e, axis=-1, keepdims=True), approx=True)

    def attention(xq_bf, xkv_bf, prefix, mask):
        # Per-head Q/K/V use per-head weight blocks (head split done on the
        # weights at pack time => no lane-offset slicing of activations).  The
        # V weights are head-embedded into full D columns so head outputs sum
        # into one [rows, D] array; a single output projection finishes it.
        o = None
        for h in range(H):
            q = mm(xq_bf, f"{prefix}_wq{h}")                  # [Rq, Dh], scale folded
            k = mm(xkv_bf, f"{prefix}_wk{h}")                 # [Rk, Dh]
            vh = mm(xkv_bf, f"{prefix}_wv{h}")                # [Rk, D] (head-embedded)
            s = lax.dot_general(q.astype(bf16), k.astype(bf16),
                                (((1,), (1,)), ((), ())),
                                preferred_element_type=f32) + mask
            p = softmax(s)
            oh = jnp.dot(p.astype(bf16), vh.astype(bf16),
                         preferred_element_type=f32)          # [Rq, D]
            o = oh if o is None else o + oh
        return mm(o.astype(bf16), f"{prefix}_wo") + vec(f"{prefix}_bo")

    def mlp(x_bf, prefix):
        h1 = linear(x_bf, f"{prefix}_fc", act="gelu")
        return linear(h1.astype(bf16), f"{prefix}_proj")

    def res(x_bf, delta_f32):              # residual update, bf16 stream
        return (x_bf.astype(f32) + delta_f32).astype(bf16)

    # -------- embeddings + positional embeddings (pos pre-tiled over batch) --
    states = states_ref[...].astype(bf16)        # [B*t,   obs_dim]
    actions = actions_ref[...].astype(bf16)      # [B*t_a, action_dim]
    goals = goals_ref[...].astype(bf16)          # [B*t_g, goal_dim]
    sinemb = sinemb_ref[...].astype(bf16)        # [B, D]

    goal_x = linear(goals, "goal_emb") + vec("pos_goal")        # f32
    state_x = linear(states, "tok_emb") + vec("pos_state")
    action_x = linear(actions, "action_emb") + vec("pos_action")

    mask_enc = vec("mask_enc")
    mask_dec = vec("mask_dec")
    mask_cross = vec("mask_cross")

    # -------- encoder over [all goal tokens ; all state tokens] --------------
    xe = jnp.concatenate([goal_x, state_x], axis=0).astype(bf16)
    for l in range(cfg["n_enc_layers"]):
        pre = f"enc{l}"
        xn = layernorm(xe, f"{pre}_ln1")
        xe = res(xe, attention(xn, xn, f"{pre}_sa", mask_enc))
        xe = res(xe, mlp(layernorm(xe, f"{pre}_ln2"), f"{pre}_mlp"))
    ctx = layernorm(xe, "enc_lnf")               # bf16 context for cross-attn

    # -------- decoder over action tokens --------------------------------------
    xd = action_x.astype(bf16)
    for l in range(cfg["n_dec_layers"]):
        pre = f"dec{l}"
        xn = layernorm(xd, f"{pre}_ln1")
        xd = res(xd, attention(xn, xn, f"{pre}_sa", mask_dec))
        xn = layernorm(xd, f"{pre}_ln3")
        xd = res(xd, attention(xn, ctx, f"{pre}_ca", mask_cross))
        xd = res(xd, mlp(layernorm(xd, f"{pre}_ln2"), f"{pre}_mlp"))
    xd = layernorm(xd, "dec_lnf")

    # -------- heads: lane-dense 128-wide padded output stores -----------------
    pred_ref[...] = linear(xd, "action_pred")                     # [B*t_a, 128]

    hs = linear(sinemb, "sigma_l1", act="mish")
    embt_ref[...] = linear(hs.astype(bf16), "sigma_l2")           # [B, 128]


# ----------------------------------------------------------------------------
# Parameter init + pack (mirrors _init_weights: normal std=0.02 weights, zero
# biases, LN weight=1/bias=0, pos_emb normal std=0.02).  Weights go to the
# bf16 slab with the softmax scale folded into Q and the action/sigma heads
# zero-padded to 128 output lanes; biases / LN params / pre-tiled pos-emb and
# additive attention masks go to the f32 slab.
# ----------------------------------------------------------------------------

def init_and_pack_params(key, cfg, batch_size):
    D = cfg["embed_dim"]
    H = cfg["n_heads"]
    Dh = D // H
    t_g, t, t_a = cfg["goal_seq_len"], cfg["obs_seq_len"], cfg["action_seq_len"]
    B = batch_size
    scale = 1.0 / math.sqrt(Dh)

    keys = iter(jax.random.split(key, 128))

    def nrm(shape):
        return np.asarray(0.02 * jax.random.normal(next(keys), shape, jnp.float32))

    wp = _SlabPacker(jnp.bfloat16, align=16)     # matmul weights
    vp = _SlabPacker(jnp.float32, align=8)       # biases / LN / pos / masks

    def add_linear(name, din, dout, pad_out=None):
        wmat = nrm((din, dout))
        if pad_out is not None and pad_out > dout:
            wfull = np.zeros((din, pad_out), np.float32)
            wfull[:, :dout] = wmat
            wmat = wfull
            dout = pad_out
        wp.add(name + "_w", wmat)
        vp.add(name + "_b", np.zeros((dout,), np.float32))

    def add_ln(name):
        vp.add(name + "_g", np.ones((D,), np.float32))
        vp.add(name + "_b", np.zeros((D,), np.float32))

    def add_attention(prefix):
        wq, wk, wv, wo = nrm((D, D)), nrm((D, D)), nrm((D, D)), nrm((D, D))
        for h in range(H):
            lo, hi = h * Dh, (h + 1) * Dh
            wp.add(f"{prefix}_wq{h}", wq[:, lo:hi] * scale)   # 1/sqrt(Dh) folded in
            wp.add(f"{prefix}_wk{h}", wk[:, lo:hi])
            wv_emb = np.zeros((D, D), np.float32)
            wv_emb[:, lo:hi] = wv[:, lo:hi]
            wp.add(f"{prefix}_wv{h}", wv_emb)                 # head-embedded V
        wp.add(f"{prefix}_wo", wo)
        vp.add(f"{prefix}_bo", np.zeros((D,), np.float32))

    def add_mlp(prefix):
        add_linear(f"{prefix}_fc", D, 4 * D)
        add_linear(f"{prefix}_proj", 4 * D, D)

    add_linear("tok_emb", cfg["obs_dim"], D)
    add_linear("goal_emb", cfg["goal_dim"], D)
    add_linear("action_emb", cfg["action_dim"], D)
    add_linear("sigma_l1", D, 2 * D)
    add_linear("sigma_l2", 2 * D, D, pad_out=LANES)
    add_linear("action_pred", D, cfg["action_dim"], pad_out=LANES)

    for l in range(cfg["n_enc_layers"]):
        pre = f"enc{l}"
        add_ln(f"{pre}_ln1")
        add_attention(f"{pre}_sa")
        add_ln(f"{pre}_ln2")
        add_mlp(f"{pre}_mlp")
    add_ln("enc_lnf")

    for l in range(cfg["n_dec_layers"]):
        pre = f"dec{l}"
        add_ln(f"{pre}_ln1")
        add_attention(f"{pre}_sa")
        add_ln(f"{pre}_ln3")
        add_attention(f"{pre}_ca")
        add_ln(f"{pre}_ln2")
        add_mlp(f"{pre}_mlp")
    add_ln("dec_lnf")

    # Positional embeddings, pre-tiled over the folded batch at pack time.
    pos = nrm((t_g + t + t_a, D))
    vp.add("pos_goal", np.tile(pos[:t_g], (B, 1)))
    vp.add("pos_state", np.tile(pos[t_g:t_g + t], (B, 1)))
    vp.add("pos_action", np.tile(pos[t_g + t:], (B, 1)))

    # Additive attention masks for the batch-folded token layouts.
    # Encoder tokens are ordered [all goal tokens ; all state tokens].
    eb = np.concatenate([np.repeat(np.arange(B), t_g), np.repeat(np.arange(B), t)])
    ep = np.concatenate([np.tile(np.arange(t_g), B), np.tile(t_g + np.arange(t), B)])
    db = np.repeat(np.arange(B), t_a)
    dp = np.tile(np.arange(t_a), B)
    enc_ok = eb[:, None] == eb[None, :]
    if ENCODER_CAUSAL:
        enc_ok &= ep[None, :] <= ep[:, None]
    dec_ok = (db[:, None] == db[None, :]) & (dp[None, :] <= dp[:, None])
    cross_ok = db[:, None] == eb[None, :]
    vp.add("mask_enc", np.where(enc_ok, 0.0, NEG_INF))
    vp.add("mask_dec", np.where(dec_ok, 0.0, NEG_INF))
    vp.add("mask_cross", np.where(cross_ok, 0.0, NEG_INF))

    wslab, wmeta = wp.finalize()
    vslab, vmeta = vp.finalize()
    return wslab, wmeta, vslab, vmeta


# ----------------------------------------------------------------------------
# Host-side wrapper: fold batch into rows, one no-grid pallas_call, slice the
# lane-padded outputs back to action_dim / embed_dim.
# ----------------------------------------------------------------------------

def mdt_forward(wslab, vslab, states, actions, goals, sigma, *, wmeta, vmeta, cfg):
    B, t, obs_dim = states.shape
    t_a = actions.shape[1]
    t_g = goals.shape[1]
    D = cfg["embed_dim"]

    # SinusoidalPosEmb(log(sigma)/4): tiny element-wise prep on the host side.
    half = D // 2
    freqs = jnp.exp(jnp.arange(half, dtype=jnp.float32)
                    * (-math.log(10000.0) / (half - 1)))
    ang = (jnp.log(sigma) / 4.0)[:, None] * freqs[None, :]
    sinemb = jnp.concatenate([jnp.sin(ang), jnp.cos(ang)], axis=-1)     # [B, D]

    states2d = states.reshape(B * t, obs_dim)
    actions2d = actions.reshape(B * t_a, actions.shape[2])
    goals2d = goals.reshape(B * t_g, goals.shape[2])

    kernel = functools.partial(_mdt_fused_kernel, wmeta=wmeta, vmeta=vmeta, cfg=cfg)
    vmem = pl.BlockSpec(memory_space=pltpu.MemorySpace.VMEM)

    pred_pad, embt_pad = pl.pallas_call(
        kernel,
        out_shape=(jax.ShapeDtypeStruct((B * t_a, LANES), jnp.float32),
                   jax.ShapeDtypeStruct((B, LANES), jnp.float32)),
        in_specs=[vmem] * 6,
        out_specs=(vmem, vmem),
    )(states2d, actions2d, goals2d, sinemb, wslab, vslab)

    pred = pred_pad[:, :cfg["action_dim"]].reshape(B, t_a, cfg["action_dim"])
    emb_t = embt_pad[:, :D].reshape(B, 1, D)
    return pred, emb_t


# ----------------------------------------------------------------------------
# main
# ----------------------------------------------------------------------------

if __name__ == "__main__":
    cfg = dict(
        obs_dim=16, goal_dim=16, action_dim=8,
        embed_dim=32, n_heads=4,
        n_enc_layers=2, n_dec_layers=2,
        goal_seq_len=1, obs_seq_len=7, action_seq_len=8,
    )
    B = 2

    root = jax.random.PRNGKey(0)
    kp, ks, ka, kg, ksig = jax.random.split(root, 5)

    wslab, wmeta, vslab, vmeta = init_and_pack_params(kp, cfg, B)

    states = jax.random.normal(ks, (B, cfg["obs_seq_len"], cfg["obs_dim"]), jnp.float32)
    actions = jax.random.normal(ka, (B, cfg["action_seq_len"], cfg["action_dim"]), jnp.float32)
    goals = jax.random.normal(kg, (B, cfg["goal_seq_len"], cfg["goal_dim"]), jnp.float32)
    sigma = jnp.exp(jax.random.normal(ksig, (B,), jnp.float32))   # positive noise levels

    fwd = jax.jit(functools.partial(mdt_forward, wmeta=wmeta, vmeta=vmeta, cfg=cfg))
    pred_actions, emb_t = fwd(wslab, vslab, states, actions, goals, sigma)
    jax.block_until_ready((pred_actions, emb_t))

    assert pred_actions.shape == (B, cfg["action_seq_len"], cfg["action_dim"])
    assert emb_t.shape == (B, 1, cfg["embed_dim"])
    assert bool(jnp.all(jnp.isfinite(pred_actions)))
    assert bool(jnp.all(jnp.isfinite(emb_t)))
    print("KERNEL_OK")
</pallas_src>

<mosaic_0001>
module attributes {stable_mosaic.version = 11 : i64} {
  func.func @_mdt_fused_kernel(%arg0: memref<14x16xf32, #tpu.memory_space<vmem>>, %arg1: memref<16x8xf32, #tpu.memory_space<vmem>>, %arg2: memref<2x16xf32, #tpu.memory_space<vmem>>, %arg3: memref<2x32xf32, #tpu.memory_space<vmem>>, %arg4: memref<3312x128xbf16, #tpu.memory_space<vmem>>, %arg5: memref<440x128xf32, #tpu.memory_space<vmem>>, %arg6: memref<16x128xf32, #tpu.memory_space<vmem>>, %arg7: memref<2x128xf32, #tpu.memory_space<vmem>>) attributes {dimension_semantics = [], scalar_prefetch = 0 : i64, scratch_operands = 0 : i64, tpu.core_type = #tpu.core_type<tc>} {
    %c0 = arith.constant 0 : index
    %c0_0 = arith.constant 0 : index
    %0 = vector.load %arg0[%c0, %c0_0] : memref<14x16xf32, #tpu.memory_space<vmem>>, vector<14x16xf32>
    %1 = arith.truncf %0 : vector<14x16xf32> to vector<14x16xbf16>
    %c0_1 = arith.constant 0 : index
    %c0_2 = arith.constant 0 : index
    %2 = vector.load %arg1[%c0_1, %c0_2] : memref<16x8xf32, #tpu.memory_space<vmem>>, vector<16x8xf32>
    %3 = arith.truncf %2 : vector<16x8xf32> to vector<16x8xbf16>
    %c0_3 = arith.constant 0 : index
    %c0_4 = arith.constant 0 : index
    %4 = vector.load %arg2[%c0_3, %c0_4] : memref<2x16xf32, #tpu.memory_space<vmem>>, vector<2x16xf32>
    %5 = arith.truncf %4 : vector<2x16xf32> to vector<2x16xbf16>
    %c0_5 = arith.constant 0 : index
    %c0_6 = arith.constant 0 : index
    %6 = vector.load %arg3[%c0_5, %c0_6] : memref<2x32xf32, #tpu.memory_space<vmem>>, vector<2x32xf32>
    %7 = arith.truncf %6 : vector<2x32xf32> to vector<2x32xbf16>
    %c16 = arith.constant 16 : index
    %c0_7 = arith.constant 0 : index
    %8 = vector.load %arg4[%c16, %c0_7] : memref<3312x128xbf16, #tpu.memory_space<vmem>>, vector<16x32xbf16>
    %cst = arith.constant dense<0.000000e+00> : vector<2x32xf32>
    %9 = tpu.matmul %5, %8, %cst {dimension_numbers = #tpu.dot_dimension_numbers<[1], [0], [0], [1], [0, 0, 1, 1], [], []>} : vector<2x16xbf16>, vector<16x32xbf16>, vector<2x32xf32> -> vector<2x32xf32>
    %c8 = arith.constant 8 : index
    %c0_8 = arith.constant 0 : index
    %10 = vector.load %arg5[%c8, %c0_8] : memref<440x128xf32, #tpu.memory_space<vmem>>, vector<1x32xf32>
    %11 = vector.broadcast %10 : vector<1x32xf32> to vector<2x32xf32>
    %12 = arith.addf %9, %11 : vector<2x32xf32>
    %c352 = arith.constant 352 : index
    %c0_9 = arith.constant 0 : index
    %13 = vector.load %arg5[%c352, %c0_9] : memref<440x128xf32, #tpu.memory_space<vmem>>, vector<2x32xf32>
    %14 = arith.addf %12, %13 : vector<2x32xf32>
    %c0_10 = arith.constant 0 : index
    %c0_11 = arith.constant 0 : index
    %15 = vector.load %arg4[%c0_10, %c0_11] : memref<3312x128xbf16, #tpu.memory_space<vmem>>, vector<16x32xbf16>
    %cst_12 = arith.constant dense<0.000000e+00> : vector<14x32xf32>
    %16 = tpu.matmul %1, %15, %cst_12 {dimension_numbers = #tpu.dot_dimension_numbers<[1], [0], [0], [1], [0, 0, 1, 1], [], []>} : vector<14x16xbf16>, vector<16x32xbf16>, vector<14x32xf32> -> vector<14x32xf32>
    %c0_13 = arith.constant 0 : index
    %c0_14 = arith.constant 0 : index
    %17 = vector.load %arg5[%c0_13, %c0_14] : memref<440x128xf32, #tpu.memory_space<vmem>>, vector<1x32xf32>
    %18 = vector.broadcast %17 : vector<1x32xf32> to vector<14x32xf32>
    %19 = arith.addf %16, %18 : vector<14x32xf32>
    %c360 = arith.constant 360 : index
    %c0_15 = arith.constant 0 : index
    %20 = vector.load %arg5[%c360, %c0_15] : memref<440x128xf32, #tpu.memory_space<vmem>>, vector<14x32xf32>
    %21 = arith.addf %19, %20 : vector<14x32xf32>
    %c32 = arith.constant 32 : index
    %c0_16 = arith.constant 0 : index
    %22 = vector.load %arg4[%c32, %c0_16] : memref<3312x128xbf16, #tpu.memory_space<vmem>>, vector<8x32xbf16>
    %cst_17 = arith.constant dense<0.000000e+00> : vector<16x32xf32>
    %23 = tpu.matmul %3, %22, %cst_17 {dimension_numbers = #tpu.dot_dimension_numbers<[1], [0], [0], [1], [0, 0, 1, 1], [], []>} : vector<16x8xbf16>, vector<8x32xbf16>, vector<16x32xf32> -> vector<16x32xf32>
    %c16_18 = arith.constant 16 : index
    %c0_19 = arith.constant 0 : index
    %24 = vector.load %arg5[%c16_18, %c0_19] : memref<440x128xf32, #tpu.memory_space<vmem>>, vector<1x32xf32>
    %25 = vector.broadcast %24 : vector<1x32xf32> to vector<16x32xf32>
    %26 = arith.addf %23, %25 : vector<16x32xf32>
    %c376 = arith.constant 376 : index
    %c0_20 = arith.constant 0 : index
    %27 = vector.load %arg5[%c376, %c0_20] : memref<440x128xf32, #tpu.memory_space<vmem>>, vector<16x32xf32>
    %28 = arith.addf %26, %27 : vector<16x32xf32>
    %c392 = arith.constant 392 : index
    %c0_21 = arith.constant 0 : index
    %29 = vector.load %arg5[%c392, %c0_21] : memref<440x128xf32, #tpu.memory_space<vmem>>, vector<16x16xf32>
    %c408 = arith.constant 408 : index
    %c0_22 = arith.constant 0 : index
    %30 = vector.load %arg5[%c408, %c0_22] : memref<440x128xf32, #tpu.memory_space<vmem>>, vector<16x16xf32>
    %c424 = arith.constant 424 : index
    %c0_23 = arith.constant 0 : index
    %31 = vector.load %arg5[%c424, %c0_23] : memref<440x128xf32, #tpu.memory_space<vmem>>, vector<16x16xf32>
    %32 = tpu.concatenate %14, %21 in 0 : vector<2x32xf32>, vector<14x32xf32> -> vector<16x32xf32>
    %33 = arith.truncf %32 : vector<16x32xf32> to vector<16x32xbf16>
    %34 = arith.extf %33 : vector<16x32xbf16> to vector<16x32xf32>
    %cst_24 = arith.constant dense<0.000000e+00> : vector<16xf32>
    %35 = vector.multi_reduction <add>, %34, %cst_24 [1] : vector<16x32xf32> to vector<16xf32>
    %36 = vector.shape_cast %35 : vector<16xf32> to vector<16x1xf32>
    %cst_25 = arith.constant 3.200000e+01 : f32
    %37 = vector.broadcast %cst_25 : f32 to vector<16x1xf32>
    %38 = arith.divf %36, %37 : vector<16x1xf32>
    %39 = vector.broadcast %38 : vector<16x1xf32> to vector<16x32xf32>
    %40 = arith.subf %34, %39 : vector<16x32xf32>
    %41 = arith.mulf %40, %40 : vector<16x32xf32>
    %cst_26 = arith.constant dense<0.000000e+00> : vector<16xf32>
    %42 = vector.multi_reduction <add>, %41, %cst_26 [1] : vector<16x32xf32> to vector<16xf32>
    %43 = vector.shape_cast %42 : vector<16xf32> to vector<16x1xf32>
    %cst_27 = arith.constant 3.200000e+01 : f32
    %44 = vector.broadcast %cst_27 : f32 to vector<16x1xf32>
    %45 = arith.divf %43, %44 : vector<16x1xf32>
    %cst_28 = arith.constant 9.99999974E-6 : f32
    %46 = vector.broadcast %cst_28 : f32 to vector<16x1xf32>
    %47 = arith.addf %45, %46 : vector<16x1xf32>
    %48 = math.rsqrt %47 : vector<16x1xf32>
    %49 = vector.broadcast %48 : vector<16x1xf32> to vector<16x32xf32>
    %50 = arith.mulf %40, %49 : vector<16x32xf32>
    %c48 = arith.constant 48 : index
    %c0_29 = arith.constant 0 : index
    %51 = vector.load %arg5[%c48, %c0_29] : memref<440x128xf32, #tpu.memory_space<vmem>>, vector<1x32xf32>
    %52 = vector.broadcast %51 : vector<1x32xf32> to vector<16x32xf32>
    %53 = arith.mulf %50, %52 : vector<16x32xf32>
    %c56 = arith.constant 56 : index
    %c0_30 = arith.constant 0 : index
    %54 = vector.load %arg5[%c56, %c0_30] : memref<440x128xf32, #tpu.memory_space<vmem>>, vector<1x32xf32>
    %55 = vector.broadcast %54 : vector<1x32xf32> to vector<16x32xf32>
    %56 = arith.addf %53, %55 : vector<16x32xf32>
    %57 = arith.truncf %56 : vector<16x32xf32> to vector<16x32xbf16>
    %c176 = arith.constant 176 : index
    %c0_31 = arith.constant 0 : index
    %58 = vector.load %arg4[%c176, %c0_31] : memref<3312x128xbf16, #tpu.memory_space<vmem>>, vector<32x8xbf16>
    %cst_32 = arith.constant dense<0.000000e+00> : vector<16x8xf32>
    %59 = tpu.matmul %57, %58, %cst_32 {dimension_numbers = #tpu.dot_dimension_numbers<[1], [0], [0], [1], [0, 0, 1, 1], [], []>} : vector<16x32xbf16>, vector<32x8xbf16>, vector<16x8xf32> -> vector<16x8xf32>
    %c208 = arith.constant 208 : index
    %c0_33 = arith.constant 0 : index
    %60 = vector.load %arg4[%c208, %c0_33] : memref<3312x128xbf16, #tpu.memory_space<vmem>>, vector<32x8xbf16>
    %cst_34 = arith.constant dense<0.000000e+00> : vector<16x8xf32>
    %61 = tpu.matmul %57, %60, %cst_34 {dimension_numbers = #tpu.dot_dimension_numbers<[1], [0], [0], [1], [0, 0, 1, 1], [], []>} : vector<16x32xbf16>, vector<32x8xbf16>, vector<16x8xf32> -> vector<16x8xf32>
    %c240 = arith.constant 240 : index
    %c0_35 = arith.constant 0 : index
    %62 = vector.load %arg4[%c240, %c0_35] : memref<3312x128xbf16, #tpu.memory_space<vmem>>, vector<32x32xbf16>
    %cst_36 = arith.constant dense<0.000000e+00> : vector<16x32xf32>
    %63 = tpu.matmul %57, %62, %cst_36 {dimension_numbers = #tpu.dot_dimension_numbers<[1], [0], [0], [1], [0, 0, 1, 1], [], []>} : vector<16x32xbf16>, vector<32x32xbf16>, vector<16x32xf32> -> vector<16x32xf32>
    %64 = arith.truncf %59 : vector<16x8xf32> to vector<16x8xbf16>
    %65 = arith.truncf %61 : vector<16x8xf32> to vector<16x8xbf16>
    %cst_37 = arith.constant dense<0.000000e+00> : vector<16x16xf32>
    %66 = tpu.matmul %64, %65, %cst_37 {dimension_numbers = #tpu.dot_dimension_numbers<[1], [1], [0], [0], [0, 0, 1, 0], [], []>} : vector<16x8xbf16>, vector<16x8xbf16>, vector<16x16xf32> -> vector<16x16xf32>
    %67 = arith.addf %66, %29 : vector<16x16xf32>
    %cst_38 = arith.constant dense<0xFF800000> : vector<16xf32>
    %68 = vector.multi_reduction <maximumf>, %67, %cst_38 [1] : vector<16x16xf32> to vector<16xf32>
    %69 = vector.shape_cast %68 : vector<16xf32> to vector<16x1xf32>
    %70 = vector.broadcast %69 : vector<16x1xf32> to vector<16x16xf32>
    %71 = arith.subf %67, %70 : vector<16x16xf32>
    %72 = math.exp %71 : vector<16x16xf32>
    %cst_39 = arith.constant dense<0.000000e+00> : vector<16xf32>
    %73 = vector.multi_reduction <add>, %72, %cst_39 [1] : vector<16x16xf32> to vector<16xf32>
    %74 = vector.shape_cast %73 : vector<16xf32> to vector<16x1xf32>
    %75 = tpu.reciprocal %74 {approx = true} : vector<16x1xf32> -> vector<16x1xf32>
    %76 = vector.broadcast %75 : vector<16x1xf32> to vector<16x16xf32>
    %77 = arith.mulf %72, %76 : vector<16x16xf32>
    %78 = arith.truncf %77 : vector<16x16xf32> to vector<16x16xbf16>
    %79 = arith.truncf %63 : vector<16x32xf32> to vector<16x32xbf16>
    %cst_40 = arith.constant dense<0.000000e+00> : vector<16x32xf32>
    %80 = tpu.matmul %78, %79, %cst_40 {dimension_numbers = #tpu.dot_dimension_numbers<[1], [0], [0], [1], [0, 0, 1, 1], [], []>} : vector<16x16xbf16>, vector<16x32xbf16>, vector<16x32xf32> -> vector<16x32xf32>
    %c272 = arith.constant 272 : index
    %c0_41 = arith.constant 0 : index
    %81 = vector.load %arg4[%c272, %c0_41] : memref<3312x128xbf16, #tpu.memory_space<vmem>>, vector<32x8xbf16>
    %cst_42 = arith.constant dense<0.000000e+00> : vector<16x8xf32>
    %82 = tpu.matmul %57, %81, %cst_42 {dimension_numbers = #tpu.dot_dimension_numbers<[1], [0], [0], [1], [0, 0, 1, 1], [], []>} : vector<16x32xbf16>, vector<32x8xbf16>, vector<16x8xf32> -> vector<16x8xf32>
    %c304 = arith.constant 304 : index
    %c0_43 = arith.constant 0 : index
    %83 = vector.load %arg4[%c304, %c0_43] : memref<3312x128xbf16, #tpu.memory_space<vmem>>, vector<32x8xbf16>
    %cst_44 = arith.constant dense<0.000000e+00> : vector<16x8xf32>
    %84 = tpu.matmul %57, %83, %cst_44 {dimension_numbers = #tpu.dot_dimension_numbers<[1], [0], [0], [1], [0, 0, 1, 1], [], []>} : vector<16x32xbf16>, vector<32x8xbf16>, vector<16x8xf32> -> vector<16x8xf32>
    %c336 = arith.constant 336 : index
    %c0_45 = arith.constant 0 : index
    %85 = vector.load %arg4[%c336, %c0_45] : memref<3312x128xbf16, #tpu.memory_space<vmem>>, vector<32x32xbf16>
    %cst_46 = arith.constant dense<0.000000e+00> : vector<16x32xf32>
    %86 = tpu.matmul %57, %85, %cst_46 {dimension_numbers = #tpu.dot_dimension_numbers<[1], [0], [0], [1], [0, 0, 1, 1], [], []>} : vector<16x32xbf16>, vector<32x32xbf16>, vector<16x32xf32> -> vector<16x32xf32>
    %87 = arith.truncf %82 : vector<16x8xf32> to vector<16x8xbf16>
    %88 = arith.truncf %84 : vector<16x8xf32> to vector<16x8xbf16>
    %cst_47 = arith.constant dense<0.000000e+00> : vector<16x16xf32>
    %89 = tpu.matmul %87, %88, %cst_47 {dimension_numbers = #tpu.dot_dimension_numbers<[1], [1], [0], [0], [0, 0, 1, 0], [], []>} : vector<16x8xbf16>, vector<16x8xbf16>, vector<16x16xf32> -> vector<16x16xf32>
    %90 = arith.addf %89, %29 : vector<16x16xf32>
    %cst_48 = arith.constant dense<0xFF800000> : vector<16xf32>
    %91 = vector.multi_reduction <maximumf>, %90, %cst_48 [1] : vector<16x16xf32> to vector<16xf32>
    %92 = vector.shape_cast %91 : vector<16xf32> to vector<16x1xf32>
    %93 = vector.broadcast %92 : vector<16x1xf32> to vector<16x16xf32>
    %94 = arith.subf %90, %93 : vector<16x16xf32>
    %95 = math.exp %94 : vector<16x16xf32>
    %cst_49 = arith.constant dense<0.000000e+00> : vector<16xf32>
    %96 = vector.multi_reduction <add>, %95, %cst_49 [1] : vector<16x16xf32> to vector<16xf32>
    %97 = vector.shape_cast %96 : vector<16xf32> to vector<16x1xf32>
    %98 = tpu.reciprocal %97 {approx = true} : vector<16x1xf32> -> vector<16x1xf32>
    %99 = vector.broadcast %98 : vector<16x1xf32> to vector<16x16xf32>
    %100 = arith.mulf %95, %99 : vector<16x16xf32>
    %101 = arith.truncf %100 : vector<16x16xf32> to vector<16x16xbf16>
    %102 = arith.truncf %86 : vector<16x32xf32> to vector<16x32xbf16>
    %cst_50 = arith.constant dense<0.000000e+00> : vector<16x32xf32>
    %103 = tpu.matmul %101, %102, %cst_50 {dimension_numbers = #tpu.dot_dimension_numbers<[1], [0], [0], [1], [0, 0, 1, 1], [], []>} : vector<16x16xbf16>, vector<16x32xbf16>, vector<16x32xf32> -> vector<16x32xf32>
    %104 = arith.addf %80, %103 : vector<16x32xf32>
    %c368 = arith.constant 368 : index
    %c0_51 = arith.constant 0 : index
    %105 = vector.load %arg4[%c368, %c0_51] : memref<3312x128xbf16, #tpu.memory_space<vmem>>, vector<32x8xbf16>
    %cst_52 = arith.constant dense<0.000000e+00> : vector<16x8xf32>
    %106 = tpu.matmul %57, %105, %cst_52 {dimension_numbers = #tpu.dot_dimension_numbers<[1], [0], [0], [1], [0, 0, 1, 1], [], []>} : vector<16x32xbf16>, vector<32x8xbf16>, vector<16x8xf32> -> vector<16x8xf32>
    %c400 = arith.constant 400 : index
    %c0_53 = arith.constant 0 : index
    %107 = vector.load %arg4[%c400, %c0_53] : memref<3312x128xbf16, #tpu.memory_space<vmem>>, vector<32x8xbf16>
    %cst_54 = arith.constant dense<0.000000e+00> : vector<16x8xf32>
    %108 = tpu.matmul %57, %107, %cst_54 {dimension_numbers = #tpu.dot_dimension_numbers<[1], [0], [0], [1], [0, 0, 1, 1], [], []>} : vector<16x32xbf16>, vector<32x8xbf16>, vector<16x8xf32> -> vector<16x8xf32>
    %c432 = arith.constant 432 : index
    %c0_55 = arith.constant 0 : index
    %109 = vector.load %arg4[%c432, %c0_55] : memref<3312x128xbf16, #tpu.memory_space<vmem>>, vector<32x32xbf16>
    %cst_56 = arith.constant dense<0.000000e+00> : vector<16x32xf32>
    %110 = tpu.matmul %57, %109, %cst_56 {dimension_numbers = #tpu.dot_dimension_numbers<[1], [0], [0], [1], [0, 0, 1, 1], [], []>} : vector<16x32xbf16>, vector<32x32xbf16>, vector<16x32xf32> -> vector<16x32xf32>
    %111 = arith.truncf %106 : vector<16x8xf32> to vector<16x8xbf16>
    %112 = arith.truncf %108 : vector<16x8xf32> to vector<16x8xbf16>
    %cst_57 = arith.constant dense<0.000000e+00> : vector<16x16xf32>
    %113 = tpu.matmul %111, %112, %cst_57 {dimension_numbers = #tpu.dot_dimension_numbers<[1], [1], [0], [0], [0, 0, 1, 0], [], []>} : vector<16x8xbf16>, vector<16x8xbf16>, vector<16x16xf32> -> vector<16x16xf32>
    %114 = arith.addf %113, %29 : vector<16x16xf32>
    %cst_58 = arith.constant dense<0xFF800000> : vector<16xf32>
    %115 = vector.multi_reduction <maximumf>, %114, %cst_58 [1] : vector<16x16xf32> to vector<16xf32>
    %116 = vector.shape_cast %115 : vector<16xf32> to vector<16x1xf32>
    %117 = vector.broadcast %116 : vector<16x1xf32> to vector<16x16xf32>
    %118 = arith.subf %114, %117 : vector<16x16xf32>
    %119 = math.exp %118 : vector<16x16xf32>
    %cst_59 = arith.constant dense<0.000000e+00> : vector<16xf32>
    %120 = vector.multi_reduction <add>, %119, %cst_59 [1] : vector<16x16xf32> to vector<16xf32>
    %121 = vector.shape_cast %120 : vector<16xf32> to vector<16x1xf32>
    %122 = tpu.reciprocal %121 {approx = true} : vector<16x1xf32> -> vector<16x1xf32>
    %123 = vector.broadcast %122 : vector<16x1xf32> to vector<16x16xf32>
    %124 = arith.mulf %119, %123 : vector<16x16xf32>
    %125 = arith.truncf %124 : vector<16x16xf32> to vector<16x16xbf16>
    %126 = arith.truncf %110 : vector<16x32xf32> to vector<16x32xbf16>
    %cst_60 = arith.constant dense<0.000000e+00> : vector<16x32xf32>
    %127 = tpu.matmul %125, %126, %cst_60 {dimension_numbers = #tpu.dot_dimension_numbers<[1], [0], [0], [1], [0, 0, 1, 1], [], []>} : vector<16x16xbf16>, vector<16x32xbf16>, vector<16x32xf32> -> vector<16x32xf32>
    %128 = arith.addf %104, %127 : vector<16x32xf32>
    %c464 = arith.constant 464 : index
    %c0_61 = arith.constant 0 : index
    %129 = vector.load %arg4[%c464, %c0_61] : memref<3312x128xbf16, #tpu.memory_space<vmem>>, vector<32x8xbf16>
    %cst_62 = arith.constant dense<0.000000e+00> : vector<16x8xf32>
    %130 = tpu.matmul %57, %129, %cst_62 {dimension_numbers = #tpu.dot_dimension_numbers<[1], [0], [0], [1], [0, 0, 1, 1], [], []>} : vector<16x32xbf16>, vector<32x8xbf16>, vector<16x8xf32> -> vector<16x8xf32>
    %c496 = arith.constant 496 : index
    %c0_63 = arith.constant 0 : index
    %131 = vector.load %arg4[%c496, %c0_63] : memref<3312x128xbf16, #tpu.memory_space<vmem>>, vector<32x8xbf16>
    %cst_64 = arith.constant dense<0.000000e+00> : vector<16x8xf32>
    %132 = tpu.matmul %57, %131, %cst_64 {dimension_numbers = #tpu.dot_dimension_numbers<[1], [0], [0], [1], [0, 0, 1, 1], [], []>} : vector<16x32xbf16>, vector<32x8xbf16>, vector<16x8xf32> -> vector<16x8xf32>
    %c528 = arith.constant 528 : index
    %c0_65 = arith.constant 0 : index
    %133 = vector.load %arg4[%c528, %c0_65] : memref<3312x128xbf16, #tpu.memory_space<vmem>>, vector<32x32xbf16>
    %cst_66 = arith.constant dense<0.000000e+00> : vector<16x32xf32>
    %134 = tpu.matmul %57, %133, %cst_66 {dimension_numbers = #tpu.dot_dimension_numbers<[1], [0], [0], [1], [0, 0, 1, 1], [], []>} : vector<16x32xbf16>, vector<32x32xbf16>, vector<16x32xf32> -> vector<16x32xf32>
    %135 = arith.truncf %130 : vector<16x8xf32> to vector<16x8xbf16>
    %136 = arith.truncf %132 : vector<16x8xf32> to vector<16x8xbf16>
    %cst_67 = arith.constant dense<0.000000e+00> : vector<16x16xf32>
    %137 = tpu.matmul %135, %136, %cst_67 {dimension_numbers = #tpu.dot_dimension_numbers<[1], [1], [0], [0], [0, 0, 1, 0], [], []>} : vector<16x8xbf16>, vector<16x8xbf16>, vector<16x16xf32> -> vector<16x16xf32>
    %138 = arith.addf %137, %29 : vector<16x16xf32>
    %cst_68 = arith.constant dense<0xFF800000> : vector<16xf32>
    %139 = vector.multi_reduction <maximumf>, %138, %cst_68 [1] : vector<16x16xf32> to vector<16xf32>
    %140 = vector.shape_cast %139 : vector<16xf32> to vector<16x1xf32>
    %141 = vector.broadcast %140 : vector<16x1xf32> to vector<16x16xf32>
    %142 = arith.subf %138, %141 : vector<16x16xf32>
    %143 = math.exp %142 : vector<16x16xf32>
    %cst_69 = arith.constant dense<0.000000e+00> : vector<16xf32>
    %144 = vector.multi_reduction <add>, %143, %cst_69 [1] : vector<16x16xf32> to vector<16xf32>
    %145 = vector.shape_cast %144 : vector<16xf32> to vector<16x1xf32>
    %146 = tpu.reciprocal %145 {approx = true} : vector<16x1xf32> -> vector<16x1xf32>
    %147 = vector.broadcast %146 : vector<16x1xf32> to vector<16x16xf32>
    %148 = arith.mulf %143, %147 : vector<16x16xf32>
    %149 = arith.truncf %148 : vector<16x16xf32> to vector<16x16xbf16>
    %150 = arith.truncf %134 : vector<16x32xf32> to vector<16x32xbf16>
    %cst_70 = arith.constant dense<0.000000e+00> : vector<16x32xf32>
    %151 = tpu.matmul %149, %150, %cst_70 {dimension_numbers = #tpu.dot_dimension_numbers<[1], [0], [0], [1], [0, 0, 1, 1], [], []>} : vector<16x16xbf16>, vector<16x32xbf16>, vector<16x32xf32> -> vector<16x32xf32>
    %152 = arith.addf %128, %151 : vector<16x32xf32>
    %153 = arith.truncf %152 : vector<16x32xf32> to vector<16x32xbf16>
    %c560 = arith.constant 560 : index
    %c0_71 = arith.constant 0 : index
    %154 = vector.load %arg4[%c560, %c0_71] : memref<3312x128xbf16, #tpu.memory_space<vmem>>, vector<32x32xbf16>
    %cst_72 = arith.constant dense<0.000000e+00> : vector<16x32xf32>
    %155 = tpu.matmul %153, %154, %cst_72 {dimension_numbers = #tpu.dot_dimension_numbers<[1], [0], [0], [1], [0, 0, 1, 1], [], []>} : vector<16x32xbf16>, vector<32x32xbf16>, vector<16x32xf32> -> vector<16x32xf32>
    %c64 = arith.constant 64 : index
    %c0_73 = arith.constant 0 : index
    %156 = vector.load %arg5[%c64, %c0_73] : memref<440x128xf32, #tpu.memory_space<vmem>>, vector<1x32xf32>
    %157 = vector.broadcast %156 : vector<1x32xf32> to vector<16x32xf32>
    %158 = arith.addf %155, %157 : vector<16x32xf32>
    %159 = arith.extf %33 : vector<16x32xbf16> to vector<16x32xf32>
    %160 = arith.addf %159, %158 : vector<16x32xf32>
    %161 = arith.truncf %160 : vector<16x32xf32> to vector<16x32xbf16>
    %162 = arith.extf %161 : vector<16x32xbf16> to vector<16x32xf32>
    %cst_74 = arith.constant dense<0.000000e+00> : vector<16xf32>
    %163 = vector.multi_reduction <add>, %162, %cst_74 [1] : vector<16x32xf32> to vector<16xf32>
    %164 = vector.shape_cast %163 : vector<16xf32> to vector<16x1xf32>
    %cst_75 = arith.constant 3.200000e+01 : f32
    %165 = vector.broadcast %cst_75 : f32 to vector<16x1xf32>
    %166 = arith.divf %164, %165 : vector<16x1xf32>
    %167 = vector.broadcast %166 : vector<16x1xf32> to vector<16x32xf32>
    %168 = arith.subf %162, %167 : vector<16x32xf32>
    %169 = arith.mulf %168, %168 : vector<16x32xf32>
    %cst_76 = arith.constant dense<0.000000e+00> : vector<16xf32>
    %170 = vector.multi_reduction <add>, %169, %cst_76 [1] : vector<16x32xf32> to vector<16xf32>
    %171 = vector.shape_cast %170 : vector<16xf32> to vector<16x1xf32>
    %cst_77 = arith.constant 3.200000e+01 : f32
    %172 = vector.broadcast %cst_77 : f32 to vector<16x1xf32>
    %173 = arith.divf %171, %172 : vector<16x1xf32>
    %cst_78 = arith.constant 9.99999974E-6 : f32
    %174 = vector.broadcast %cst_78 : f32 to vector<16x1xf32>
    %175 = arith.addf %173, %174 : vector<16x1xf32>
    %176 = math.rsqrt %175 : vector<16x1xf32>
    %177 = vector.broadcast %176 : vector<16x1xf32> to vector<16x32xf32>
    %178 = arith.mulf %168, %177 : vector<16x32xf32>
    %c72 = arith.constant 72 : index
    %c0_79 = arith.constant 0 : index
    %179 = vector.load %arg5[%c72, %c0_79] : memref<440x128xf32, #tpu.memory_space<vmem>>, vector<1x32xf32>
    %180 = vector.broadcast %179 : vector<1x32xf32> to vector<16x32xf32>
    %181 = arith.mulf %178, %180 : vector<16x32xf32>
    %c80 = arith.constant 80 : index
    %c0_80 = arith.constant 0 : index
    %182 = vector.load %arg5[%c80, %c0_80] : memref<440x128xf32, #tpu.memory_space<vmem>>, vector<1x32xf32>
    %183 = vector.broadcast %182 : vector<1x32xf32> to vector<16x32xf32>
    %184 = arith.addf %181, %183 : vector<16x32xf32>
    %185 = arith.truncf %184 : vector<16x32xf32> to vector<16x32xbf16>
    %c592 = arith.constant 592 : index
    %c0_81 = arith.constant 0 : index
    %186 = vector.load %arg4[%c592, %c0_81] : memref<3312x128xbf16, #tpu.memory_space<vmem>>, vector<32x128xbf16>
    %cst_82 = arith.constant dense<0.000000e+00> : vector<16x128xf32>
    %187 = tpu.matmul %185, %186, %cst_82 {dimension_numbers = #tpu.dot_dimension_numbers<[1], [0], [0], [1], [0, 0, 1, 1], [], []>} : vector<16x32xbf16>, vector<32x128xbf16>, vector<16x128xf32> -> vector<16x128xf32>
    %c88 = arith.constant 88 : index
    %c0_83 = arith.constant 0 : index
    %188 = vector.load %arg5[%c88, %c0_83] : memref<440x128xf32, #tpu.memory_space<vmem>>, vector<1x128xf32>
    %189 = vector.broadcast %188 : vector<1x128xf32> to vector<16x128xf32>
    %190 = arith.addf %187, %189 : vector<16x128xf32>
    %cst_84 = arith.constant 5.000000e-01 : f32
    %191 = vector.broadcast %cst_84 : f32 to vector<16x128xf32>
    %192 = arith.mulf %191, %190 : vector<16x128xf32>
    %cst_85 = arith.constant 4.471500e-02 : f32
    %193 = vector.broadcast %cst_85 : f32 to vector<16x128xf32>
    %194 = arith.mulf %193, %190 : vector<16x128xf32>
    %195 = arith.mulf %194, %190 : vector<16x128xf32>
    %196 = arith.mulf %195, %190 : vector<16x128xf32>
    %197 = arith.addf %190, %196 : vector<16x128xf32>
    %cst_86 = arith.constant 0.797884583 : f32
    %198 = vector.broadcast %cst_86 : f32 to vector<16x128xf32>
    %199 = arith.mulf %198, %197 : vector<16x128xf32>
    %200 = math.tanh %199 : vector<16x128xf32>
    %cst_87 = arith.constant 1.000000e+00 : f32
    %201 = vector.broadcast %cst_87 : f32 to vector<16x128xf32>
    %202 = arith.addf %201, %200 : vector<16x128xf32>
    %203 = arith.mulf %192, %202 : vector<16x128xf32>
    %204 = arith.truncf %203 : vector<16x128xf32> to vector<16x128xbf16>
    %c624 = arith.constant 624 : index
    %c0_88 = arith.constant 0 : index
    %205 = vector.load %arg4[%c624, %c0_88] : memref<3312x128xbf16, #tpu.memory_space<vmem>>, vector<128x32xbf16>
    %cst_89 = arith.constant dense<0.000000e+00> : vector<16x32xf32>
    %206 = tpu.matmul %204, %205, %cst_89 {dimension_numbers = #tpu.dot_dimension_numbers<[1], [0], [0], [1], [0, 0, 1, 1], [], []>} : vector<16x128xbf16>, vector<128x32xbf16>, vector<16x32xf32> -> vector<16x32xf32>
    %c96 = arith.constant 96 : index
    %c0_90 = arith.constant 0 : index
    %207 = vector.load %arg5[%c96, %c0_90] : memref<440x128xf32, #tpu.memory_space<vmem>>, vector<1x32xf32>
    %208 = vector.broadcast %207 : vector<1x32xf32> to vector<16x32xf32>
    %209 = arith.addf %206, %208 : vector<16x32xf32>
    %210 = arith.extf %161 : vector<16x32xbf16> to vector<16x32xf32>
    %211 = arith.addf %210, %209 : vector<16x32xf32>
    %212 = arith.truncf %211 : vector<16x32xf32> to vector<16x32xbf16>
    %213 = arith.extf %212 : vector<16x32xbf16> to vector<16x32xf32>
    %cst_91 = arith.constant dense<0.000000e+00> : vector<16xf32>
    %214 = vector.multi_reduction <add>, %213, %cst_91 [1] : vector<16x32xf32> to vector<16xf32>
    %215 = vector.shape_cast %214 : vector<16xf32> to vector<16x1xf32>
    %cst_92 = arith.constant 3.200000e+01 : f32
    %216 = vector.broadcast %cst_92 : f32 to vector<16x1xf32>
    %217 = arith.divf %215, %216 : vector<16x1xf32>
    %218 = vector.broadcast %217 : vector<16x1xf32> to vector<16x32xf32>
    %219 = arith.subf %213, %218 : vector<16x32xf32>
    %220 = arith.mulf %219, %219 : vector<16x32xf32>
    %cst_93 = arith.constant dense<0.000000e+00> : vector<16xf32>
    %221 = vector.multi_reduction <add>, %220, %cst_93 [1] : vector<16x32xf32> to vector<16xf32>
    %222 = vector.shape_cast %221 : vector<16xf32> to vector<16x1xf32>
    %cst_94 = arith.constant 3.200000e+01 : f32
    %223 = vector.broadcast %cst_94 : f32 to vector<16x1xf32>
    %224 = arith.divf %222, %223 : vector<16x1xf32>
    %cst_95 = arith.constant 9.99999974E-6 : f32
    %225 = vector.broadcast %cst_95 : f32 to vector<16x1xf32>
    %226 = arith.addf %224, %225 : vector<16x1xf32>
    %227 = math.rsqrt %226 : vector<16x1xf32>
    %228 = vector.broadcast %227 : vector<16x1xf32> to vector<16x32xf32>
    %229 = arith.mulf %219, %228 : vector<16x32xf32>
    %c104 = arith.constant 104 : index
    %c0_96 = arith.constant 0 : index
    %230 = vector.load %arg5[%c104, %c0_96] : memref<440x128xf32, #tpu.memory_space<vmem>>, vector<1x32xf32>
    %231 = vector.broadcast %230 : vector<1x32xf32> to vector<16x32xf32>
    %232 = arith.mulf %229, %231 : vector<16x32xf32>
    %c112 = arith.constant 112 : index
    %c0_97 = arith.constant 0 : index
    %233 = vector.load %arg5[%c112, %c0_97] : memref<440x128xf32, #tpu.memory_space<vmem>>, vector<1x32xf32>
    %234 = vector.broadcast %233 : vector<1x32xf32> to vector<16x32xf32>
    %235 = arith.addf %232, %234 : vector<16x32xf32>
    %236 = arith.truncf %235 : vector<16x32xf32> to vector<16x32xbf16>
    %c752 = arith.constant 752 : index
    %c0_98 = arith.constant 0 : index
    %237 = vector.load %arg4[%c752, %c0_98] : memref<3312x128xbf16, #tpu.memory_space<vmem>>, vector<32x8xbf16>
    %cst_99 = arith.constant dense<0.000000e+00> : vector<16x8xf32>
    %238 = tpu.matmul %236, %237, %cst_99 {dimension_numbers = #tpu.dot_dimension_numbers<[1], [0], [0], [1], [0, 0, 1, 1], [], []>} : vector<16x32xbf16>, vector<32x8xbf16>, vector<16x8xf32> -> vector<16x8xf32>
    %c784 = arith.constant 784 : index
    %c0_100 = arith.constant 0 : index
    %239 = vector.load %arg4[%c784, %c0_100] : memref<3312x128xbf16, #tpu.memory_space<vmem>>, vector<32x8xbf16>
    %cst_101 = arith.constant dense<0.000000e+00> : vector<16x8xf32>
    %240 = tpu.matmul %236, %239, %cst_101 {dimension_numbers = #tpu.dot_dimension_numbers<[1], [0], [0], [1], [0, 0, 1, 1], [], []>} : vector<16x32xbf16>, vector<32x8xbf16>, vector<16x8xf32> -> vector<16x8xf32>
    %c816 = arith.constant 816 : index
    %c0_102 = arith.constant 0 : index
    %241 = vector.load %arg4[%c816, %c0_102] : memref<3312x128xbf16, #tpu.memory_space<vmem>>, vector<32x32xbf16>
    %cst_103 = arith.constant dense<0.000000e+00> : vector<16x32xf32>
    %242 = tpu.matmul %236, %241, %cst_103 {dimension_numbers = #tpu.dot_dimension_numbers<[1], [0], [0], [1], [0, 0, 1, 1], [], []>} : vector<16x32xbf16>, vector<32x32xbf16>, vector<16x32xf32> -> vector<16x32xf32>
    %243 = arith.truncf %238 : vector<16x8xf32> to vector<16x8xbf16>
    %244 = arith.truncf %240 : vector<16x8xf32> to vector<16x8xbf16>
    %cst_104 = arith.constant dense<0.000000e+00> : vector<16x16xf32>
    %245 = tpu.matmul %243, %244, %cst_104 {dimension_numbers = #tpu.dot_dimension_numbers<[1], [1], [0], [0], [0, 0, 1, 0], [], []>} : vector<16x8xbf16>, vector<16x8xbf16>, vector<16x16xf32> -> vector<16x16xf32>
    %246 = arith.addf %245, %29 : vector<16x16xf32>
    %cst_105 = arith.constant dense<0xFF800000> : vector<16xf32>
    %247 = vector.multi_reduction <maximumf>, %246, %cst_105 [1] : vector<16x16xf32> to vector<16xf32>
    %248 = vector.shape_cast %247 : vector<16xf32> to vector<16x1xf32>
    %249 = vector.broadcast %248 : vector<16x1xf32> to vector<16x16xf32>
    %250 = arith.subf %246, %249 : vector<16x16xf32>
    %251 = math.exp %250 : vector<16x16xf32>
    %cst_106 = arith.constant dense<0.000000e+00> : vector<16xf32>
    %252 = vector.multi_reduction <add>, %251, %cst_106 [1] : vector<16x16xf32> to vector<16xf32>
    %253 = vector.shape_cast %252 : vector<16xf32> to vector<16x1xf32>
    %254 = tpu.reciprocal %253 {approx = true} : vector<16x1xf32> -> vector<16x1xf32>
    %255 = vector.broadcast %254 : vector<16x1xf32> to vector<16x16xf32>
    %256 = arith.mulf %251, %255 : vector<16x16xf32>
    %257 = arith.truncf %256 : vector<16x16xf32> to vector<16x16xbf16>
    %258 = arith.truncf %242 : vector<16x32xf32> to vector<16x32xbf16>
    %cst_107 = arith.constant dense<0.000000e+00> : vector<16x32xf32>
    %259 = tpu.matmul %257, %258, %cst_107 {dimension_numbers = #tpu.dot_dimension_numbers<[1], [0], [0], [1], [0, 0, 1, 1], [], []>} : vector<16x16xbf16>, vector<16x32xbf16>, vector<16x32xf32> -> vector<16x32xf32>
    %c848 = arith.constant 848 : index
    %c0_108 = arith.constant 0 : index
    %260 = vector.load %arg4[%c848, %c0_108] : memref<3312x128xbf16, #tpu.memory_space<vmem>>, vector<32x8xbf16>
    %cst_109 = arith.constant dense<0.000000e+00> : vector<16x8xf32>
    %261 = tpu.matmul %236, %260, %cst_109 {dimension_numbers = #tpu.dot_dimension_numbers<[1], [0], [0], [1], [0, 0, 1, 1], [], []>} : vector<16x32xbf16>, vector<32x8xbf16>, vector<16x8xf32> -> vector<16x8xf32>
    %c880 = arith.constant 880 : index
    %c0_110 = arith.constant 0 : index
    %262 = vector.load %arg4[%c880, %c0_110] : memref<3312x128xbf16, #tpu.memory_space<vmem>>, vector<32x8xbf16>
    %cst_111 = arith.constant dense<0.000000e+00> : vector<16x8xf32>
    %263 = tpu.matmul %236, %262, %cst_111 {dimension_numbers = #tpu.dot_dimension_numbers<[1], [0], [0], [1], [0, 0, 1, 1], [], []>} : vector<16x32xbf16>, vector<32x8xbf16>, vector<16x8xf32> -> vector<16x8xf32>
    %c912 = arith.constant 912 : index
    %c0_112 = arith.constant 0 : index
    %264 = vector.load %arg4[%c912, %c0_112] : memref<3312x128xbf16, #tpu.memory_space<vmem>>, vector<32x32xbf16>
    %cst_113 = arith.constant dense<0.000000e+00> : vector<16x32xf32>
    %265 = tpu.matmul %236, %264, %cst_113 {dimension_numbers = #tpu.dot_dimension_numbers<[1], [0], [0], [1], [0, 0, 1, 1], [], []>} : vector<16x32xbf16>, vector<32x32xbf16>, vector<16x32xf32> -> vector<16x32xf32>
    %266 = arith.truncf %261 : vector<16x8xf32> to vector<16x8xbf16>
    %267 = arith.truncf %263 : vector<16x8xf32> to vector<16x8xbf16>
    %cst_114 = arith.constant dense<0.000000e+00> : vector<16x16xf32>
    %268 = tpu.matmul %266, %267, %cst_114 {dimension_numbers = #tpu.dot_dimension_numbers<[1], [1], [0], [0], [0, 0, 1, 0], [], []>} : vector<16x8xbf16>, vector<16x8xbf16>, vector<16x16xf32> -> vector<16x16xf32>
    %269 = arith.addf %268, %29 : vector<16x16xf32>
    %cst_115 = arith.constant dense<0xFF800000> : vector<16xf32>
    %270 = vector.multi_reduction <maximumf>, %269, %cst_115 [1] : vector<16x16xf32> to vector<16xf32>
    %271 = vector.shape_cast %270 : vector<16xf32> to vector<16x1xf32>
    %272 = vector.broadcast %271 : vector<16x1xf32> to vector<16x16xf32>
    %273 = arith.subf %269, %272 : vector<16x16xf32>
    %274 = math.exp %273 : vector<16x16xf32>
    %cst_116 = arith.constant dense<0.000000e+00> : vector<16xf32>
    %275 = vector.multi_reduction <add>, %274, %cst_116 [1] : vector<16x16xf32> to vector<16xf32>
    %276 = vector.shape_cast %275 : vector<16xf32> to vector<16x1xf32>
    %277 = tpu.reciprocal %276 {approx = true} : vector<16x1xf32> -> vector<16x1xf32>
    %278 = vector.broadcast %277 : vector<16x1xf32> to vector<16x16xf32>
    %279 = arith.mulf %274, %278 : vector<16x16xf32>
    %280 = arith.truncf %279 : vector<16x16xf32> to vector<16x16xbf16>
    %281 = arith.truncf %265 : vector<16x32xf32> to vector<16x32xbf16>
    %cst_117 = arith.constant dense<0.000000e+00> : vector<16x32xf32>
    %282 = tpu.matmul %280, %281, %cst_117 {dimension_numbers = #tpu.dot_dimension_numbers<[1], [0], [0], [1], [0, 0, 1, 1], [], []>} : vector<16x16xbf16>, vector<16x32xbf16>, vector<16x32xf32> -> vector<16x32xf32>
    %283 = arith.addf %259, %282 : vector<16x32xf32>
    %c944 = arith.constant 944 : index
    %c0_118 = arith.constant 0 : index
    %284 = vector.load %arg4[%c944, %c0_118] : memref<3312x128xbf16, #tpu.memory_space<vmem>>, vector<32x8xbf16>
    %cst_119 = arith.constant dense<0.000000e+00> : vector<16x8xf32>
    %285 = tpu.matmul %236, %284, %cst_119 {dimension_numbers = #tpu.dot_dimension_numbers<[1], [0], [0], [1], [0, 0, 1, 1], [], []>} : vector<16x32xbf16>, vector<32x8xbf16>, vector<16x8xf32> -> vector<16x8xf32>
    %c976 = arith.constant 976 : index
    %c0_120 = arith.constant 0 : index
    %286 = vector.load %arg4[%c976, %c0_120] : memref<3312x128xbf16, #tpu.memory_space<vmem>>, vector<32x8xbf16>
    %cst_121 = arith.constant dense<0.000000e+00> : vector<16x8xf32>
    %287 = tpu.matmul %236, %286, %cst_121 {dimension_numbers = #tpu.dot_dimension_numbers<[1], [0], [0], [1], [0, 0, 1, 1], [], []>} : vector<16x32xbf16>, vector<32x8xbf16>, vector<16x8xf32> -> vector<16x8xf32>
    %c1008 = arith.constant 1008 : index
    %c0_122 = arith.constant 0 : index
    %288 = vector.load %arg4[%c1008, %c0_122] : memref<3312x128xbf16, #tpu.memory_space<vmem>>, vector<32x32xbf16>
    %cst_123 = arith.constant dense<0.000000e+00> : vector<16x32xf32>
    %289 = tpu.matmul %236, %288, %cst_123 {dimension_numbers = #tpu.dot_dimension_numbers<[1], [0], [0], [1], [0, 0, 1, 1], [], []>} : vector<16x32xbf16>, vector<32x32xbf16>, vector<16x32xf32> -> vector<16x32xf32>
    %290 = arith.truncf %285 : vector<16x8xf32> to vector<16x8xbf16>
    %291 = arith.truncf %287 : vector<16x8xf32> to vector<16x8xbf16>
    %cst_124 = arith.constant dense<0.000000e+00> : vector<16x16xf32>
    %292 = tpu.matmul %290, %291, %cst_124 {dimension_numbers = #tpu.dot_dimension_numbers<[1], [1], [0], [0], [0, 0, 1, 0], [], []>} : vector<16x8xbf16>, vector<16x8xbf16>, vector<16x16xf32> -> vector<16x16xf32>
    %293 = arith.addf %292, %29 : vector<16x16xf32>
    %cst_125 = arith.constant dense<0xFF800000> : vector<16xf32>
    %294 = vector.multi_reduction <maximumf>, %293, %cst_125 [1] : vector<16x16xf32> to vector<16xf32>
    %295 = vector.shape_cast %294 : vector<16xf32> to vector<16x1xf32>
    %296 = vector.broadcast %295 : vector<16x1xf32> to vector<16x16xf32>
    %297 = arith.subf %293, %296 : vector<16x16xf32>
    %298 = math.exp %297 : vector<16x16xf32>
    %cst_126 = arith.constant dense<0.000000e+00> : vector<16xf32>
    %299 = vector.multi_reduction <add>, %298, %cst_126 [1] : vector<16x16xf32> to vector<16xf32>
    %300 = vector.shape_cast %299 : vector<16xf32> to vector<16x1xf32>
    %301 = tpu.reciprocal %300 {approx = true} : vector<16x1xf32> -> vector<16x1xf32>
    %302 = vector.broadcast %301 : vector<16x1xf32> to vector<16x16xf32>
    %303 = arith.mulf %298, %302 : vector<16x16xf32>
    %304 = arith.truncf %303 : vector<16x16xf32> to vector<16x16xbf16>
    %305 = arith.truncf %289 : vector<16x32xf32> to vector<16x32xbf16>
    %cst_127 = arith.constant dense<0.000000e+00> : vector<16x32xf32>
    %306 = tpu.matmul %304, %305, %cst_127 {dimension_numbers = #tpu.dot_dimension_numbers<[1], [0], [0], [1], [0, 0, 1, 1], [], []>} : vector<16x16xbf16>, vector<16x32xbf16>, vector<16x32xf32> -> vector<16x32xf32>
    %307 = arith.addf %283, %306 : vector<16x32xf32>
    %c1040 = arith.constant 1040 : index
    %c0_128 = arith.constant 0 : index
    %308 = vector.load %arg4[%c1040, %c0_128] : memref<3312x128xbf16, #tpu.memory_space<vmem>>, vector<32x8xbf16>
    %cst_129 = arith.constant dense<0.000000e+00> : vector<16x8xf32>
    %309 = tpu.matmul %236, %308, %cst_129 {dimension_numbers = #tpu.dot_dimension_numbers<[1], [0], [0], [1], [0, 0, 1, 1], [], []>} : vector<16x32xbf16>, vector<32x8xbf16>, vector<16x8xf32> -> vector<16x8xf32>
    %c1072 = arith.constant 1072 : index
    %c0_130 = arith.constant 0 : index
    %310 = vector.load %arg4[%c1072, %c0_130] : memref<3312x128xbf16, #tpu.memory_space<vmem>>, vector<32x8xbf16>
    %cst_131 = arith.constant dense<0.000000e+00> : vector<16x8xf32>
    %311 = tpu.matmul %236, %310, %cst_131 {dimension_numbers = #tpu.dot_dimension_numbers<[1], [0], [0], [1], [0, 0, 1, 1], [], []>} : vector<16x32xbf16>, vector<32x8xbf16>, vector<16x8xf32> -> vector<16x8xf32>
    %c1104 = arith.constant 1104 : index
    %c0_132 = arith.constant 0 : index
    %312 = vector.load %arg4[%c1104, %c0_132] : memref<3312x128xbf16, #tpu.memory_space<vmem>>, vector<32x32xbf16>
    %cst_133 = arith.constant dense<0.000000e+00> : vector<16x32xf32>
    %313 = tpu.matmul %236, %312, %cst_133 {dimension_numbers = #tpu.dot_dimension_numbers<[1], [0], [0], [1], [0, 0, 1, 1], [], []>} : vector<16x32xbf16>, vector<32x32xbf16>, vector<16x32xf32> -> vector<16x32xf32>
    %314 = arith.truncf %309 : vector<16x8xf32> to vector<16x8xbf16>
    %315 = arith.truncf %311 : vector<16x8xf32> to vector<16x8xbf16>
    %cst_134 = arith.constant dense<0.000000e+00> : vector<16x16xf32>
    %316 = tpu.matmul %314, %315, %cst_134 {dimension_numbers = #tpu.dot_dimension_numbers<[1], [1], [0], [0], [0, 0, 1, 0], [], []>} : vector<16x8xbf16>, vector<16x8xbf16>, vector<16x16xf32> -> vector<16x16xf32>
    %317 = arith.addf %316, %29 : vector<16x16xf32>
    %cst_135 = arith.constant dense<0xFF800000> : vector<16xf32>
    %318 = vector.multi_reduction <maximumf>, %317, %cst_135 [1] : vector<16x16xf32> to vector<16xf32>
    %319 = vector.shape_cast %318 : vector<16xf32> to vector<16x1xf32>
    %320 = vector.broadcast %319 : vector<16x1xf32> to vector<16x16xf32>
    %321 = arith.subf %317, %320 : vector<16x16xf32>
    %322 = math.exp %321 : vector<16x16xf32>
    %cst_136 = arith.constant dense<0.000000e+00> : vector<16xf32>
    %323 = vector.multi_reduction <add>, %322, %cst_136 [1] : vector<16x16xf32> to vector<16xf32>
    %324 = vector.shape_cast %323 : vector<16xf32> to vector<16x1xf32>
    %325 = tpu.reciprocal %324 {approx = true} : vector<16x1xf32> -> vector<16x1xf32>
    %326 = vector.broadcast %325 : vector<16x1xf32> to vector<16x16xf32>
    %327 = arith.mulf %322, %326 : vector<16x16xf32>
    %328 = arith.truncf %327 : vector<16x16xf32> to vector<16x16xbf16>
    %329 = arith.truncf %313 : vector<16x32xf32> to vector<16x32xbf16>
    %cst_137 = arith.constant dense<0.000000e+00> : vector<16x32xf32>
    %330 = tpu.matmul %328, %329, %cst_137 {dimension_numbers = #tpu.dot_dimension_numbers<[1], [0], [0], [1], [0, 0, 1, 1], [], []>} : vector<16x16xbf16>, vector<16x32xbf16>, vector<16x32xf32> -> vector<16x32xf32>
    %331 = arith.addf %307, %330 : vector<16x32xf32>
    %332 = arith.truncf %331 : vector<16x32xf32> to vector<16x32xbf16>
    %c1136 = arith.constant 1136 : index
    %c0_138 = arith.constant 0 : index
    %333 = vector.load %arg4[%c1136, %c0_138] : memref<3312x128xbf16, #tpu.memory_space<vmem>>, vector<32x32xbf16>
    %cst_139 = arith.constant dense<0.000000e+00> : vector<16x32xf32>
    %334 = tpu.matmul %332, %333, %cst_139 {dimension_numbers = #tpu.dot_dimension_numbers<[1], [0], [0], [1], [0, 0, 1, 1], [], []>} : vector<16x32xbf16>, vector<32x32xbf16>, vector<16x32xf32> -> vector<16x32xf32>
    %c120 = arith.constant 120 : index
    %c0_140 = arith.constant 0 : index
    %335 = vector.load %arg5[%c120, %c0_140] : memref<440x128xf32, #tpu.memory_space<vmem>>, vector<1x32xf32>
    %336 = vector.broadcast %335 : vector<1x32xf32> to vector<16x32xf32>
    %337 = arith.addf %334, %336 : vector<16x32xf32>
    %338 = arith.extf %212 : vector<16x32xbf16> to vector<16x32xf32>
    %339 = arith.addf %338, %337 : vector<16x32xf32>
    %340 = arith.truncf %339 : vector<16x32xf32> to vector<16x32xbf16>
    %341 = arith.extf %340 : vector<16x32xbf16> to vector<16x32xf32>
    %cst_141 = arith.constant dense<0.000000e+00> : vector<16xf32>
    %342 = vector.multi_reduction <add>, %341, %cst_141 [1] : vector<16x32xf32> to vector<16xf32>
    %343 = vector.shape_cast %342 : vector<16xf32> to vector<16x1xf32>
    %cst_142 = arith.constant 3.200000e+01 : f32
    %344 = vector.broadcast %cst_142 : f32 to vector<16x1xf32>
    %345 = arith.divf %343, %344 : vector<16x1xf32>
    %346 = vector.broadcast %345 : vector<16x1xf32> to vector<16x32xf32>
    %347 = arith.subf %341, %346 : vector<16x32xf32>
    %348 = arith.mulf %347, %347 : vector<16x32xf32>
    %cst_143 = arith.constant dense<0.000000e+00> : vector<16xf32>
    %349 = vector.multi_reduction <add>, %348, %cst_143 [1] : vector<16x32xf32> to vector<16xf32>
    %350 = vector.shape_cast %349 : vector<16xf32> to vector<16x1xf32>
    %cst_144 = arith.constant 3.200000e+01 : f32
    %351 = vector.broadcast %cst_144 : f32 to vector<16x1xf32>
    %352 = arith.divf %350, %351 : vector<16x1xf32>
    %cst_145 = arith.constant 9.99999974E-6 : f32
    %353 = vector.broadcast %cst_145 : f32 to vector<16x1xf32>
    %354 = arith.addf %352, %353 : vector<16x1xf32>
    %355 = math.rsqrt %354 : vector<16x1xf32>
    %356 = vector.broadcast %355 : vector<16x1xf32> to vector<16x32xf32>
    %357 = arith.mulf %347, %356 : vector<16x32xf32>
    %c128 = arith.constant 128 : index
    %c0_146 = arith.constant 0 : index
    %358 = vector.load %arg5[%c128, %c0_146] : memref<440x128xf32, #tpu.memory_space<vmem>>, vector<1x32xf32>
    %359 = vector.broadcast %358 : vector<1x32xf32> to vector<16x32xf32>
    %360 = arith.mulf %357, %359 : vector<16x32xf32>
    %c136 = arith.constant 136 : index
    %c0_147 = arith.constant 0 : index
    %361 = vector.load %arg5[%c136, %c0_147] : memref<440x128xf32, #tpu.memory_space<vmem>>, vector<1x32xf32>
    %362 = vector.broadcast %361 : vector<1x32xf32> to vector<16x32xf32>
    %363 = arith.addf %360, %362 : vector<16x32xf32>
    %364 = arith.truncf %363 : vector<16x32xf32> to vector<16x32xbf16>
    %c1168 = arith.constant 1168 : index
    %c0_148 = arith.constant 0 : index
    %365 = vector.load %arg4[%c1168, %c0_148] : memref<3312x128xbf16, #tpu.memory_space<vmem>>, vector<32x128xbf16>
    %cst_149 = arith.constant dense<0.000000e+00> : vector<16x128xf32>
    %366 = tpu.matmul %364, %365, %cst_149 {dimension_numbers = #tpu.dot_dimension_numbers<[1], [0], [0], [1], [0, 0, 1, 1], [], []>} : vector<16x32xbf16>, vector<32x128xbf16>, vector<16x128xf32> -> vector<16x128xf32>
    %c144 = arith.constant 144 : index
    %c0_150 = arith.constant 0 : index
    %367 = vector.load %arg5[%c144, %c0_150] : memref<440x128xf32, #tpu.memory_space<vmem>>, vector<1x128xf32>
    %368 = vector.broadcast %367 : vector<1x128xf32> to vector<16x128xf32>
    %369 = arith.addf %366, %368 : vector<16x128xf32>
    %cst_151 = arith.constant 5.000000e-01 : f32
    %370 = vector.broadcast %cst_151 : f32 to vector<16x128xf32>
    %371 = arith.mulf %370, %369 : vector<16x128xf32>
    %cst_152 = arith.constant 4.471500e-02 : f32
    %372 = vector.broadcast %cst_152 : f32 to vector<16x128xf32>
    %373 = arith.mulf %372, %369 : vector<16x128xf32>
    %374 = arith.mulf %373, %369 : vector<16x128xf32>
    %375 = arith.mulf %374, %369 : vector<16x128xf32>
    %376 = arith.addf %369, %375 : vector<16x128xf32>
    %cst_153 = arith.constant 0.797884583 : f32
    %377 = vector.broadcast %cst_153 : f32 to vector<16x128xf32>
    %378 = arith.mulf %377, %376 : vector<16x128xf32>
    %379 = math.tanh %378 : vector<16x128xf32>
    %cst_154 = arith.constant 1.000000e+00 : f32
    %380 = vector.broadcast %cst_154 : f32 to vector<16x128xf32>
    %381 = arith.addf %380, %379 : vector<16x128xf32>
    %382 = arith.mulf %371, %381 : vector<16x128xf32>
    %383 = arith.truncf %382 : vector<16x128xf32> to vector<16x128xbf16>
    %c1200 = arith.constant 1200 : index
    %c0_155 = arith.constant 0 : index
    %384 = vector.load %arg4[%c1200, %c0_155] : memref<3312x128xbf16, #tpu.memory_space<vmem>>, vector<128x32xbf16>
    %cst_156 = arith.constant dense<0.000000e+00> : vector<16x32xf32>
    %385 = tpu.matmul %383, %384, %cst_156 {dimension_numbers = #tpu.dot_dimension_numbers<[1], [0], [0], [1], [0, 0, 1, 1], [], []>} : vector<16x128xbf16>, vector<128x32xbf16>, vector<16x32xf32> -> vector<16x32xf32>
    %c152 = arith.constant 152 : index
    %c0_157 = arith.constant 0 : index
    %386 = vector.load %arg5[%c152, %c0_157] : memref<440x128xf32, #tpu.memory_space<vmem>>, vector<1x32xf32>
    %387 = vector.broadcast %386 : vector<1x32xf32> to vector<16x32xf32>
    %388 = arith.addf %385, %387 : vector<16x32xf32>
    %389 = arith.extf %340 : vector<16x32xbf16> to vector<16x32xf32>
    %390 = arith.addf %389, %388 : vector<16x32xf32>
    %391 = arith.truncf %390 : vector<16x32xf32> to vector<16x32xbf16>
    %392 = arith.extf %391 : vector<16x32xbf16> to vector<16x32xf32>
    %cst_158 = arith.constant dense<0.000000e+00> : vector<16xf32>
    %393 = vector.multi_reduction <add>, %392, %cst_158 [1] : vector<16x32xf32> to vector<16xf32>
    %394 = vector.shape_cast %393 : vector<16xf32> to vector<16x1xf32>
    %cst_159 = arith.constant 3.200000e+01 : f32
    %395 = vector.broadcast %cst_159 : f32 to vector<16x1xf32>
    %396 = arith.divf %394, %395 : vector<16x1xf32>
    %397 = vector.broadcast %396 : vector<16x1xf32> to vector<16x32xf32>
    %398 = arith.subf %392, %397 : vector<16x32xf32>
    %399 = arith.mulf %398, %398 : vector<16x32xf32>
    %cst_160 = arith.constant dense<0.000000e+00> : vector<16xf32>
    %400 = vector.multi_reduction <add>, %399, %cst_160 [1] : vector<16x32xf32> to vector<16xf32>
    %401 = vector.shape_cast %400 : vector<16xf32> to vector<16x1xf32>
    %cst_161 = arith.constant 3.200000e+01 : f32
    %402 = vector.broadcast %cst_161 : f32 to vector<16x1xf32>
    %403 = arith.divf %401, %402 : vector<16x1xf32>
    %cst_162 = arith.constant 9.99999974E-6 : f32
    %404 = vector.broadcast %cst_162 : f32 to vector<16x1xf32>
    %405 = arith.addf %403, %404 : vector<16x1xf32>
    %406 = math.rsqrt %405 : vector<16x1xf32>
    %407 = vector.broadcast %406 : vector<16x1xf32> to vector<16x32xf32>
    %408 = arith.mulf %398, %407 : vector<16x32xf32>
    %c160 = arith.constant 160 : index
    %c0_163 = arith.constant 0 : index
    %409 = vector.load %arg5[%c160, %c0_163] : memref<440x128xf32, #tpu.memory_space<vmem>>, vector<1x32xf32>
    %410 = vector.broadcast %409 : vector<1x32xf32> to vector<16x32xf32>
    %411 = arith.mulf %408, %410 : vector<16x32xf32>
    %c168 = arith.constant 168 : index
    %c0_164 = arith.constant 0 : index
    %412 = vector.load %arg5[%c168, %c0_164] : memref<440x128xf32, #tpu.memory_space<vmem>>, vector<1x32xf32>
    %413 = vector.broadcast %412 : vector<1x32xf32> to vector<16x32xf32>
    %414 = arith.addf %411, %413 : vector<16x32xf32>
    %415 = arith.truncf %414 : vector<16x32xf32> to vector<16x32xbf16>
    %416 = arith.truncf %28 : vector<16x32xf32> to vector<16x32xbf16>
    %417 = arith.extf %416 : vector<16x32xbf16> to vector<16x32xf32>
    %cst_165 = arith.constant dense<0.000000e+00> : vector<16xf32>
    %418 = vector.multi_reduction <add>, %417, %cst_165 [1] : vector<16x32xf32> to vector<16xf32>
    %419 = vector.shape_cast %418 : vector<16xf32> to vector<16x1xf32>
    %cst_166 = arith.constant 3.200000e+01 : f32
    %420 = vector.broadcast %cst_166 : f32 to vector<16x1xf32>
    %421 = arith.divf %419, %420 : vector<16x1xf32>
    %422 = vector.broadcast %421 : vector<16x1xf32> to vector<16x32xf32>
    %423 = arith.subf %417, %422 : vector<16x32xf32>
    %424 = arith.mulf %423, %423 : vector<16x32xf32>
    %cst_167 = arith.constant dense<0.000000e+00> : vector<16xf32>
    %425 = vector.multi_reduction <add>, %424, %cst_167 [1] : vector<16x32xf32> to vector<16xf32>
    %426 = vector.shape_cast %425 : vector<16xf32> to vector<16x1xf32>
    %cst_168 = arith.constant 3.200000e+01 : f32
    %427 = vector.broadcast %cst_168 : f32 to vector<16x1xf32>
    %428 = arith.divf %426, %427 : vector<16x1xf32>
    %cst_169 = arith.constant 9.99999974E-6 : f32
    %429 = vector.broadcast %cst_169 : f32 to vector<16x1xf32>
    %430 = arith.addf %428, %429 : vector<16x1xf32>
    %431 = math.rsqrt %430 : vector<16x1xf32>
    %432 = vector.broadcast %431 : vector<16x1xf32> to vector<16x32xf32>
    %433 = arith.mulf %423, %432 : vector<16x32xf32>
    %c176_170 = arith.constant 176 : index
    %c0_171 = arith.constant 0 : index
    %434 = vector.load %arg5[%c176_170, %c0_171] : memref<440x128xf32, #tpu.memory_space<vmem>>, vector<1x32xf32>
    %435 = vector.broadcast %434 : vector<1x32xf32> to vector<16x32xf32>
    %436 = arith.mulf %433, %435 : vector<16x32xf32>
    %c184 = arith.constant 184 : index
    %c0_172 = arith.constant 0 : index
    %437 = vector.load %arg5[%c184, %c0_172] : memref<440x128xf32, #tpu.memory_space<vmem>>, vector<1x32xf32>
    %438 = vector.broadcast %437 : vector<1x32xf32> to vector<16x32xf32>
    %439 = arith.addf %436, %438 : vector<16x32xf32>
    %440 = arith.truncf %439 : vector<16x32xf32> to vector<16x32xbf16>
    %c1328 = arith.constant 1328 : index
    %c0_173 = arith.constant 0 : index
    %441 = vector.load %arg4[%c1328, %c0_173] : memref<3312x128xbf16, #tpu.memory_space<vmem>>, vector<32x8xbf16>
    %cst_174 = arith.constant dense<0.000000e+00> : vector<16x8xf32>
    %442 = tpu.matmul %440, %441, %cst_174 {dimension_numbers = #tpu.dot_dimension_numbers<[1], [0], [0], [1], [0, 0, 1, 1], [], []>} : vector<16x32xbf16>, vector<32x8xbf16>, vector<16x8xf32> -> vector<16x8xf32>
    %c1360 = arith.constant 1360 : index
    %c0_175 = arith.constant 0 : index
    %443 = vector.load %arg4[%c1360, %c0_175] : memref<3312x128xbf16, #tpu.memory_space<vmem>>, vector<32x8xbf16>
    %cst_176 = arith.constant dense<0.000000e+00> : vector<16x8xf32>
    %444 = tpu.matmul %440, %443, %cst_176 {dimension_numbers = #tpu.dot_dimension_numbers<[1], [0], [0], [1], [0, 0, 1, 1], [], []>} : vector<16x32xbf16>, vector<32x8xbf16>, vector<16x8xf32> -> vector<16x8xf32>
    %c1392 = arith.constant 1392 : index
    %c0_177 = arith.constant 0 : index
    %445 = vector.load %arg4[%c1392, %c0_177] : memref<3312x128xbf16, #tpu.memory_space<vmem>>, vector<32x32xbf16>
    %cst_178 = arith.constant dense<0.000000e+00> : vector<16x32xf32>
    %446 = tpu.matmul %440, %445, %cst_178 {dimension_numbers = #tpu.dot_dimension_numbers<[1], [0], [0], [1], [0, 0, 1, 1], [], []>} : vector<16x32xbf16>, vector<32x32xbf16>, vector<16x32xf32> -> vector<16x32xf32>
    %447 = arith.truncf %442 : vector<16x8xf32> to vector<16x8xbf16>
    %448 = arith.truncf %444 : vector<16x8xf32> to vector<16x8xbf16>
    %cst_179 = arith.constant dense<0.000000e+00> : vector<16x16xf32>
    %449 = tpu.matmul %447, %448, %cst_179 {dimension_numbers = #tpu.dot_dimension_numbers<[1], [1], [0], [0], [0, 0, 1, 0], [], []>} : vector<16x8xbf16>, vector<16x8xbf16>, vector<16x16xf32> -> vector<16x16xf32>
    %450 = arith.addf %449, %30 : vector<16x16xf32>
    %cst_180 = arith.constant dense<0xFF800000> : vector<16xf32>
    %451 = vector.multi_reduction <maximumf>, %450, %cst_180 [1] : vector<16x16xf32> to vector<16xf32>
    %452 = vector.shape_cast %451 : vector<16xf32> to vector<16x1xf32>
    %453 = vector.broadcast %452 : vector<16x1xf32> to vector<16x16xf32>
    %454 = arith.subf %450, %453 : vector<16x16xf32>
    %455 = math.exp %454 : vector<16x16xf32>
    %cst_181 = arith.constant dense<0.000000e+00> : vector<16xf32>
    %456 = vector.multi_reduction <add>, %455, %cst_181 [1] : vector<16x16xf32> to vector<16xf32>
    %457 = vector.shape_cast %456 : vector<16xf32> to vector<16x1xf32>
    %458 = tpu.reciprocal %457 {approx = true} : vector<16x1xf32> -> vector<16x1xf32>
    %459 = vector.broadcast %458 : vector<16x1xf32> to vector<16x16xf32>
    %460 = arith.mulf %455, %459 : vector<16x16xf32>
    %461 = arith.truncf %460 : vector<16x16xf32> to vector<16x16xbf16>
    %462 = arith.truncf %446 : vector<16x32xf32> to vector<16x32xbf16>
    %cst_182 = arith.constant dense<0.000000e+00> : vector<16x32xf32>
    %463 = tpu.matmul %461, %462, %cst_182 {dimension_numbers = #tpu.dot_dimension_numbers<[1], [0], [0], [1], [0, 0, 1, 1], [], []>} : vector<16x16xbf16>, vector<16x32xbf16>, vector<16x32xf32> -> vector<16x32xf32>
    %c1424 = arith.constant 1424 : index
    %c0_183 = arith.constant 0 : index
    %464 = vector.load %arg4[%c1424, %c0_183] : memref<3312x128xbf16, #tpu.memory_space<vmem>>, vector<32x8xbf16>
    %cst_184 = arith.constant dense<0.000000e+00> : vector<16x8xf32>
    %465 = tpu.matmul %440, %464, %cst_184 {dimension_numbers = #tpu.dot_dimension_numbers<[1], [0], [0], [1], [0, 0, 1, 1], [], []>} : vector<16x32xbf16>, vector<32x8xbf16>, vector<16x8xf32> -> vector<16x8xf32>
    %c1456 = arith.constant 1456 : index
    %c0_185 = arith.constant 0 : index
    %466 = vector.load %arg4[%c1456, %c0_185] : memref<3312x128xbf16, #tpu.memory_space<vmem>>, vector<32x8xbf16>
    %cst_186 = arith.constant dense<0.000000e+00> : vector<16x8xf32>
    %467 = tpu.matmul %440, %466, %cst_186 {dimension_numbers = #tpu.dot_dimension_numbers<[1], [0], [0], [1], [0, 0, 1, 1], [], []>} : vector<16x32xbf16>, vector<32x8xbf16>, vector<16x8xf32> -> vector<16x8xf32>
    %c1488 = arith.constant 1488 : index
    %c0_187 = arith.constant 0 : index
    %468 = vector.load %arg4[%c1488, %c0_187] : memref<3312x128xbf16, #tpu.memory_space<vmem>>, vector<32x32xbf16>
    %cst_188 = arith.constant dense<0.000000e+00> : vector<16x32xf32>
    %469 = tpu.matmul %440, %468, %cst_188 {dimension_numbers = #tpu.dot_dimension_numbers<[1], [0], [0], [1], [0, 0, 1, 1], [], []>} : vector<16x32xbf16>, vector<32x32xbf16>, vector<16x32xf32> -> vector<16x32xf32>
    %470 = arith.truncf %465 : vector<16x8xf32> to vector<16x8xbf16>
    %471 = arith.truncf %467 : vector<16x8xf32> to vector<16x8xbf16>
    %cst_189 = arith.constant dense<0.000000e+00> : vector<16x16xf32>
    %472 = tpu.matmul %470, %471, %cst_189 {dimension_numbers = #tpu.dot_dimension_numbers<[1], [1], [0], [0], [0, 0, 1, 0], [], []>} : vector<16x8xbf16>, vector<16x8xbf16>, vector<16x16xf32> -> vector<16x16xf32>
    %473 = arith.addf %472, %30 : vector<16x16xf32>
    %cst_190 = arith.constant dense<0xFF800000> : vector<16xf32>
    %474 = vector.multi_reduction <maximumf>, %473, %cst_190 [1] : vector<16x16xf32> to vector<16xf32>
    %475 = vector.shape_cast %474 : vector<16xf32> to vector<16x1xf32>
    %476 = vector.broadcast %475 : vector<16x1xf32> to vector<16x16xf32>
    %477 = arith.subf %473, %476 : vector<16x16xf32>
    %478 = math.exp %477 : vector<16x16xf32>
    %cst_191 = arith.constant dense<0.000000e+00> : vector<16xf32>
    %479 = vector.multi_reduction <add>, %478, %cst_191 [1] : vector<16x16xf32> to vector<16xf32>
    %480 = vector.shape_cast %479 : vector<16xf32> to vector<16x1xf32>
    %481 = tpu.reciprocal %480 {approx = true} : vector<16x1xf32> -> vector<16x1xf32>
    %482 = vector.broadcast %481 : vector<16x1xf32> to vector<16x16xf32>
    %483 = arith.mulf %478, %482 : vector<16x16xf32>
    %484 = arith.truncf %483 : vector<16x16xf32> to vector<16x16xbf16>
    %485 = arith.truncf %469 : vector<16x32xf32> to vector<16x32xbf16>
    %cst_192 = arith.constant dense<0.000000e+00> : vector<16x32xf32>
    %486 = tpu.matmul %484, %485, %cst_192 {dimension_numbers = #tpu.dot_dimension_numbers<[1], [0], [0], [1], [0, 0, 1, 1], [], []>} : vector<16x16xbf16>, vector<16x32xbf16>, vector<16x32xf32> -> vector<16x32xf32>
    %487 = arith.addf %463, %486 : vector<16x32xf32>
    %c1520 = arith.constant 1520 : index
    %c0_193 = arith.constant 0 : index
    %488 = vector.load %arg4[%c1520, %c0_193] : memref<3312x128xbf16, #tpu.memory_space<vmem>>, vector<32x8xbf16>
    %cst_194 = arith.constant dense<0.000000e+00> : vector<16x8xf32>
    %489 = tpu.matmul %440, %488, %cst_194 {dimension_numbers = #tpu.dot_dimension_numbers<[1], [0], [0], [1], [0, 0, 1, 1], [], []>} : vector<16x32xbf16>, vector<32x8xbf16>, vector<16x8xf32> -> vector<16x8xf32>
    %c1552 = arith.constant 1552 : index
    %c0_195 = arith.constant 0 : index
    %490 = vector.load %arg4[%c1552, %c0_195] : memref<3312x128xbf16, #tpu.memory_space<vmem>>, vector<32x8xbf16>
    %cst_196 = arith.constant dense<0.000000e+00> : vector<16x8xf32>
    %491 = tpu.matmul %440, %490, %cst_196 {dimension_numbers = #tpu.dot_dimension_numbers<[1], [0], [0], [1], [0, 0, 1, 1], [], []>} : vector<16x32xbf16>, vector<32x8xbf16>, vector<16x8xf32> -> vector<16x8xf32>
    %c1584 = arith.constant 1584 : index
    %c0_197 = arith.constant 0 : index
    %492 = vector.load %arg4[%c1584, %c0_197] : memref<3312x128xbf16, #tpu.memory_space<vmem>>, vector<32x32xbf16>
    %cst_198 = arith.constant dense<0.000000e+00> : vector<16x32xf32>
    %493 = tpu.matmul %440, %492, %cst_198 {dimension_numbers = #tpu.dot_dimension_numbers<[1], [0], [0], [1], [0, 0, 1, 1], [], []>} : vector<16x32xbf16>, vector<32x32xbf16>, vector<16x32xf32> -> vector<16x32xf32>
    %494 = arith.truncf %489 : vector<16x8xf32> to vector<16x8xbf16>
    %495 = arith.truncf %491 : vector<16x8xf32> to vector<16x8xbf16>
    %cst_199 = arith.constant dense<0.000000e+00> : vector<16x16xf32>
    %496 = tpu.matmul %494, %495, %cst_199 {dimension_numbers = #tpu.dot_dimension_numbers<[1], [1], [0], [0], [0, 0, 1, 0], [], []>} : vector<16x8xbf16>, vector<16x8xbf16>, vector<16x16xf32> -> vector<16x16xf32>
    %497 = arith.addf %496, %30 : vector<16x16xf32>
    %cst_200 = arith.constant dense<0xFF800000> : vector<16xf32>
    %498 = vector.multi_reduction <maximumf>, %497, %cst_200 [1] : vector<16x16xf32> to vector<16xf32>
    %499 = vector.shape_cast %498 : vector<16xf32> to vector<16x1xf32>
    %500 = vector.broadcast %499 : vector<16x1xf32> to vector<16x16xf32>
    %501 = arith.subf %497, %500 : vector<16x16xf32>
    %502 = math.exp %501 : vector<16x16xf32>
    %cst_201 = arith.constant dense<0.000000e+00> : vector<16xf32>
    %503 = vector.multi_reduction <add>, %502, %cst_201 [1] : vector<16x16xf32> to vector<16xf32>
    %504 = vector.shape_cast %503 : vector<16xf32> to vector<16x1xf32>
    %505 = tpu.reciprocal %504 {approx = true} : vector<16x1xf32> -> vector<16x1xf32>
    %506 = vector.broadcast %505 : vector<16x1xf32> to vector<16x16xf32>
    %507 = arith.mulf %502, %506 : vector<16x16xf32>
    %508 = arith.truncf %507 : vector<16x16xf32> to vector<16x16xbf16>
    %509 = arith.truncf %493 : vector<16x32xf32> to vector<16x32xbf16>
    %cst_202 = arith.constant dense<0.000000e+00> : vector<16x32xf32>
    %510 = tpu.matmul %508, %509, %cst_202 {dimension_numbers = #tpu.dot_dimension_numbers<[1], [0], [0], [1], [0, 0, 1, 1], [], []>} : vector<16x16xbf16>, vector<16x32xbf16>, vector<16x32xf32> -> vector<16x32xf32>
    %511 = arith.addf %487, %510 : vector<16x32xf32>
    %c1616 = arith.constant 1616 : index
    %c0_203 = arith.constant 0 : index
    %512 = vector.load %arg4[%c1616, %c0_203] : memref<3312x128xbf16, #tpu.memory_space<vmem>>, vector<32x8xbf16>
    %cst_204 = arith.constant dense<0.000000e+00> : vector<16x8xf32>
    %513 = tpu.matmul %440, %512, %cst_204 {dimension_numbers = #tpu.dot_dimension_numbers<[1], [0], [0], [1], [0, 0, 1, 1], [], []>} : vector<16x32xbf16>, vector<32x8xbf16>, vector<16x8xf32> -> vector<16x8xf32>
    %c1648 = arith.constant 1648 : index
    %c0_205 = arith.constant 0 : index
    %514 = vector.load %arg4[%c1648, %c0_205] : memref<3312x128xbf16, #tpu.memory_space<vmem>>, vector<32x8xbf16>
    %cst_206 = arith.constant dense<0.000000e+00> : vector<16x8xf32>
    %515 = tpu.matmul %440, %514, %cst_206 {dimension_numbers = #tpu.dot_dimension_numbers<[1], [0], [0], [1], [0, 0, 1, 1], [], []>} : vector<16x32xbf16>, vector<32x8xbf16>, vector<16x8xf32> -> vector<16x8xf32>
    %c1680 = arith.constant 1680 : index
    %c0_207 = arith.constant 0 : index
    %516 = vector.load %arg4[%c1680, %c0_207] : memref<3312x128xbf16, #tpu.memory_space<vmem>>, vector<32x32xbf16>
    %cst_208 = arith.constant dense<0.000000e+00> : vector<16x32xf32>
    %517 = tpu.matmul %440, %516, %cst_208 {dimension_numbers = #tpu.dot_dimension_numbers<[1], [0], [0], [1], [0, 0, 1, 1], [], []>} : vector<16x32xbf16>, vector<32x32xbf16>, vector<16x32xf32> -> vector<16x32xf32>
    %518 = arith.truncf %513 : vector<16x8xf32> to vector<16x8xbf16>
    %519 = arith.truncf %515 : vector<16x8xf32> to vector<16x8xbf16>
    %cst_209 = arith.constant dense<0.000000e+00> : vector<16x16xf32>
    %520 = tpu.matmul %518, %519, %cst_209 {dimension_numbers = #tpu.dot_dimension_numbers<[1], [1], [0], [0], [0, 0, 1, 0], [], []>} : vector<16x8xbf16>, vector<16x8xbf16>, vector<16x16xf32> -> vector<16x16xf32>
    %521 = arith.addf %520, %30 : vector<16x16xf32>
    %cst_210 = arith.constant dense<0xFF800000> : vector<16xf32>
    %522 = vector.multi_reduction <maximumf>, %521, %cst_210 [1] : vector<16x16xf32> to vector<16xf32>
    %523 = vector.shape_cast %522 : vector<16xf32> to vector<16x1xf32>
    %524 = vector.broadcast %523 : vector<16x1xf32> to vector<16x16xf32>
    %525 = arith.subf %521, %524 : vector<16x16xf32>
    %526 = math.exp %525 : vector<16x16xf32>
    %cst_211 = arith.constant dense<0.000000e+00> : vector<16xf32>
    %527 = vector.multi_reduction <add>, %526, %cst_211 [1] : vector<16x16xf32> to vector<16xf32>
    %528 = vector.shape_cast %527 : vector<16xf32> to vector<16x1xf32>
    %529 = tpu.reciprocal %528 {approx = true} : vector<16x1xf32> -> vector<16x1xf32>
    %530 = vector.broadcast %529 : vector<16x1xf32> to vector<16x16xf32>
    %531 = arith.mulf %526, %530 : vector<16x16xf32>
    %532 = arith.truncf %531 : vector<16x16xf32> to vector<16x16xbf16>
    %533 = arith.truncf %517 : vector<16x32xf32> to vector<16x32xbf16>
    %cst_212 = arith.constant dense<0.000000e+00> : vector<16x32xf32>
    %534 = tpu.matmul %532, %533, %cst_212 {dimension_numbers = #tpu.dot_dimension_numbers<[1], [0], [0], [1], [0, 0, 1, 1], [], []>} : vector<16x16xbf16>, vector<16x32xbf16>, vector<16x32xf32> -> vector<16x32xf32>
    %535 = arith.addf %511, %534 : vector<16x32xf32>
    %536 = arith.truncf %535 : vector<16x32xf32> to vector<16x32xbf16>
    %c1712 = arith.constant 1712 : index
    %c0_213 = arith.constant 0 : index
    %537 = vector.load %arg4[%c1712, %c0_213] : memref<3312x128xbf16, #tpu.memory_space<vmem>>, vector<32x32xbf16>
    %cst_214 = arith.constant dense<0.000000e+00> : vector<16x32xf32>
    %538 = tpu.matmul %536, %537, %cst_214 {dimension_numbers = #tpu.dot_dimension_numbers<[1], [0], [0], [1], [0, 0, 1, 1], [], []>} : vector<16x32xbf16>, vector<32x32xbf16>, vector<16x32xf32> -> vector<16x32xf32>
    %c192 = arith.constant 192 : index
    %c0_215 = arith.constant 0 : index
    %539 = vector.load %arg5[%c192, %c0_215] : memref<440x128xf32, #tpu.memory_space<vmem>>, vector<1x32xf32>
    %540 = vector.broadcast %539 : vector<1x32xf32> to vector<16x32xf32>
    %541 = arith.addf %538, %540 : vector<16x32xf32>
    %542 = arith.extf %416 : vector<16x32xbf16> to vector<16x32xf32>
    %543 = arith.addf %542, %541 : vector<16x32xf32>
    %544 = arith.truncf %543 : vector<16x32xf32> to vector<16x32xbf16>
    %545 = arith.extf %544 : vector<16x32xbf16> to vector<16x32xf32>
    %cst_216 = arith.constant dense<0.000000e+00> : vector<16xf32>
    %546 = vector.multi_reduction <add>, %545, %cst_216 [1] : vector<16x32xf32> to vector<16xf32>
    %547 = vector.shape_cast %546 : vector<16xf32> to vector<16x1xf32>
    %cst_217 = arith.constant 3.200000e+01 : f32
    %548 = vector.broadcast %cst_217 : f32 to vector<16x1xf32>
    %549 = arith.divf %547, %548 : vector<16x1xf32>
    %550 = vector.broadcast %549 : vector<16x1xf32> to vector<16x32xf32>
    %551 = arith.subf %545, %550 : vector<16x32xf32>
    %552 = arith.mulf %551, %551 : vector<16x32xf32>
    %cst_218 = arith.constant dense<0.000000e+00> : vector<16xf32>
    %553 = vector.multi_reduction <add>, %552, %cst_218 [1] : vector<16x32xf32> to vector<16xf32>
    %554 = vector.shape_cast %553 : vector<16xf32> to vector<16x1xf32>
    %cst_219 = arith.constant 3.200000e+01 : f32
    %555 = vector.broadcast %cst_219 : f32 to vector<16x1xf32>
    %556 = arith.divf %554, %555 : vector<16x1xf32>
    %cst_220 = arith.constant 9.99999974E-6 : f32
    %557 = vector.broadcast %cst_220 : f32 to vector<16x1xf32>
    %558 = arith.addf %556, %557 : vector<16x1xf32>
    %559 = math.rsqrt %558 : vector<16x1xf32>
    %560 = vector.broadcast %559 : vector<16x1xf32> to vector<16x32xf32>
    %561 = arith.mulf %551, %560 : vector<16x32xf32>
    %c200 = arith.constant 200 : index
    %c0_221 = arith.constant 0 : index
    %562 = vector.load %arg5[%c200, %c0_221] : memref<440x128xf32, #tpu.memory_space<vmem>>, vector<1x32xf32>
    %563 = vector.broadcast %562 : vector<1x32xf32> to vector<16x32xf32>
    %564 = arith.mulf %561, %563 : vector<16x32xf32>
    %c208_222 = arith.constant 208 : index
    %c0_223 = arith.constant 0 : index
    %565 = vector.load %arg5[%c208_222, %c0_223] : memref<440x128xf32, #tpu.memory_space<vmem>>, vector<1x32xf32>
    %566 = vector.broadcast %565 : vector<1x32xf32> to vector<16x32xf32>
    %567 = arith.addf %564, %566 : vector<16x32xf32>
    %568 = arith.truncf %567 : vector<16x32xf32> to vector<16x32xbf16>
    %c1744 = arith.constant 1744 : index
    %c0_224 = arith.constant 0 : index
    %569 = vector.load %arg4[%c1744, %c0_224] : memref<3312x128xbf16, #tpu.memory_space<vmem>>, vector<32x8xbf16>
    %cst_225 = arith.constant dense<0.000000e+00> : vector<16x8xf32>
    %570 = tpu.matmul %568, %569, %cst_225 {dimension_numbers = #tpu.dot_dimension_numbers<[1], [0], [0], [1], [0, 0, 1, 1], [], []>} : vector<16x32xbf16>, vector<32x8xbf16>, vector<16x8xf32> -> vector<16x8xf32>
    %c1776 = arith.constant 1776 : index
    %c0_226 = arith.constant 0 : index
    %571 = vector.load %arg4[%c1776, %c0_226] : memref<3312x128xbf16, #tpu.memory_space<vmem>>, vector<32x8xbf16>
    %cst_227 = arith.constant dense<0.000000e+00> : vector<16x8xf32>
    %572 = tpu.matmul %415, %571, %cst_227 {dimension_numbers = #tpu.dot_dimension_numbers<[1], [0], [0], [1], [0, 0, 1, 1], [], []>} : vector<16x32xbf16>, vector<32x8xbf16>, vector<16x8xf32> -> vector<16x8xf32>
    %c1808 = arith.constant 1808 : index
    %c0_228 = arith.constant 0 : index
    %573 = vector.load %arg4[%c1808, %c0_228] : memref<3312x128xbf16, #tpu.memory_space<vmem>>, vector<32x32xbf16>
    %cst_229 = arith.constant dense<0.000000e+00> : vector<16x32xf32>
    %574 = tpu.matmul %415, %573, %cst_229 {dimension_numbers = #tpu.dot_dimension_numbers<[1], [0], [0], [1], [0, 0, 1, 1], [], []>} : vector<16x32xbf16>, vector<32x32xbf16>, vector<16x32xf32> -> vector<16x32xf32>
    %575 = arith.truncf %570 : vector<16x8xf32> to vector<16x8xbf16>
    %576 = arith.truncf %572 : vector<16x8xf32> to vector<16x8xbf16>
    %cst_230 = arith.constant dense<0.000000e+00> : vector<16x16xf32>
    %577 = tpu.matmul %575, %576, %cst_230 {dimension_numbers = #tpu.dot_dimension_numbers<[1], [1], [0], [0], [0, 0, 1, 0], [], []>} : vector<16x8xbf16>, vector<16x8xbf16>, vector<16x16xf32> -> vector<16x16xf32>
    %578 = arith.addf %577, %31 : vector<16x16xf32>
    %cst_231 = arith.constant dense<0xFF800000> : vector<16xf32>
    %579 = vector.multi_reduction <maximumf>, %578, %cst_231 [1] : vector<16x16xf32> to vector<16xf32>
    %580 = vector.shape_cast %579 : vector<16xf32> to vector<16x1xf32>
    %581 = vector.broadcast %580 : vector<16x1xf32> to vector<16x16xf32>
    %582 = arith.subf %578, %581 : vector<16x16xf32>
    %583 = math.exp %582 : vector<16x16xf32>
    %cst_232 = arith.constant dense<0.000000e+00> : vector<16xf32>
    %584 = vector.multi_reduction <add>, %583, %cst_232 [1] : vector<16x16xf32> to vector<16xf32>
    %585 = vector.shape_cast %584 : vector<16xf32> to vector<16x1xf32>
    %586 = tpu.reciprocal %585 {approx = true} : vector<16x1xf32> -> vector<16x1xf32>
    %587 = vector.broadcast %586 : vector<16x1xf32> to vector<16x16xf32>
    %588 = arith.mulf %583, %587 : vector<16x16xf32>
    %589 = arith.truncf %588 : vector<16x16xf32> to vector<16x16xbf16>
    %590 = arith.truncf %574 : vector<16x32xf32> to vector<16x32xbf16>
    %cst_233 = arith.constant dense<0.000000e+00> : vector<16x32xf32>
    %591 = tpu.matmul %589, %590, %cst_233 {dimension_numbers = #tpu.dot_dimension_numbers<[1], [0], [0], [1], [0, 0, 1, 1], [], []>} : vector<16x16xbf16>, vector<16x32xbf16>, vector<16x32xf32> -> vector<16x32xf32>
    %c1840 = arith.constant 1840 : index
    %c0_234 = arith.constant 0 : index
    %592 = vector.load %arg4[%c1840, %c0_234] : memref<3312x128xbf16, #tpu.memory_space<vmem>>, vector<32x8xbf16>
    %cst_235 = arith.constant dense<0.000000e+00> : vector<16x8xf32>
    %593 = tpu.matmul %568, %592, %cst_235 {dimension_numbers = #tpu.dot_dimension_numbers<[1], [0], [0], [1], [0, 0, 1, 1], [], []>} : vector<16x32xbf16>, vector<32x8xbf16>, vector<16x8xf32> -> vector<16x8xf32>
    %c1872 = arith.constant 1872 : index
    %c0_236 = arith.constant 0 : index
    %594 = vector.load %arg4[%c1872, %c0_236] : memref<3312x128xbf16, #tpu.memory_space<vmem>>, vector<32x8xbf16>
    %cst_237 = arith.constant dense<0.000000e+00> : vector<16x8xf32>
    %595 = tpu.matmul %415, %594, %cst_237 {dimension_numbers = #tpu.dot_dimension_numbers<[1], [0], [0], [1], [0, 0, 1, 1], [], []>} : vector<16x32xbf16>, vector<32x8xbf16>, vector<16x8xf32> -> vector<16x8xf32>
    %c1904 = arith.constant 1904 : index
    %c0_238 = arith.constant 0 : index
    %596 = vector.load %arg4[%c1904, %c0_238] : memref<3312x128xbf16, #tpu.memory_space<vmem>>, vector<32x32xbf16>
    %cst_239 = arith.constant dense<0.000000e+00> : vector<16x32xf32>
    %597 = tpu.matmul %415, %596, %cst_239 {dimension_numbers = #tpu.dot_dimension_numbers<[1], [0], [0], [1], [0, 0, 1, 1], [], []>} : vector<16x32xbf16>, vector<32x32xbf16>, vector<16x32xf32> -> vector<16x32xf32>
    %598 = arith.truncf %593 : vector<16x8xf32> to vector<16x8xbf16>
    %599 = arith.truncf %595 : vector<16x8xf32> to vector<16x8xbf16>
    %cst_240 = arith.constant dense<0.000000e+00> : vector<16x16xf32>
    %600 = tpu.matmul %598, %599, %cst_240 {dimension_numbers = #tpu.dot_dimension_numbers<[1], [1], [0], [0], [0, 0, 1, 0], [], []>} : vector<16x8xbf16>, vector<16x8xbf16>, vector<16x16xf32> -> vector<16x16xf32>
    %601 = arith.addf %600, %31 : vector<16x16xf32>
    %cst_241 = arith.constant dense<0xFF800000> : vector<16xf32>
    %602 = vector.multi_reduction <maximumf>, %601, %cst_241 [1] : vector<16x16xf32> to vector<16xf32>
    %603 = vector.shape_cast %602 : vector<16xf32> to vector<16x1xf32>
    %604 = vector.broadcast %603 : vector<16x1xf32> to vector<16x16xf32>
    %605 = arith.subf %601, %604 : vector<16x16xf32>
    %606 = math.exp %605 : vector<16x16xf32>
    %cst_242 = arith.constant dense<0.000000e+00> : vector<16xf32>
    %607 = vector.multi_reduction <add>, %606, %cst_242 [1] : vector<16x16xf32> to vector<16xf32>
    %608 = vector.shape_cast %607 : vector<16xf32> to vector<16x1xf32>
    %609 = tpu.reciprocal %608 {approx = true} : vector<16x1xf32> -> vector<16x1xf32>
    %610 = vector.broadcast %609 : vector<16x1xf32> to vector<16x16xf32>
    %611 = arith.mulf %606, %610 : vector<16x16xf32>
    %612 = arith.truncf %611 : vector<16x16xf32> to vector<16x16xbf16>
    %613 = arith.truncf %597 : vector<16x32xf32> to vector<16x32xbf16>
    %cst_243 = arith.constant dense<0.000000e+00> : vector<16x32xf32>
    %614 = tpu.matmul %612, %613, %cst_243 {dimension_numbers = #tpu.dot_dimension_numbers<[1], [0], [0], [1], [0, 0, 1, 1], [], []>} : vector<16x16xbf16>, vector<16x32xbf16>, vector<16x32xf32> -> vector<16x32xf32>
    %615 = arith.addf %591, %614 : vector<16x32xf32>
    %c1936 = arith.constant 1936 : index
    %c0_244 = arith.constant 0 : index
    %616 = vector.load %arg4[%c1936, %c0_244] : memref<3312x128xbf16, #tpu.memory_space<vmem>>, vector<32x8xbf16>
    %cst_245 = arith.constant dense<0.000000e+00> : vector<16x8xf32>
    %617 = tpu.matmul %568, %616, %cst_245 {dimension_numbers = #tpu.dot_dimension_numbers<[1], [0], [0], [1], [0, 0, 1, 1], [], []>} : vector<16x32xbf16>, vector<32x8xbf16>, vector<16x8xf32> -> vector<16x8xf32>
    %c1968 = arith.constant 1968 : index
    %c0_246 = arith.constant 0 : index
    %618 = vector.load %arg4[%c1968, %c0_246] : memref<3312x128xbf16, #tpu.memory_space<vmem>>, vector<32x8xbf16>
    %cst_247 = arith.constant dense<0.000000e+00> : vector<16x8xf32>
    %619 = tpu.matmul %415, %618, %cst_247 {dimension_numbers = #tpu.dot_dimension_numbers<[1], [0], [0], [1], [0, 0, 1, 1], [], []>} : vector<16x32xbf16>, vector<32x8xbf16>, vector<16x8xf32> -> vector<16x8xf32>
    %c2000 = arith.constant 2000 : index
    %c0_248 = arith.constant 0 : index
    %620 = vector.load %arg4[%c2000, %c0_248] : memref<3312x128xbf16, #tpu.memory_space<vmem>>, vector<32x32xbf16>
    %cst_249 = arith.constant dense<0.000000e+00> : vector<16x32xf32>
    %621 = tpu.matmul %415, %620, %cst_249 {dimension_numbers = #tpu.dot_dimension_numbers<[1], [0], [0], [1], [0, 0, 1, 1], [], []>} : vector<16x32xbf16>, vector<32x32xbf16>, vector<16x32xf32> -> vector<16x32xf32>
    %622 = arith.truncf %617 : vector<16x8xf32> to vector<16x8xbf16>
    %623 = arith.truncf %619 : vector<16x8xf32> to vector<16x8xbf16>
    %cst_250 = arith.constant dense<0.000000e+00> : vector<16x16xf32>
    %624 = tpu.matmul %622, %623, %cst_250 {dimension_numbers = #tpu.dot_dimension_numbers<[1], [1], [0], [0], [0, 0, 1, 0], [], []>} : vector<16x8xbf16>, vector<16x8xbf16>, vector<16x16xf32> -> vector<16x16xf32>
    %625 = arith.addf %624, %31 : vector<16x16xf32>
    %cst_251 = arith.constant dense<0xFF800000> : vector<16xf32>
    %626 = vector.multi_reduction <maximumf>, %625, %cst_251 [1] : vector<16x16xf32> to vector<16xf32>
    %627 = vector.shape_cast %626 : vector<16xf32> to vector<16x1xf32>
    %628 = vector.broadcast %627 : vector<16x1xf32> to vector<16x16xf32>
    %629 = arith.subf %625, %628 : vector<16x16xf32>
    %630 = math.exp %629 : vector<16x16xf32>
    %cst_252 = arith.constant dense<0.000000e+00> : vector<16xf32>
    %631 = vector.multi_reduction <add>, %630, %cst_252 [1] : vector<16x16xf32> to vector<16xf32>
    %632 = vector.shape_cast %631 : vector<16xf32> to vector<16x1xf32>
    %633 = tpu.reciprocal %632 {approx = true} : vector<16x1xf32> -> vector<16x1xf32>
    %634 = vector.broadcast %633 : vector<16x1xf32> to vector<16x16xf32>
    %635 = arith.mulf %630, %634 : vector<16x16xf32>
    %636 = arith.truncf %635 : vector<16x16xf32> to vector<16x16xbf16>
    %637 = arith.truncf %621 : vector<16x32xf32> to vector<16x32xbf16>
    %cst_253 = arith.constant dense<0.000000e+00> : vector<16x32xf32>
    %638 = tpu.matmul %636, %637, %cst_253 {dimension_numbers = #tpu.dot_dimension_numbers<[1], [0], [0], [1], [0, 0, 1, 1], [], []>} : vector<16x16xbf16>, vector<16x32xbf16>, vector<16x32xf32> -> vector<16x32xf32>
    %639 = arith.addf %615, %638 : vector<16x32xf32>
    %c2032 = arith.constant 2032 : index
    %c0_254 = arith.constant 0 : index
    %640 = vector.load %arg4[%c2032, %c0_254] : memref<3312x128xbf16, #tpu.memory_space<vmem>>, vector<32x8xbf16>
    %cst_255 = arith.constant dense<0.000000e+00> : vector<16x8xf32>
    %641 = tpu.matmul %568, %640, %cst_255 {dimension_numbers = #tpu.dot_dimension_numbers<[1], [0], [0], [1], [0, 0, 1, 1], [], []>} : vector<16x32xbf16>, vector<32x8xbf16>, vector<16x8xf32> -> vector<16x8xf32>
    %c2064 = arith.constant 2064 : index
    %c0_256 = arith.constant 0 : index
    %642 = vector.load %arg4[%c2064, %c0_256] : memref<3312x128xbf16, #tpu.memory_space<vmem>>, vector<32x8xbf16>
    %cst_257 = arith.constant dense<0.000000e+00> : vector<16x8xf32>
    %643 = tpu.matmul %415, %642, %cst_257 {dimension_numbers = #tpu.dot_dimension_numbers<[1], [0], [0], [1], [0, 0, 1, 1], [], []>} : vector<16x32xbf16>, vector<32x8xbf16>, vector<16x8xf32> -> vector<16x8xf32>
    %c2096 = arith.constant 2096 : index
    %c0_258 = arith.constant 0 : index
    %644 = vector.load %arg4[%c2096, %c0_258] : memref<3312x128xbf16, #tpu.memory_space<vmem>>, vector<32x32xbf16>
    %cst_259 = arith.constant dense<0.000000e+00> : vector<16x32xf32>
    %645 = tpu.matmul %415, %644, %cst_259 {dimension_numbers = #tpu.dot_dimension_numbers<[1], [0], [0], [1], [0, 0, 1, 1], [], []>} : vector<16x32xbf16>, vector<32x32xbf16>, vector<16x32xf32> -> vector<16x32xf32>
    %646 = arith.truncf %641 : vector<16x8xf32> to vector<16x8xbf16>
    %647 = arith.truncf %643 : vector<16x8xf32> to vector<16x8xbf16>
    %cst_260 = arith.constant dense<0.000000e+00> : vector<16x16xf32>
    %648 = tpu.matmul %646, %647, %cst_260 {dimension_numbers = #tpu.dot_dimension_numbers<[1], [1], [0], [0], [0, 0, 1, 0], [], []>} : vector<16x8xbf16>, vector<16x8xbf16>, vector<16x16xf32> -> vector<16x16xf32>
    %649 = arith.addf %648, %31 : vector<16x16xf32>
    %cst_261 = arith.constant dense<0xFF800000> : vector<16xf32>
    %650 = vector.multi_reduction <maximumf>, %649, %cst_261 [1] : vector<16x16xf32> to vector<16xf32>
    %651 = vector.shape_cast %650 : vector<16xf32> to vector<16x1xf32>
    %652 = vector.broadcast %651 : vector<16x1xf32> to vector<16x16xf32>
    %653 = arith.subf %649, %652 : vector<16x16xf32>
    %654 = math.exp %653 : vector<16x16xf32>
    %cst_262 = arith.constant dense<0.000000e+00> : vector<16xf32>
    %655 = vector.multi_reduction <add>, %654, %cst_262 [1] : vector<16x16xf32> to vector<16xf32>
    %656 = vector.shape_cast %655 : vector<16xf32> to vector<16x1xf32>
    %657 = tpu.reciprocal %656 {approx = true} : vector<16x1xf32> -> vector<16x1xf32>
    %658 = vector.broadcast %657 : vector<16x1xf32> to vector<16x16xf32>
    %659 = arith.mulf %654, %658 : vector<16x16xf32>
    %660 = arith.truncf %659 : vector<16x16xf32> to vector<16x16xbf16>
    %661 = arith.truncf %645 : vector<16x32xf32> to vector<16x32xbf16>
    %cst_263 = arith.constant dense<0.000000e+00> : vector<16x32xf32>
    %662 = tpu.matmul %660, %661, %cst_263 {dimension_numbers = #tpu.dot_dimension_numbers<[1], [0], [0], [1], [0, 0, 1, 1], [], []>} : vector<16x16xbf16>, vector<16x32xbf16>, vector<16x32xf32> -> vector<16x32xf32>
    %663 = arith.addf %639, %662 : vector<16x32xf32>
    %664 = arith.truncf %663 : vector<16x32xf32> to vector<16x32xbf16>
    %c2128 = arith.constant 2128 : index
    %c0_264 = arith.constant 0 : index
    %665 = vector.load %arg4[%c2128, %c0_264] : memref<3312x128xbf16, #tpu.memory_space<vmem>>, vector<32x32xbf16>
    %cst_265 = arith.constant dense<0.000000e+00> : vector<16x32xf32>
    %666 = tpu.matmul %664, %665, %cst_265 {dimension_numbers = #tpu.dot_dimension_numbers<[1], [0], [0], [1], [0, 0, 1, 1], [], []>} : vector<16x32xbf16>, vector<32x32xbf16>, vector<16x32xf32> -> vector<16x32xf32>
    %c216 = arith.constant 216 : index
    %c0_266 = arith.constant 0 : index
    %667 = vector.load %arg5[%c216, %c0_266] : memref<440x128xf32, #tpu.memory_space<vmem>>, vector<1x32xf32>
    %668 = vector.broadcast %667 : vector<1x32xf32> to vector<16x32xf32>
    %669 = arith.addf %666, %668 : vector<16x32xf32>
    %670 = arith.extf %544 : vector<16x32xbf16> to vector<16x32xf32>
    %671 = arith.addf %670, %669 : vector<16x32xf32>
    %672 = arith.truncf %671 : vector<16x32xf32> to vector<16x32xbf16>
    %673 = arith.extf %672 : vector<16x32xbf16> to vector<16x32xf32>
    %cst_267 = arith.constant dense<0.000000e+00> : vector<16xf32>
    %674 = vector.multi_reduction <add>, %673, %cst_267 [1] : vector<16x32xf32> to vector<16xf32>
    %675 = vector.shape_cast %674 : vector<16xf32> to vector<16x1xf32>
    %cst_268 = arith.constant 3.200000e+01 : f32
    %676 = vector.broadcast %cst_268 : f32 to vector<16x1xf32>
    %677 = arith.divf %675, %676 : vector<16x1xf32>
    %678 = vector.broadcast %677 : vector<16x1xf32> to vector<16x32xf32>
    %679 = arith.subf %673, %678 : vector<16x32xf32>
    %680 = arith.mulf %679, %679 : vector<16x32xf32>
    %cst_269 = arith.constant dense<0.000000e+00> : vector<16xf32>
    %681 = vector.multi_reduction <add>, %680, %cst_269 [1] : vector<16x32xf32> to vector<16xf32>
    %682 = vector.shape_cast %681 : vector<16xf32> to vector<16x1xf32>
    %cst_270 = arith.constant 3.200000e+01 : f32
    %683 = vector.broadcast %cst_270 : f32 to vector<16x1xf32>
    %684 = arith.divf %682, %683 : vector<16x1xf32>
    %cst_271 = arith.constant 9.99999974E-6 : f32
    %685 = vector.broadcast %cst_271 : f32 to vector<16x1xf32>
    %686 = arith.addf %684, %685 : vector<16x1xf32>
    %687 = math.rsqrt %686 : vector<16x1xf32>
    %688 = vector.broadcast %687 : vector<16x1xf32> to vector<16x32xf32>
    %689 = arith.mulf %679, %688 : vector<16x32xf32>
    %c224 = arith.constant 224 : index
    %c0_272 = arith.constant 0 : index
    %690 = vector.load %arg5[%c224, %c0_272] : memref<440x128xf32, #tpu.memory_space<vmem>>, vector<1x32xf32>
    %691 = vector.broadcast %690 : vector<1x32xf32> to vector<16x32xf32>
    %692 = arith.mulf %689, %691 : vector<16x32xf32>
    %c232 = arith.constant 232 : index
    %c0_273 = arith.constant 0 : index
    %693 = vector.load %arg5[%c232, %c0_273] : memref<440x128xf32, #tpu.memory_space<vmem>>, vector<1x32xf32>
    %694 = vector.broadcast %693 : vector<1x32xf32> to vector<16x32xf32>
    %695 = arith.addf %692, %694 : vector<16x32xf32>
    %696 = arith.truncf %695 : vector<16x32xf32> to vector<16x32xbf16>
    %c2160 = arith.constant 2160 : index
    %c0_274 = arith.constant 0 : index
    %697 = vector.load %arg4[%c2160, %c0_274] : memref<3312x128xbf16, #tpu.memory_space<vmem>>, vector<32x128xbf16>
    %cst_275 = arith.constant dense<0.000000e+00> : vector<16x128xf32>
    %698 = tpu.matmul %696, %697, %cst_275 {dimension_numbers = #tpu.dot_dimension_numbers<[1], [0], [0], [1], [0, 0, 1, 1], [], []>} : vector<16x32xbf16>, vector<32x128xbf16>, vector<16x128xf32> -> vector<16x128xf32>
    %c240_276 = arith.constant 240 : index
    %c0_277 = arith.constant 0 : index
    %699 = vector.load %arg5[%c240_276, %c0_277] : memref<440x128xf32, #tpu.memory_space<vmem>>, vector<1x128xf32>
    %700 = vector.broadcast %699 : vector<1x128xf32> to vector<16x128xf32>
    %701 = arith.addf %698, %700 : vector<16x128xf32>
    %cst_278 = arith.constant 5.000000e-01 : f32
    %702 = vector.broadcast %cst_278 : f32 to vector<16x128xf32>
    %703 = arith.mulf %702, %701 : vector<16x128xf32>
    %cst_279 = arith.constant 4.471500e-02 : f32
    %704 = vector.broadcast %cst_279 : f32 to vector<16x128xf32>
    %705 = arith.mulf %704, %701 : vector<16x128xf32>
    %706 = arith.mulf %705, %701 : vector<16x128xf32>
    %707 = arith.mulf %706, %701 : vector<16x128xf32>
    %708 = arith.addf %701, %707 : vector<16x128xf32>
    %cst_280 = arith.constant 0.797884583 : f32
    %709 = vector.broadcast %cst_280 : f32 to vector<16x128xf32>
    %710 = arith.mulf %709, %708 : vector<16x128xf32>
    %711 = math.tanh %710 : vector<16x128xf32>
    %cst_281 = arith.constant 1.000000e+00 : f32
    %712 = vector.broadcast %cst_281 : f32 to vector<16x128xf32>
    %713 = arith.addf %712, %711 : vector<16x128xf32>
    %714 = arith.mulf %703, %713 : vector<16x128xf32>
    %715 = arith.truncf %714 : vector<16x128xf32> to vector<16x128xbf16>
    %c2192 = arith.constant 2192 : index
    %c0_282 = arith.constant 0 : index
    %716 = vector.load %arg4[%c2192, %c0_282] : memref<3312x128xbf16, #tpu.memory_space<vmem>>, vector<128x32xbf16>
    %cst_283 = arith.constant dense<0.000000e+00> : vector<16x32xf32>
    %717 = tpu.matmul %715, %716, %cst_283 {dimension_numbers = #tpu.dot_dimension_numbers<[1], [0], [0], [1], [0, 0, 1, 1], [], []>} : vector<16x128xbf16>, vector<128x32xbf16>, vector<16x32xf32> -> vector<16x32xf32>
    %c248 = arith.constant 248 : index
    %c0_284 = arith.constant 0 : index
    %718 = vector.load %arg5[%c248, %c0_284] : memref<440x128xf32, #tpu.memory_space<vmem>>, vector<1x32xf32>
    %719 = vector.broadcast %718 : vector<1x32xf32> to vector<16x32xf32>
    %720 = arith.addf %717, %719 : vector<16x32xf32>
    %721 = arith.extf %672 : vector<16x32xbf16> to vector<16x32xf32>
    %722 = arith.addf %721, %720 : vector<16x32xf32>
    %723 = arith.truncf %722 : vector<16x32xf32> to vector<16x32xbf16>
    %724 = arith.extf %723 : vector<16x32xbf16> to vector<16x32xf32>
    %cst_285 = arith.constant dense<0.000000e+00> : vector<16xf32>
    %725 = vector.multi_reduction <add>, %724, %cst_285 [1] : vector<16x32xf32> to vector<16xf32>
    %726 = vector.shape_cast %725 : vector<16xf32> to vector<16x1xf32>
    %cst_286 = arith.constant 3.200000e+01 : f32
    %727 = vector.broadcast %cst_286 : f32 to vector<16x1xf32>
    %728 = arith.divf %726, %727 : vector<16x1xf32>
    %729 = vector.broadcast %728 : vector<16x1xf32> to vector<16x32xf32>
    %730 = arith.subf %724, %729 : vector<16x32xf32>
    %731 = arith.mulf %730, %730 : vector<16x32xf32>
    %cst_287 = arith.constant dense<0.000000e+00> : vector<16xf32>
    %732 = vector.multi_reduction <add>, %731, %cst_287 [1] : vector<16x32xf32> to vector<16xf32>
    %733 = vector.shape_cast %732 : vector<16xf32> to vector<16x1xf32>
    %cst_288 = arith.constant 3.200000e+01 : f32
    %734 = vector.broadcast %cst_288 : f32 to vector<16x1xf32>
    %735 = arith.divf %733, %734 : vector<16x1xf32>
    %cst_289 = arith.constant 9.99999974E-6 : f32
    %736 = vector.broadcast %cst_289 : f32 to vector<16x1xf32>
    %737 = arith.addf %735, %736 : vector<16x1xf32>
    %738 = math.rsqrt %737 : vector<16x1xf32>
    %739 = vector.broadcast %738 : vector<16x1xf32> to vector<16x32xf32>
    %740 = arith.mulf %730, %739 : vector<16x32xf32>
    %c256 = arith.constant 256 : index
    %c0_290 = arith.constant 0 : index
    %741 = vector.load %arg5[%c256, %c0_290] : memref<440x128xf32, #tpu.memory_space<vmem>>, vector<1x32xf32>
    %742 = vector.broadcast %741 : vector<1x32xf32> to vector<16x32xf32>
    %743 = arith.mulf %740, %742 : vector<16x32xf32>
    %c264 = arith.constant 264 : index
    %c0_291 = arith.constant 0 : index
    %744 = vector.load %arg5[%c264, %c0_291] : memref<440x128xf32, #tpu.memory_space<vmem>>, vector<1x32xf32>
    %745 = vector.broadcast %744 : vector<1x32xf32> to vector<16x32xf32>
    %746 = arith.addf %743, %745 : vector<16x32xf32>
    %747 = arith.truncf %746 : vector<16x32xf32> to vector<16x32xbf16>
    %c2320 = arith.constant 2320 : index
    %c0_292 = arith.constant 0 : index
    %748 = vector.load %arg4[%c2320, %c0_292] : memref<3312x128xbf16, #tpu.memory_space<vmem>>, vector<32x8xbf16>
    %cst_293 = arith.constant dense<0.000000e+00> : vector<16x8xf32>
    %749 = tpu.matmul %747, %748, %cst_293 {dimension_numbers = #tpu.dot_dimension_numbers<[1], [0], [0], [1], [0, 0, 1, 1], [], []>} : vector<16x32xbf16>, vector<32x8xbf16>, vector<16x8xf32> -> vector<16x8xf32>
    %c2352 = arith.constant 2352 : index
    %c0_294 = arith.constant 0 : index
    %750 = vector.load %arg4[%c2352, %c0_294] : memref<3312x128xbf16, #tpu.memory_space<vmem>>, vector<32x8xbf16>
    %cst_295 = arith.constant dense<0.000000e+00> : vector<16x8xf32>
    %751 = tpu.matmul %747, %750, %cst_295 {dimension_numbers = #tpu.dot_dimension_numbers<[1], [0], [0], [1], [0, 0, 1, 1], [], []>} : vector<16x32xbf16>, vector<32x8xbf16>, vector<16x8xf32> -> vector<16x8xf32>
    %c2384 = arith.constant 2384 : index
    %c0_296 = arith.constant 0 : index
    %752 = vector.load %arg4[%c2384, %c0_296] : memref<3312x128xbf16, #tpu.memory_space<vmem>>, vector<32x32xbf16>
    %cst_297 = arith.constant dense<0.000000e+00> : vector<16x32xf32>
    %753 = tpu.matmul %747, %752, %cst_297 {dimension_numbers = #tpu.dot_dimension_numbers<[1], [0], [0], [1], [0, 0, 1, 1], [], []>} : vector<16x32xbf16>, vector<32x32xbf16>, vector<16x32xf32> -> vector<16x32xf32>
    %754 = arith.truncf %749 : vector<16x8xf32> to vector<16x8xbf16>
    %755 = arith.truncf %751 : vector<16x8xf32> to vector<16x8xbf16>
    %cst_298 = arith.constant dense<0.000000e+00> : vector<16x16xf32>
    %756 = tpu.matmul %754, %755, %cst_298 {dimension_numbers = #tpu.dot_dimension_numbers<[1], [1], [0], [0], [0, 0, 1, 0], [], []>} : vector<16x8xbf16>, vector<16x8xbf16>, vector<16x16xf32> -> vector<16x16xf32>
    %757 = arith.addf %756, %30 : vector<16x16xf32>
    %cst_299 = arith.constant dense<0xFF800000> : vector<16xf32>
    %758 = vector.multi_reduction <maximumf>, %757, %cst_299 [1] : vector<16x16xf32> to vector<16xf32>
    %759 = vector.shape_cast %758 : vector<16xf32> to vector<16x1xf32>
    %760 = vector.broadcast %759 : vector<16x1xf32> to vector<16x16xf32>
    %761 = arith.subf %757, %760 : vector<16x16xf32>
    %762 = math.exp %761 : vector<16x16xf32>
    %cst_300 = arith.constant dense<0.000000e+00> : vector<16xf32>
    %763 = vector.multi_reduction <add>, %762, %cst_300 [1] : vector<16x16xf32> to vector<16xf32>
    %764 = vector.shape_cast %763 : vector<16xf32> to vector<16x1xf32>
    %765 = tpu.reciprocal %764 {approx = true} : vector<16x1xf32> -> vector<16x1xf32>
    %766 = vector.broadcast %765 : vector<16x1xf32> to vector<16x16xf32>
    %767 = arith.mulf %762, %766 : vector<16x16xf32>
    %768 = arith.truncf %767 : vector<16x16xf32> to vector<16x16xbf16>
    %769 = arith.truncf %753 : vector<16x32xf32> to vector<16x32xbf16>
    %cst_301 = arith.constant dense<0.000000e+00> : vector<16x32xf32>
    %770 = tpu.matmul %768, %769, %cst_301 {dimension_numbers = #tpu.dot_dimension_numbers<[1], [0], [0], [1], [0, 0, 1, 1], [], []>} : vector<16x16xbf16>, vector<16x32xbf16>, vector<16x32xf32> -> vector<16x32xf32>
    %c2416 = arith.constant 2416 : index
    %c0_302 = arith.constant 0 : index
    %771 = vector.load %arg4[%c2416, %c0_302] : memref<3312x128xbf16, #tpu.memory_space<vmem>>, vector<32x8xbf16>
    %cst_303 = arith.constant dense<0.000000e+00> : vector<16x8xf32>
    %772 = tpu.matmul %747, %771, %cst_303 {dimension_numbers = #tpu.dot_dimension_numbers<[1], [0], [0], [1], [0, 0, 1, 1], [], []>} : vector<16x32xbf16>, vector<32x8xbf16>, vector<16x8xf32> -> vector<16x8xf32>
    %c2448 = arith.constant 2448 : index
    %c0_304 = arith.constant 0 : index
    %773 = vector.load %arg4[%c2448, %c0_304] : memref<3312x128xbf16, #tpu.memory_space<vmem>>, vector<32x8xbf16>
    %cst_305 = arith.constant dense<0.000000e+00> : vector<16x8xf32>
    %774 = tpu.matmul %747, %773, %cst_305 {dimension_numbers = #tpu.dot_dimension_numbers<[1], [0], [0], [1], [0, 0, 1, 1], [], []>} : vector<16x32xbf16>, vector<32x8xbf16>, vector<16x8xf32> -> vector<16x8xf32>
    %c2480 = arith.constant 2480 : index
    %c0_306 = arith.constant 0 : index
    %775 = vector.load %arg4[%c2480, %c0_306] : memref<3312x128xbf16, #tpu.memory_space<vmem>>, vector<32x32xbf16>
    %cst_307 = arith.constant dense<0.000000e+00> : vector<16x32xf32>
    %776 = tpu.matmul %747, %775, %cst_307 {dimension_numbers = #tpu.dot_dimension_numbers<[1], [0], [0], [1], [0, 0, 1, 1], [], []>} : vector<16x32xbf16>, vector<32x32xbf16>, vector<16x32xf32> -> vector<16x32xf32>
    %777 = arith.truncf %772 : vector<16x8xf32> to vector<16x8xbf16>
    %778 = arith.truncf %774 : vector<16x8xf32> to vector<16x8xbf16>
    %cst_308 = arith.constant dense<0.000000e+00> : vector<16x16xf32>
    %779 = tpu.matmul %777, %778, %cst_308 {dimension_numbers = #tpu.dot_dimension_numbers<[1], [1], [0], [0], [0, 0, 1, 0], [], []>} : vector<16x8xbf16>, vector<16x8xbf16>, vector<16x16xf32> -> vector<16x16xf32>
    %780 = arith.addf %779, %30 : vector<16x16xf32>
    %cst_309 = arith.constant dense<0xFF800000> : vector<16xf32>
    %781 = vector.multi_reduction <maximumf>, %780, %cst_309 [1] : vector<16x16xf32> to vector<16xf32>
    %782 = vector.shape_cast %781 : vector<16xf32> to vector<16x1xf32>
    %783 = vector.broadcast %782 : vector<16x1xf32> to vector<16x16xf32>
    %784 = arith.subf %780, %783 : vector<16x16xf32>
    %785 = math.exp %784 : vector<16x16xf32>
    %cst_310 = arith.constant dense<0.000000e+00> : vector<16xf32>
    %786 = vector.multi_reduction <add>, %785, %cst_310 [1] : vector<16x16xf32> to vector<16xf32>
    %787 = vector.shape_cast %786 : vector<16xf32> to vector<16x1xf32>
    %788 = tpu.reciprocal %787 {approx = true} : vector<16x1xf32> -> vector<16x1xf32>
    %789 = vector.broadcast %788 : vector<16x1xf32> to vector<16x16xf32>
    %790 = arith.mulf %785, %789 : vector<16x16xf32>
    %791 = arith.truncf %790 : vector<16x16xf32> to vector<16x16xbf16>
    %792 = arith.truncf %776 : vector<16x32xf32> to vector<16x32xbf16>
    %cst_311 = arith.constant dense<0.000000e+00> : vector<16x32xf32>
    %793 = tpu.matmul %791, %792, %cst_311 {dimension_numbers = #tpu.dot_dimension_numbers<[1], [0], [0], [1], [0, 0, 1, 1], [], []>} : vector<16x16xbf16>, vector<16x32xbf16>, vector<16x32xf32> -> vector<16x32xf32>
    %794 = arith.addf %770, %793 : vector<16x32xf32>
    %c2512 = arith.constant 2512 : index
    %c0_312 = arith.constant 0 : index
    %795 = vector.load %arg4[%c2512, %c0_312] : memref<3312x128xbf16, #tpu.memory_space<vmem>>, vector<32x8xbf16>
    %cst_313 = arith.constant dense<0.000000e+00> : vector<16x8xf32>
    %796 = tpu.matmul %747, %795, %cst_313 {dimension_numbers = #tpu.dot_dimension_numbers<[1], [0], [0], [1], [0, 0, 1, 1], [], []>} : vector<16x32xbf16>, vector<32x8xbf16>, vector<16x8xf32> -> vector<16x8xf32>
    %c2544 = arith.constant 2544 : index
    %c0_314 = arith.constant 0 : index
    %797 = vector.load %arg4[%c2544, %c0_314] : memref<3312x128xbf16, #tpu.memory_space<vmem>>, vector<32x8xbf16>
    %cst_315 = arith.constant dense<0.000000e+00> : vector<16x8xf32>
    %798 = tpu.matmul %747, %797, %cst_315 {dimension_numbers = #tpu.dot_dimension_numbers<[1], [0], [0], [1], [0, 0, 1, 1], [], []>} : vector<16x32xbf16>, vector<32x8xbf16>, vector<16x8xf32> -> vector<16x8xf32>
    %c2576 = arith.constant 2576 : index
    %c0_316 = arith.constant 0 : index
    %799 = vector.load %arg4[%c2576, %c0_316] : memref<3312x128xbf16, #tpu.memory_space<vmem>>, vector<32x32xbf16>
    %cst_317 = arith.constant dense<0.000000e+00> : vector<16x32xf32>
    %800 = tpu.matmul %747, %799, %cst_317 {dimension_numbers = #tpu.dot_dimension_numbers<[1], [0], [0], [1], [0, 0, 1, 1], [], []>} : vector<16x32xbf16>, vector<32x32xbf16>, vector<16x32xf32> -> vector<16x32xf32>
    %801 = arith.truncf %796 : vector<16x8xf32> to vector<16x8xbf16>
    %802 = arith.truncf %798 : vector<16x8xf32> to vector<16x8xbf16>
    %cst_318 = arith.constant dense<0.000000e+00> : vector<16x16xf32>
    %803 = tpu.matmul %801, %802, %cst_318 {dimension_numbers = #tpu.dot_dimension_numbers<[1], [1], [0], [0], [0, 0, 1, 0], [], []>} : vector<16x8xbf16>, vector<16x8xbf16>, vector<16x16xf32> -> vector<16x16xf32>
    %804 = arith.addf %803, %30 : vector<16x16xf32>
    %cst_319 = arith.constant dense<0xFF800000> : vector<16xf32>
    %805 = vector.multi_reduction <maximumf>, %804, %cst_319 [1] : vector<16x16xf32> to vector<16xf32>
    %806 = vector.shape_cast %805 : vector<16xf32> to vector<16x1xf32>
    %807 = vector.broadcast %806 : vector<16x1xf32> to vector<16x16xf32>
    %808 = arith.subf %804, %807 : vector<16x16xf32>
    %809 = math.exp %808 : vector<16x16xf32>
    %cst_320 = arith.constant dense<0.000000e+00> : vector<16xf32>
    %810 = vector.multi_reduction <add>, %809, %cst_320 [1] : vector<16x16xf32> to vector<16xf32>
    %811 = vector.shape_cast %810 : vector<16xf32> to vector<16x1xf32>
    %812 = tpu.reciprocal %811 {approx = true} : vector<16x1xf32> -> vector<16x1xf32>
    %813 = vector.broadcast %812 : vector<16x1xf32> to vector<16x16xf32>
    %814 = arith.mulf %809, %813 : vector<16x16xf32>
    %815 = arith.truncf %814 : vector<16x16xf32> to vector<16x16xbf16>
    %816 = arith.truncf %800 : vector<16x32xf32> to vector<16x32xbf16>
    %cst_321 = arith.constant dense<0.000000e+00> : vector<16x32xf32>
    %817 = tpu.matmul %815, %816, %cst_321 {dimension_numbers = #tpu.dot_dimension_numbers<[1], [0], [0], [1], [0, 0, 1, 1], [], []>} : vector<16x16xbf16>, vector<16x32xbf16>, vector<16x32xf32> -> vector<16x32xf32>
    %818 = arith.addf %794, %817 : vector<16x32xf32>
    %c2608 = arith.constant 2608 : index
    %c0_322 = arith.constant 0 : index
    %819 = vector.load %arg4[%c2608, %c0_322] : memref<3312x128xbf16, #tpu.memory_space<vmem>>, vector<32x8xbf16>
    %cst_323 = arith.constant dense<0.000000e+00> : vector<16x8xf32>
    %820 = tpu.matmul %747, %819, %cst_323 {dimension_numbers = #tpu.dot_dimension_numbers<[1], [0], [0], [1], [0, 0, 1, 1], [], []>} : vector<16x32xbf16>, vector<32x8xbf16>, vector<16x8xf32> -> vector<16x8xf32>
    %c2640 = arith.constant 2640 : index
    %c0_324 = arith.constant 0 : index
    %821 = vector.load %arg4[%c2640, %c0_324] : memref<3312x128xbf16, #tpu.memory_space<vmem>>, vector<32x8xbf16>
    %cst_325 = arith.constant dense<0.000000e+00> : vector<16x8xf32>
    %822 = tpu.matmul %747, %821, %cst_325 {dimension_numbers = #tpu.dot_dimension_numbers<[1], [0], [0], [1], [0, 0, 1, 1], [], []>} : vector<16x32xbf16>, vector<32x8xbf16>, vector<16x8xf32> -> vector<16x8xf32>
    %c2672 = arith.constant 2672 : index
    %c0_326 = arith.constant 0 : index
    %823 = vector.load %arg4[%c2672, %c0_326] : memref<3312x128xbf16, #tpu.memory_space<vmem>>, vector<32x32xbf16>
    %cst_327 = arith.constant dense<0.000000e+00> : vector<16x32xf32>
    %824 = tpu.matmul %747, %823, %cst_327 {dimension_numbers = #tpu.dot_dimension_numbers<[1], [0], [0], [1], [0, 0, 1, 1], [], []>} : vector<16x32xbf16>, vector<32x32xbf16>, vector<16x32xf32> -> vector<16x32xf32>
    %825 = arith.truncf %820 : vector<16x8xf32> to vector<16x8xbf16>
    %826 = arith.truncf %822 : vector<16x8xf32> to vector<16x8xbf16>
    %cst_328 = arith.constant dense<0.000000e+00> : vector<16x16xf32>
    %827 = tpu.matmul %825, %826, %cst_328 {dimension_numbers = #tpu.dot_dimension_numbers<[1], [1], [0], [0], [0, 0, 1, 0], [], []>} : vector<16x8xbf16>, vector<16x8xbf16>, vector<16x16xf32> -> vector<16x16xf32>
    %828 = arith.addf %827, %30 : vector<16x16xf32>
    %cst_329 = arith.constant dense<0xFF800000> : vector<16xf32>
    %829 = vector.multi_reduction <maximumf>, %828, %cst_329 [1] : vector<16x16xf32> to vector<16xf32>
    %830 = vector.shape_cast %829 : vector<16xf32> to vector<16x1xf32>
    %831 = vector.broadcast %830 : vector<16x1xf32> to vector<16x16xf32>
    %832 = arith.subf %828, %831 : vector<16x16xf32>
    %833 = math.exp %832 : vector<16x16xf32>
    %cst_330 = arith.constant dense<0.000000e+00> : vector<16xf32>
    %834 = vector.multi_reduction <add>, %833, %cst_330 [1] : vector<16x16xf32> to vector<16xf32>
    %835 = vector.shape_cast %834 : vector<16xf32> to vector<16x1xf32>
    %836 = tpu.reciprocal %835 {approx = true} : vector<16x1xf32> -> vector<16x1xf32>
    %837 = vector.broadcast %836 : vector<16x1xf32> to vector<16x16xf32>
    %838 = arith.mulf %833, %837 : vector<16x16xf32>
    %839 = arith.truncf %838 : vector<16x16xf32> to vector<16x16xbf16>
    %840 = arith.truncf %824 : vector<16x32xf32> to vector<16x32xbf16>
    %cst_331 = arith.constant dense<0.000000e+00> : vector<16x32xf32>
    %841 = tpu.matmul %839, %840, %cst_331 {dimension_numbers = #tpu.dot_dimension_numbers<[1], [0], [0], [1], [0, 0, 1, 1], [], []>} : vector<16x16xbf16>, vector<16x32xbf16>, vector<16x32xf32> -> vector<16x32xf32>
    %842 = arith.addf %818, %841 : vector<16x32xf32>
    %843 = arith.truncf %842 : vector<16x32xf32> to vector<16x32xbf16>
    %c2704 = arith.constant 2704 : index
    %c0_332 = arith.constant 0 : index
    %844 = vector.load %arg4[%c2704, %c0_332] : memref<3312x128xbf16, #tpu.memory_space<vmem>>, vector<32x32xbf16>
    %cst_333 = arith.constant dense<0.000000e+00> : vector<16x32xf32>
    %845 = tpu.matmul %843, %844, %cst_333 {dimension_numbers = #tpu.dot_dimension_numbers<[1], [0], [0], [1], [0, 0, 1, 1], [], []>} : vector<16x32xbf16>, vector<32x32xbf16>, vector<16x32xf32> -> vector<16x32xf32>
    %c272_334 = arith.constant 272 : index
    %c0_335 = arith.constant 0 : index
    %846 = vector.load %arg5[%c272_334, %c0_335] : memref<440x128xf32, #tpu.memory_space<vmem>>, vector<1x32xf32>
    %847 = vector.broadcast %846 : vector<1x32xf32> to vector<16x32xf32>
    %848 = arith.addf %845, %847 : vector<16x32xf32>
    %849 = arith.extf %723 : vector<16x32xbf16> to vector<16x32xf32>
    %850 = arith.addf %849, %848 : vector<16x32xf32>
    %851 = arith.truncf %850 : vector<16x32xf32> to vector<16x32xbf16>
    %852 = arith.extf %851 : vector<16x32xbf16> to vector<16x32xf32>
    %cst_336 = arith.constant dense<0.000000e+00> : vector<16xf32>
    %853 = vector.multi_reduction <add>, %852, %cst_336 [1] : vector<16x32xf32> to vector<16xf32>
    %854 = vector.shape_cast %853 : vector<16xf32> to vector<16x1xf32>
    %cst_337 = arith.constant 3.200000e+01 : f32
    %855 = vector.broadcast %cst_337 : f32 to vector<16x1xf32>
    %856 = arith.divf %854, %855 : vector<16x1xf32>
    %857 = vector.broadcast %856 : vector<16x1xf32> to vector<16x32xf32>
    %858 = arith.subf %852, %857 : vector<16x32xf32>
    %859 = arith.mulf %858, %858 : vector<16x32xf32>
    %cst_338 = arith.constant dense<0.000000e+00> : vector<16xf32>
    %860 = vector.multi_reduction <add>, %859, %cst_338 [1] : vector<16x32xf32> to vector<16xf32>
    %861 = vector.shape_cast %860 : vector<16xf32> to vector<16x1xf32>
    %cst_339 = arith.constant 3.200000e+01 : f32
    %862 = vector.broadcast %cst_339 : f32 to vector<16x1xf32>
    %863 = arith.divf %861, %862 : vector<16x1xf32>
    %cst_340 = arith.constant 9.99999974E-6 : f32
    %864 = vector.broadcast %cst_340 : f32 to vector<16x1xf32>
    %865 = arith.addf %863, %864 : vector<16x1xf32>
    %866 = math.rsqrt %865 : vector<16x1xf32>
    %867 = vector.broadcast %866 : vector<16x1xf32> to vector<16x32xf32>
    %868 = arith.mulf %858, %867 : vector<16x32xf32>
    %c280 = arith.constant 280 : index
    %c0_341 = arith.constant 0 : index
    %869 = vector.load %arg5[%c280, %c0_341] : memref<440x128xf32, #tpu.memory_space<vmem>>, vector<1x32xf32>
    %870 = vector.broadcast %869 : vector<1x32xf32> to vector<16x32xf32>
    %871 = arith.mulf %868, %870 : vector<16x32xf32>
    %c288 = arith.constant 288 : index
    %c0_342 = arith.constant 0 : index
    %872 = vector.load %arg5[%c288, %c0_342] : memref<440x128xf32, #tpu.memory_space<vmem>>, vector<1x32xf32>
    %873 = vector.broadcast %872 : vector<1x32xf32> to vector<16x32xf32>
    %874 = arith.addf %871, %873 : vector<16x32xf32>
    %875 = arith.truncf %874 : vector<16x32xf32> to vector<16x32xbf16>
    %c2736 = arith.constant 2736 : index
    %c0_343 = arith.constant 0 : index
    %876 = vector.load %arg4[%c2736, %c0_343] : memref<3312x128xbf16, #tpu.memory_space<vmem>>, vector<32x8xbf16>
    %cst_344 = arith.constant dense<0.000000e+00> : vector<16x8xf32>
    %877 = tpu.matmul %875, %876, %cst_344 {dimension_numbers = #tpu.dot_dimension_numbers<[1], [0], [0], [1], [0, 0, 1, 1], [], []>} : vector<16x32xbf16>, vector<32x8xbf16>, vector<16x8xf32> -> vector<16x8xf32>
    %c2768 = arith.constant 2768 : index
    %c0_345 = arith.constant 0 : index
    %878 = vector.load %arg4[%c2768, %c0_345] : memref<3312x128xbf16, #tpu.memory_space<vmem>>, vector<32x8xbf16>
    %cst_346 = arith.constant dense<0.000000e+00> : vector<16x8xf32>
    %879 = tpu.matmul %415, %878, %cst_346 {dimension_numbers = #tpu.dot_dimension_numbers<[1], [0], [0], [1], [0, 0, 1, 1], [], []>} : vector<16x32xbf16>, vector<32x8xbf16>, vector<16x8xf32> -> vector<16x8xf32>
    %c2800 = arith.constant 2800 : index
    %c0_347 = arith.constant 0 : index
    %880 = vector.load %arg4[%c2800, %c0_347] : memref<3312x128xbf16, #tpu.memory_space<vmem>>, vector<32x32xbf16>
    %cst_348 = arith.constant dense<0.000000e+00> : vector<16x32xf32>
    %881 = tpu.matmul %415, %880, %cst_348 {dimension_numbers = #tpu.dot_dimension_numbers<[1], [0], [0], [1], [0, 0, 1, 1], [], []>} : vector<16x32xbf16>, vector<32x32xbf16>, vector<16x32xf32> -> vector<16x32xf32>
    %882 = arith.truncf %877 : vector<16x8xf32> to vector<16x8xbf16>
    %883 = arith.truncf %879 : vector<16x8xf32> to vector<16x8xbf16>
    %cst_349 = arith.constant dense<0.000000e+00> : vector<16x16xf32>
    %884 = tpu.matmul %882, %883, %cst_349 {dimension_numbers = #tpu.dot_dimension_numbers<[1], [1], [0], [0], [0, 0, 1, 0], [], []>} : vector<16x8xbf16>, vector<16x8xbf16>, vector<16x16xf32> -> vector<16x16xf32>
    %885 = arith.addf %884, %31 : vector<16x16xf32>
    %cst_350 = arith.constant dense<0xFF800000> : vector<16xf32>
    %886 = vector.multi_reduction <maximumf>, %885, %cst_350 [1] : vector<16x16xf32> to vector<16xf32>
    %887 = vector.shape_cast %886 : vector<16xf32> to vector<16x1xf32>
    %888 = vector.broadcast %887 : vector<16x1xf32> to vector<16x16xf32>
    %889 = arith.subf %885, %888 : vector<16x16xf32>
    %890 = math.exp %889 : vector<16x16xf32>
    %cst_351 = arith.constant dense<0.000000e+00> : vector<16xf32>
    %891 = vector.multi_reduction <add>, %890, %cst_351 [1] : vector<16x16xf32> to vector<16xf32>
    %892 = vector.shape_cast %891 : vector<16xf32> to vector<16x1xf32>
    %893 = tpu.reciprocal %892 {approx = true} : vector<16x1xf32> -> vector<16x1xf32>
    %894 = vector.broadcast %893 : vector<16x1xf32> to vector<16x16xf32>
    %895 = arith.mulf %890, %894 : vector<16x16xf32>
    %896 = arith.truncf %895 : vector<16x16xf32> to vector<16x16xbf16>
    %897 = arith.truncf %881 : vector<16x32xf32> to vector<16x32xbf16>
    %cst_352 = arith.constant dense<0.000000e+00> : vector<16x32xf32>
    %898 = tpu.matmul %896, %897, %cst_352 {dimension_numbers = #tpu.dot_dimension_numbers<[1], [0], [0], [1], [0, 0, 1, 1], [], []>} : vector<16x16xbf16>, vector<16x32xbf16>, vector<16x32xf32> -> vector<16x32xf32>
    %c2832 = arith.constant 2832 : index
    %c0_353 = arith.constant 0 : index
    %899 = vector.load %arg4[%c2832, %c0_353] : memref<3312x128xbf16, #tpu.memory_space<vmem>>, vector<32x8xbf16>
    %cst_354 = arith.constant dense<0.000000e+00> : vector<16x8xf32>
    %900 = tpu.matmul %875, %899, %cst_354 {dimension_numbers = #tpu.dot_dimension_numbers<[1], [0], [0], [1], [0, 0, 1, 1], [], []>} : vector<16x32xbf16>, vector<32x8xbf16>, vector<16x8xf32> -> vector<16x8xf32>
    %c2864 = arith.constant 2864 : index
    %c0_355 = arith.constant 0 : index
    %901 = vector.load %arg4[%c2864, %c0_355] : memref<3312x128xbf16, #tpu.memory_space<vmem>>, vector<32x8xbf16>
    %cst_356 = arith.constant dense<0.000000e+00> : vector<16x8xf32>
    %902 = tpu.matmul %415, %901, %cst_356 {dimension_numbers = #tpu.dot_dimension_numbers<[1], [0], [0], [1], [0, 0, 1, 1], [], []>} : vector<16x32xbf16>, vector<32x8xbf16>, vector<16x8xf32> -> vector<16x8xf32>
    %c2896 = arith.constant 2896 : index
    %c0_357 = arith.constant 0 : index
    %903 = vector.load %arg4[%c2896, %c0_357] : memref<3312x128xbf16, #tpu.memory_space<vmem>>, vector<32x32xbf16>
    %cst_358 = arith.constant dense<0.000000e+00> : vector<16x32xf32>
    %904 = tpu.matmul %415, %903, %cst_358 {dimension_numbers = #tpu.dot_dimension_numbers<[1], [0], [0], [1], [0, 0, 1, 1], [], []>} : vector<16x32xbf16>, vector<32x32xbf16>, vector<16x32xf32> -> vector<16x32xf32>
    %905 = arith.truncf %900 : vector<16x8xf32> to vector<16x8xbf16>
    %906 = arith.truncf %902 : vector<16x8xf32> to vector<16x8xbf16>
    %cst_359 = arith.constant dense<0.000000e+00> : vector<16x16xf32>
    %907 = tpu.matmul %905, %906, %cst_359 {dimension_numbers = #tpu.dot_dimension_numbers<[1], [1], [0], [0], [0, 0, 1, 0], [], []>} : vector<16x8xbf16>, vector<16x8xbf16>, vector<16x16xf32> -> vector<16x16xf32>
    %908 = arith.addf %907, %31 : vector<16x16xf32>
    %cst_360 = arith.constant dense<0xFF800000> : vector<16xf32>
    %909 = vector.multi_reduction <maximumf>, %908, %cst_360 [1] : vector<16x16xf32> to vector<16xf32>
    %910 = vector.shape_cast %909 : vector<16xf32> to vector<16x1xf32>
    %911 = vector.broadcast %910 : vector<16x1xf32> to vector<16x16xf32>
    %912 = arith.subf %908, %911 : vector<16x16xf32>
    %913 = math.exp %912 : vector<16x16xf32>
    %cst_361 = arith.constant dense<0.000000e+00> : vector<16xf32>
    %914 = vector.multi_reduction <add>, %913, %cst_361 [1] : vector<16x16xf32> to vector<16xf32>
    %915 = vector.shape_cast %914 : vector<16xf32> to vector<16x1xf32>
    %916 = tpu.reciprocal %915 {approx = true} : vector<16x1xf32> -> vector<16x1xf32>
    %917 = vector.broadcast %916 : vector<16x1xf32> to vector<16x16xf32>
    %918 = arith.mulf %913, %917 : vector<16x16xf32>
    %919 = arith.truncf %918 : vector<16x16xf32> to vector<16x16xbf16>
    %920 = arith.truncf %904 : vector<16x32xf32> to vector<16x32xbf16>
    %cst_362 = arith.constant dense<0.000000e+00> : vector<16x32xf32>
    %921 = tpu.matmul %919, %920, %cst_362 {dimension_numbers = #tpu.dot_dimension_numbers<[1], [0], [0], [1], [0, 0, 1, 1], [], []>} : vector<16x16xbf16>, vector<16x32xbf16>, vector<16x32xf32> -> vector<16x32xf32>
    %922 = arith.addf %898, %921 : vector<16x32xf32>
    %c2928 = arith.constant 2928 : index
    %c0_363 = arith.constant 0 : index
    %923 = vector.load %arg4[%c2928, %c0_363] : memref<3312x128xbf16, #tpu.memory_space<vmem>>, vector<32x8xbf16>
    %cst_364 = arith.constant dense<0.000000e+00> : vector<16x8xf32>
    %924 = tpu.matmul %875, %923, %cst_364 {dimension_numbers = #tpu.dot_dimension_numbers<[1], [0], [0], [1], [0, 0, 1, 1], [], []>} : vector<16x32xbf16>, vector<32x8xbf16>, vector<16x8xf32> -> vector<16x8xf32>
    %c2960 = arith.constant 2960 : index
    %c0_365 = arith.constant 0 : index
    %925 = vector.load %arg4[%c2960, %c0_365] : memref<3312x128xbf16, #tpu.memory_space<vmem>>, vector<32x8xbf16>
    %cst_366 = arith.constant dense<0.000000e+00> : vector<16x8xf32>
    %926 = tpu.matmul %415, %925, %cst_366 {dimension_numbers = #tpu.dot_dimension_numbers<[1], [0], [0], [1], [0, 0, 1, 1], [], []>} : vector<16x32xbf16>, vector<32x8xbf16>, vector<16x8xf32> -> vector<16x8xf32>
    %c2992 = arith.constant 2992 : index
    %c0_367 = arith.constant 0 : index
    %927 = vector.load %arg4[%c2992, %c0_367] : memref<3312x128xbf16, #tpu.memory_space<vmem>>, vector<32x32xbf16>
    %cst_368 = arith.constant dense<0.000000e+00> : vector<16x32xf32>
    %928 = tpu.matmul %415, %927, %cst_368 {dimension_numbers = #tpu.dot_dimension_numbers<[1], [0], [0], [1], [0, 0, 1, 1], [], []>} : vector<16x32xbf16>, vector<32x32xbf16>, vector<16x32xf32> -> vector<16x32xf32>
    %929 = arith.truncf %924 : vector<16x8xf32> to vector<16x8xbf16>
    %930 = arith.truncf %926 : vector<16x8xf32> to vector<16x8xbf16>
    %cst_369 = arith.constant dense<0.000000e+00> : vector<16x16xf32>
    %931 = tpu.matmul %929, %930, %cst_369 {dimension_numbers = #tpu.dot_dimension_numbers<[1], [1], [0], [0], [0, 0, 1, 0], [], []>} : vector<16x8xbf16>, vector<16x8xbf16>, vector<16x16xf32> -> vector<16x16xf32>
    %932 = arith.addf %931, %31 : vector<16x16xf32>
    %cst_370 = arith.constant dense<0xFF800000> : vector<16xf32>
    %933 = vector.multi_reduction <maximumf>, %932, %cst_370 [1] : vector<16x16xf32> to vector<16xf32>
    %934 = vector.shape_cast %933 : vector<16xf32> to vector<16x1xf32>
    %935 = vector.broadcast %934 : vector<16x1xf32> to vector<16x16xf32>
    %936 = arith.subf %932, %935 : vector<16x16xf32>
    %937 = math.exp %936 : vector<16x16xf32>
    %cst_371 = arith.constant dense<0.000000e+00> : vector<16xf32>
    %938 = vector.multi_reduction <add>, %937, %cst_371 [1] : vector<16x16xf32> to vector<16xf32>
    %939 = vector.shape_cast %938 : vector<16xf32> to vector<16x1xf32>
    %940 = tpu.reciprocal %939 {approx = true} : vector<16x1xf32> -> vector<16x1xf32>
    %941 = vector.broadcast %940 : vector<16x1xf32> to vector<16x16xf32>
    %942 = arith.mulf %937, %941 : vector<16x16xf32>
    %943 = arith.truncf %942 : vector<16x16xf32> to vector<16x16xbf16>
    %944 = arith.truncf %928 : vector<16x32xf32> to vector<16x32xbf16>
    %cst_372 = arith.constant dense<0.000000e+00> : vector<16x32xf32>
    %945 = tpu.matmul %943, %944, %cst_372 {dimension_numbers = #tpu.dot_dimension_numbers<[1], [0], [0], [1], [0, 0, 1, 1], [], []>} : vector<16x16xbf16>, vector<16x32xbf16>, vector<16x32xf32> -> vector<16x32xf32>
    %946 = arith.addf %922, %945 : vector<16x32xf32>
    %c3024 = arith.constant 3024 : index
    %c0_373 = arith.constant 0 : index
    %947 = vector.load %arg4[%c3024, %c0_373] : memref<3312x128xbf16, #tpu.memory_space<vmem>>, vector<32x8xbf16>
    %cst_374 = arith.constant dense<0.000000e+00> : vector<16x8xf32>
    %948 = tpu.matmul %875, %947, %cst_374 {dimension_numbers = #tpu.dot_dimension_numbers<[1], [0], [0], [1], [0, 0, 1, 1], [], []>} : vector<16x32xbf16>, vector<32x8xbf16>, vector<16x8xf32> -> vector<16x8xf32>
    %c3056 = arith.constant 3056 : index
    %c0_375 = arith.constant 0 : index
    %949 = vector.load %arg4[%c3056, %c0_375] : memref<3312x128xbf16, #tpu.memory_space<vmem>>, vector<32x8xbf16>
    %cst_376 = arith.constant dense<0.000000e+00> : vector<16x8xf32>
    %950 = tpu.matmul %415, %949, %cst_376 {dimension_numbers = #tpu.dot_dimension_numbers<[1], [0], [0], [1], [0, 0, 1, 1], [], []>} : vector<16x32xbf16>, vector<32x8xbf16>, vector<16x8xf32> -> vector<16x8xf32>
    %c3088 = arith.constant 3088 : index
    %c0_377 = arith.constant 0 : index
    %951 = vector.load %arg4[%c3088, %c0_377] : memref<3312x128xbf16, #tpu.memory_space<vmem>>, vector<32x32xbf16>
    %cst_378 = arith.constant dense<0.000000e+00> : vector<16x32xf32>
    %952 = tpu.matmul %415, %951, %cst_378 {dimension_numbers = #tpu.dot_dimension_numbers<[1], [0], [0], [1], [0, 0, 1, 1], [], []>} : vector<16x32xbf16>, vector<32x32xbf16>, vector<16x32xf32> -> vector<16x32xf32>
    %953 = arith.truncf %948 : vector<16x8xf32> to vector<16x8xbf16>
    %954 = arith.truncf %950 : vector<16x8xf32> to vector<16x8xbf16>
    %cst_379 = arith.constant dense<0.000000e+00> : vector<16x16xf32>
    %955 = tpu.matmul %953, %954, %cst_379 {dimension_numbers = #tpu.dot_dimension_numbers<[1], [1], [0], [0], [0, 0, 1, 0], [], []>} : vector<16x8xbf16>, vector<16x8xbf16>, vector<16x16xf32> -> vector<16x16xf32>
    %956 = arith.addf %955, %31 : vector<16x16xf32>
    %cst_380 = arith.constant dense<0xFF800000> : vector<16xf32>
    %957 = vector.multi_reduction <maximumf>, %956, %cst_380 [1] : vector<16x16xf32> to vector<16xf32>
    %958 = vector.shape_cast %957 : vector<16xf32> to vector<16x1xf32>
    %959 = vector.broadcast %958 : vector<16x1xf32> to vector<16x16xf32>
    %960 = arith.subf %956, %959 : vector<16x16xf32>
    %961 = math.exp %960 : vector<16x16xf32>
    %cst_381 = arith.constant dense<0.000000e+00> : vector<16xf32>
    %962 = vector.multi_reduction <add>, %961, %cst_381 [1] : vector<16x16xf32> to vector<16xf32>
    %963 = vector.shape_cast %962 : vector<16xf32> to vector<16x1xf32>
    %964 = tpu.reciprocal %963 {approx = true} : vector<16x1xf32> -> vector<16x1xf32>
    %965 = vector.broadcast %964 : vector<16x1xf32> to vector<16x16xf32>
    %966 = arith.mulf %961, %965 : vector<16x16xf32>
    %967 = arith.truncf %966 : vector<16x16xf32> to vector<16x16xbf16>
    %968 = arith.truncf %952 : vector<16x32xf32> to vector<16x32xbf16>
    %cst_382 = arith.constant dense<0.000000e+00> : vector<16x32xf32>
    %969 = tpu.matmul %967, %968, %cst_382 {dimension_numbers = #tpu.dot_dimension_numbers<[1], [0], [0], [1], [0, 0, 1, 1], [], []>} : vector<16x16xbf16>, vector<16x32xbf16>, vector<16x32xf32> -> vector<16x32xf32>
    %970 = arith.addf %946, %969 : vector<16x32xf32>
    %971 = arith.truncf %970 : vector<16x32xf32> to vector<16x32xbf16>
    %c3120 = arith.constant 3120 : index
    %c0_383 = arith.constant 0 : index
    %972 = vector.load %arg4[%c3120, %c0_383] : memref<3312x128xbf16, #tpu.memory_space<vmem>>, vector<32x32xbf16>
    %cst_384 = arith.constant dense<0.000000e+00> : vector<16x32xf32>
    %973 = tpu.matmul %971, %972, %cst_384 {dimension_numbers = #tpu.dot_dimension_numbers<[1], [0], [0], [1], [0, 0, 1, 1], [], []>} : vector<16x32xbf16>, vector<32x32xbf16>, vector<16x32xf32> -> vector<16x32xf32>
    %c296 = arith.constant 296 : index
    %c0_385 = arith.constant 0 : index
    %974 = vector.load %arg5[%c296, %c0_385] : memref<440x128xf32, #tpu.memory_space<vmem>>, vector<1x32xf32>
    %975 = vector.broadcast %974 : vector<1x32xf32> to vector<16x32xf32>
    %976 = arith.addf %973, %975 : vector<16x32xf32>
    %977 = arith.extf %851 : vector<16x32xbf16> to vector<16x32xf32>
    %978 = arith.addf %977, %976 : vector<16x32xf32>
    %979 = arith.truncf %978 : vector<16x32xf32> to vector<16x32xbf16>
    %980 = arith.extf %979 : vector<16x32xbf16> to vector<16x32xf32>
    %cst_386 = arith.constant dense<0.000000e+00> : vector<16xf32>
    %981 = vector.multi_reduction <add>, %980, %cst_386 [1] : vector<16x32xf32> to vector<16xf32>
    %982 = vector.shape_cast %981 : vector<16xf32> to vector<16x1xf32>
    %cst_387 = arith.constant 3.200000e+01 : f32
    %983 = vector.broadcast %cst_387 : f32 to vector<16x1xf32>
    %984 = arith.divf %982, %983 : vector<16x1xf32>
    %985 = vector.broadcast %984 : vector<16x1xf32> to vector<16x32xf32>
    %986 = arith.subf %980, %985 : vector<16x32xf32>
    %987 = arith.mulf %986, %986 : vector<16x32xf32>
    %cst_388 = arith.constant dense<0.000000e+00> : vector<16xf32>
    %988 = vector.multi_reduction <add>, %987, %cst_388 [1] : vector<16x32xf32> to vector<16xf32>
    %989 = vector.shape_cast %988 : vector<16xf32> to vector<16x1xf32>
    %cst_389 = arith.constant 3.200000e+01 : f32
    %990 = vector.broadcast %cst_389 : f32 to vector<16x1xf32>
    %991 = arith.divf %989, %990 : vector<16x1xf32>
    %cst_390 = arith.constant 9.99999974E-6 : f32
    %992 = vector.broadcast %cst_390 : f32 to vector<16x1xf32>
    %993 = arith.addf %991, %992 : vector<16x1xf32>
    %994 = math.rsqrt %993 : vector<16x1xf32>
    %995 = vector.broadcast %994 : vector<16x1xf32> to vector<16x32xf32>
    %996 = arith.mulf %986, %995 : vector<16x32xf32>
    %c304_391 = arith.constant 304 : index
    %c0_392 = arith.constant 0 : index
    %997 = vector.load %arg5[%c304_391, %c0_392] : memref<440x128xf32, #tpu.memory_space<vmem>>, vector<1x32xf32>
    %998 = vector.broadcast %997 : vector<1x32xf32> to vector<16x32xf32>
    %999 = arith.mulf %996, %998 : vector<16x32xf32>
    %c312 = arith.constant 312 : index
    %c0_393 = arith.constant 0 : index
    %1000 = vector.load %arg5[%c312, %c0_393] : memref<440x128xf32, #tpu.memory_space<vmem>>, vector<1x32xf32>
    %1001 = vector.broadcast %1000 : vector<1x32xf32> to vector<16x32xf32>
    %1002 = arith.addf %999, %1001 : vector<16x32xf32>
    %1003 = arith.truncf %1002 : vector<16x32xf32> to vector<16x32xbf16>
    %c3152 = arith.constant 3152 : index
    %c0_394 = arith.constant 0 : index
    %1004 = vector.load %arg4[%c3152, %c0_394] : memref<3312x128xbf16, #tpu.memory_space<vmem>>, vector<32x128xbf16>
    %cst_395 = arith.constant dense<0.000000e+00> : vector<16x128xf32>
    %1005 = tpu.matmul %1003, %1004, %cst_395 {dimension_numbers = #tpu.dot_dimension_numbers<[1], [0], [0], [1], [0, 0, 1, 1], [], []>} : vector<16x32xbf16>, vector<32x128xbf16>, vector<16x128xf32> -> vector<16x128xf32>
    %c320 = arith.constant 320 : index
    %c0_396 = arith.constant 0 : index
    %1006 = vector.load %arg5[%c320, %c0_396] : memref<440x128xf32, #tpu.memory_space<vmem>>, vector<1x128xf32>
    %1007 = vector.broadcast %1006 : vector<1x128xf32> to vector<16x128xf32>
    %1008 = arith.addf %1005, %1007 : vector<16x128xf32>
    %cst_397 = arith.constant 5.000000e-01 : f32
    %1009 = vector.broadcast %cst_397 : f32 to vector<16x128xf32>
    %1010 = arith.mulf %1009, %1008 : vector<16x128xf32>
    %cst_398 = arith.constant 4.471500e-02 : f32
    %1011 = vector.broadcast %cst_398 : f32 to vector<16x128xf32>
    %1012 = arith.mulf %1011, %1008 : vector<16x128xf32>
    %1013 = arith.mulf %1012, %1008 : vector<16x128xf32>
    %1014 = arith.mulf %1013, %1008 : vector<16x128xf32>
    %1015 = arith.addf %1008, %1014 : vector<16x128xf32>
    %cst_399 = arith.constant 0.797884583 : f32
    %1016 = vector.broadcast %cst_399 : f32 to vector<16x128xf32>
    %1017 = arith.mulf %1016, %1015 : vector<16x128xf32>
    %1018 = math.tanh %1017 : vector<16x128xf32>
    %cst_400 = arith.constant 1.000000e+00 : f32
    %1019 = vector.broadcast %cst_400 : f32 to vector<16x128xf32>
    %1020 = arith.addf %1019, %1018 : vector<16x128xf32>
    %1021 = arith.mulf %1010, %1020 : vector<16x128xf32>
    %1022 = arith.truncf %1021 : vector<16x128xf32> to vector<16x128xbf16>
    %c3184 = arith.constant 3184 : index
    %c0_401 = arith.constant 0 : index
    %1023 = vector.load %arg4[%c3184, %c0_401] : memref<3312x128xbf16, #tpu.memory_space<vmem>>, vector<128x32xbf16>
    %cst_402 = arith.constant dense<0.000000e+00> : vector<16x32xf32>
    %1024 = tpu.matmul %1022, %1023, %cst_402 {dimension_numbers = #tpu.dot_dimension_numbers<[1], [0], [0], [1], [0, 0, 1, 1], [], []>} : vector<16x128xbf16>, vector<128x32xbf16>, vector<16x32xf32> -> vector<16x32xf32>
    %c328 = arith.constant 328 : index
    %c0_403 = arith.constant 0 : index
    %1025 = vector.load %arg5[%c328, %c0_403] : memref<440x128xf32, #tpu.memory_space<vmem>>, vector<1x32xf32>
    %1026 = vector.broadcast %1025 : vector<1x32xf32> to vector<16x32xf32>
    %1027 = arith.addf %1024, %1026 : vector<16x32xf32>
    %1028 = arith.extf %979 : vector<16x32xbf16> to vector<16x32xf32>
    %1029 = arith.addf %1028, %1027 : vector<16x32xf32>
    %1030 = arith.truncf %1029 : vector<16x32xf32> to vector<16x32xbf16>
    %1031 = arith.extf %1030 : vector<16x32xbf16> to vector<16x32xf32>
    %cst_404 = arith.constant dense<0.000000e+00> : vector<16xf32>
    %1032 = vector.multi_reduction <add>, %1031, %cst_404 [1] : vector<16x32xf32> to vector<16xf32>
    %1033 = vector.shape_cast %1032 : vector<16xf32> to vector<16x1xf32>
    %cst_405 = arith.constant 3.200000e+01 : f32
    %1034 = vector.broadcast %cst_405 : f32 to vector<16x1xf32>
    %1035 = arith.divf %1033, %1034 : vector<16x1xf32>
    %1036 = vector.broadcast %1035 : vector<16x1xf32> to vector<16x32xf32>
    %1037 = arith.subf %1031, %1036 : vector<16x32xf32>
    %1038 = arith.mulf %1037, %1037 : vector<16x32xf32>
    %cst_406 = arith.constant dense<0.000000e+00> : vector<16xf32>
    %1039 = vector.multi_reduction <add>, %1038, %cst_406 [1] : vector<16x32xf32> to vector<16xf32>
    %1040 = vector.shape_cast %1039 : vector<16xf32> to vector<16x1xf32>
    %cst_407 = arith.constant 3.200000e+01 : f32
    %1041 = vector.broadcast %cst_407 : f32 to vector<16x1xf32>
    %1042 = arith.divf %1040, %1041 : vector<16x1xf32>
    %cst_408 = arith.constant 9.99999974E-6 : f32
    %1043 = vector.broadcast %cst_408 : f32 to vector<16x1xf32>
    %1044 = arith.addf %1042, %1043 : vector<16x1xf32>
    %1045 = math.rsqrt %1044 : vector<16x1xf32>
    %1046 = vector.broadcast %1045 : vector<16x1xf32> to vector<16x32xf32>
    %1047 = arith.mulf %1037, %1046 : vector<16x32xf32>
    %c336_409 = arith.constant 336 : index
    %c0_410 = arith.constant 0 : index
    %1048 = vector.load %arg5[%c336_409, %c0_410] : memref<440x128xf32, #tpu.memory_space<vmem>>, vector<1x32xf32>
    %1049 = vector.broadcast %1048 : vector<1x32xf32> to vector<16x32xf32>
    %1050 = arith.mulf %1047, %1049 : vector<16x32xf32>
    %c344 = arith.constant 344 : index
    %c0_411 = arith.constant 0 : index
    %1051 = vector.load %arg5[%c344, %c0_411] : memref<440x128xf32, #tpu.memory_space<vmem>>, vector<1x32xf32>
    %1052 = vector.broadcast %1051 : vector<1x32xf32> to vector<16x32xf32>
    %1053 = arith.addf %1050, %1052 : vector<16x32xf32>
    %1054 = arith.truncf %1053 : vector<16x32xf32> to vector<16x32xbf16>
    %c144_412 = arith.constant 144 : index
    %c0_413 = arith.constant 0 : index
    %1055 = vector.load %arg4[%c144_412, %c0_413] : memref<3312x128xbf16, #tpu.memory_space<vmem>>, vector<32x128xbf16>
    %cst_414 = arith.constant dense<0.000000e+00> : vector<16x128xf32>
    %1056 = tpu.matmul %1054, %1055, %cst_414 {dimension_numbers = #tpu.dot_dimension_numbers<[1], [0], [0], [1], [0, 0, 1, 1], [], []>} : vector<16x32xbf16>, vector<32x128xbf16>, vector<16x128xf32> -> vector<16x128xf32>
    %c40 = arith.constant 40 : index
    %c0_415 = arith.constant 0 : index
    %1057 = vector.load %arg5[%c40, %c0_415] : memref<440x128xf32, #tpu.memory_space<vmem>>, vector<1x128xf32>
    %1058 = vector.broadcast %1057 : vector<1x128xf32> to vector<16x128xf32>
    %1059 = arith.addf %1056, %1058 : vector<16x128xf32>
    %c0_416 = arith.constant 0 : index
    %c0_417 = arith.constant 0 : index
    %1060 = vector.load %arg6[%c0_416, %c0_417] : memref<16x128xf32, #tpu.memory_space<vmem>>, vector<16x128xf32>
    tpu.vector_store %arg6[%c0_416, %c0_417], %1059 {strides = array<i32>} : memref<16x128xf32, #tpu.memory_space<vmem>>, vector<16x128xf32>,
    %c48_418 = arith.constant 48 : index
    %c0_419 = arith.constant 0 : index
    %1061 = vector.load %arg4[%c48_418, %c0_419] : memref<3312x128xbf16, #tpu.memory_space<vmem>>, vector<32x64xbf16>
    %cst_420 = arith.constant dense<0.000000e+00> : vector<2x64xf32>
    %1062 = tpu.matmul %7, %1061, %cst_420 {dimension_numbers = #tpu.dot_dimension_numbers<[1], [0], [0], [1], [0, 0, 1, 1], [], []>} : vector<2x32xbf16>, vector<32x64xbf16>, vector<2x64xf32> -> vector<2x64xf32>
    %c24 = arith.constant 24 : index
    %c0_421 = arith.constant 0 : index
    %1063 = vector.load %arg5[%c24, %c0_421] : memref<440x128xf32, #tpu.memory_space<vmem>>, vector<1x64xf32>
    %1064 = vector.broadcast %1063 : vector<1x64xf32> to vector<2x64xf32>
    %1065 = arith.addf %1062, %1064 : vector<2x64xf32>
    %cst_422 = arith.constant 0.000000e+00 : f32
    %1066 = vector.broadcast %cst_422 : f32 to vector<2x64xf32>
    %1067 = arith.maximumf %1065, %1066 : vector<2x64xf32>
    %1068 = math.absf %1065 : vector<2x64xf32>
    %cst_423 = arith.constant 0.000000e+00 : f32
    %1069 = vector.broadcast %cst_423 : f32 to vector<2x64xf32>
    %1070 = arith.subf %1069, %1068 : vector<2x64xf32>
    %1071 = math.exp %1070 : vector<2x64xf32>
    %cst_424 = arith.constant 1.000000e+00 : f32
    %1072 = vector.broadcast %cst_424 : f32 to vector<2x64xf32>
    %1073 = arith.addf %1072, %1071 : vector<2x64xf32>
    %1074 = math.log %1073 : vector<2x64xf32>
    %1075 = arith.addf %1067, %1074 : vector<2x64xf32>
    %1076 = math.tanh %1075 : vector<2x64xf32>
    %1077 = arith.mulf %1065, %1076 : vector<2x64xf32>
    %1078 = arith.truncf %1077 : vector<2x64xf32> to vector<2x64xbf16>
    %c80_425 = arith.constant 80 : index
    %c0_426 = arith.constant 0 : index
    %1079 = vector.load %arg4[%c80_425, %c0_426] : memref<3312x128xbf16, #tpu.memory_space<vmem>>, vector<64x128xbf16>
    %cst_427 = arith.constant dense<0.000000e+00> : vector<2x128xf32>
    %1080 = tpu.matmul %1078, %1079, %cst_427 {dimension_numbers = #tpu.dot_dimension_numbers<[1], [0], [0], [1], [0, 0, 1, 1], [], []>} : vector<2x64xbf16>, vector<64x128xbf16>, vector<2x128xf32> -> vector<2x128xf32>
    %c32_428 = arith.constant 32 : index
    %c0_429 = arith.constant 0 : index
    %1081 = vector.load %arg5[%c32_428, %c0_429] : memref<440x128xf32, #tpu.memory_space<vmem>>, vector<1x128xf32>
    %1082 = vector.broadcast %1081 : vector<1x128xf32> to vector<2x128xf32>
    %1083 = arith.addf %1080, %1082 : vector<2x128xf32>
    %c0_430 = arith.constant 0 : index
    %c0_431 = arith.constant 0 : index
    %1084 = vector.load %arg7[%c0_430, %c0_431] : memref<2x128xf32, #tpu.memory_space<vmem>>, vector<2x128xf32>
    tpu.vector_store %arg7[%c0_430, %c0_431], %1083 {strides = array<i32>} : memref<2x128xf32, #tpu.memory_space<vmem>>, vector<2x128xf32>,
    return
  }
}

</mosaic_0001>

<llo_original>
// kernel: mdt_forward.1
$region0: #{mdt_forward.1}
  #allocation0 [shape = 'u32[]', space=smem, size = 0x4, offset = 0x4, fixed_abs, tag = 'smem constant byte address 0x4 - core index']
  #allocation1 [shape = 'u32[144,128]{1,0:T(1,128)}', space=vmem, size = 0x12000, scoped, tag = 'internal scratch']
  %s0 = inlined_call_operand.vmem [shape: f32[14,16], index: 0, kind: input, shape index: {}]
  %s1 = inlined_call_operand.vmem [shape: f32[16,8], index: 1, kind: input, shape index: {}]
  %s2 = inlined_call_operand.vmem [shape: f32[2,16], index: 2, kind: input, shape index: {}]
  %s3 = inlined_call_operand.vmem [shape: f32[2,32], index: 3, kind: input, shape index: {}]
  %s4 = inlined_call_operand.hbm [shape: bf16[3312,128], index: 4, kind: input, shape index: {}]
  %s5 = inlined_call_operand.hbm [shape: f32[440,128], index: 5, kind: input, shape index: {}]
  %s6 = inlined_call_operand.vmem [shape: f32[16,128], index: 6, kind: output, shape index: {0}]
  %s7 = inlined_call_operand.hbm [shape: f32[2,128], index: 7, kind: output, shape index: {1}]
  %8 = xla_tuple %s6, %s7
  %s9 = sld [smem:[#allocation0]]
  $region50: #{mdt_forward.1} parent=0
    _
  %s11 = ssub.s32 1, %s9
  %s12 = scalar_select 0, %s11, %s9
  $region1: #{mdt_forward.1} parent=0
    #allocation2 [shape = 'u8[847872]{0}', space=vmem, size = 0xcf000, scoped, tag = 'input window, operand 4, single buffered']
    #allocation3 [shape = 's32[1]{0}', space=sflag, size = 0x4, scoped, tag = 'scoped memory for mdt_forward.1']
    #allocation4 [shape = 's32[1]{0}', space=sflag, size = 0x4, scoped, tag = 'scoped memory for mdt_forward.1']
    #allocation5 [shape = 'u8[225280]{0}', space=vmem, size = 0x37000, scoped, tag = 'input window, operand 5, single buffered']
    #allocation6 [shape = 's32[1]{0}', space=sflag, size = 0x4, scoped, tag = 'scoped memory for mdt_forward.1']
    #allocation7 [shape = 'u8[1024]{0}', space=vmem, size = 0x400, scoped, tag = 'output window, operand 1, single buffered']
    %13 = vsyncpa [#allocation3], 0
    %14 = vsyncpa [#allocation6], 0
    %15 = vsyncpa [#allocation4], 0
    // Predicated region
    $region2: #{mdt_forward.1} parent=1 // pred_check
      _
    $region3: #{mdt_forward.1} parent=1 // pred_check_branch
      %17 = sbr.rel (0) target = $region5
    $region4: #{mdt_forward.1} parent=1 // pred_region
      _
    $region5: #{mdt_forward.1} parent=1 // pred_fallthru
      _
    // Predicated region
    $region6: #{mdt_forward.1} parent=1 // pred_check
      _
    $region7: #{mdt_forward.1} parent=1 // pred_check_branch
      %19 = sbr.rel (0) target = $region9
    $region8: #{mdt_forward.1} parent=1 // pred_region
      _
    $region9: #{mdt_forward.1} parent=1 // pred_fallthru
      _
    // Predicated region
    $region10: #{mdt_forward.1} parent=1 // pred_check
      _
    $region11: #{mdt_forward.1} parent=1 // pred_check_branch
      %21 = sbr.rel (0) target = $region13
    $region12: #{mdt_forward.1} parent=1 // pred_region
      _
    $region13: #{mdt_forward.1} parent=1 // pred_fallthru
      _
    // Predicated region
    $region14: #{mdt_forward.1} parent=1 // pred_check
      _
    $region15: #{mdt_forward.1} parent=1 // pred_check_branch
      %23 = sbr.rel (0) target = $region17
    $region16: #{mdt_forward.1} parent=1 // pred_region
      _
    $region17: #{mdt_forward.1} parent=1 // pred_fallthru
      _
    // Predicated region
    $region18: #{mdt_forward.1} parent=1 // pred_check
      _
    $region19: #{mdt_forward.1} parent=1 // pred_check_branch
      %25 = sbr.rel (0) target = $region21
    $region20: #{mdt_forward.1} parent=1 // pred_region
      %s27 = ssub.s32 26496, 26496
      %28 = vsyncadd [#allocation3], %s27
      %s29 = sshll.u32 [#allocation2], 4
      %s30 = int_to_ptr.vmem [resolvable:$true] %s29
      %35 = dma.hbm_to_vmem [thread:$0]  %s4, 26496, %s30, [#allocation3], 64, 64, 4
    $region21: #{mdt_forward.1} parent=1 // pred_fallthru
      _
    // Predicated region
    $region22: #{mdt_forward.1} parent=1 // pred_check
      _
    $region23: #{mdt_forward.1} parent=1 // pred_check_branch
      %37 = sbr.rel (0) target = $region25
    $region24: #{mdt_forward.1} parent=1 // pred_region
      %s39 = ssub.s32 7040, 7040
      %40 = vsyncadd [#allocation6], %s39
      %s41 = sshll.u32 [#allocation5], 4
      %s42 = int_to_ptr.vmem [resolvable:$true] %s41
      %47 = dma.hbm_to_vmem [thread:$0]  %s5, 7040, %s42, [#allocation6], 128, 128, 8
    $region25: #{mdt_forward.1} parent=1 // pred_fallthru
      _
    // Predicated region
    $region26: #{mdt_forward.1} parent=1 // pred_check
      _
    $region27: #{mdt_forward.1} parent=1 // pred_check_branch
      %49 = sbr.rel (0) target = $region29
    $region28: #{mdt_forward.1} parent=1 // pred_region
      %50 = dma.done [#allocation3], 26496
    $region29: #{mdt_forward.1} parent=1 // pred_fallthru
      _
    // Predicated region
    $region30: #{mdt_forward.1} parent=1 // pred_check
      _
    $region31: #{mdt_forward.1} parent=1 // pred_check_branch
      %52 = sbr.rel (0) target = $region33
    $region32: #{mdt_forward.1} parent=1 // pred_region
      %53 = dma.done [#allocation6], 7040
    $region33: #{mdt_forward.1} parent=1 // pred_fallthru
      _
    %v55 = vld [vmem:[%s0] sm:$0xff]
    %v56 = vld [vmem:[%s0 + $0x8] sm:$0x3f]
    %v57 = vpack.c.bf16 %v56, %v55
    %v58 = vld [vmem:[%s1] sm:$0xff]
    %v59 = vld [vmem:[%s1 + $0x8] sm:$0xff]
    %v60 = vpack.c.bf16 %v59, %v58
    %v61 = vld [vmem:[%s2] sm:$0x3]
    %v62 = vpack.c.bf16 %v61, %v61
    %v63 = vld [vmem:[%s3] sm:$0x3]
    %v64 = vpack.c.bf16 %v63, %v63
    %v65 = vld [vmem:[#allocation2 + $0x8] sm:$0xf]
    %v66 = vld [vmem:[#allocation2 + $0xc] sm:$0xf]
    %v67 = vld [vmem:[#allocation5 + $0x8] sm:$0x1]
    %v68 = vlaneseq
    %v69 = vshrl.u32 %v68, 7
    %v70 = vsub.s32 0, %v69
    %v71 = vrot.slane %v67, %v70
    %v74 = vunpack.c.l.b16 %v65
    %v75 = vunpack.c.l.b16 %v66
    %v76 = vpack.c.b16 %v75, %v74
    %vm78 = vcmask 130048
    %v80 = vsel %vm78, %v62, 0
    %82 = vmatprep.subr.bf16.mxu0 0
    %83 = vmatpush1.bf16.msra.mxu0 0
    %84 = vmatprep.subr.bf16.mxu0 0
    %85 = vmatpush1.bf16.msra.mxu0 0
    %86 = vmatprep.subr.bf16.mxu0 0
    %87 = vmatpush1.bf16.msra.mxu0 0
    %88 = vmatprep.subr.bf16.mxu0 0
    %89 = vmatpush1.bf16.msra.mxu0 0
    %90 = vmatprep.subr.bf16.mxu0 0
    %91 = vmatpush1.bf16.msra.mxu0 0
    %92 = vmatprep.subr.bf16.mxu0 0
    %93 = vmatpush1.bf16.msra.mxu0 0
    %94 = vmatprep.subr.bf16.mxu0 0
    %95 = vmatpush1.bf16.msra.mxu0 0
    %96 = vmatprep.subr.bf16.mxu0 0
    %97 = vmatpush1.bf16.msra.mxu0 %v76
    %98 = vmatprep.subr.bf16.mxu0 0
    %99 = vmatpush2.bf16.msra.mxu0 0
    %100 = vmatprep.subr.bf16.mxu0 0
    %101 = vmatpush2.bf16.msra.mxu0 0
    %102 = vmatprep.subr.bf16.mxu0 0
    %103 = vmatpush2.bf16.msra.mxu0 0
    %104 = vmatprep.subr.bf16.mxu0 0
    %105 = vmatpush2.bf16.msra.mxu0 0
    %106 = vmatprep.subr.bf16.mxu0 0
    %107 = vmatpush2.bf16.msra.mxu0 0
    %108 = vmatprep.subr.bf16.mxu0 0
    %109 = vmatpush2.bf16.msra.mxu0 0
    %110 = vmatprep.subr.bf16.mxu0 0
    %111 = vmatpush2.bf16.msra.mxu0 0
    %112 = vmatprep.subr.bf16.mxu0 0
    %113 = vmatpush2.bf16.msra.mxu0 0
    %114 = vmatprep.mubr.bf16.mxu0 0
    %115 = vmatmul.mubr.bf16.gmra.mxu0 %v80
    %v116 = vpop.f32.mrf.mxu0
    %v117 = vadd.f32 %v71, %v116
    %v118 = vpop.f32.mrf.mxu0
    %v119 = vpop.f32.mrf.mxu0
    %v120 = vpop.f32.mrf.mxu0
    %121 = vdwg.mxu0
    %v122 = vld [vmem:[#allocation5 + $0x160] sm:$0x3]
    %v123 = vadd.f32 %v117, %v122
    %v124 = vld [vmem:[#allocation2] sm:$0xf]
    %v125 = vld [vmem:[#allocation2 + $0x4] sm:$0xf]
    %v126 = vld [vmem:[#allocation5] sm:$0x1]
    %v127 = vlaneseq
    %v128 = vshrl.u32 %v127, 7
    %v129 = vsub.s32 0, %v128
    %v130 = vrot.slane %v126, %v129
    %v133 = vunpack.c.l.b16 %v124
    %v134 = vunpack.c.l.b16 %v125
    %v135 = vpack.c.b16 %v134, %v133
    %v138 = vsel %vm78, %v57, 0
    %140 = vmatprep.subr.bf16.mxu0 0
    %141 = vmatpush1.bf16.msra.mxu0 0
    %142 = vmatprep.subr.bf16.mxu0 0
    %143 = vmatpush1.bf16.msra.mxu0 0
    %144 = vmatprep.subr.bf16.mxu0 0
    %145 = vmatpush1.bf16.msra.mxu0 0
    %146 = vmatprep.subr.bf16.mxu0 0
    %147 = vmatpush1.bf16.msra.mxu0 0
    %148 = vmatprep.subr.bf16.mxu0 0
    %149 = vmatpush1.bf16.msra.mxu0 0
    %150 = vmatprep.subr.bf16.mxu0 0
    %151 = vmatpush1.bf16.msra.mxu0 0
    %152 = vmatprep.subr.bf16.mxu0 0
    %153 = vmatpush1.bf16.msra.mxu0 0
    %154 = vmatprep.subr.bf16.mxu0 0
    %155 = vmatpush1.bf16.msra.mxu0 %v135
    %156 = vmatprep.subr.bf16.mxu0 0
    %157 = vmatpush2.bf16.msra.mxu0 0
    %158 = vmatprep.subr.bf16.mxu0 0
    %159 = vmatpush2.bf16.msra.mxu0 0
    %160 = vmatprep.subr.bf16.mxu0 0
    %161 = vmatpush2.bf16.msra.mxu0 0
    %162 = vmatprep.subr.bf16.mxu0 0
    %163 = vmatpush2.bf16.msra.mxu0 0
    %164 = vmatprep.subr.bf16.mxu0 0
    %165 = vmatpush2.bf16.msra.mxu0 0
    %166 = vmatprep.subr.bf16.mxu0 0
    %167 = vmatpush2.bf16.msra.mxu0 0
    %168 = vmatprep.subr.bf16.mxu0 0
    %169 = vmatpush2.bf16.msra.mxu0 0
    %170 = vmatprep.subr.bf16.mxu0 0
    %171 = vmatpush2.bf16.msra.mxu0 0
    %172 = vmatprep.mubr.bf16.mxu0 0
    %173 = vmatmul.mubr.bf16.gmra.mxu0 %v138
    %v174 = vpop.f32.mrf.mxu0
    %v175 = vadd.f32 %v130, %v174
    %v176 = vpop.f32.mrf.mxu0
    %v177 = vpop.f32.mrf.mxu0
    %v178 = vadd.f32 %v130, %v177
    %v179 = vpop.f32.mrf.mxu0
    %180 = vdwg.mxu0
    %v181 = vld [vmem:[#allocation5 + $0x168] sm:$0xff]
    %v182 = vld [vmem:[#allocation5 + $0x170] sm:$0x3f]
    %v183 = vadd.f32 %v175, %v181
    %v184 = vadd.f32 %v178, %v182
    %v185 = vld [vmem:[#allocation2 + $0x10] sm:$0xf]
    %v186 = vld [vmem:[#allocation5 + $0x10] sm:$0x1]
    %v187 = vlaneseq
    %v188 = vshrl.u32 %v187, 7
    %v189 = vsub.s32 0, %v188
    %v190 = vrot.slane %v186, %v189
    %vm191 = vcmask 64512
    %v193 = vsel %vm191, %v60, 0
    %vm195 = vcmask 1043456
    %v197 = vsel %vm195, %v185, 0
    %199 = vmatprep.subr.bf16.mxu0 0
    %200 = vmatpush1.bf16.msra.mxu0 0
    %201 = vmatprep.subr.bf16.mxu0 0
    %202 = vmatpush1.bf16.msra.mxu0 0
    %203 = vmatprep.subr.bf16.mxu0 0
    %204 = vmatpush1.bf16.msra.mxu0 0
    %205 = vmatprep.subr.bf16.mxu0 0
    %206 = vmatpush1.bf16.msra.mxu0 0
    %207 = vmatprep.subr.bf16.mxu0 0
    %208 = vmatpush1.bf16.msra.mxu0 0
    %209 = vmatprep.subr.bf16.mxu0 0
    %210 = vmatpush1.bf16.msra.mxu0 0
    %211 = vmatprep.subr.bf16.mxu0 0
    %212 = vmatpush1.bf16.msra.mxu0 0
    %213 = vmatprep.subr.bf16.mxu0 0
    %214 = vmatpush1.bf16.msra.mxu0 %v197
    %215 = vmatprep.subr.bf16.mxu0 0
    %216 = vmatpush2.bf16.msra.mxu0 0
    %217 = vmatprep.subr.bf16.mxu0 0
    %218 = vmatpush2.bf16.msra.mxu0 0
    %219 = vmatprep.subr.bf16.mxu0 0
    %220 = vmatpush2.bf16.msra.mxu0 0
    %221 = vmatprep.subr.bf16.mxu0 0
    %222 = vmatpush2.bf16.msra.mxu0 0
    %223 = vmatprep.subr.bf16.mxu0 0
    %224 = vmatpush2.bf16.msra.mxu0 0
    %225 = vmatprep.subr.bf16.mxu0 0
    %226 = vmatpush2.bf16.msra.mxu0 0
    %227 = vmatprep.subr.bf16.mxu0 0
    %228 = vmatpush2.bf16.msra.mxu0 0
    %229 = vmatprep.subr.bf16.mxu0 0
    %230 = vmatpush2.bf16.msra.mxu0 0
    %231 = vmatprep.mubr.bf16.mxu0 0
    %232 = vmatmul.mubr.bf16.gmra.mxu0 %v193
    %v233 = vpop.f32.mrf.mxu0
    %v234 = vadd.f32 %v190, %v233
    %v235 = vpop.f32.mrf.mxu0
    %v236 = vpop.f32.mrf.mxu0
    %v237 = vadd.f32 %v190, %v236
    %v238 = vpop.f32.mrf.mxu0
    %239 = vdwg.mxu0
    %v240 = vld [vmem:[#allocation5 + $0x178] sm:$0xff]
    %v241 = vld [vmem:[#allocation5 + $0x180] sm:$0xff]
    %v242 = vadd.f32 %v234, %v240
    %v243 = vadd.f32 %v237, %v241
    %v244 = vld [vmem:[#allocation5 + $0x188] sm:$0xff]
    %v245 = vld [vmem:[#allocation5 + $0x190] sm:$0xff]
    %v246 = vld [vmem:[#allocation5 + $0x198] sm:$0xff]
    %v247 = vld [vmem:[#allocation5 + $0x1a0] sm:$0xff]
    %v248 = vld [vmem:[#allocation5 + $0x1a8] sm:$0xff]
    %v249 = vld [vmem:[#allocation5 + $0x1b0] sm:$0xff]
    %vm252 = vcmask 1041408
    %v253 = vrot.slane %v183, 6
    %v254 = vrot.slane %v184, 6
    %v255 = vsel %vm252, %v253, %v254
    %v258 = vsel %vm252, %v123, %v253
    %v259 = vpack.c.bf16 %v255, %v258
    %v260 = vunpack.c.l.bf16 %v259
    %v261 = vunpack.c.h.bf16 %v259
    %vm262 = vcmask 261120
    %v263 = vsel %vm262, %v260, 0.0
    %264 = vadd.xlane.f32.xlu0 %v263
    %v265 = vpop.xlane.xlu0 %264
    %v266 = vsel %vm262, %v261, 0.0
    %267 = vadd.xlane.f32.xlu0 %v266
    %v268 = vpop.xlane.xlu0 %267
    %v269 = vrcp.pop 32.0
    %v270 = vmul.f32 %v265, %v269
    %v271 = vmul.f32 %v268, %v269
    %v272 = vsub.f32 %v260, %v270
    %v273 = vsub.f32 %v261, %v271
    %v274 = vmul.f32 %v272, %v272
    %v275 = vmul.f32 %v273, %v273
    %v276 = vsel %vm262, %v274, 0.0
    %277 = vadd.xlane.f32.xlu0 %v276
    %v278 = vpop.xlane.xlu0 %277
    %v279 = vsel %vm262, %v275, 0.0
    %280 = vadd.xlane.f32.xlu0 %v279
    %v281 = vpop.xlane.xlu0 %280
    %v282 = vmul.f32 %v278, %v269
    %v283 = vmul.f32 %v281, %v269
    %v284 = vadd.f32 %v282, 1e-05
    %v285 = vadd.f32 %v283, 1e-05
    %v286 = vrsqrt.pop %v284
    %v287 = vrsqrt.pop %v285
    %v288 = vmul.f32 %v272, %v286
    %v289 = vmul.f32 %v273, %v287
    %v290 = vld [vmem:[#allocation5 + $0x30] sm:$0x1]
    %v291 = vlaneseq
    %v292 = vshrl.u32 %v291, 7
    %v293 = vsub.s32 0, %v292
    %v294 = vrot.slane %v290, %v293
    %v295 = vmul.f32 %v288, %v294
    %v296 = vmul.f32 %v289, %v294
    %v297 = vld [vmem:[#allocation5 + $0x38] sm:$0x1]
    %v298 = vlaneseq
    %v299 = vshrl.u32 %v298, 7
    %v300 = vsub.s32 0, %v299
    %v301 = vrot.slane %v297, %v300
    %v302 = vadd.f32 %v295, %v301
    %v303 = vadd.f32 %v296, %v301
    %v304 = vpack.c.bf16 %v303, %v302
    %v305 = vld [vmem:[#allocation2 + $0x58] sm:$0xf]
    %v306 = vld [vmem:[#allocation2 + $0x5c] sm:$0xf]
    %v307 = vld [vmem:[#allocation2 + $0x60] sm:$0xf]
    %v308 = vld [vmem:[#allocation2 + $0x64] sm:$0xf]
    %v313 = vunpack.c.l.b16 %v305
    %v314 = vunpack.c.l.b16 %v306
    %v315 = vunpack.c.l.b16 %v307
    %v316 = vunpack.c.l.b16 %v308
    %v317 = vpack.c.b16 %v314, %v313
    %v318 = vpack.c.b16 %v316, %v315
    %v322 = vsel %vm262, %v304, 0
    %324 = vmatprep.subr.bf16.mxu0 0
    %325 = vmatpush1.bf16.msra.mxu0 0
    %326 = vmatprep.subr.bf16.mxu0 0
    %327 = vmatpush1.bf16.msra.mxu0 0
    %328 = vmatprep.subr.bf16.mxu0 0
    %329 = vmatpush1.bf16.msra.mxu0 0
    %330 = vmatprep.subr.bf16.mxu0 0
    %331 = vmatpush1.bf16.msra.mxu0 0
    %332 = vmatprep.subr.bf16.mxu0 0
    %333 = vmatpush1.bf16.msra.mxu0 0
    %334 = vmatprep.subr.bf16.mxu0 0
    %335 = vmatpush1.bf16.msra.mxu0 0
    %336 = vmatprep.subr.bf16.mxu0 0
    %337 = vmatpush1.bf16.msra.mxu0 %v318
    %338 = vmatprep.subr.bf16.mxu0 0
    %339 = vmatpush1.bf16.msra.mxu0 %v317
    %340 = vmatprep.subr.bf16.mxu0 0
    %341 = vmatpush2.bf16.msra.mxu0 0
    %342 = vmatprep.subr.bf16.mxu0 0
    %343 = vmatpush2.bf16.msra.mxu0 0
    %344 = vmatprep.subr.bf16.mxu0 0
    %345 = vmatpush2.bf16.msra.mxu0 0
    %346 = vmatprep.subr.bf16.mxu0 0
    %347 = vmatpush2.bf16.msra.mxu0 0
    %348 = vmatprep.subr.bf16.mxu0 0
    %349 = vmatpush2.bf16.msra.mxu0 0
    %350 = vmatprep.subr.bf16.mxu0 0
    %351 = vmatpush2.bf16.msra.mxu0 0
    %352 = vmatprep.subr.bf16.mxu0 0
    %353 = vmatpush2.bf16.msra.mxu0 0
    %354 = vmatprep.subr.bf16.mxu0 0
    %355 = vmatpush2.bf16.msra.mxu0 0
    %356 = vmatprep.mubr.bf16.mxu0 0
    %357 = vmatmul.mubr.bf16.gmra.mxu0 %v322
    %v358 = vpop.f32.mrf.mxu0
    %v359 = vadd.f32 0.0, %v358
    %v360 = vpop.f32.mrf.mxu0
    %v361 = vpop.f32.mrf.mxu0
    %v362 = vadd.f32 0.0, %v361
    %v363 = vpop.f32.mrf.mxu0
    %364 = vdwg.mxu0
    %v365 = vld [vmem:[#allocation2 + $0x68] sm:$0xf]
    %v366 = vld [vmem:[#allocation2 + $0x6c] sm:$0xf]
    %v367 = vld [vmem:[#allocation2 + $0x70] sm:$0xf]
    %v368 = vld [vmem:[#allocation2 + $0x74] sm:$0xf]
    %v373 = vunpack.c.l.b16 %v365
    %v374 = vunpack.c.l.b16 %v366
    %v375 = vunpack.c.l.b16 %v367
    %v376 = vunpack.c.l.b16 %v368
    %v377 = vpack.c.b16 %v374, %v373
    %v378 = vpack.c.b16 %v376, %v375
    %381 = vmatprep.subr.bf16.mxu0 0
    %382 = vmatpush1.bf16.msra.mxu0 0
    %383 = vmatprep.subr.bf16.mxu0 0
    %384 = vmatpush1.bf16.msra.mxu0 0
    %385 = vmatprep.subr.bf16.mxu0 0
    %386 = vmatpush1.bf16.msra.mxu0 0
    %387 = vmatprep.subr.bf16.mxu0 0
    %388 = vmatpush1.bf16.msra.mxu0 0
    %389 = vmatprep.subr.bf16.mxu0 0
    %390 = vmatpush1.bf16.msra.mxu0 0
    %391 = vmatprep.subr.bf16.mxu0 0
    %392 = vmatpush1.bf16.msra.mxu0 0
    %393 = vmatprep.subr.bf16.mxu0 0
    %394 = vmatpush1.bf16.msra.mxu0 %v378
    %395 = vmatprep.subr.bf16.mxu0 0
    %396 = vmatpush1.bf16.msra.mxu0 %v377
    %397 = vmatprep.subr.bf16.mxu0 0
    %398 = vmatpush2.bf16.msra.mxu0 0
    %399 = vmatprep.subr.bf16.mxu0 0
    %400 = vmatpush2.bf16.msra.mxu0 0
    %401 = vmatprep.subr.bf16.mxu0 0
    %402 = vmatpush2.bf16.msra.mxu0 0
    %403 = vmatprep.subr.bf16.mxu0 0
    %404 = vmatpush2.bf16.msra.mxu0 0
    %405 = vmatprep.subr.bf16.mxu0 0
    %406 = vmatpush2.bf16.msra.mxu0 0
    %407 = vmatprep.subr.bf16.mxu0 0
    %408 = vmatpush2.bf16.msra.mxu0 0
    %409 = vmatprep.subr.bf16.mxu0 0
    %410 = vmatpush2.bf16.msra.mxu0 0
    %411 = vmatprep.subr.bf16.mxu0 0
    %412 = vmatpush2.bf16.msra.mxu0 0
    %413 = vmatprep.mubr.bf16.mxu0 0
    %414 = vmatmul.mubr.bf16.gmra.mxu0 %v322
    %v415 = vpop.f32.mrf.mxu0
    %v416 = vadd.f32 0.0, %v415
    %v417 = vpop.f32.mrf.mxu0
    %v418 = vpop.f32.mrf.mxu0
    %v419 = vadd.f32 0.0, %v418
    %v420 = vpop.f32.mrf.mxu0
    %421 = vdwg.mxu0
    %v422 = vld [vmem:[#allocation2 + $0x78] sm:$0xf]
    %v423 = vld [vmem:[#allocation2 + $0x7c] sm:$0xf]
    %v424 = vld [vmem:[#allocation2 + $0x80] sm:$0xf]
    %v425 = vld [vmem:[#allocation2 + $0x84] sm:$0xf]
    %v430 = vunpack.c.l.b16 %v422
    %v431 = vunpack.c.l.b16 %v423
    %v432 = vunpack.c.l.b16 %v424
    %v433 = vunpack.c.l.b16 %v425
    %v434 = vpack.c.b16 %v431, %v430
    %v435 = vpack.c.b16 %v433, %v432
    %438 = vmatprep.subr.bf16.mxu0 0
    %439 = vmatpush1.bf16.msra.mxu0 0
    %440 = vmatprep.subr.bf16.mxu0 0
    %441 = vmatpush1.bf16.msra.mxu0 0
    %442 = vmatprep.subr.bf16.mxu0 0
    %443 = vmatpush1.bf16.msra.mxu0 0
    %444 = vmatprep.subr.bf16.mxu0 0
    %445 = vmatpush1.bf16.msra.mxu0 0
    %446 = vmatprep.subr.bf16.mxu0 0
    %447 = vmatpush1.bf16.msra.mxu0 0
    %448 = vmatprep.subr.bf16.mxu0 0
    %449 = vmatpush1.bf16.msra.mxu0 0
    %450 = vmatprep.subr.bf16.mxu0 0
    %451 = vmatpush1.bf16.msra.mxu0 %v435
    %452 = vmatprep.subr.bf16.mxu0 0
    %453 = vmatpush1.bf16.msra.mxu0 %v434
    %454 = vmatprep.subr.bf16.mxu0 0
    %455 = vmatpush2.bf16.msra.mxu0 0
    %456 = vmatprep.subr.bf16.mxu0 0
    %457 = vmatpush2.bf16.msra.mxu0 0
    %458 = vmatprep.subr.bf16.mxu0 0
    %459 = vmatpush2.bf16.msra.mxu0 0
    %460 = vmatprep.subr.bf16.mxu0 0
    %461 = vmatpush2.bf16.msra.mxu0 0
    %462 = vmatprep.subr.bf16.mxu0 0
    %463 = vmatpush2.bf16.msra.mxu0 0
    %464 = vmatprep.subr.bf16.mxu0 0
    %465 = vmatpush2.bf16.msra.mxu0 0
    %466 = vmatprep.subr.bf16.mxu0 0
    %467 = vmatpush2.bf16.msra.mxu0 0
    %468 = vmatprep.subr.bf16.mxu0 0
    %469 = vmatpush2.bf16.msra.mxu0 0
    %470 = vmatprep.mubr.bf16.mxu0 0
    %471 = vmatmul.mubr.bf16.gmra.mxu0 %v322
    %v472 = vpop.f32.mrf.mxu0
    %v473 = vadd.f32 0.0, %v472
    %v474 = vpop.f32.mrf.mxu0
    %v475 = vpop.f32.mrf.mxu0
    %v476 = vadd.f32 0.0, %v475
    %v477 = vpop.f32.mrf.mxu0
    %478 = vdwg.mxu0
    %v479 = vpack.c.bf16 %v362, %v359
    %v480 = vpack.c.bf16 %v419, %v416
    %v482 = vsel %vm191, %v479, 0
    %v485 = vsel %vm191, %v480, 0
    %487 = vmatprep.subr.bf16.mxu0 0
    %488 = vmatpush1.bf16.xpose.msra.mxu0 0
    %489 = vmatprep.subr.bf16.mxu0 0
    %490 = vmatpush1.bf16.xpose.msra.mxu0 0
    %491 = vmatprep.subr.bf16.mxu0 0
    %492 = vmatpush1.bf16.xpose.msra.mxu0 0
    %493 = vmatprep.subr.bf16.mxu0 0
    %494 = vmatpush1.bf16.xpose.msra.mxu0 0
    %495 = vmatprep.subr.bf16.mxu0 0
    %496 = vmatpush1.bf16.xpose.msra.mxu0 0
    %497 = vmatprep.subr.bf16.mxu0 0
    %498 = vmatpush1.bf16.xpose.msra.mxu0 0
    %499 = vmatprep.subr.bf16.mxu0 0
    %500 = vmatpush1.bf16.xpose.msra.mxu0 0
    %501 = vmatprep.subr.bf16.mxu0 0
    %502 = vmatpush1.bf16.xpose.msra.mxu0 %v485
    %503 = vmatprep.subr.bf16.mxu0 0
    %504 = vmatpush2.bf16.xpose.msra.mxu0 0
    %505 = vmatprep.subr.bf16.mxu0 0
    %506 = vmatpush2.bf16.xpose.msra.mxu0 0
    %507 = vmatprep.subr.bf16.mxu0 0
    %508 = vmatpush2.bf16.xpose.msra.mxu0 0
    %509 = vmatprep.subr.bf16.mxu0 0
    %510 = vmatpush2.bf16.xpose.msra.mxu0 0
    %511 = vmatprep.subr.bf16.mxu0 0
    %512 = vmatpush2.bf16.xpose.msra.mxu0 0
    %513 = vmatprep.subr.bf16.mxu0 0
    %514 = vmatpush2.bf16.xpose.msra.mxu0 0
    %515 = vmatprep.subr.bf16.mxu0 0
    %516 = vmatpush2.bf16.xpose.msra.mxu0 0
    %517 = vmatprep.subr.bf16.mxu0 0
    %518 = vmatpush2.bf16.xpose.msra.mxu0 0
    %519 = vmatprep.mubr.bf16.mxu0 0
    %520 = vmatmul.mubr.bf16.gmra.mxu0 %v482
    %v521 = vpop.f32.mrf.mxu0
    %v522 = vadd.f32 %v244, %v521
    %v523 = vpop.f32.mrf.mxu0
    %v524 = vpop.f32.mrf.mxu0
    %v525 = vadd.f32 %v245, %v524
    %v526 = vpop.f32.mrf.mxu0
    %527 = vdwg.mxu0
    %v528 = vsel %vm78, %v522, -inf
    %529 = vmax.xlane.f32.xlu0 %v528
    %v530 = vpop.xlane.xlu0 %529
    %v531 = vsel %vm78, %v525, -inf
    %532 = vmax.xlane.f32.xlu0 %v531
    %v533 = vpop.xlane.xlu0 %532
    %v534 = vsub.f32 %v522, %v530
    %v535 = vsub.f32 %v525, %v533
    %v536 = vmul.f32 %v534, 1.442695
    %v537 = vpow.pop %v536
    %v538 = vmul.f32 %v535, 1.442695
    %v539 = vpow.pop %v538
    %v540 = vsel %vm78, %v537, 0.0
    %541 = vadd.xlane.f32.xlu0 %v540
    %v542 = vpop.xlane.xlu0 %541
    %v543 = vsel %vm78, %v539, 0.0
    %544 = vadd.xlane.f32.xlu0 %v543
    %v545 = vpop.xlane.xlu0 %544
    %v546 = vrcp.pop %v542
    %v547 = vrcp.pop %v545
    %v548 = vmul.f32 %v537, %v546
    %v549 = vmul.f32 %v539, %v547
    %v550 = vpack.c.bf16 %v549, %v548
    %v551 = vpack.c.bf16 %v476, %v473
    %v552 = vld [vmem:[#allocation2 + $0x88] sm:$0xf]
    %v553 = vld [vmem:[#allocation2 + $0x8c] sm:$0xf]
    %v554 = vld [vmem:[#allocation2 + $0x90] sm:$0xf]
    %v555 = vld [vmem:[#allocation2 + $0x94] sm:$0xf]
    %v560 = vunpack.c.l.b16 %v552
    %v561 = vunpack.c.l.b16 %v553
    %v562 = vunpack.c.l.b16 %v554
    %v563 = vunpack.c.l.b16 %v555
    %v564 = vpack.c.b16 %v561, %v560
    %v565 = vpack.c.b16 %v563, %v562
    %568 = vmatprep.subr.bf16.mxu0 0
    %569 = vmatpush1.bf16.msra.mxu0 0
    %570 = vmatprep.subr.bf16.mxu0 0
    %571 = vmatpush1.bf16.msra.mxu0 0
    %572 = vmatprep.subr.bf16.mxu0 0
    %573 = vmatpush1.bf16.msra.mxu0 0
    %574 = vmatprep.subr.bf16.mxu0 0
    %575 = vmatpush1.bf16.msra.mxu0 0
    %576 = vmatprep.subr.bf16.mxu0 0
    %577 = vmatpush1.bf16.msra.mxu0 0
    %578 = vmatprep.subr.bf16.mxu0 0
    %579 = vmatpush1.bf16.msra.mxu0 0
    %580 = vmatprep.subr.bf16.mxu0 0
    %581 = vmatpush1.bf16.msra.mxu0 %v565
    %582 = vmatprep.subr.bf16.mxu0 0
    %583 = vmatpush1.bf16.msra.mxu0 %v564
    %584 = vmatprep.subr.bf16.mxu0 0
    %585 = vmatpush2.bf16.msra.mxu0 0
    %586 = vmatprep.subr.bf16.mxu0 0
    %587 = vmatpush2.bf16.msra.mxu0 0
    %588 = vmatprep.subr.bf16.mxu0 0
    %589 = vmatpush2.bf16.msra.mxu0 0
    %590 = vmatprep.subr.bf16.mxu0 0
    %591 = vmatpush2.bf16.msra.mxu0 0
    %592 = vmatprep.subr.bf16.mxu0 0
    %593 = vmatpush2.bf16.msra.mxu0 0
    %594 = vmatprep.subr.bf16.mxu0 0
    %595 = vmatpush2.bf16.msra.mxu0 0
    %596 = vmatprep.subr.bf16.mxu0 0
    %597 = vmatpush2.bf16.msra.mxu0 0
    %598 = vmatprep.subr.bf16.mxu0 0
    %599 = vmatpush2.bf16.msra.mxu0 0
    %600 = vmatprep.mubr.bf16.mxu0 0
    %601 = vmatmul.mubr.bf16.gmra.mxu0 %v322
    %v602 = vpop.f32.mrf.mxu0
    %v603 = vadd.f32 0.0, %v602
    %v604 = vpop.f32.mrf.mxu0
    %v605 = vpop.f32.mrf.mxu0
    %v606 = vadd.f32 0.0, %v605
    %v607 = vpop.f32.mrf.mxu0
    %608 = vdwg.mxu0
    %v609 = vld [vmem:[#allocation2 + $0x98] sm:$0xf]
    %v610 = vld [vmem:[#allocation2 + $0x9c] sm:$0xf]
    %v611 = vld [vmem:[#allocation2 + $0xa0] sm:$0xf]
    %v612 = vld [vmem:[#allocation2 + $0xa4] sm:$0xf]
    %v617 = vunpack.c.l.b16 %v609
    %v618 = vunpack.c.l.b16 %v610
    %v619 = vunpack.c.l.b16 %v611
    %v620 = vunpack.c.l.b16 %v612
    %v621 = vpack.c.b16 %v618, %v617
    %v622 = vpack.c.b16 %v620, %v619
    %625 = vmatprep.subr.bf16.mxu0 0
    %626 = vmatpush1.bf16.msra.mxu0 0
    %627 = vmatprep.subr.bf16.mxu0 0
    %628 = vmatpush1.bf16.msra.mxu0 0
    %629 = vmatprep.subr.bf16.mxu0 0
    %630 = vmatpush1.bf16.msra.mxu0 0
    %631 = vmatprep.subr.bf16.mxu0 0
    %632 = vmatpush1.bf16.msra.mxu0 0
    %633 = vmatprep.subr.bf16.mxu0 0
    %634 = vmatpush1.bf16.msra.mxu0 0
    %635 = vmatprep.subr.bf16.mxu0 0
    %636 = vmatpush1.bf16.msra.mxu0 0
    %637 = vmatprep.subr.bf16.mxu0 0
    %638 = vmatpush1.bf16.msra.mxu0 %v622
    %639 = vmatprep.subr.bf16.mxu0 0
    %640 = vmatpush1.bf16.msra.mxu0 %v621
    %641 = vmatprep.subr.bf16.mxu0 0
    %642 = vmatpush2.bf16.msra.mxu0 0
    %643 = vmatprep.subr.bf16.mxu0 0
    %644 = vmatpush2.bf16.msra.mxu0 0
    %645 = vmatprep.subr.bf16.mxu0 0
    %646 = vmatpush2.bf16.msra.mxu0 0
    %647 = vmatprep.subr.bf16.mxu0 0
    %648 = vmatpush2.bf16.msra.mxu0 0
    %649 = vmatprep.subr.bf16.mxu0 0
    %650 = vmatpush2.bf16.msra.mxu0 0
    %651 = vmatprep.subr.bf16.mxu0 0
    %652 = vmatpush2.bf16.msra.mxu0 0
    %653 = vmatprep.subr.bf16.mxu0 0
    %654 = vmatpush2.bf16.msra.mxu0 0
    %655 = vmatprep.subr.bf16.mxu0 0
    %656 = vmatpush2.bf16.msra.mxu0 0
    %657 = vmatprep.mubr.bf16.mxu0 0
    %658 = vmatmul.mubr.bf16.gmra.mxu0 %v322
    %v659 = vpop.f32.mrf.mxu0
    %v660 = vadd.f32 0.0, %v659
    %v661 = vpop.f32.mrf.mxu0
    %v662 = vpop.f32.mrf.mxu0
    %v663 = vadd.f32 0.0, %v662
    %v664 = vpop.f32.mrf.mxu0
    %665 = vdwg.mxu0
    %v666 = vld [vmem:[#allocation2 + $0xa8] sm:$0xf]
    %v667 = vld [vmem:[#allocation2 + $0xac] sm:$0xf]
    %v668 = vld [vmem:[#allocation2 + $0xb0] sm:$0xf]
    %v669 = vld [vmem:[#allocation2 + $0xb4] sm:$0xf]
    %v674 = vunpack.c.l.b16 %v666
    %v675 = vunpack.c.l.b16 %v667
    %v676 = vunpack.c.l.b16 %v668
    %v677 = vunpack.c.l.b16 %v669
    %v678 = vpack.c.b16 %v675, %v674
    %v679 = vpack.c.b16 %v677, %v676
    %682 = vmatprep.subr.bf16.mxu0 0
    %683 = vmatpush1.bf16.msra.mxu0 0
    %684 = vmatprep.subr.bf16.mxu0 0
    %685 = vmatpush1.bf16.msra.mxu0 0
    %686 = vmatprep.subr.bf16.mxu0 0
    %687 = vmatpush1.bf16.msra.mxu0 0
    %688 = vmatprep.subr.bf16.mxu0 0
    %689 = vmatpush1.bf16.msra.mxu0 0
    %690 = vmatprep.subr.bf16.mxu0 0
    %691 = vmatpush1.bf16.msra.mxu0 0
    %692 = vmatprep.subr.bf16.mxu0 0
    %693 = vmatpush1.bf16.msra.mxu0 0
    %694 = vmatprep.subr.bf16.mxu0 0
    %695 = vmatpush1.bf16.msra.mxu0 %v679
    %696 = vmatprep.subr.bf16.mxu0 0
    %697 = vmatpush1.bf16.msra.mxu0 %v678
    %698 = vmatprep.subr.bf16.mxu0 0
    %699 = vmatpush2.bf16.msra.mxu0 0
    %700 = vmatprep.subr.bf16.mxu0 0
    %701 = vmatpush2.bf16.msra.mxu0 0
    %702 = vmatprep.subr.bf16.mxu0 0
    %703 = vmatpush2.bf16.msra.mxu0 0
    %704 = vmatprep.subr.bf16.mxu0 0
    %705 = vmatpush2.bf16.msra.mxu0 0
    %706 = vmatprep.subr.bf16.mxu0 0
    %707 = vmatpush2.bf16.msra.mxu0 0
    %708 = vmatprep.subr.bf16.mxu0 0
    %709 = vmatpush2.bf16.msra.mxu0 0
    %710 = vmatprep.subr.bf16.mxu0 0
    %711 = vmatpush2.bf16.msra.mxu0 0
    %712 = vmatprep.subr.bf16.mxu0 0
    %713 = vmatpush2.bf16.msra.mxu0 0
    %714 = vmatprep.mubr.bf16.mxu0 0
    %715 = vmatmul.mubr.bf16.gmra.mxu0 %v322
    %v716 = vpop.f32.mrf.mxu0
    %v717 = vadd.f32 0.0, %v716
    %v718 = vpop.f32.mrf.mxu0
    %v719 = vpop.f32.mrf.mxu0
    %v720 = vadd.f32 0.0, %v719
    %v721 = vpop.f32.mrf.mxu0
    %722 = vdwg.mxu0
    %v723 = vpack.c.bf16 %v606, %v603
    %v724 = vpack.c.bf16 %v663, %v660
    %v726 = vsel %vm191, %v723, 0
    %v729 = vsel %vm191, %v724, 0
    %731 = vmatprep.subr.bf16.mxu0 0
    %732 = vmatpush1.bf16.xpose.msra.mxu0 0
    %733 = vmatprep.subr.bf16.mxu0 0
    %734 = vmatpush1.bf16.xpose.msra.mxu0 0
    %735 = vmatprep.subr.bf16.mxu0 0
    %736 = vmatpush1.bf16.xpose.msra.mxu0 0
    %737 = vmatprep.subr.bf16.mxu0 0
    %738 = vmatpush1.bf16.xpose.msra.mxu0 0
    %739 = vmatprep.subr.bf16.mxu0 0
    %740 = vmatpush1.bf16.xpose.msra.mxu0 0
    %741 = vmatprep.subr.bf16.mxu0 0
    %742 = vmatpush1.bf16.xpose.msra.mxu0 0
    %743 = vmatprep.subr.bf16.mxu0 0
    %744 = vmatpush1.bf16.xpose.msra.mxu0 0
    %745 = vmatprep.subr.bf16.mxu0 0
    %746 = vmatpush1.bf16.xpose.msra.mxu0 %v729
    %747 = vmatprep.subr.bf16.mxu0 0
    %748 = vmatpush2.bf16.xpose.msra.mxu0 0
    %749 = vmatprep.subr.bf16.mxu0 0
    %750 = vmatpush2.bf16.xpose.msra.mxu0 0
    %751 = vmatprep.subr.bf16.mxu0 0
    %752 = vmatpush2.bf16.xpose.msra.mxu0 0
    %753 = vmatprep.subr.bf16.mxu0 0
    %754 = vmatpush2.bf16.xpose.msra.mxu0 0
    %755 = vmatprep.subr.bf16.mxu0 0
    %756 = vmatpush2.bf16.xpose.msra.mxu0 0
    %757 = vmatprep.subr.bf16.mxu0 0
    %758 = vmatpush2.bf16.xpose.msra.mxu0 0
    %759 = vmatprep.subr.bf16.mxu0 0
    %760 = vmatpush2.bf16.xpose.msra.mxu0 0
    %761 = vmatprep.subr.bf16.mxu0 0
    %762 = vmatpush2.bf16.xpose.msra.mxu0 0
    %763 = vmatprep.mubr.bf16.mxu0 0
    %764 = vmatmul.mubr.bf16.gmra.mxu0 %v726
    %v765 = vpop.f32.mrf.mxu0
    %v766 = vadd.f32 %v244, %v765
    %v767 = vpop.f32.mrf.mxu0
    %v768 = vpop.f32.mrf.mxu0
    %v769 = vadd.f32 %v245, %v768
    %v770 = vpop.f32.mrf.mxu0
    %771 = vdwg.mxu0
    %v772 = vsel %vm78, %v766, -inf
    %773 = vmax.xlane.f32.xlu0 %v772
    %v774 = vpop.xlane.xlu0 %773
    %v775 = vsel %vm78, %v769, -inf
    %776 = vmax.xlane.f32.xlu0 %v775
    %v777 = vpop.xlane.xlu0 %776
    %v778 = vsub.f32 %v766, %v774
    %v779 = vsub.f32 %v769, %v777
    %v780 = vmul.f32 %v778, 1.442695
    %v781 = vpow.pop %v780
    %v782 = vmul.f32 %v779, 1.442695
    %v783 = vpow.pop %v782
    %v784 = vsel %vm78, %v781, 0.0
    %785 = vadd.xlane.f32.xlu0 %v784
    %v786 = vpop.xlane.xlu0 %785
    %v787 = vsel %vm78, %v783, 0.0
    %788 = vadd.xlane.f32.xlu0 %v787
    %v789 = vpop.xlane.xlu0 %788
    %v790 = vrcp.pop %v786
    %v791 = vrcp.pop %v789
    %v792 = vmul.f32 %v781, %v790
    %v793 = vmul.f32 %v783, %v791
    %v794 = vpack.c.bf16 %v793, %v792
    %v795 = vpack.c.bf16 %v720, %v717
    %v797 = vsel %vm78, %v794, 0
    %799 = vmatprep.subr.bf16.mxu0 0
    %800 = vmatpush1.bf16.msra.mxu0 0
    %801 = vmatprep.subr.bf16.mxu0 0
    %802 = vmatpush1.bf16.msra.mxu0 0
    %803 = vmatprep.subr.bf16.mxu0 0
    %804 = vmatpush1.bf16.msra.mxu0 0
    %805 = vmatprep.subr.bf16.mxu0 0
    %806 = vmatpush1.bf16.msra.mxu0 0
    %807 = vmatprep.subr.bf16.mxu0 0
    %808 = vmatpush1.bf16.msra.mxu0 0
    %809 = vmatprep.subr.bf16.mxu0 0
    %810 = vmatpush1.bf16.msra.mxu0 0
    %811 = vmatprep.subr.bf16.mxu0 0
    %812 = vmatpush1.bf16.msra.mxu0 0
    %813 = vmatprep.subr.bf16.mxu0 0
    %814 = vmatpush1.bf16.msra.mxu0 %v795
    %815 = vmatprep.subr.bf16.mxu0 0
    %816 = vmatpush2.bf16.msra.mxu0 0
    %817 = vmatprep.subr.bf16.mxu0 0
    %818 = vmatpush2.bf16.msra.mxu0 0
    %819 = vmatprep.subr.bf16.mxu0 0
    %820 = vmatpush2.bf16.msra.mxu0 0
    %821 = vmatprep.subr.bf16.mxu0 0
    %822 = vmatpush2.bf16.msra.mxu0 0
    %823 = vmatprep.subr.bf16.mxu0 0
    %824 = vmatpush2.bf16.msra.mxu0 0
    %825 = vmatprep.subr.bf16.mxu0 0
    %826 = vmatpush2.bf16.msra.mxu0 0
    %827 = vmatprep.subr.bf16.mxu0 0
    %828 = vmatpush2.bf16.msra.mxu0 0
    %829 = vmatprep.subr.bf16.mxu0 0
    %830 = vmatpush2.bf16.msra.mxu0 0
    %831 = vmatprep.mubr.bf16.mxu0 0
    %832 = vmatmul.mubr.bf16.gmra.mxu0 %v797
    %v833 = vpop.f32.mrf.mxu0
    %v834 = vadd.f32 0.0, %v833
    %v835 = vpop.f32.mrf.mxu0
    %v836 = vpop.f32.mrf.mxu0
    %v837 = vadd.f32 0.0, %v836
    %v838 = vpop.f32.mrf.mxu0
    %839 = vdwg.mxu0
    %v841 = vsel %vm78, %v550, 0
    %843 = vmatprep.subr.bf16.mxu0 0
    %844 = vmatpush1.bf16.msra.mxu0 0
    %845 = vmatprep.subr.bf16.mxu0 0
    %846 = vmatpush1.bf16.msra.mxu0 0
    %847 = vmatprep.subr.bf16.mxu0 0
    %848 = vmatpush1.bf16.msra.mxu0 0
    %849 = vmatprep.subr.bf16.mxu0 0
    %850 = vmatpush1.bf16.msra.mxu0 0
    %851 = vmatprep.subr.bf16.mxu0 0
    %852 = vmatpush1.bf16.msra.mxu0 0
    %853 = vmatprep.subr.bf16.mxu0 0
    %854 = vmatpush1.bf16.msra.mxu0 0
    %855 = vmatprep.subr.bf16.mxu0 0
    %856 = vmatpush1.bf16.msra.mxu0 0
    %857 = vmatprep.subr.bf16.mxu0 0
    %858 = vmatpush1.bf16.msra.mxu0 %v551
    %859 = vmatprep.subr.bf16.mxu0 0
    %860 = vmatpush2.bf16.msra.mxu0 0
    %861 = vmatprep.subr.bf16.mxu0 0
    %862 = vmatpush2.bf16.msra.mxu0 0
    %863 = vmatprep.subr.bf16.mxu0 0
    %864 = vmatpush2.bf16.msra.mxu0 0
    %865 = vmatprep.subr.bf16.mxu0 0
    %866 = vmatpush2.bf16.msra.mxu0 0
    %867 = vmatprep.subr.bf16.mxu0 0
    %868 = vmatpush2.bf16.msra.mxu0 0
    %869 = vmatprep.subr.bf16.mxu0 0
    %870 = vmatpush2.bf16.msra.mxu0 0
    %871 = vmatprep.subr.bf16.mxu0 0
    %872 = vmatpush2.bf16.msra.mxu0 0
    %873 = vmatprep.subr.bf16.mxu0 0
    %874 = vmatpush2.bf16.msra.mxu0 0
    %875 = vmatprep.mubr.bf16.mxu0 0
    %876 = vmatmul.mubr.bf16.gmra.mxu0 %v841
    %v877 = vpop.f32.mrf.mxu0
    %v878 = vadd.f32 %v834, %v877
    %v879 = vpop.f32.mrf.mxu0
    %v880 = vpop.f32.mrf.mxu0
    %v881 = vadd.f32 %v837, %v880
    %v882 = vpop.f32.mrf.mxu0
    %883 = vdwg.mxu0
    %v884 = vld [vmem:[#allocation2 + $0xb8] sm:$0xf]
    %v885 = vld [vmem:[#allocation2 + $0xbc] sm:$0xf]
    %v886 = vld [vmem:[#allocation2 + $0xc0] sm:$0xf]
    %v887 = vld [vmem:[#allocation2 + $0xc4] sm:$0xf]
    %v892 = vunpack.c.l.b16 %v884
    %v893 = vunpack.c.l.b16 %v885
    %v894 = vunpack.c.l.b16 %v886
    %v895 = vunpack.c.l.b16 %v887
    %v896 = vpack.c.b16 %v893, %v892
    %v897 = vpack.c.b16 %v895, %v894
    %900 = vmatprep.subr.bf16.mxu0 0
    %901 = vmatpush1.bf16.msra.mxu0 0
    %902 = vmatprep.subr.bf16.mxu0 0
    %903 = vmatpush1.bf16.msra.mxu0 0
    %904 = vmatprep.subr.bf16.mxu0 0
    %905 = vmatpush1.bf16.msra.mxu0 0
    %906 = vmatprep.subr.bf16.mxu0 0
    %907 = vmatpush1.bf16.msra.mxu0 0
    %908 = vmatprep.subr.bf16.mxu0 0
    %909 = vmatpush1.bf16.msra.mxu0 0
    %910 = vmatprep.subr.bf16.mxu0 0
    %911 = vmatpush1.bf16.msra.mxu0 0
    %912 = vmatprep.subr.bf16.mxu0 0
    %913 = vmatpush1.bf16.msra.mxu0 %v897
    %914 = vmatprep.subr.bf16.mxu0 0
    %915 = vmatpush1.bf16.msra.mxu0 %v896
    %916 = vmatprep.subr.bf16.mxu0 0
    %917 = vmatpush2.bf16.msra.mxu0 0
    %918 = vmatprep.subr.bf16.mxu0 0
    %919 = vmatpush2.bf16.msra.mxu0 0
    %920 = vmatprep.subr.bf16.mxu0 0
    %921 = vmatpush2.bf16.msra.mxu0 0
    %922 = vmatprep.subr.bf16.mxu0 0
    %923 = vmatpush2.bf16.msra.mxu0 0
    %924 = vmatprep.subr.bf16.mxu0 0
    %925 = vmatpush2.bf16.msra.mxu0 0
    %926 = vmatprep.subr.bf16.mxu0 0
    %927 = vmatpush2.bf16.msra.mxu0 0
    %928 = vmatprep.subr.bf16.mxu0 0
    %929 = vmatpush2.bf16.msra.mxu0 0
    %930 = vmatprep.subr.bf16.mxu0 0
    %931 = vmatpush2.bf16.msra.mxu0 0
    %932 = vmatprep.mubr.bf16.mxu0 0
    %933 = vmatmul.mubr.bf16.gmra.mxu0 %v322
    %v934 = vpop.f32.mrf.mxu0
    %v935 = vadd.f32 0.0, %v934
    %v936 = vpop.f32.mrf.mxu0
    %v937 = vpop.f32.mrf.mxu0
    %v938 = vadd.f32 0.0, %v937
    %v939 = vpop.f32.mrf.mxu0
    %940 = vdwg.mxu0
    %v941 = vld [vmem:[#allocation2 + $0xc8] sm:$0xf]
    %v942 = vld [vmem:[#allocation2 + $0xcc] sm:$0xf]
    %v943 = vld [vmem:[#allocation2 + $0xd0] sm:$0xf]
    %v944 = vld [vmem:[#allocation2 + $0xd4] sm:$0xf]
    %v949 = vunpack.c.l.b16 %v941
    %v950 = vunpack.c.l.b16 %v942
    %v951 = vunpack.c.l.b16 %v943
    %v952 = vunpack.c.l.b16 %v944
    %v953 = vpack.c.b16 %v950, %v949
    %v954 = vpack.c.b16 %v952, %v951
    %957 = vmatprep.subr.bf16.mxu0 0
    %958 = vmatpush1.bf16.msra.mxu0 0
    %959 = vmatprep.subr.bf16.mxu0 0
    %960 = vmatpush1.bf16.msra.mxu0 0
    %961 = vmatprep.subr.bf16.mxu0 0
    %962 = vmatpush1.bf16.msra.mxu0 0
    %963 = vmatprep.subr.bf16.mxu0 0
    %964 = vmatpush1.bf16.msra.mxu0 0
    %965 = vmatprep.subr.bf16.mxu0 0
    %966 = vmatpush1.bf16.msra.mxu0 0
    %967 = vmatprep.subr.bf16.mxu0 0
    %968 = vmatpush1.bf16.msra.mxu0 0
    %969 = vmatprep.subr.bf16.mxu0 0
    %970 = vmatpush1.bf16.msra.mxu0 %v954
    %971 = vmatprep.subr.bf16.mxu0 0
    %972 = vmatpush1.bf16.msra.mxu0 %v953
    %973 = vmatprep.subr.bf16.mxu0 0
    %974 = vmatpush2.bf16.msra.mxu0 0
    %975 = vmatprep.subr.bf16.mxu0 0
    %976 = vmatpush2.bf16.msra.mxu0 0
    %977 = vmatprep.subr.bf16.mxu0 0
    %978 = vmatpush2.bf16.msra.mxu0 0
    %979 = vmatprep.subr.bf16.mxu0 0
    %980 = vmatpush2.bf16.msra.mxu0 0
    %981 = vmatprep.subr.bf16.mxu0 0
    %982 = vmatpush2.bf16.msra.mxu0 0
    %983 = vmatprep.subr.bf16.mxu0 0
    %984 = vmatpush2.bf16.msra.mxu0 0
    %985 = vmatprep.subr.bf16.mxu0 0
    %986 = vmatpush2.bf16.msra.mxu0 0
    %987 = vmatprep.subr.bf16.mxu0 0
    %988 = vmatpush2.bf16.msra.mxu0 0
    %989 = vmatprep.mubr.bf16.mxu0 0
    %990 = vmatmul.mubr.bf16.gmra.mxu0 %v322
    %v991 = vpop.f32.mrf.mxu0
    %v992 = vadd.f32 0.0, %v991
    %v993 = vpop.f32.mrf.mxu0
    %v994 = vpop.f32.mrf.mxu0
    %v995 = vadd.f32 0.0, %v994
    %v996 = vpop.f32.mrf.mxu0
    %997 = vdwg.mxu0
    %v998 = vld [vmem:[#allocation2 + $0xd8] sm:$0xf]
    %v999 = vld [vmem:[#allocation2 + $0xdc] sm:$0xf]
    %v1000 = vld [vmem:[#allocation2 + $0xe0] sm:$0xf]
    %v1001 = vld [vmem:[#allocation2 + $0xe4] sm:$0xf]
    %v1006 = vunpack.c.l.b16 %v998
    %v1007 = vunpack.c.l.b16 %v999
    %v1008 = vunpack.c.l.b16 %v1000
    %v1009 = vunpack.c.l.b16 %v1001
    %v1010 = vpack.c.b16 %v1007, %v1006
    %v1011 = vpack.c.b16 %v1009, %v1008
    %1014 = vmatprep.subr.bf16.mxu0 0
    %1015 = vmatpush1.bf16.msra.mxu0 0
    %1016 = vmatprep.subr.bf16.mxu0 0
    %1017 = vmatpush1.bf16.msra.mxu0 0
    %1018 = vmatprep.subr.bf16.mxu0 0
    %1019 = vmatpush1.bf16.msra.mxu0 0
    %1020 = vmatprep.subr.bf16.mxu0 0
    %1021 = vmatpush1.bf16.msra.mxu0 0
    %1022 = vmatprep.subr.bf16.mxu0 0
    %1023 = vmatpush1.bf16.msra.mxu0 0
    %1024 = vmatprep.subr.bf16.mxu0 0
    %1025 = vmatpush1.bf16.msra.mxu0 0
    %1026 = vmatprep.subr.bf16.mxu0 0
    %1027 = vmatpush1.bf16.msra.mxu0 %v1011
    %1028 = vmatprep.subr.bf16.mxu0 0
    %1029 = vmatpush1.bf16.msra.mxu0 %v1010
    %1030 = vmatprep.subr.bf16.mxu0 0
    %1031 = vmatpush2.bf16.msra.mxu0 0
    %1032 = vmatprep.subr.bf16.mxu0 0
    %1033 = vmatpush2.bf16.msra.mxu0 0
    %1034 = vmatprep.subr.bf16.mxu0 0
    %1035 = vmatpush2.bf16.msra.mxu0 0
    %1036 = vmatprep.subr.bf16.mxu0 0
    %1037 = vmatpush2.bf16.msra.mxu0 0
    %1038 = vmatprep.subr.bf16.mxu0 0
    %1039 = vmatpush2.bf16.msra.mxu0 0
    %1040 = vmatprep.subr.bf16.mxu0 0
    %1041 = vmatpush2.bf16.msra.mxu0 0
    %1042 = vmatprep.subr.bf16.mxu0 0
    %1043 = vmatpush2.bf16.msra.mxu0 0
    %1044 = vmatprep.subr.bf16.mxu0 0
    %1045 = vmatpush2.bf16.msra.mxu0 0
    %1046 = vmatprep.mubr.bf16.mxu0 0
    %1047 = vmatmul.mubr.bf16.gmra.mxu0 %v322
    %v1048 = vpop.f32.mrf.mxu0
    %v1049 = vadd.f32 0.0, %v1048
    %v1050 = vpop.f32.mrf.mxu0
    %v1051 = vpop.f32.mrf.mxu0
    %v1052 = vadd.f32 0.0, %v1051
    %v1053 = vpop.f32.mrf.mxu0
    %1054 = vdwg.mxu0
    %v1055 = vpack.c.bf16 %v938, %v935
    %v1056 = vpack.c.bf16 %v995, %v992
    %v1058 = vsel %vm191, %v1055, 0
    %v1061 = vsel %vm191, %v1056, 0
    %1063 = vmatprep.subr.bf16.mxu0 0
    %1064 = vmatpush1.bf16.xpose.msra.mxu0 0
    %1065 = vmatprep.subr.bf16.mxu0 0
    %1066 = vmatpush1.bf16.xpose.msra.mxu0 0
    %1067 = vmatprep.subr.bf16.mxu0 0
    %1068 = vmatpush1.bf16.xpose.msra.mxu0 0
    %1069 = vmatprep.subr.bf16.mxu0 0
    %1070 = vmatpush1.bf16.xpose.msra.mxu0 0
    %1071 = vmatprep.subr.bf16.mxu0 0
    %1072 = vmatpush1.bf16.xpose.msra.mxu0 0
    %1073 = vmatprep.subr.bf16.mxu0 0
    %1074 = vmatpush1.bf16.xpose.msra.mxu0 0
    %1075 = vmatprep.subr.bf16.mxu0 0
    %1076 = vmatpush1.bf16.xpose.msra.mxu0 0
    %1077 = vmatprep.subr.bf16.mxu0 0
    %1078 = vmatpush1.bf16.xpose.msra.mxu0 %v1061
    %1079 = vmatprep.subr.bf16.mxu0 0
    %1080 = vmatpush2.bf16.xpose.msra.mxu0 0
    %1081 = vmatprep.subr.bf16.mxu0 0
    %1082 = vmatpush2.bf16.xpose.msra.mxu0 0
    %1083 = vmatprep.subr.bf16.mxu0 0
    %1084 = vmatpush2.bf16.xpose.msra.mxu0 0
    %1085 = vmatprep.subr.bf16.mxu0 0
    %1086 = vmatpush2.bf16.xpose.msra.mxu0 0
    %1087 = vmatprep.subr.bf16.mxu0 0
    %1088 = vmatpush2.bf16.xpose.msra.mxu0 0
    %1089 = vmatprep.subr.bf16.mxu0 0
    %1090 = vmatpush2.bf16.xpose.msra.mxu0 0
    %1091 = vmatprep.subr.bf16.mxu0 0
    %1092 = vmatpush2.bf16.xpose.msra.mxu0 0
    %1093 = vmatprep.subr.bf16.mxu0 0
    %1094 = vmatpush2.bf16.xpose.msra.mxu0 0
    %1095 = vmatprep.mubr.bf16.mxu0 0
    %1096 = vmatmul.mubr.bf16.gmra.mxu0 %v1058
    %v1097 = vpop.f32.mrf.mxu0
    %v1098 = vadd.f32 %v244, %v1097
    %v1099 = vpop.f32.mrf.mxu0
    %v1100 = vpop.f32.mrf.mxu0
    %v1101 = vadd.f32 %v245, %v1100
    %v1102 = vpop.f32.mrf.mxu0
    %1103 = vdwg.mxu0
    %v1104 = vsel %vm78, %v1098, -inf
    %1105 = vmax.xlane.f32.xlu0 %v1104
    %v1106 = vpop.xlane.xlu0 %1105
    %v1107 = vsel %vm78, %v1101, -inf
    %1108 = vmax.xlane.f32.xlu0 %v1107
    %v1109 = vpop.xlane.xlu0 %1108
    %v1110 = vsub.f32 %v1098, %v1106
    %v1111 = vsub.f32 %v1101, %v1109
    %v1112 = vmul.f32 %v1110, 1.442695
    %v1113 = vpow.pop %v1112
    %v1114 = vmul.f32 %v1111, 1.442695
    %v1115 = vpow.pop %v1114
    %v1116 = vsel %vm78, %v1113, 0.0
    %1117 = vadd.xlane.f32.xlu0 %v1116
    %v1118 = vpop.xlane.xlu0 %1117
    %v1119 = vsel %vm78, %v1115, 0.0
    %1120 = vadd.xlane.f32.xlu0 %v1119
    %v1121 = vpop.xlane.xlu0 %1120
    %v1122 = vrcp.pop %v1118
    %v1123 = vrcp.pop %v1121
    %v1124 = vmul.f32 %v1113, %v1122
    %v1125 = vmul.f32 %v1115, %v1123
    %v1126 = vpack.c.bf16 %v1125, %v1124
    %v1127 = vpack.c.bf16 %v1052, %v1049
    %v1129 = vsel %vm78, %v1126, 0
    %1131 = vmatprep.subr.bf16.mxu0 0
    %1132 = vmatpush1.bf16.msra.mxu0 0
    %1133 = vmatprep.subr.bf16.mxu0 0
    %1134 = vmatpush1.bf16.msra.mxu0 0
    %1135 = vmatprep.subr.bf16.mxu0 0
    %1136 = vmatpush1.bf16.msra.mxu0 0
    %1137 = vmatprep.subr.bf16.mxu0 0
    %1138 = vmatpush1.bf16.msra.mxu0 0
    %1139 = vmatprep.subr.bf16.mxu0 0
    %1140 = vmatpush1.bf16.msra.mxu0 0
    %1141 = vmatprep.subr.bf16.mxu0 0
    %1142 = vmatpush1.bf16.msra.mxu0 0
    %1143 = vmatprep.subr.bf16.mxu0 0
    %1144 = vmatpush1.bf16.msra.mxu0 0
    %1145 = vmatprep.subr.bf16.mxu0 0
    %1146 = vmatpush1.bf16.msra.mxu0 %v1127
    %1147 = vmatprep.subr.bf16.mxu0 0
    %1148 = vmatpush2.bf16.msra.mxu0 0
    %1149 = vmatprep.subr.bf16.mxu0 0
    %1150 = vmatpush2.bf16.msra.mxu0 0
    %1151 = vmatprep.subr.bf16.mxu0 0
    %1152 = vmatpush2.bf16.msra.mxu0 0
    %1153 = vmatprep.subr.bf16.mxu0 0
    %1154 = vmatpush2.bf16.msra.mxu0 0
    %1155 = vmatprep.subr.bf16.mxu0 0
    %1156 = vmatpush2.bf16.msra.mxu0 0
    %1157 = vmatprep.subr.bf16.mxu0 0
    %1158 = vmatpush2.bf16.msra.mxu0 0
    %1159 = vmatprep.subr.bf16.mxu0 0
    %1160 = vmatpush2.bf16.msra.mxu0 0
    %1161 = vmatprep.subr.bf16.mxu0 0
    %1162 = vmatpush2.bf16.msra.mxu0 0
    %1163 = vmatprep.mubr.bf16.mxu0 0
    %1164 = vmatmul.mubr.bf16.gmra.mxu0 %v1129
    %v1165 = vpop.f32.mrf.mxu0
    %v1166 = vadd.f32 0.0, %v1165
    %v1167 = vpop.f32.mrf.mxu0
    %v1168 = vpop.f32.mrf.mxu0
    %v1169 = vadd.f32 0.0, %v1168
    %v1170 = vpop.f32.mrf.mxu0
    %1171 = vdwg.mxu0
    %v1172 = vadd.f32 %v878, %v1166
    %v1173 = vadd.f32 %v881, %v1169
    %v1174 = vld [vmem:[#allocation2 + $0xe8] sm:$0xf]
    %v1175 = vld [vmem:[#allocation2 + $0xec] sm:$0xf]
    %v1176 = vld [vmem:[#allocation2 + $0xf0] sm:$0xf]
    %v1177 = vld [vmem:[#allocation2 + $0xf4] sm:$0xf]
    %v1182 = vunpack.c.l.b16 %v1174
    %v1183 = vunpack.c.l.b16 %v1175
    %v1184 = vunpack.c.l.b16 %v1176
    %v1185 = vunpack.c.l.b16 %v1177
    %v1186 = vpack.c.b16 %v1183, %v1182
    %v1187 = vpack.c.b16 %v1185, %v1184
    %1190 = vmatprep.subr.bf16.mxu0 0
    %1191 = vmatpush1.bf16.msra.mxu0 0
    %1192 = vmatprep.subr.bf16.mxu0 0
    %1193 = vmatpush1.bf16.msra.mxu0 0
    %1194 = vmatprep.subr.bf16.mxu0 0
    %1195 = vmatpush1.bf16.msra.mxu0 0
    %1196 = vmatprep.subr.bf16.mxu0 0
    %1197 = vmatpush1.bf16.msra.mxu0 0
    %1198 = vmatprep.subr.bf16.mxu0 0
    %1199 = vmatpush1.bf16.msra.mxu0 0
    %1200 = vmatprep.subr.bf16.mxu0 0
    %1201 = vmatpush1.bf16.msra.mxu0 0
    %1202 = vmatprep.subr.bf16.mxu0 0
    %1203 = vmatpush1.bf16.msra.mxu0 %v1187
    %1204 = vmatprep.subr.bf16.mxu0 0
    %1205 = vmatpush1.bf16.msra.mxu0 %v1186
    %1206 = vmatprep.subr.bf16.mxu0 0
    %1207 = vmatpush2.bf16.msra.mxu0 0
    %1208 = vmatprep.subr.bf16.mxu0 0
    %1209 = vmatpush2.bf16.msra.mxu0 0
    %1210 = vmatprep.subr.bf16.mxu0 0
    %1211 = vmatpush2.bf16.msra.mxu0 0
    %1212 = vmatprep.subr.bf16.mxu0 0
    %1213 = vmatpush2.bf16.msra.mxu0 0
    %1214 = vmatprep.subr.bf16.mxu0 0
    %1215 = vmatpush2.bf16.msra.mxu0 0
    %1216 = vmatprep.subr.bf16.mxu0 0
    %1217 = vmatpush2.bf16.msra.mxu0 0
    %1218 = vmatprep.subr.bf16.mxu0 0
    %1219 = vmatpush2.bf16.msra.mxu0 0
    %1220 = vmatprep.subr.bf16.mxu0 0
    %1221 = vmatpush2.bf16.msra.mxu0 0
    %1222 = vmatprep.mubr.bf16.mxu0 0
    %1223 = vmatmul.mubr.bf16.gmra.mxu0 %v322
    %v1224 = vpop.f32.mrf.mxu0
    %v1225 = vadd.f32 0.0, %v1224
    %v1226 = vpop.f32.mrf.mxu0
    %v1227 = vpop.f32.mrf.mxu0
    %v1228 = vadd.f32 0.0, %v1227
    %v1229 = vpop.f32.mrf.mxu0
    %1230 = vdwg.mxu0
    %v1231 = vld [vmem:[#allocation2 + $0xf8] sm:$0xf]
    %v1232 = vld [vmem:[#allocation2 + $0xfc] sm:$0xf]
    %v1233 = vld [vmem:[#allocation2 + $0x100] sm:$0xf]
    %v1234 = vld [vmem:[#allocation2 + $0x104] sm:$0xf]
    %v1239 = vunpack.c.l.b16 %v1231
    %v1240 = vunpack.c.l.b16 %v1232
    %v1241 = vunpack.c.l.b16 %v1233
    %v1242 = vunpack.c.l.b16 %v1234
    %v1243 = vpack.c.b16 %v1240, %v1239
    %v1244 = vpack.c.b16 %v1242, %v1241
    %1247 = vmatprep.subr.bf16.mxu0 0
    %1248 = vmatpush1.bf16.msra.mxu0 0
    %1249 = vmatprep.subr.bf16.mxu0 0
    %1250 = vmatpush1.bf16.msra.mxu0 0
    %1251 = vmatprep.subr.bf16.mxu0 0
    %1252 = vmatpush1.bf16.msra.mxu0 0
    %1253 = vmatprep.subr.bf16.mxu0 0
    %1254 = vmatpush1.bf16.msra.mxu0 0
    %1255 = vmatprep.subr.bf16.mxu0 0
    %1256 = vmatpush1.bf16.msra.mxu0 0
    %1257 = vmatprep.subr.bf16.mxu0 0
    %1258 = vmatpush1.bf16.msra.mxu0 0
    %1259 = vmatprep.subr.bf16.mxu0 0
    %1260 = vmatpush1.bf16.msra.mxu0 %v1244
    %1261 = vmatprep.subr.bf16.mxu0 0
    %1262 = vmatpush1.bf16.msra.mxu0 %v1243
    %1263 = vmatprep.subr.bf16.mxu0 0
    %1264 = vmatpush2.bf16.msra.mxu0 0
    %1265 = vmatprep.subr.bf16.mxu0 0
    %1266 = vmatpush2.bf16.msra.mxu0 0
    %1267 = vmatprep.subr.bf16.mxu0 0
    %1268 = vmatpush2.bf16.msra.mxu0 0
    %1269 = vmatprep.subr.bf16.mxu0 0
    %1270 = vmatpush2.bf16.msra.mxu0 0
    %1271 = vmatprep.subr.bf16.mxu0 0
    %1272 = vmatpush2.bf16.msra.mxu0 0
    %1273 = vmatprep.subr.bf16.mxu0 0
    %1274 = vmatpush2.bf16.msra.mxu0 0
    %1275 = vmatprep.subr.bf16.mxu0 0
    %1276 = vmatpush2.bf16.msra.mxu0 0
    %1277 = vmatprep.subr.bf16.mxu0 0
    %1278 = vmatpush2.bf16.msra.mxu0 0
    %1279 = vmatprep.mubr.bf16.mxu0 0
    %1280 = vmatmul.mubr.bf16.gmra.mxu0 %v322
    %v1281 = vpop.f32.mrf.mxu0
    %v1282 = vadd.f32 0.0, %v1281
    %v1283 = vpop.f32.mrf.mxu0
    %v1284 = vpop.f32.mrf.mxu0
    %v1285 = vadd.f32 0.0, %v1284
    %v1286 = vpop.f32.mrf.mxu0
    %1287 = vdwg.mxu0
    %v1288 = vld [vmem:[#allocation2 + $0x108] sm:$0xf]
    %v1289 = vld [vmem:[#allocation2 + $0x10c] sm:$0xf]
    %v1290 = vld [vmem:[#allocation2 + $0x110] sm:$0xf]
    %v1291 = vld [vmem:[#allocation2 + $0x114] sm:$0xf]
    %v1296 = vunpack.c.l.b16 %v1288
    %v1297 = vunpack.c.l.b16 %v1289
    %v1298 = vunpack.c.l.b16 %v1290
    %v1299 = vunpack.c.l.b16 %v1291
    %v1300 = vpack.c.b16 %v1297, %v1296
    %v1301 = vpack.c.b16 %v1299, %v1298
    %1304 = vmatprep.subr.bf16.mxu0 0
    %1305 = vmatpush1.bf16.msra.mxu0 0
    %1306 = vmatprep.subr.bf16.mxu0 0
    %1307 = vmatpush1.bf16.msra.mxu0 0
    %1308 = vmatprep.subr.bf16.mxu0 0
    %1309 = vmatpush1.bf16.msra.mxu0 0
    %1310 = vmatprep.subr.bf16.mxu0 0
    %1311 = vmatpush1.bf16.msra.mxu0 0
    %1312 = vmatprep.subr.bf16.mxu0 0
    %1313 = vmatpush1.bf16.msra.mxu0 0
    %1314 = vmatprep.subr.bf16.mxu0 0
    %1315 = vmatpush1.bf16.msra.mxu0 0
    %1316 = vmatprep.subr.bf16.mxu0 0
    %1317 = vmatpush1.bf16.msra.mxu0 %v1301
    %1318 = vmatprep.subr.bf16.mxu0 0
    %1319 = vmatpush1.bf16.msra.mxu0 %v1300
    %1320 = vmatprep.subr.bf16.mxu0 0
    %1321 = vmatpush2.bf16.msra.mxu0 0
    %1322 = vmatprep.subr.bf16.mxu0 0
    %1323 = vmatpush2.bf16.msra.mxu0 0
    %1324 = vmatprep.subr.bf16.mxu0 0
    %1325 = vmatpush2.bf16.msra.mxu0 0
    %1326 = vmatprep.subr.bf16.mxu0 0
    %1327 = vmatpush2.bf16.msra.mxu0 0
    %1328 = vmatprep.subr.bf16.mxu0 0
    %1329 = vmatpush2.bf16.msra.mxu0 0
    %1330 = vmatprep.subr.bf16.mxu0 0
    %1331 = vmatpush2.bf16.msra.mxu0 0
    %1332 = vmatprep.subr.bf16.mxu0 0
    %1333 = vmatpush2.bf16.msra.mxu0 0
    %1334 = vmatprep.subr.bf16.mxu0 0
    %1335 = vmatpush2.bf16.msra.mxu0 0
    %1336 = vmatprep.mubr.bf16.mxu0 0
    %1337 = vmatmul.mubr.bf16.gmra.mxu0 %v322
    %v1338 = vpop.f32.mrf.mxu0
    %v1339 = vadd.f32 0.0, %v1338
    %v1340 = vpop.f32.mrf.mxu0
    %v1341 = vpop.f32.mrf.mxu0
    %v1342 = vadd.f32 0.0, %v1341
    %v1343 = vpop.f32.mrf.mxu0
    %1344 = vdwg.mxu0
    %v1345 = vpack.c.bf16 %v1228, %v1225
    %v1346 = vpack.c.bf16 %v1285, %v1282
    %v1348 = vsel %vm191, %v1345, 0
    %v1351 = vsel %vm191, %v1346, 0
    %1353 = vmatprep.subr.bf16.mxu0 0
    %1354 = vmatpush1.bf16.xpose.msra.mxu0 0
    %1355 = vmatprep.subr.bf16.mxu0 0
    %1356 = vmatpush1.bf16.xpose.msra.mxu0 0
    %1357 = vmatprep.subr.bf16.mxu0 0
    %1358 = vmatpush1.bf16.xpose.msra.mxu0 0
    %1359 = vmatprep.subr.bf16.mxu0 0
    %1360 = vmatpush1.bf16.xpose.msra.mxu0 0
    %1361 = vmatprep.subr.bf16.mxu0 0
    %1362 = vmatpush1.bf16.xpose.msra.mxu0 0
    %1363 = vmatprep.subr.bf16.mxu0 0
    %1364 = vmatpush1.bf16.xpose.msra.mxu0 0
    %1365 = vmatprep.subr.bf16.mxu0 0
    %1366 = vmatpush1.bf16.xpose.msra.mxu0 0
    %1367 = vmatprep.subr.bf16.mxu0 0
    %1368 = vmatpush1.bf16.xpose.msra.mxu0 %v1351
    %1369 = vmatprep.subr.bf16.mxu0 0
    %1370 = vmatpush2.bf16.xpose.msra.mxu0 0
    %1371 = vmatprep.subr.bf16.mxu0 0
    %1372 = vmatpush2.bf16.xpose.msra.mxu0 0
    %1373 = vmatprep.subr.bf16.mxu0 0
    %1374 = vmatpush2.bf16.xpose.msra.mxu0 0
    %1375 = vmatprep.subr.bf16.mxu0 0
    %1376 = vmatpush2.bf16.xpose.msra.mxu0 0
    %1377 = vmatprep.subr.bf16.mxu0 0
    %1378 = vmatpush2.bf16.xpose.msra.mxu0 0
    %1379 = vmatprep.subr.bf16.mxu0 0
    %1380 = vmatpush2.bf16.xpose.msra.mxu0 0
    %1381 = vmatprep.subr.bf16.mxu0 0
    %1382 = vmatpush2.bf16.xpose.msra.mxu0 0
    %1383 = vmatprep.subr.bf16.mxu0 0
    %1384 = vmatpush2.bf16.xpose.msra.mxu0 0
    %1385 = vmatprep.mubr.bf16.mxu0 0
    %1386 = vmatmul.mubr.bf16.gmra.mxu0 %v1348
    %v1387 = vpop.f32.mrf.mxu0
    %v1388 = vadd.f32 %v244, %v1387
    %v1389 = vpop.f32.mrf.mxu0
    %v1390 = vpop.f32.mrf.mxu0
    %v1391 = vadd.f32 %v245, %v1390
    %v1392 = vpop.f32.mrf.mxu0
    %1393 = vdwg.mxu0
    %v1394 = vsel %vm78, %v1388, -inf
    %1395 = vmax.xlane.f32.xlu0 %v1394
    %v1396 = vpop.xlane.xlu0 %1395
    %v1397 = vsel %vm78, %v1391, -inf
    %1398 = vmax.xlane.f32.xlu0 %v1397
    %v1399 = vpop.xlane.xlu0 %1398
    %v1400 = vsub.f32 %v1388, %v1396
    %v1401 = vsub.f32 %v1391, %v1399
    %v1402 = vmul.f32 %v1400, 1.442695
    %v1403 = vpow.pop %v1402
    %v1404 = vmul.f32 %v1401, 1.442695
    %v1405 = vpow.pop %v1404
    %v1406 = vsel %vm78, %v1403, 0.0
    %1407 = vadd.xlane.f32.xlu0 %v1406
    %v1408 = vpop.xlane.xlu0 %1407
    %v1409 = vsel %vm78, %v1405, 0.0
    %1410 = vadd.xlane.f32.xlu0 %v1409
    %v1411 = vpop.xlane.xlu0 %1410
    %v1412 = vrcp.pop %v1408
    %v1413 = vrcp.pop %v1411
    %v1414 = vmul.f32 %v1403, %v1412
    %v1415 = vmul.f32 %v1405, %v1413
    %v1416 = vpack.c.bf16 %v1415, %v1414
    %v1417 = vpack.c.bf16 %v1342, %v1339
    %v1419 = vsel %vm78, %v1416, 0
    %1421 = vmatprep.subr.bf16.mxu0 0
    %1422 = vmatpush1.bf16.msra.mxu0 0
    %1423 = vmatprep.subr.bf16.mxu0 0
    %1424 = vmatpush1.bf16.msra.mxu0 0
    %1425 = vmatprep.subr.bf16.mxu0 0
    %1426 = vmatpush1.bf16.msra.mxu0 0
    %1427 = vmatprep.subr.bf16.mxu0 0
    %1428 = vmatpush1.bf16.msra.mxu0 0
    %1429 = vmatprep.subr.bf16.mxu0 0
    %1430 = vmatpush1.bf16.msra.mxu0 0
    %1431 = vmatprep.subr.bf16.mxu0 0
    %1432 = vmatpush1.bf16.msra.mxu0 0
    %1433 = vmatprep.subr.bf16.mxu0 0
    %1434 = vmatpush1.bf16.msra.mxu0 0
    %1435 = vmatprep.subr.bf16.mxu0 0
    %1436 = vmatpush1.bf16.msra.mxu0 %v1417
    %1437 = vmatprep.subr.bf16.mxu0 0
    %1438 = vmatpush2.bf16.msra.mxu0 0
    %1439 = vmatprep.subr.bf16.mxu0 0
    %1440 = vmatpush2.bf16.msra.mxu0 0
    %1441 = vmatprep.subr.bf16.mxu0 0
    %1442 = vmatpush2.bf16.msra.mxu0 0
    %1443 = vmatprep.subr.bf16.mxu0 0
    %1444 = vmatpush2.bf16.msra.mxu0 0
    %1445 = vmatprep.subr.bf16.mxu0 0
    %1446 = vmatpush2.bf16.msra.mxu0 0
    %1447 = vmatprep.subr.bf16.mxu0 0
    %1448 = vmatpush2.bf16.msra.mxu0 0
    %1449 = vmatprep.subr.bf16.mxu0 0
    %1450 = vmatpush2.bf16.msra.mxu0 0
    %1451 = vmatprep.subr.bf16.mxu0 0
    %1452 = vmatpush2.bf16.msra.mxu0 0
    %1453 = vmatprep.mubr.bf16.mxu0 0
    %1454 = vmatmul.mubr.bf16.gmra.mxu0 %v1419
    %v1455 = vpop.f32.mrf.mxu0
    %v1456 = vadd.f32 0.0, %v1455
    %v1457 = vpop.f32.mrf.mxu0
    %v1458 = vpop.f32.mrf.mxu0
    %v1459 = vadd.f32 0.0, %v1458
    %v1460 = vpop.f32.mrf.mxu0
    %1461 = vdwg.mxu0
    %v1462 = vadd.f32 %v1172, %v1456
    %v1463 = vadd.f32 %v1173, %v1459
    %v1464 = vpack.c.bf16 %v1463, %v1462
    %v1465 = vld [vmem:[#allocation2 + $0x118] sm:$0xf]
    %v1466 = vld [vmem:[#allocation2 + $0x11c] sm:$0xf]
    %v1467 = vld [vmem:[#allocation2 + $0x120] sm:$0xf]
    %v1468 = vld [vmem:[#allocation2 + $0x124] sm:$0xf]
    %v1469 = vld [vmem:[#allocation5 + $0x40] sm:$0x1]
    %v1470 = vlaneseq
    %v1471 = vshrl.u32 %v1470, 7
    %v1472 = vsub.s32 0, %v1471
    %v1473 = vrot.slane %v1469, %v1472
    %v1478 = vunpack.c.l.b16 %v1465
    %v1479 = vunpack.c.l.b16 %v1466
    %v1480 = vunpack.c.l.b16 %v1467
    %v1481 = vunpack.c.l.b16 %v1468
    %v1482 = vpack.c.b16 %v1479, %v1478
    %v1483 = vpack.c.b16 %v1481, %v1480
    %v1487 = vsel %vm262, %v1464, 0
    %1489 = vmatprep.subr.bf16.mxu0 0
    %1490 = vmatpush1.bf16.msra.mxu0 0
    %1491 = vmatprep.subr.bf16.mxu0 0
    %1492 = vmatpush1.bf16.msra.mxu0 0
    %1493 = vmatprep.subr.bf16.mxu0 0
    %1494 = vmatpush1.bf16.msra.mxu0 0
    %1495 = vmatprep.subr.bf16.mxu0 0
    %1496 = vmatpush1.bf16.msra.mxu0 0
    %1497 = vmatprep.subr.bf16.mxu0 0
    %1498 = vmatpush1.bf16.msra.mxu0 0
    %1499 = vmatprep.subr.bf16.mxu0 0
    %1500 = vmatpush1.bf16.msra.mxu0 0
    %1501 = vmatprep.subr.bf16.mxu0 0
    %1502 = vmatpush1.bf16.msra.mxu0 %v1483
    %1503 = vmatprep.subr.bf16.mxu0 0
    %1504 = vmatpush1.bf16.msra.mxu0 %v1482
    %1505 = vmatprep.subr.bf16.mxu0 0
    %1506 = vmatpush2.bf16.msra.mxu0 0
    %1507 = vmatprep.subr.bf16.mxu0 0
    %1508 = vmatpush2.bf16.msra.mxu0 0
    %1509 = vmatprep.subr.bf16.mxu0 0
    %1510 = vmatpush2.bf16.msra.mxu0 0
    %1511 = vmatprep.subr.bf16.mxu0 0
    %1512 = vmatpush2.bf16.msra.mxu0 0
    %1513 = vmatprep.subr.bf16.mxu0 0
    %1514 = vmatpush2.bf16.msra.mxu0 0
    %1515 = vmatprep.subr.bf16.mxu0 0
    %1516 = vmatpush2.bf16.msra.mxu0 0
    %1517 = vmatprep.subr.bf16.mxu0 0
    %1518 = vmatpush2.bf16.msra.mxu0 0
    %1519 = vmatprep.subr.bf16.mxu0 0
    %1520 = vmatpush2.bf16.msra.mxu0 0
    %1521 = vmatprep.mubr.bf16.mxu0 0
    %1522 = vmatmul.mubr.bf16.gmra.mxu0 %v1487
    %v1523 = vpop.f32.mrf.mxu0
    %v1524 = vadd.f32 %v1473, %v1523
    %v1525 = vpop.f32.mrf.mxu0
    %v1526 = vpop.f32.mrf.mxu0
    %v1527 = vadd.f32 %v1473, %v1526
    %v1528 = vpop.f32.mrf.mxu0
    %1529 = vdwg.mxu0
    %v1530 = vadd.f32 %v260, %v1524
    %v1531 = vadd.f32 %v261, %v1527
    %v1532 = vpack.c.bf16 %v1531, %v1530
    %v1533 = vunpack.c.l.bf16 %v1532
    %v1534 = vunpack.c.h.bf16 %v1532
    %v1535 = vsel %vm262, %v1533, 0.0
    %1536 = vadd.xlane.f32.xlu0 %v1535
    %v1537 = vpop.xlane.xlu0 %1536
    %v1538 = vsel %vm262, %v1534, 0.0
    %1539 = vadd.xlane.f32.xlu0 %v1538
    %v1540 = vpop.xlane.xlu0 %1539
    %v1541 = vmul.f32 %v1537, %v269
    %v1542 = vmul.f32 %v1540, %v269
    %v1543 = vsub.f32 %v1533, %v1541
    %v1544 = vsub.f32 %v1534, %v1542
    %v1545 = vmul.f32 %v1543, %v1543
    %v1546 = vmul.f32 %v1544, %v1544
    %v1547 = vsel %vm262, %v1545, 0.0
    %1548 = vadd.xlane.f32.xlu0 %v1547
    %v1549 = vpop.xlane.xlu0 %1548
    %v1550 = vsel %vm262, %v1546, 0.0
    %1551 = vadd.xlane.f32.xlu0 %v1550
    %v1552 = vpop.xlane.xlu0 %1551
    %v1553 = vmul.f32 %v1549, %v269
    %v1554 = vmul.f32 %v1552, %v269
    %v1555 = vadd.f32 %v1553, 1e-05
    %v1556 = vadd.f32 %v1554, 1e-05
    %v1557 = vrsqrt.pop %v1555
    %v1558 = vrsqrt.pop %v1556
    %v1559 = vmul.f32 %v1543, %v1557
    %v1560 = vmul.f32 %v1544, %v1558
    %v1561 = vld [vmem:[#allocation5 + $0x48] sm:$0x1]
    %v1562 = vlaneseq
    %v1563 = vshrl.u32 %v1562, 7
    %v1564 = vsub.s32 0, %v1563
    %v1565 = vrot.slane %v1561, %v1564
    %v1566 = vmul.f32 %v1559, %v1565
    %v1567 = vmul.f32 %v1560, %v1565
    %v1568 = vld [vmem:[#allocation5 + $0x50] sm:$0x1]
    %v1569 = vlaneseq
    %v1570 = vshrl.u32 %v1569, 7
    %v1571 = vsub.s32 0, %v1570
    %v1572 = vrot.slane %v1568, %v1571
    %v1573 = vadd.f32 %v1566, %v1572
    %v1574 = vadd.f32 %v1567, %v1572
    %v1575 = vpack.c.bf16 %v1574, %v1573
    %v1576 = vld [vmem:[#allocation2 + $0x128] sm:$0xf]
    %v1577 = vld [vmem:[#allocation2 + $0x12c] sm:$0xf]
    %v1578 = vld [vmem:[#allocation2 + $0x130] sm:$0xf]
    %v1579 = vld [vmem:[#allocation2 + $0x134] sm:$0xf]
    %v1580 = vld [vmem:[#allocation5 + $0x58] sm:$0x1]
    %v1581 = vlaneseq
    %v1582 = vshrl.u32 %v1581, 7
    %v1583 = vsub.s32 0, %v1582
    %v1584 = vrot.slane %v1580, %v1583
    %v1589 = vunpack.c.l.b16 %v1576
    %v1590 = vunpack.c.l.b16 %v1577
    %v1591 = vunpack.c.l.b16 %v1578
    %v1592 = vunpack.c.l.b16 %v1579
    %v1593 = vpack.c.b16 %v1590, %v1589
    %v1594 = vpack.c.b16 %v1592, %v1591
    %v1598 = vsel %vm262, %v1575, 0
    %1600 = vmatprep.subr.bf16.mxu0 0
    %1601 = vmatpush1.bf16.msra.mxu0 0
    %1602 = vmatprep.subr.bf16.mxu0 0
    %1603 = vmatpush1.bf16.msra.mxu0 0
    %1604 = vmatprep.subr.bf16.mxu0 0
    %1605 = vmatpush1.bf16.msra.mxu0 0
    %1606 = vmatprep.subr.bf16.mxu0 0
    %1607 = vmatpush1.bf16.msra.mxu0 0
    %1608 = vmatprep.subr.bf16.mxu0 0
    %1609 = vmatpush1.bf16.msra.mxu0 0
    %1610 = vmatprep.subr.bf16.mxu0 0
    %1611 = vmatpush1.bf16.msra.mxu0 0
    %1612 = vmatprep.subr.bf16.mxu0 0
    %1613 = vmatpush1.bf16.msra.mxu0 %v1594
    %1614 = vmatprep.subr.bf16.mxu0 0
    %1615 = vmatpush1.bf16.msra.mxu0 %v1593
    %1616 = vmatprep.subr.bf16.mxu0 0
    %1617 = vmatpush2.bf16.msra.mxu0 0
    %1618 = vmatprep.subr.bf16.mxu0 0
    %1619 = vmatpush2.bf16.msra.mxu0 0
    %1620 = vmatprep.subr.bf16.mxu0 0
    %1621 = vmatpush2.bf16.msra.mxu0 0
    %1622 = vmatprep.subr.bf16.mxu0 0
    %1623 = vmatpush2.bf16.msra.mxu0 0
    %1624 = vmatprep.subr.bf16.mxu0 0
    %1625 = vmatpush2.bf16.msra.mxu0 0
    %1626 = vmatprep.subr.bf16.mxu0 0
    %1627 = vmatpush2.bf16.msra.mxu0 0
    %1628 = vmatprep.subr.bf16.mxu0 0
    %1629 = vmatpush2.bf16.msra.mxu0 0
    %1630 = vmatprep.subr.bf16.mxu0 0
    %1631 = vmatpush2.bf16.msra.mxu0 0
    %1632 = vmatprep.mubr.bf16.mxu0 0
    %1633 = vmatmul.mubr.bf16.gmra.mxu0 %v1598
    %v1634 = vpop.f32.mrf.mxu0
    %v1635 = vadd.f32 %v1584, %v1634
    %v1636 = vpop.f32.mrf.mxu0
    %v1637 = vpop.f32.mrf.mxu0
    %v1638 = vadd.f32 %v1584, %v1637
    %v1639 = vpop.f32.mrf.mxu0
    %1640 = vdwg.mxu0
    %v1641 = vmul.f32 %v1635, 0.5
    %v1642 = vmul.f32 %v1638, 0.5
    %v1643 = vmul.f32 %v1635, 0.044715
    %v1644 = vmul.f32 %v1638, 0.044715
    %v1645 = vmul.f32 %v1643, %v1635
    %v1646 = vmul.f32 %v1644, %v1638
    %v1647 = vmul.f32 %v1645, %v1635
    %v1648 = vmul.f32 %v1646, %v1638
    %v1649 = vadd.f32 %v1635, %v1647
    %v1650 = vadd.f32 %v1638, %v1648
    %v1651 = vmul.f32 %v1649, 0.7978846
    %v1652 = vmul.f32 %v1650, 0.7978846
    %v1653 = vtanh.pop %v1651
    %v1654 = vtanh.pop %v1652
    %v1655 = vadd.f32 %v1653, 1.0
    %v1656 = vadd.f32 %v1654, 1.0
    %v1657 = vmul.f32 %v1641, %v1655
    %v1658 = vmul.f32 %v1642, %v1656
    %v1659 = vpack.c.bf16 %v1658, %v1657
    %v1660 = vld [vmem:[#allocation2 + $0x138] sm:$0xf]
    %v1661 = vld [vmem:[#allocation2 + $0x13c] sm:$0xf]
    %v1662 = vld [vmem:[#allocation2 + $0x140] sm:$0xf]
    %v1663 = vld [vmem:[#allocation2 + $0x144] sm:$0xf]
    %v1664 = vld [vmem:[#allocation2 + $0x148] sm:$0xf]
    %v1665 = vld [vmem:[#allocation2 + $0x14c] sm:$0xf]
    %v1666 = vld [vmem:[#allocation2 + $0x150] sm:$0xf]
    %v1667 = vld [vmem:[#allocation2 + $0x154] sm:$0xf]
    %v1668 = vld [vmem:[#allocation2 + $0x158] sm:$0xf]
    %v1669 = vld [vmem:[#allocation2 + $0x15c] sm:$0xf]
    %v1670 = vld [vmem:[#allocation2 + $0x160] sm:$0xf]
    %v1671 = vld [vmem:[#allocation2 + $0x164] sm:$0xf]
    %v1672 = vld [vmem:[#allocation2 + $0x168] sm:$0xf]
    %v1673 = vld [vmem:[#allocation2 + $0x16c] sm:$0xf]
    %v1674 = vld [vmem:[#allocation2 + $0x170] sm:$0xf]
    %v1675 = vld [vmem:[#allocation2 + $0x174] sm:$0xf]
    %v1676 = vld [vmem:[#allocation5 + $0x60] sm:$0x1]
    %v1677 = vlaneseq
    %v1678 = vshrl.u32 %v1677, 7
    %v1679 = vsub.s32 0, %v1678
    %v1680 = vrot.slane %v1676, %v1679
    %v1697 = vunpack.c.l.b16 %v1660
    %v1698 = vunpack.c.l.b16 %v1661
    %v1699 = vunpack.c.l.b16 %v1662
    %v1700 = vunpack.c.l.b16 %v1663
    %v1701 = vunpack.c.l.b16 %v1664
    %v1702 = vunpack.c.l.b16 %v1665
    %v1703 = vunpack.c.l.b16 %v1666
    %v1704 = vunpack.c.l.b16 %v1667
    %v1705 = vunpack.c.l.b16 %v1668
    %v1706 = vunpack.c.l.b16 %v1669
    %v1707 = vunpack.c.l.b16 %v1670
    %v1708 = vunpack.c.l.b16 %v1671
    %v1709 = vunpack.c.l.b16 %v1672
    %v1710 = vunpack.c.l.b16 %v1673
    %v1711 = vunpack.c.l.b16 %v1674
    %v1712 = vunpack.c.l.b16 %v1675
    %v1713 = vpack.c.b16 %v1698, %v1697
    %v1714 = vpack.c.b16 %v1700, %v1699
    %v1715 = vpack.c.b16 %v1702, %v1701
    %v1716 = vpack.c.b16 %v1704, %v1703
    %v1717 = vpack.c.b16 %v1706, %v1705
    %v1718 = vpack.c.b16 %v1708, %v1707
    %v1719 = vpack.c.b16 %v1710, %v1709
    %v1720 = vpack.c.b16 %v1712, %v1711
    %1729 = vmatprep.subr.bf16.mxu0 0
    %1730 = vmatpush1.bf16.msra.mxu0 %v1720
    %1731 = vmatprep.subr.bf16.mxu0 0
    %1732 = vmatpush1.bf16.msra.mxu0 %v1719
    %1733 = vmatprep.subr.bf16.mxu0 0
    %1734 = vmatpush1.bf16.msra.mxu0 %v1718
    %1735 = vmatprep.subr.bf16.mxu0 0
    %1736 = vmatpush1.bf16.msra.mxu0 %v1717
    %1737 = vmatprep.subr.bf16.mxu0 0
    %1738 = vmatpush1.bf16.msra.mxu0 %v1716
    %1739 = vmatprep.subr.bf16.mxu0 0
    %1740 = vmatpush1.bf16.msra.mxu0 %v1715
    %1741 = vmatprep.subr.bf16.mxu0 0
    %1742 = vmatpush1.bf16.msra.mxu0 %v1714
    %1743 = vmatprep.subr.bf16.mxu0 0
    %1744 = vmatpush1.bf16.msra.mxu0 %v1713
    %1745 = vmatprep.subr.bf16.mxu0 0
    %1746 = vmatpush2.bf16.msra.mxu0 0
    %1747 = vmatprep.subr.bf16.mxu0 0
    %1748 = vmatpush2.bf16.msra.mxu0 0
    %1749 = vmatprep.subr.bf16.mxu0 0
    %1750 = vmatpush2.bf16.msra.mxu0 0
    %1751 = vmatprep.subr.bf16.mxu0 0
    %1752 = vmatpush2.bf16.msra.mxu0 0
    %1753 = vmatprep.subr.bf16.mxu0 0
    %1754 = vmatpush2.bf16.msra.mxu0 0
    %1755 = vmatprep.subr.bf16.mxu0 0
    %1756 = vmatpush2.bf16.msra.mxu0 0
    %1757 = vmatprep.subr.bf16.mxu0 0
    %1758 = vmatpush2.bf16.msra.mxu0 0
    %1759 = vmatprep.subr.bf16.mxu0 0
    %1760 = vmatpush2.bf16.msra.mxu0 0
    %1761 = vmatprep.mubr.bf16.mxu0 0
    %1762 = vmatmul.mubr.bf16.gmra.mxu0 %v1659
    %v1763 = vpop.f32.mrf.mxu0
    %v1764 = vadd.f32 %v1680, %v1763
    %v1765 = vpop.f32.mrf.mxu0
    %v1766 = vpop.f32.mrf.mxu0
    %v1767 = vadd.f32 %v1680, %v1766
    %v1768 = vpop.f32.mrf.mxu0
    %1769 = vdwg.mxu0
    %v1770 = vadd.f32 %v1533, %v1764
    %v1771 = vadd.f32 %v1534, %v1767
    %v1772 = vpack.c.bf16 %v1771, %v1770
    %v1773 = vunpack.c.l.bf16 %v1772
    %v1774 = vunpack.c.h.bf16 %v1772
    %v1775 = vsel %vm262, %v1773, 0.0
    %1776 = vadd.xlane.f32.xlu0 %v1775
    %v1777 = vpop.xlane.xlu0 %1776
    %v1778 = vsel %vm262, %v1774, 0.0
    %1779 = vadd.xlane.f32.xlu0 %v1778
    %v1780 = vpop.xlane.xlu0 %1779
    %v1781 = vmul.f32 %v1777, %v269
    %v1782 = vmul.f32 %v1780, %v269
    %v1783 = vsub.f32 %v1773, %v1781
    %v1784 = vsub.f32 %v1774, %v1782
    %v1785 = vmul.f32 %v1783, %v1783
    %v1786 = vmul.f32 %v1784, %v1784
    %v1787 = vsel %vm262, %v1785, 0.0
    %1788 = vadd.xlane.f32.xlu0 %v1787
    %v1789 = vpop.xlane.xlu0 %1788
    %v1790 = vsel %vm262, %v1786, 0.0
    %1791 = vadd.xlane.f32.xlu0 %v1790
    %v1792 = vpop.xlane.xlu0 %1791
    %v1793 = vmul.f32 %v1789, %v269
    %v1794 = vmul.f32 %v1792, %v269
    %v1795 = vadd.f32 %v1793, 1e-05
    %v1796 = vadd.f32 %v1794, 1e-05
    %v1797 = vrsqrt.pop %v1795
    %v1798 = vrsqrt.pop %v1796
    %v1799 = vmul.f32 %v1783, %v1797
    %v1800 = vmul.f32 %v1784, %v1798
    %v1801 = vld [vmem:[#allocation5 + $0x68] sm:$0x1]
    %v1802 = vlaneseq
    %v1803 = vshrl.u32 %v1802, 7
    %v1804 = vsub.s32 0, %v1803
    %v1805 = vrot.slane %v1801, %v1804
    %v1806 = vmul.f32 %v1799, %v1805
    %v1807 = vmul.f32 %v1800, %v1805
    %v1808 = vld [vmem:[#allocation5 + $0x70] sm:$0x1]
    %v1809 = vlaneseq
    %v1810 = vshrl.u32 %v1809, 7
    %v1811 = vsub.s32 0, %v1810
    %v1812 = vrot.slane %v1808, %v1811
    %v1813 = vadd.f32 %v1806, %v1812
    %v1814 = vadd.f32 %v1807, %v1812
    %v1815 = vpack.c.bf16 %v1814, %v1813
    %v1816 = vld [vmem:[#allocation2 + $0x178] sm:$0xf]
    %v1817 = vld [vmem:[#allocation2 + $0x17c] sm:$0xf]
    %v1818 = vld [vmem:[#allocation2 + $0x180] sm:$0xf]
    %v1819 = vld [vmem:[#allocation2 + $0x184] sm:$0xf]
    %v1824 = vunpack.c.l.b16 %v1816
    %v1825 = vunpack.c.l.b16 %v1817
    %v1826 = vunpack.c.l.b16 %v1818
    %v1827 = vunpack.c.l.b16 %v1819
    %v1828 = vpack.c.b16 %v1825, %v1824
    %v1829 = vpack.c.b16 %v1827, %v1826
    %v1833 = vsel %vm262, %v1815, 0
    %1835 = vmatprep.subr.bf16.mxu0 0
    %1836 = vmatpush1.bf16.msra.mxu0 0
    %1837 = vmatprep.subr.bf16.mxu0 0
    %1838 = vmatpush1.bf16.msra.mxu0 0
    %1839 = vmatprep.subr.bf16.mxu0 0
    %1840 = vmatpush1.bf16.msra.mxu0 0
    %1841 = vmatprep.subr.bf16.mxu0 0
    %1842 = vmatpush1.bf16.msra.mxu0 0
    %1843 = vmatprep.subr.bf16.mxu0 0
    %1844 = vmatpush1.bf16.msra.mxu0 0
    %1845 = vmatprep.subr.bf16.mxu0 0
    %1846 = vmatpush1.bf16.msra.mxu0 0
    %1847 = vmatprep.subr.bf16.mxu0 0
    %1848 = vmatpush1.bf16.msra.mxu0 %v1829
    %1849 = vmatprep.subr.bf16.mxu0 0
    %1850 = vmatpush1.bf16.msra.mxu0 %v1828
    %1851 = vmatprep.subr.bf16.mxu0 0
    %1852 = vmatpush2.bf16.msra.mxu0 0
    %1853 = vmatprep.subr.bf16.mxu0 0
    %1854 = vmatpush2.bf16.msra.mxu0 0
    %1855 = vmatprep.subr.bf16.mxu0 0
    %1856 = vmatpush2.bf16.msra.mxu0 0
    %1857 = vmatprep.subr.bf16.mxu0 0
    %1858 = vmatpush2.bf16.msra.mxu0 0
    %1859 = vmatprep.subr.bf16.mxu0 0
    %1860 = vmatpush2.bf16.msra.mxu0 0
    %1861 = vmatprep.subr.bf16.mxu0 0
    %1862 = vmatpush2.bf16.msra.mxu0 0
    %1863 = vmatprep.subr.bf16.mxu0 0
    %1864 = vmatpush2.bf16.msra.mxu0 0
    %1865 = vmatprep.subr.bf16.mxu0 0
    %1866 = vmatpush2.bf16.msra.mxu0 0
    %1867 = vmatprep.mubr.bf16.mxu0 0
    %1868 = vmatmul.mubr.bf16.gmra.mxu0 %v1833
    %v1869 = vpop.f32.mrf.mxu0
    %v1870 = vadd.f32 0.0, %v1869
    %v1871 = vpop.f32.mrf.mxu0
    %v1872 = vpop.f32.mrf.mxu0
    %v1873 = vadd.f32 0.0, %v1872
    %v1874 = vpop.f32.mrf.mxu0
    %1875 = vdwg.mxu0
    %v1876 = vld [vmem:[#allocation2 + $0x188] sm:$0xf]
    %v1877 = vld [vmem:[#allocation2 + $0x18c] sm:$0xf]
    %v1878 = vld [vmem:[#allocation2 + $0x190] sm:$0xf]
    %v1879 = vld [vmem:[#allocation2 + $0x194] sm:$0xf]
    %v1884 = vunpack.c.l.b16 %v1876
    %v1885 = vunpack.c.l.b16 %v1877
    %v1886 = vunpack.c.l.b16 %v1878
    %v1887 = vunpack.c.l.b16 %v1879
    %v1888 = vpack.c.b16 %v1885, %v1884
    %v1889 = vpack.c.b16 %v1887, %v1886
    %1892 = vmatprep.subr.bf16.mxu0 0
    %1893 = vmatpush1.bf16.msra.mxu0 0
    %1894 = vmatprep.subr.bf16.mxu0 0
    %1895 = vmatpush1.bf16.msra.mxu0 0
    %1896 = vmatprep.subr.bf16.mxu0 0
    %1897 = vmatpush1.bf16.msra.mxu0 0
    %1898 = vmatprep.subr.bf16.mxu0 0
    %1899 = vmatpush1.bf16.msra.mxu0 0
    %1900 = vmatprep.subr.bf16.mxu0 0
    %1901 = vmatpush1.bf16.msra.mxu0 0
    %1902 = vmatprep.subr.bf16.mxu0 0
    %1903 = vmatpush1.bf16.msra.mxu0 0
    %1904 = vmatprep.subr.bf16.mxu0 0
    %1905 = vmatpush1.bf16.msra.mxu0 %v1889
    %1906 = vmatprep.subr.bf16.mxu0 0
    %1907 = vmatpush1.bf16.msra.mxu0 %v1888
    %1908 = vmatprep.subr.bf16.mxu0 0
    %1909 = vmatpush2.bf16.msra.mxu0 0
    %1910 = vmatprep.subr.bf16.mxu0 0
    %1911 = vmatpush2.bf16.msra.mxu0 0
    %1912 = vmatprep.subr.bf16.mxu0 0
    %1913 = vmatpush2.bf16.msra.mxu0 0
    %1914 = vmatprep.subr.bf16.mxu0 0
    %1915 = vmatpush2.bf16.msra.mxu0 0
    %1916 = vmatprep.subr.bf16.mxu0 0
    %1917 = vmatpush2.bf16.msra.mxu0 0
    %1918 = vmatprep.subr.bf16.mxu0 0
    %1919 = vmatpush2.bf16.msra.mxu0 0
    %1920 = vmatprep.subr.bf16.mxu0 0
    %1921 = vmatpush2.bf16.msra.mxu0 0
    %1922 = vmatprep.subr.bf16.mxu0 0
    %1923 = vmatpush2.bf16.msra.mxu0 0
    %1924 = vmatprep.mubr.bf16.mxu0 0
    %1925 = vmatmul.mubr.bf16.gmra.mxu0 %v1833
    %v1926 = vpop.f32.mrf.mxu0
    %v1927 = vadd.f32 0.0, %v1926
    %v1928 = vpop.f32.mrf.mxu0
    %v1929 = vpop.f32.mrf.mxu0
    %v1930 = vadd.f32 0.0, %v1929
    %v1931 = vpop.f32.mrf.mxu0
    %1932 = vdwg.mxu0
    %v1933 = vld [vmem:[#allocation2 + $0x198] sm:$0xf]
    %v1934 = vld [vmem:[#allocation2 + $0x19c] sm:$0xf]
    %v1935 = vld [vmem:[#allocation2 + $0x1a0] sm:$0xf]
    %v1936 = vld [vmem:[#allocation2 + $0x1a4] sm:$0xf]
    %v1941 = vunpack.c.l.b16 %v1933
    %v1942 = vunpack.c.l.b16 %v1934
    %v1943 = vunpack.c.l.b16 %v1935
    %v1944 = vunpack.c.l.b16 %v1936
    %v1945 = vpack.c.b16 %v1942, %v1941
    %v1946 = vpack.c.b16 %v1944, %v1943
    %1949 = vmatprep.subr.bf16.mxu0 0
    %1950 = vmatpush1.bf16.msra.mxu0 0
    %1951 = vmatprep.subr.bf16.mxu0 0
    %1952 = vmatpush1.bf16.msra.mxu0 0
    %1953 = vmatprep.subr.bf16.mxu0 0
    %1954 = vmatpush1.bf16.msra.mxu0 0
    %1955 = vmatprep.subr.bf16.mxu0 0
    %1956 = vmatpush1.bf16.msra.mxu0 0
    %1957 = vmatprep.subr.bf16.mxu0 0
    %1958 = vmatpush1.bf16.msra.mxu0 0
    %1959 = vmatprep.subr.bf16.mxu0 0
    %1960 = vmatpush1.bf16.msra.mxu0 0
    %1961 = vmatprep.subr.bf16.mxu0 0
    %1962 = vmatpush1.bf16.msra.mxu0 %v1946
    %1963 = vmatprep.subr.bf16.mxu0 0
    %1964 = vmatpush1.bf16.msra.mxu0 %v1945
    %1965 = vmatprep.subr.bf16.mxu0 0
    %1966 = vmatpush2.bf16.msra.mxu0 0
    %1967 = vmatprep.subr.bf16.mxu0 0
    %1968 = vmatpush2.bf16.msra.mxu0 0
    %1969 = vmatprep.subr.bf16.mxu0 0
    %1970 = vmatpush2.bf16.msra.mxu0 0
    %1971 = vmatprep.subr.bf16.mxu0 0
    %1972 = vmatpush2.bf16.msra.mxu0 0
    %1973 = vmatprep.subr.bf16.mxu0 0
    %1974 = vmatpush2.bf16.msra.mxu0 0
    %1975 = vmatprep.subr.bf16.mxu0 0
    %1976 = vmatpush2.bf16.msra.mxu0 0
    %1977 = vmatprep.subr.bf16.mxu0 0
    %1978 = vmatpush2.bf16.msra.mxu0 0
    %1979 = vmatprep.subr.bf16.mxu0 0
    %1980 = vmatpush2.bf16.msra.mxu0 0
    %1981 = vmatprep.mubr.bf16.mxu0 0
    %1982 = vmatmul.mubr.bf16.gmra.mxu0 %v1833
    %v1983 = vpop.f32.mrf.mxu0
    %v1984 = vadd.f32 0.0, %v1983
    %v1985 = vpop.f32.mrf.mxu0
    %v1986 = vpop.f32.mrf.mxu0
    %v1987 = vadd.f32 0.0, %v1986
    %v1988 = vpop.f32.mrf.mxu0
    %1989 = vdwg.mxu0
    %v1990 = vpack.c.bf16 %v1873, %v1870
    %v1991 = vpack.c.bf16 %v1930, %v1927
    %v1993 = vsel %vm191, %v1990, 0
    %v1996 = vsel %vm191, %v1991, 0
    %1998 = vmatprep.subr.bf16.mxu0 0
    %1999 = vmatpush1.bf16.xpose.msra.mxu0 0
    %2000 = vmatprep.subr.bf16.mxu0 0
    %2001 = vmatpush1.bf16.xpose.msra.mxu0 0
    %2002 = vmatprep.subr.bf16.mxu0 0
    %2003 = vmatpush1.bf16.xpose.msra.mxu0 0
    %2004 = vmatprep.subr.bf16.mxu0 0
    %2005 = vmatpush1.bf16.xpose.msra.mxu0 0
    %2006 = vmatprep.subr.bf16.mxu0 0
    %2007 = vmatpush1.bf16.xpose.msra.mxu0 0
    %2008 = vmatprep.subr.bf16.mxu0 0
    %2009 = vmatpush1.bf16.xpose.msra.mxu0 0
    %2010 = vmatprep.subr.bf16.mxu0 0
    %2011 = vmatpush1.bf16.xpose.msra.mxu0 0
    %2012 = vmatprep.subr.bf16.mxu0 0
    %2013 = vmatpush1.bf16.xpose.msra.mxu0 %v1996
    %2014 = vmatprep.subr.bf16.mxu0 0
    %2015 = vmatpush2.bf16.xpose.msra.mxu0 0
    %2016 = vmatprep.subr.bf16.mxu0 0
    %2017 = vmatpush2.bf16.xpose.msra.mxu0 0
    %2018 = vmatprep.subr.bf16.mxu0 0
    %2019 = vmatpush2.bf16.xpose.msra.mxu0 0
    %2020 = vmatprep.subr.bf16.mxu0 0
    %2021 = vmatpush2.bf16.xpose.msra.mxu0 0
    %2022 = vmatprep.subr.bf16.mxu0 0
    %2023 = vmatpush2.bf16.xpose.msra.mxu0 0
    %2024 = vmatprep.subr.bf16.mxu0 0
    %2025 = vmatpush2.bf16.xpose.msra.mxu0 0
    %2026 = vmatprep.subr.bf16.mxu0 0
    %2027 = vmatpush2.bf16.xpose.msra.mxu0 0
    %2028 = vmatprep.subr.bf16.mxu0 0
    %2029 = vmatpush2.bf16.xpose.msra.mxu0 0
    %2030 = vmatprep.mubr.bf16.mxu0 0
    %2031 = vmatmul.mubr.bf16.gmra.mxu0 %v1993
    %v2032 = vpop.f32.mrf.mxu0
    %v2033 = vadd.f32 %v244, %v2032
    %v2034 = vpop.f32.mrf.mxu0
    %v2035 = vpop.f32.mrf.mxu0
    %v2036 = vadd.f32 %v245, %v2035
    %v2037 = vpop.f32.mrf.mxu0
    %2038 = vdwg.mxu0
    %v2039 = vsel %vm78, %v2033, -inf
    %2040 = vmax.xlane.f32.xlu0 %v2039
    %v2041 = vpop.xlane.xlu0 %2040
    %v2042 = vsel %vm78, %v2036, -inf
    %2043 = vmax.xlane.f32.xlu0 %v2042
    %v2044 = vpop.xlane.xlu0 %2043
    %v2045 = vsub.f32 %v2033, %v2041
    %v2046 = vsub.f32 %v2036, %v2044
    %v2047 = vmul.f32 %v2045, 1.442695
    %v2048 = vpow.pop %v2047
    %v2049 = vmul.f32 %v2046, 1.442695
    %v2050 = vpow.pop %v2049
    %v2051 = vsel %vm78, %v2048, 0.0
    %2052 = vadd.xlane.f32.xlu0 %v2051
    %v2053 = vpop.xlane.xlu0 %2052
    %v2054 = vsel %vm78, %v2050, 0.0
    %2055 = vadd.xlane.f32.xlu0 %v2054
    %v2056 = vpop.xlane.xlu0 %2055
    %v2057 = vrcp.pop %v2053
    %v2058 = vrcp.pop %v2056
    %v2059 = vmul.f32 %v2048, %v2057
    %v2060 = vmul.f32 %v2050, %v2058
    %v2061 = vpack.c.bf16 %v2060, %v2059
    %v2062 = vpack.c.bf16 %v1987, %v1984
    %v2063 = vld [vmem:[#allocation2 + $0x1a8] sm:$0xf]
    %v2064 = vld [vmem:[#allocation2 + $0x1ac] sm:$0xf]
    %v2065 = vld [vmem:[#allocation2 + $0x1b0] sm:$0xf]
    %v2066 = vld [vmem:[#allocation2 + $0x1b4] sm:$0xf]
    %v2071 = vunpack.c.l.b16 %v2063
    %v2072 = vunpack.c.l.b16 %v2064
    %v2073 = vunpack.c.l.b16 %v2065
    %v2074 = vunpack.c.l.b16 %v2066
    %v2075 = vpack.c.b16 %v2072, %v2071
    %v2076 = vpack.c.b16 %v2074, %v2073
    %2079 = vmatprep.subr.bf16.mxu0 0
    %2080 = vmatpush1.bf16.msra.mxu0 0
    %2081 = vmatprep.subr.bf16.mxu0 0
    %2082 = vmatpush1.bf16.msra.mxu0 0
    %2083 = vmatprep.subr.bf16.mxu0 0
    %2084 = vmatpush1.bf16.msra.mxu0 0
    %2085 = vmatprep.subr.bf16.mxu0 0
    %2086 = vmatpush1.bf16.msra.mxu0 0
    %2087 = vmatprep.subr.bf16.mxu0 0
    %2088 = vmatpush1.bf16.msra.mxu0 0
    %2089 = vmatprep.subr.bf16.mxu0 0
    %2090 = vmatpush1.bf16.msra.mxu0 0
    %2091 = vmatprep.subr.bf16.mxu0 0
    %2092 = vmatpush1.bf16.msra.mxu0 %v2076
    %2093 = vmatprep.subr.bf16.mxu0 0
    %2094 = vmatpush1.bf16.msra.mxu0 %v2075
    %2095 = vmatprep.subr.bf16.mxu0 0
    %2096 = vmatpush2.bf16.msra.mxu0 0
    %2097 = vmatprep.subr.bf16.mxu0 0
    %2098 = vmatpush2.bf16.msra.mxu0 0
    %2099 = vmatprep.subr.bf16.mxu0 0
    %2100 = vmatpush2.bf16.msra.mxu0 0
    %2101 = vmatprep.subr.bf16.mxu0 0
    %2102 = vmatpush2.bf16.msra.mxu0 0
    %2103 = vmatprep.subr.bf16.mxu0 0
    %2104 = vmatpush2.bf16.msra.mxu0 0
    %2105 = vmatprep.subr.bf16.mxu0 0
    %2106 = vmatpush2.bf16.msra.mxu0 0
    %2107 = vmatprep.subr.bf16.mxu0 0
    %2108 = vmatpush2.bf16.msra.mxu0 0
    %2109 = vmatprep.subr.bf16.mxu0 0
    %2110 = vmatpush2.bf16.msra.mxu0 0
    %2111 = vmatprep.mubr.bf16.mxu0 0
    %2112 = vmatmul.mubr.bf16.gmra.mxu0 %v1833
    %v2113 = vpop.f32.mrf.mxu0
    %v2114 = vadd.f32 0.0, %v2113
    %v2115 = vpop.f32.mrf.mxu0
    %v2116 = vpop.f32.mrf.mxu0
    %v2117 = vadd.f32 0.0, %v2116
    %v2118 = vpop.f32.mrf.mxu0
    %2119 = vdwg.mxu0
    %v2120 = vld [vmem:[#allocation2 + $0x1b8] sm:$0xf]
    %v2121 = vld [vmem:[#allocation2 + $0x1bc] sm:$0xf]
    %v2122 = vld [vmem:[#allocation2 + $0x1c0] sm:$0xf]
    %v2123 = vld [vmem:[#allocation2 + $0x1c4] sm:$0xf]
    %v2128 = vunpack.c.l.b16 %v2120
    %v2129 = vunpack.c.l.b16 %v2121
    %v2130 = vunpack.c.l.b16 %v2122
    %v2131 = vunpack.c.l.b16 %v2123
    %v2132 = vpack.c.b16 %v2129, %v2128
    %v2133 = vpack.c.b16 %v2131, %v2130
    %2136 = vmatprep.subr.bf16.mxu0 0
    %2137 = vmatpush1.bf16.msra.mxu0 0
    %2138 = vmatprep.subr.bf16.mxu0 0
    %2139 = vmatpush1.bf16.msra.mxu0 0
    %2140 = vmatprep.subr.bf16.mxu0 0
    %2141 = vmatpush1.bf16.msra.mxu0 0
    %2142 = vmatprep.subr.bf16.mxu0 0
    %2143 = vmatpush1.bf16.msra.mxu0 0
    %2144 = vmatprep.subr.bf16.mxu0 0
    %2145 = vmatpush1.bf16.msra.mxu0 0
    %2146 = vmatprep.subr.bf16.mxu0 0
    %2147 = vmatpush1.bf16.msra.mxu0 0
    %2148 = vmatprep.subr.bf16.mxu0 0
    %2149 = vmatpush1.bf16.msra.mxu0 %v2133
    %2150 = vmatprep.subr.bf16.mxu0 0
    %2151 = vmatpush1.bf16.msra.mxu0 %v2132
    %2152 = vmatprep.subr.bf16.mxu0 0
    %2153 = vmatpush2.bf16.msra.mxu0 0
    %2154 = vmatprep.subr.bf16.mxu0 0
    %2155 = vmatpush2.bf16.msra.mxu0 0
    %2156 = vmatprep.subr.bf16.mxu0 0
    %2157 = vmatpush2.bf16.msra.mxu0 0
    %2158 = vmatprep.subr.bf16.mxu0 0
    %2159 = vmatpush2.bf16.msra.mxu0 0
    %2160 = vmatprep.subr.bf16.mxu0 0
    %2161 = vmatpush2.bf16.msra.mxu0 0
    %2162 = vmatprep.subr.bf16.mxu0 0
    %2163 = vmatpush2.bf16.msra.mxu0 0
    %2164 = vmatprep.subr.bf16.mxu0 0
    %2165 = vmatpush2.bf16.msra.mxu0 0
    %2166 = vmatprep.subr.bf16.mxu0 0
    %2167 = vmatpush2.bf16.msra.mxu0 0
    %2168 = vmatprep.mubr.bf16.mxu0 0
    %2169 = vmatmul.mubr.bf16.gmra.mxu0 %v1833
    %v2170 = vpop.f32.mrf.mxu0
    %v2171 = vadd.f32 0.0, %v2170
    %v2172 = vpop.f32.mrf.mxu0
    %v2173 = vpop.f32.mrf.mxu0
    %v2174 = vadd.f32 0.0, %v2173
    %v2175 = vpop.f32.mrf.mxu0
    %2176 = vdwg.mxu0
    %v2177 = vld [vmem:[#allocation2 + $0x1c8] sm:$0xf]
    %v2178 = vld [vmem:[#allocation2 + $0x1cc] sm:$0xf]
    %v2179 = vld [vmem:[#allocation2 + $0x1d0] sm:$0xf]
    %v2180 = vld [vmem:[#allocation2 + $0x1d4] sm:$0xf]
    %v2185 = vunpack.c.l.b16 %v2177
    %v2186 = vunpack.c.l.b16 %v2178
    %v2187 = vunpack.c.l.b16 %v2179
    %v2188 = vunpack.c.l.b16 %v2180
    %v2189 = vpack.c.b16 %v2186, %v2185
    %v2190 = vpack.c.b16 %v2188, %v2187
    %2193 = vmatprep.subr.bf16.mxu0 0
    %2194 = vmatpush1.bf16.msra.mxu0 0
    %2195 = vmatprep.subr.bf16.mxu0 0
    %2196 = vmatpush1.bf16.msra.mxu0 0
    %2197 = vmatprep.subr.bf16.mxu0 0
    %2198 = vmatpush1.bf16.msra.mxu0 0
    %2199 = vmatprep.subr.bf16.mxu0 0
    %2200 = vmatpush1.bf16.msra.mxu0 0
    %2201 = vmatprep.subr.bf16.mxu0 0
    %2202 = vmatpush1.bf16.msra.mxu0 0
    %2203 = vmatprep.subr.bf16.mxu0 0
    %2204 = vmatpush1.bf16.msra.mxu0 0
    %2205 = vmatprep.subr.bf16.mxu0 0
    %2206 = vmatpush1.bf16.msra.mxu0 %v2190
    %2207 = vmatprep.subr.bf16.mxu0 0
    %2208 = vmatpush1.bf16.msra.mxu0 %v2189
    %2209 = vmatprep.subr.bf16.mxu0 0
    %2210 = vmatpush2.bf16.msra.mxu0 0
    %2211 = vmatprep.subr.bf16.mxu0 0
    %2212 = vmatpush2.bf16.msra.mxu0 0
    %2213 = vmatprep.subr.bf16.mxu0 0
    %2214 = vmatpush2.bf16.msra.mxu0 0
    %2215 = vmatprep.subr.bf16.mxu0 0
    %2216 = vmatpush2.bf16.msra.mxu0 0
    %2217 = vmatprep.subr.bf16.mxu0 0
    %2218 = vmatpush2.bf16.msra.mxu0 0
    %2219 = vmatprep.subr.bf16.mxu0 0
    %2220 = vmatpush2.bf16.msra.mxu0 0
    %2221 = vmatprep.subr.bf16.mxu0 0
    %2222 = vmatpush2.bf16.msra.mxu0 0
    %2223 = vmatprep.subr.bf16.mxu0 0
    %2224 = vmatpush2.bf16.msra.mxu0 0
    %2225 = vmatprep.mubr.bf16.mxu0 0
    %2226 = vmatmul.mubr.bf16.gmra.mxu0 %v1833
    %v2227 = vpop.f32.mrf.mxu0
    %v2228 = vadd.f32 0.0, %v2227
    %v2229 = vpop.f32.mrf.mxu0
    %v2230 = vpop.f32.mrf.mxu0
    %v2231 = vadd.f32 0.0, %v2230
    %v2232 = vpop.f32.mrf.mxu0
    %2233 = vdwg.mxu0
    %v2234 = vpack.c.bf16 %v2117, %v2114
    %v2235 = vpack.c.bf16 %v2174, %v2171
    %v2237 = vsel %vm191, %v2234, 0
    %v2240 = vsel %vm191, %v2235, 0
    %2242 = vmatprep.subr.bf16.mxu0 0
    %2243 = vmatpush1.bf16.xpose.msra.mxu0 0
    %2244 = vmatprep.subr.bf16.mxu0 0
    %2245 = vmatpush1.bf16.xpose.msra.mxu0 0
    %2246 = vmatprep.subr.bf16.mxu0 0
    %2247 = vmatpush1.bf16.xpose.msra.mxu0 0
    %2248 = vmatprep.subr.bf16.mxu0 0
    %2249 = vmatpush1.bf16.xpose.msra.mxu0 0
    %2250 = vmatprep.subr.bf16.mxu0 0
    %2251 = vmatpush1.bf16.xpose.msra.mxu0 0
    %2252 = vmatprep.subr.bf16.mxu0 0
    %2253 = vmatpush1.bf16.xpose.msra.mxu0 0
    %2254 = vmatprep.subr.bf16.mxu0 0
    %2255 = vmatpush1.bf16.xpose.msra.mxu0 0
    %2256 = vmatprep.subr.bf16.mxu0 0
    %2257 = vmatpush1.bf16.xpose.msra.mxu0 %v2240
    %2258 = vmatprep.subr.bf16.mxu0 0
    %2259 = vmatpush2.bf16.xpose.msra.mxu0 0
    %2260 = vmatprep.subr.bf16.mxu0 0
    %2261 = vmatpush2.bf16.xpose.msra.mxu0 0
    %2262 = vmatprep.subr.bf16.mxu0 0
    %2263 = vmatpush2.bf16.xpose.msra.mxu0 0
    %2264 = vmatprep.subr.bf16.mxu0 0
    %2265 = vmatpush2.bf16.xpose.msra.mxu0 0
    %2266 = vmatprep.subr.bf16.mxu0 0
    %2267 = vmatpush2.bf16.xpose.msra.mxu0 0
    %2268 = vmatprep.subr.bf16.mxu0 0
    %2269 = vmatpush2.bf16.xpose.msra.mxu0 0
    %2270 = vmatprep.subr.bf16.mxu0 0
    %2271 = vmatpush2.bf16.xpose.msra.mxu0 0
    %2272 = vmatprep.subr.bf16.mxu0 0
    %2273 = vmatpush2.bf16.xpose.msra.mxu0 0
    %2274 = vmatprep.mubr.bf16.mxu0 0
    %2275 = vmatmul.mubr.bf16.gmra.mxu0 %v2237
    %v2276 = vpop.f32.mrf.mxu0
    %v2277 = vadd.f32 %v244, %v2276
    %v2278 = vpop.f32.mrf.mxu0
    %v2279 = vpop.f32.mrf.mxu0
    %v2280 = vadd.f32 %v245, %v2279
    %v2281 = vpop.f32.mrf.mxu0
    %2282 = vdwg.mxu0
    %v2283 = vsel %vm78, %v2277, -inf
    %2284 = vmax.xlane.f32.xlu0 %v2283
    %v2285 = vpop.xlane.xlu0 %2284
    %v2286 = vsel %vm78, %v2280, -inf
    %2287 = vmax.xlane.f32.xlu0 %v2286
    %v2288 = vpop.xlane.xlu0 %2287
    %v2289 = vsub.f32 %v2277, %v2285
    %v2290 = vsub.f32 %v2280, %v2288
    %v2291 = vmul.f32 %v2289, 1.442695
    %v2292 = vpow.pop %v2291
    %v2293 = vmul.f32 %v2290, 1.442695
    %v2294 = vpow.pop %v2293
    %v2295 = vsel %vm78, %v2292, 0.0
    %2296 = vadd.xlane.f32.xlu0 %v2295
    %v2297 = vpop.xlane.xlu0 %2296
    %v2298 = vsel %vm78, %v2294, 0.0
    %2299 = vadd.xlane.f32.xlu0 %v2298
    %v2300 = vpop.xlane.xlu0 %2299
    %v2301 = vrcp.pop %v2297
    %v2302 = vrcp.pop %v2300
    %v2303 = vmul.f32 %v2292, %v2301
    %v2304 = vmul.f32 %v2294, %v2302
    %v2305 = vpack.c.bf16 %v2304, %v2303
    %v2306 = vpack.c.bf16 %v2231, %v2228
    %v2308 = vsel %vm78, %v2305, 0
    %2310 = vmatprep.subr.bf16.mxu0 0
    %2311 = vmatpush1.bf16.msra.mxu0 0
    %2312 = vmatprep.subr.bf16.mxu0 0
    %2313 = vmatpush1.bf16.msra.mxu0 0
    %2314 = vmatprep.subr.bf16.mxu0 0
    %2315 = vmatpush1.bf16.msra.mxu0 0
    %2316 = vmatprep.subr.bf16.mxu0 0
    %2317 = vmatpush1.bf16.msra.mxu0 0
    %2318 = vmatprep.subr.bf16.mxu0 0
    %2319 = vmatpush1.bf16.msra.mxu0 0
    %2320 = vmatprep.subr.bf16.mxu0 0
    %2321 = vmatpush1.bf16.msra.mxu0 0
    %2322 = vmatprep.subr.bf16.mxu0 0
    %2323 = vmatpush1.bf16.msra.mxu0 0
    %2324 = vmatprep.subr.bf16.mxu0 0
    %2325 = vmatpush1.bf16.msra.mxu0 %v2306
    %2326 = vmatprep.subr.bf16.mxu0 0
    %2327 = vmatpush2.bf16.msra.mxu0 0
    %2328 = vmatprep.subr.bf16.mxu0 0
    %2329 = vmatpush2.bf16.msra.mxu0 0
    %2330 = vmatprep.subr.bf16.mxu0 0
    %2331 = vmatpush2.bf16.msra.mxu0 0
    %2332 = vmatprep.subr.bf16.mxu0 0
    %2333 = vmatpush2.bf16.msra.mxu0 0
    %2334 = vmatprep.subr.bf16.mxu0 0
    %2335 = vmatpush2.bf16.msra.mxu0 0
    %2336 = vmatprep.subr.bf16.mxu0 0
    %2337 = vmatpush2.bf16.msra.mxu0 0
    %2338 = vmatprep.subr.bf16.mxu0 0
    %2339 = vmatpush2.bf16.msra.mxu0 0
    %2340 = vmatprep.subr.bf16.mxu0 0
    %2341 = vmatpush2.bf16.msra.mxu0 0
    %2342 = vmatprep.mubr.bf16.mxu0 0
    %2343 = vmatmul.mubr.bf16.gmra.mxu0 %v2308
    %v2344 = vpop.f32.mrf.mxu0
    %v2345 = vadd.f32 0.0, %v2344
    %v2346 = vpop.f32.mrf.mxu0
    %v2347 = vpop.f32.mrf.mxu0
    %v2348 = vadd.f32 0.0, %v2347
    %v2349 = vpop.f32.mrf.mxu0
    %2350 = vdwg.mxu0
    %v2352 = vsel %vm78, %v2061, 0
    %2354 = vmatprep.subr.bf16.mxu0 0
    %2355 = vmatpush1.bf16.msra.mxu0 0
    %2356 = vmatprep.subr.bf16.mxu0 0
    %2357 = vmatpush1.bf16.msra.mxu0 0
    %2358 = vmatprep.subr.bf16.mxu0 0
    %2359 = vmatpush1.bf16.msra.mxu0 0
    %2360 = vmatprep.subr.bf16.mxu0 0
    %2361 = vmatpush1.bf16.msra.mxu0 0
    %2362 = vmatprep.subr.bf16.mxu0 0
    %2363 = vmatpush1.bf16.msra.mxu0 0
    %2364 = vmatprep.subr.bf16.mxu0 0
    %2365 = vmatpush1.bf16.msra.mxu0 0
    %2366 = vmatprep.subr.bf16.mxu0 0
    %2367 = vmatpush1.bf16.msra.mxu0 0
    %2368 = vmatprep.subr.bf16.mxu0 0
    %2369 = vmatpush1.bf16.msra.mxu0 %v2062
    %2370 = vmatprep.subr.bf16.mxu0 0
    %2371 = vmatpush2.bf16.msra.mxu0 0
    %2372 = vmatprep.subr.bf16.mxu0 0
    %2373 = vmatpush2.bf16.msra.mxu0 0
    %2374 = vmatprep.subr.bf16.mxu0 0
    %2375 = vmatpush2.bf16.msra.mxu0 0
    %2376 = vmatprep.subr.bf16.mxu0 0
    %2377 = vmatpush2.bf16.msra.mxu0 0
    %2378 = vmatprep.subr.bf16.mxu0 0
    %2379 = vmatpush2.bf16.msra.mxu0 0
    %2380 = vmatprep.subr.bf16.mxu0 0
    %2381 = vmatpush2.bf16.msra.mxu0 0
    %2382 = vmatprep.subr.bf16.mxu0 0
    %2383 = vmatpush2.bf16.msra.mxu0 0
    %2384 = vmatprep.subr.bf16.mxu0 0
    %2385 = vmatpush2.bf16.msra.mxu0 0
    %2386 = vmatprep.mubr.bf16.mxu0 0
    %2387 = vmatmul.mubr.bf16.gmra.mxu0 %v2352
    %v2388 = vpop.f32.mrf.mxu0
    %v2389 = vadd.f32 %v2345, %v2388
    %v2390 = vpop.f32.mrf.mxu0
    %v2391 = vpop.f32.mrf.mxu0
    %v2392 = vadd.f32 %v2348, %v2391
    %v2393 = vpop.f32.mrf.mxu0
    %2394 = vdwg.mxu0
    %v2395 = vld [vmem:[#allocation2 + $0x1d8] sm:$0xf]
    %v2396 = vld [vmem:[#allocation2 + $0x1dc] sm:$0xf]
    %v2397 = vld [vmem:[#allocation2 + $0x1e0] sm:$0xf]
    %v2398 = vld [vmem:[#allocation2 + $0x1e4] sm:$0xf]
    %v2403 = vunpack.c.l.b16 %v2395
    %v2404 = vunpack.c.l.b16 %v2396
    %v2405 = vunpack.c.l.b16 %v2397
    %v2406 = vunpack.c.l.b16 %v2398
    %v2407 = vpack.c.b16 %v2404, %v2403
    %v2408 = vpack.c.b16 %v2406, %v2405
    %2411 = vmatprep.subr.bf16.mxu0 0
    %2412 = vmatpush1.bf16.msra.mxu0 0
    %2413 = vmatprep.subr.bf16.mxu0 0
    %2414 = vmatpush1.bf16.msra.mxu0 0
    %2415 = vmatprep.subr.bf16.mxu0 0
    %2416 = vmatpush1.bf16.msra.mxu0 0
    %2417 = vmatprep.subr.bf16.mxu0 0
    %2418 = vmatpush1.bf16.msra.mxu0 0
    %2419 = vmatprep.subr.bf16.mxu0 0
    %2420 = vmatpush1.bf16.msra.mxu0 0
    %2421 = vmatprep.subr.bf16.mxu0 0
    %2422 = vmatpush1.bf16.msra.mxu0 0
    %2423 = vmatprep.subr.bf16.mxu0 0
    %2424 = vmatpush1.bf16.msra.mxu0 %v2408
    %2425 = vmatprep.subr.bf16.mxu0 0
    %2426 = vmatpush1.bf16.msra.mxu0 %v2407
    %2427 = vmatprep.subr.bf16.mxu0 0
    %2428 = vmatpush2.bf16.msra.mxu0 0
    %2429 = vmatprep.subr.bf16.mxu0 0
    %2430 = vmatpush2.bf16.msra.mxu0 0
    %2431 = vmatprep.subr.bf16.mxu0 0
    %2432 = vmatpush2.bf16.msra.mxu0 0
    %2433 = vmatprep.subr.bf16.mxu0 0
    %2434 = vmatpush2.bf16.msra.mxu0 0
    %2435 = vmatprep.subr.bf16.mxu0 0
    %2436 = vmatpush2.bf16.msra.mxu0 0
    %2437 = vmatprep.subr.bf16.mxu0 0
    %2438 = vmatpush2.bf16.msra.mxu0 0
    %2439 = vmatprep.subr.bf16.mxu0 0
    %2440 = vmatpush2.bf16.msra.mxu0 0
    %2441 = vmatprep.subr.bf16.mxu0 0
    %2442 = vmatpush2.bf16.msra.mxu0 0
    %2443 = vmatprep.mubr.bf16.mxu0 0
    %2444 = vmatmul.mubr.bf16.gmra.mxu0 %v1833
    %v2445 = vpop.f32.mrf.mxu0
    %v2446 = vadd.f32 0.0, %v2445
    %v2447 = vpop.f32.mrf.mxu0
    %v2448 = vpop.f32.mrf.mxu0
    %v2449 = vadd.f32 0.0, %v2448
    %v2450 = vpop.f32.mrf.mxu0
    %2451 = vdwg.mxu0
    %v2452 = vld [vmem:[#allocation2 + $0x1e8] sm:$0xf]
    %v2453 = vld [vmem:[#allocation2 + $0x1ec] sm:$0xf]
    %v2454 = vld [vmem:[#allocation2 + $0x1f0] sm:$0xf]
    %v2455 = vld [vmem:[#allocation2 + $0x1f4] sm:$0xf]
    %v2460 = vunpack.c.l.b16 %v2452
    %v2461 = vunpack.c.l.b16 %v2453
    %v2462 = vunpack.c.l.b16 %v2454
    %v2463 = vunpack.c.l.b16 %v2455
    %v2464 = vpack.c.b16 %v2461, %v2460
    %v2465 = vpack.c.b16 %v2463, %v2462
    %2468 = vmatprep.subr.bf16.mxu0 0
    %2469 = vmatpush1.bf16.msra.mxu0 0
    %2470 = vmatprep.subr.bf16.mxu0 0
    %2471 = vmatpush1.bf16.msra.mxu0 0
    %2472 = vmatprep.subr.bf16.mxu0 0
    %2473 = vmatpush1.bf16.msra.mxu0 0
    %2474 = vmatprep.subr.bf16.mxu0 0
    %2475 = vmatpush1.bf16.msra.mxu0 0
    %2476 = vmatprep.subr.bf16.mxu0 0
    %2477 = vmatpush1.bf16.msra.mxu0 0
    %2478 = vmatprep.subr.bf16.mxu0 0
    %2479 = vmatpush1.bf16.msra.mxu0 0
    %2480 = vmatprep.subr.bf16.mxu0 0
    %2481 = vmatpush1.bf16.msra.mxu0 %v2465
    %2482 = vmatprep.subr.bf16.mxu0 0
    %2483 = vmatpush1.bf16.msra.mxu0 %v2464
    %2484 = vmatprep.subr.bf16.mxu0 0
    %2485 = vmatpush2.bf16.msra.mxu0 0
    %2486 = vmatprep.subr.bf16.mxu0 0
    %2487 = vmatpush2.bf16.msra.mxu0 0
    %2488 = vmatprep.subr.bf16.mxu0 0
    %2489 = vmatpush2.bf16.msra.mxu0 0
    %2490 = vmatprep.subr.bf16.mxu0 0
    %2491 = vmatpush2.bf16.msra.mxu0 0
    %2492 = vmatprep.subr.bf16.mxu0 0
    %2493 = vmatpush2.bf16.msra.mxu0 0
    %2494 = vmatprep.subr.bf16.mxu0 0
    %2495 = vmatpush2.bf16.msra.mxu0 0
    %2496 = vmatprep.subr.bf16.mxu0 0
    %2497 = vmatpush2.bf16.msra.mxu0 0
    %2498 = vmatprep.subr.bf16.mxu0 0
    %2499 = vmatpush2.bf16.msra.mxu0 0
    %2500 = vmatprep.mubr.bf16.mxu0 0
    %2501 = vmatmul.mubr.bf16.gmra.mxu0 %v1833
    %v2502 = vpop.f32.mrf.mxu0
    %v2503 = vadd.f32 0.0, %v2502
    %v2504 = vpop.f32.mrf.mxu0
    %v2505 = vpop.f32.mrf.mxu0
    %v2506 = vadd.f32 0.0, %v2505
    %v2507 = vpop.f32.mrf.mxu0
    %2508 = vdwg.mxu0
    %v2509 = vld [vmem:[#allocation2 + $0x1f8] sm:$0xf]
    %v2510 = vld [vmem:[#allocation2 + $0x1fc] sm:$0xf]
    %v2511 = vld [vmem:[#allocation2 + $0x200] sm:$0xf]
    %v2512 = vld [vmem:[#allocation2 + $0x204] sm:$0xf]
    %v2517 = vunpack.c.l.b16 %v2509
    %v2518 = vunpack.c.l.b16 %v2510
    %v2519 = vunpack.c.l.b16 %v2511
    %v2520 = vunpack.c.l.b16 %v2512
    %v2521 = vpack.c.b16 %v2518, %v2517
    %v2522 = vpack.c.b16 %v2520, %v2519
    %2525 = vmatprep.subr.bf16.mxu0 0
    %2526 = vmatpush1.bf16.msra.mxu0 0
    %2527 = vmatprep.subr.bf16.mxu0 0
    %2528 = vmatpush1.bf16.msra.mxu0 0
    %2529 = vmatprep.subr.bf16.mxu0 0
    %2530 = vmatpush1.bf16.msra.mxu0 0
    %2531 = vmatprep.subr.bf16.mxu0 0
    %2532 = vmatpush1.bf16.msra.mxu0 0
    %2533 = vmatprep.subr.bf16.mxu0 0
    %2534 = vmatpush1.bf16.msra.mxu0 0
    %2535 = vmatprep.subr.bf16.mxu0 0
    %2536 = vmatpush1.bf16.msra.mxu0 0
    %2537 = vmatprep.subr.bf16.mxu0 0
    %2538 = vmatpush1.bf16.msra.mxu0 %v2522
    %2539 = vmatprep.subr.bf16.mxu0 0
    %2540 = vmatpush1.bf16.msra.mxu0 %v2521
    %2541 = vmatprep.subr.bf16.mxu0 0
    %2542 = vmatpush2.bf16.msra.mxu0 0
    %2543 = vmatprep.subr.bf16.mxu0 0
    %2544 = vmatpush2.bf16.msra.mxu0 0
    %2545 = vmatprep.subr.bf16.mxu0 0
    %2546 = vmatpush2.bf16.msra.mxu0 0
    %2547 = vmatprep.subr.bf16.mxu0 0
    %2548 = vmatpush2.bf16.msra.mxu0 0
    %2549 = vmatprep.subr.bf16.mxu0 0
    %2550 = vmatpush2.bf16.msra.mxu0 0
    %2551 = vmatprep.subr.bf16.mxu0 0
    %2552 = vmatpush2.bf16.msra.mxu0 0
    %2553 = vmatprep.subr.bf16.mxu0 0
    %2554 = vmatpush2.bf16.msra.mxu0 0
    %2555 = vmatprep.subr.bf16.mxu0 0
    %2556 = vmatpush2.bf16.msra.mxu0 0
    %2557 = vmatprep.mubr.bf16.mxu0 0
    %2558 = vmatmul.mubr.bf16.gmra.mxu0 %v1833
    %v2559 = vpop.f32.mrf.mxu0
    %v2560 = vadd.f32 0.0, %v2559
    %v2561 = vpop.f32.mrf.mxu0
    %v2562 = vpop.f32.mrf.mxu0
    %v2563 = vadd.f32 0.0, %v2562
    %v2564 = vpop.f32.mrf.mxu0
    %2565 = vdwg.mxu0
    %v2566 = vpack.c.bf16 %v2449, %v2446
    %v2567 = vpack.c.bf16 %v2506, %v2503
    %v2569 = vsel %vm191, %v2566, 0
    %v2572 = vsel %vm191, %v2567, 0
    %2574 = vmatprep.subr.bf16.mxu0 0
    %2575 = vmatpush1.bf16.xpose.msra.mxu0 0
    %2576 = vmatprep.subr.bf16.mxu0 0
    %2577 = vmatpush1.bf16.xpose.msra.mxu0 0
    %2578 = vmatprep.subr.bf16.mxu0 0
    %2579 = vmatpush1.bf16.xpose.msra.mxu0 0
    %2580 = vmatprep.subr.bf16.mxu0 0
    %2581 = vmatpush1.bf16.xpose.msra.mxu0 0
    %2582 = vmatprep.subr.bf16.mxu0 0
    %2583 = vmatpush1.bf16.xpose.msra.mxu0 0
    %2584 = vmatprep.subr.bf16.mxu0 0
    %2585 = vmatpush1.bf16.xpose.msra.mxu0 0
    %2586 = vmatprep.subr.bf16.mxu0 0
    %2587 = vmatpush1.bf16.xpose.msra.mxu0 0
    %2588 = vmatprep.subr.bf16.mxu0 0
    %2589 = vmatpush1.bf16.xpose.msra.mxu0 %v2572
    %2590 = vmatprep.subr.bf16.mxu0 0
    %2591 = vmatpush2.bf16.xpose.msra.mxu0 0
    %2592 = vmatprep.subr.bf16.mxu0 0
    %2593 = vmatpush2.bf16.xpose.msra.mxu0 0
    %2594 = vmatprep.subr.bf16.mxu0 0
    %2595 = vmatpush2.bf16.xpose.msra.mxu0 0
    %2596 = vmatprep.subr.bf16.mxu0 0
    %2597 = vmatpush2.bf16.xpose.msra.mxu0 0
    %2598 = vmatprep.subr.bf16.mxu0 0
    %2599 = vmatpush2.bf16.xpose.msra.mxu0 0
    %2600 = vmatprep.subr.bf16.mxu0 0
    %2601 = vmatpush2.bf16.xpose.msra.mxu0 0
    %2602 = vmatprep.subr.bf16.mxu0 0
    %2603 = vmatpush2.bf16.xpose.msra.mxu0 0
    %2604 = vmatprep.subr.bf16.mxu0 0
    %2605 = vmatpush2.bf16.xpose.msra.mxu0 0
    %2606 = vmatprep.mubr.bf16.mxu0 0
    %2607 = vmatmul.mubr.bf16.gmra.mxu0 %v2569
    %v2608 = vpop.f32.mrf.mxu0
    %v2609 = vadd.f32 %v244, %v2608
    %v2610 = vpop.f32.mrf.mxu0
    %v2611 = vpop.f32.mrf.mxu0
    %v2612 = vadd.f32 %v245, %v2611
    %v2613 = vpop.f32.mrf.mxu0
    %2614 = vdwg.mxu0
    %v2615 = vsel %vm78, %v2609, -inf
    %2616 = vmax.xlane.f32.xlu0 %v2615
    %v2617 = vpop.xlane.xlu0 %2616
    %v2618 = vsel %vm78, %v2612, -inf
    %2619 = vmax.xlane.f32.xlu0 %v2618
    %v2620 = vpop.xlane.xlu0 %2619
    %v2621 = vsub.f32 %v2609, %v2617
    %v2622 = vsub.f32 %v2612, %v2620
    %v2623 = vmul.f32 %v2621, 1.442695
    %v2624 = vpow.pop %v2623
    %v2625 = vmul.f32 %v2622, 1.442695
    %v2626 = vpow.pop %v2625
    %v2627 = vsel %vm78, %v2624, 0.0
    %2628 = vadd.xlane.f32.xlu0 %v2627
    %v2629 = vpop.xlane.xlu0 %2628
    %v2630 = vsel %vm78, %v2626, 0.0
    %2631 = vadd.xlane.f32.xlu0 %v2630
    %v2632 = vpop.xlane.xlu0 %2631
    %v2633 = vrcp.pop %v2629
    %v2634 = vrcp.pop %v2632
    %v2635 = vmul.f32 %v2624, %v2633
    %v2636 = vmul.f32 %v2626, %v2634
    %v2637 = vpack.c.bf16 %v2636, %v2635
    %v2638 = vpack.c.bf16 %v2563, %v2560
    %v2640 = vsel %vm78, %v2637, 0
    %2642 = vmatprep.subr.bf16.mxu0 0
    %2643 = vmatpush1.bf16.msra.mxu0 0
    %2644 = vmatprep.subr.bf16.mxu0 0
    %2645 = vmatpush1.bf16.msra.mxu0 0
    %2646 = vmatprep.subr.bf16.mxu0 0
    %2647 = vmatpush1.bf16.msra.mxu0 0
    %2648 = vmatprep.subr.bf16.mxu0 0
    %2649 = vmatpush1.bf16.msra.mxu0 0
    %2650 = vmatprep.subr.bf16.mxu0 0
    %2651 = vmatpush1.bf16.msra.mxu0 0
    %2652 = vmatprep.subr.bf16.mxu0 0
    %2653 = vmatpush1.bf16.msra.mxu0 0
    %2654 = vmatprep.subr.bf16.mxu0 0
    %2655 = vmatpush1.bf16.msra.mxu0 0
    %2656 = vmatprep.subr.bf16.mxu0 0
    %2657 = vmatpush1.bf16.msra.mxu0 %v2638
    %2658 = vmatprep.subr.bf16.mxu0 0
    %2659 = vmatpush2.bf16.msra.mxu0 0
    %2660 = vmatprep.subr.bf16.mxu0 0
    %2661 = vmatpush2.bf16.msra.mxu0 0
    %2662 = vmatprep.subr.bf16.mxu0 0
    %2663 = vmatpush2.bf16.msra.mxu0 0
    %2664 = vmatprep.subr.bf16.mxu0 0
    %2665 = vmatpush2.bf16.msra.mxu0 0
    %2666 = vmatprep.subr.bf16.mxu0 0
    %2667 = vmatpush2.bf16.msra.mxu0 0
    %2668 = vmatprep.subr.bf16.mxu0 0
    %2669 = vmatpush2.bf16.msra.mxu0 0
    %2670 = vmatprep.subr.bf16.mxu0 0
    %2671 = vmatpush2.bf16.msra.mxu0 0
    %2672 = vmatprep.subr.bf16.mxu0 0
    %2673 = vmatpush2.bf16.msra.mxu0 0
    %2674 = vmatprep.mubr.bf16.mxu0 0
    %2675 = vmatmul.mubr.bf16.gmra.mxu0 %v2640
    %v2676 = vpop.f32.mrf.mxu0
    %v2677 = vadd.f32 0.0, %v2676
    %v2678 = vpop.f32.mrf.mxu0
    %v2679 = vpop.f32.mrf.mxu0
    %v2680 = vadd.f32 0.0, %v2679
    %v2681 = vpop.f32.mrf.mxu0
    %2682 = vdwg.mxu0
    %v2683 = vadd.f32 %v2389, %v2677
    %v2684 = vadd.f32 %v2392, %v2680
    %v2685 = vld [vmem:[#allocation2 + $0x208] sm:$0xf]
    %v2686 = vld [vmem:[#allocation2 + $0x20c] sm:$0xf]
    %v2687 = vld [vmem:[#allocation2 + $0x210] sm:$0xf]
    %v2688 = vld [vmem:[#allocation2 + $0x214] sm:$0xf]
    %v2693 = vunpack.c.l.b16 %v2685
    %v2694 = vunpack.c.l.b16 %v2686
    %v2695 = vunpack.c.l.b16 %v2687
    %v2696 = vunpack.c.l.b16 %v2688
    %v2697 = vpack.c.b16 %v2694, %v2693
    %v2698 = vpack.c.b16 %v2696, %v2695
    %2701 = vmatprep.subr.bf16.mxu0 0
    %2702 = vmatpush1.bf16.msra.mxu0 0
    %2703 = vmatprep.subr.bf16.mxu0 0
    %2704 = vmatpush1.bf16.msra.mxu0 0
    %2705 = vmatprep.subr.bf16.mxu0 0
    %2706 = vmatpush1.bf16.msra.mxu0 0
    %2707 = vmatprep.subr.bf16.mxu0 0
    %2708 = vmatpush1.bf16.msra.mxu0 0
    %2709 = vmatprep.subr.bf16.mxu0 0
    %2710 = vmatpush1.bf16.msra.mxu0 0
    %2711 = vmatprep.subr.bf16.mxu0 0
    %2712 = vmatpush1.bf16.msra.mxu0 0
    %2713 = vmatprep.subr.bf16.mxu0 0
    %2714 = vmatpush1.bf16.msra.mxu0 %v2698
    %2715 = vmatprep.subr.bf16.mxu0 0
    %2716 = vmatpush1.bf16.msra.mxu0 %v2697
    %2717 = vmatprep.subr.bf16.mxu0 0
    %2718 = vmatpush2.bf16.msra.mxu0 0
    %2719 = vmatprep.subr.bf16.mxu0 0
    %2720 = vmatpush2.bf16.msra.mxu0 0
    %2721 = vmatprep.subr.bf16.mxu0 0
    %2722 = vmatpush2.bf16.msra.mxu0 0
    %2723 = vmatprep.subr.bf16.mxu0 0
    %2724 = vmatpush2.bf16.msra.mxu0 0
    %2725 = vmatprep.subr.bf16.mxu0 0
    %2726 = vmatpush2.bf16.msra.mxu0 0
    %2727 = vmatprep.subr.bf16.mxu0 0
    %2728 = vmatpush2.bf16.msra.mxu0 0
    %2729 = vmatprep.subr.bf16.mxu0 0
    %2730 = vmatpush2.bf16.msra.mxu0 0
    %2731 = vmatprep.subr.bf16.mxu0 0
    %2732 = vmatpush2.bf16.msra.mxu0 0
    %2733 = vmatprep.mubr.bf16.mxu0 0
    %2734 = vmatmul.mubr.bf16.gmra.mxu0 %v1833
    %v2735 = vpop.f32.mrf.mxu0
    %v2736 = vadd.f32 0.0, %v2735
    %v2737 = vpop.f32.mrf.mxu0
    %v2738 = vpop.f32.mrf.mxu0
    %v2739 = vadd.f32 0.0, %v2738
    %v2740 = vpop.f32.mrf.mxu0
    %2741 = vdwg.mxu0
    %v2742 = vld [vmem:[#allocation2 + $0x218] sm:$0xf]
    %v2743 = vld [vmem:[#allocation2 + $0x21c] sm:$0xf]
    %v2744 = vld [vmem:[#allocation2 + $0x220] sm:$0xf]
    %v2745 = vld [vmem:[#allocation2 + $0x224] sm:$0xf]
    %v2750 = vunpack.c.l.b16 %v2742
    %v2751 = vunpack.c.l.b16 %v2743
    %v2752 = vunpack.c.l.b16 %v2744
    %v2753 = vunpack.c.l.b16 %v2745
    %v2754 = vpack.c.b16 %v2751, %v2750
    %v2755 = vpack.c.b16 %v2753, %v2752
    %2758 = vmatprep.subr.bf16.mxu0 0
    %2759 = vmatpush1.bf16.msra.mxu0 0
    %2760 = vmatprep.subr.bf16.mxu0 0
    %2761 = vmatpush1.bf16.msra.mxu0 0
    %2762 = vmatprep.subr.bf16.mxu0 0
    %2763 = vmatpush1.bf16.msra.mxu0 0
    %2764 = vmatprep.subr.bf16.mxu0 0
    %2765 = vmatpush1.bf16.msra.mxu0 0
    %2766 = vmatprep.subr.bf16.mxu0 0
    %2767 = vmatpush1.bf16.msra.mxu0 0
    %2768 = vmatprep.subr.bf16.mxu0 0
    %2769 = vmatpush1.bf16.msra.mxu0 0
    %2770 = vmatprep.subr.bf16.mxu0 0
    %2771 = vmatpush1.bf16.msra.mxu0 %v2755
    %2772 = vmatprep.subr.bf16.mxu0 0
    %2773 = vmatpush1.bf16.msra.mxu0 %v2754
    %2774 = vmatprep.subr.bf16.mxu0 0
    %2775 = vmatpush2.bf16.msra.mxu0 0
    %2776 = vmatprep.subr.bf16.mxu0 0
    %2777 = vmatpush2.bf16.msra.mxu0 0
    %2778 = vmatprep.subr.bf16.mxu0 0
    %2779 = vmatpush2.bf16.msra.mxu0 0
    %2780 = vmatprep.subr.bf16.mxu0 0
    %2781 = vmatpush2.bf16.msra.mxu0 0
    %2782 = vmatprep.subr.bf16.mxu0 0
    %2783 = vmatpush2.bf16.msra.mxu0 0
    %2784 = vmatprep.subr.bf16.mxu0 0
    %2785 = vmatpush2.bf16.msra.mxu0 0
    %2786 = vmatprep.subr.bf16.mxu0 0
    %2787 = vmatpush2.bf16.msra.mxu0 0
    %2788 = vmatprep.subr.bf16.mxu0 0
    %2789 = vmatpush2.bf16.msra.mxu0 0
    %2790 = vmatprep.mubr.bf16.mxu0 0
    %2791 = vmatmul.mubr.bf16.gmra.mxu0 %v1833
    %v2792 = vpop.f32.mrf.mxu0
    %v2793 = vadd.f32 0.0, %v2792
    %v2794 = vpop.f32.mrf.mxu0
    %v2795 = vpop.f32.mrf.mxu0
    %v2796 = vadd.f32 0.0, %v2795
    %v2797 = vpop.f32.mrf.mxu0
    %2798 = vdwg.mxu0
    %v2799 = vld [vmem:[#allocation2 + $0x228] sm:$0xf]
    %v2800 = vld [vmem:[#allocation2 + $0x22c] sm:$0xf]
    %v2801 = vld [vmem:[#allocation2 + $0x230] sm:$0xf]
    %v2802 = vld [vmem:[#allocation2 + $0x234] sm:$0xf]
    %v2807 = vunpack.c.l.b16 %v2799
    %v2808 = vunpack.c.l.b16 %v2800
    %v2809 = vunpack.c.l.b16 %v2801
    %v2810 = vunpack.c.l.b16 %v2802
    %v2811 = vpack.c.b16 %v2808, %v2807
    %v2812 = vpack.c.b16 %v2810, %v2809
    %2815 = vmatprep.subr.bf16.mxu0 0
    %2816 = vmatpush1.bf16.msra.mxu0 0
    %2817 = vmatprep.subr.bf16.mxu0 0
    %2818 = vmatpush1.bf16.msra.mxu0 0
    %2819 = vmatprep.subr.bf16.mxu0 0
    %2820 = vmatpush1.bf16.msra.mxu0 0
    %2821 = vmatprep.subr.bf16.mxu0 0
    %2822 = vmatpush1.bf16.msra.mxu0 0
    %2823 = vmatprep.subr.bf16.mxu0 0
    %2824 = vmatpush1.bf16.msra.mxu0 0
    %2825 = vmatprep.subr.bf16.mxu0 0
    %2826 = vmatpush1.bf16.msra.mxu0 0
    %2827 = vmatprep.subr.bf16.mxu0 0
    %2828 = vmatpush1.bf16.msra.mxu0 %v2812
    %2829 = vmatprep.subr.bf16.mxu0 0
    %2830 = vmatpush1.bf16.msra.mxu0 %v2811
    %2831 = vmatprep.subr.bf16.mxu0 0
    %2832 = vmatpush2.bf16.msra.mxu0 0
    %2833 = vmatprep.subr.bf16.mxu0 0
    %2834 = vmatpush2.bf16.msra.mxu0 0
    %2835 = vmatprep.subr.bf16.mxu0 0
    %2836 = vmatpush2.bf16.msra.mxu0 0
    %2837 = vmatprep.subr.bf16.mxu0 0
    %2838 = vmatpush2.bf16.msra.mxu0 0
    %2839 = vmatprep.subr.bf16.mxu0 0
    %2840 = vmatpush2.bf16.msra.mxu0 0
    %2841 = vmatprep.subr.bf16.mxu0 0
    %2842 = vmatpush2.bf16.msra.mxu0 0
    %2843 = vmatprep.subr.bf16.mxu0 0
    %2844 = vmatpush2.bf16.msra.mxu0 0
    %2845 = vmatprep.subr.bf16.mxu0 0
    %2846 = vmatpush2.bf16.msra.mxu0 0
    %2847 = vmatprep.mubr.bf16.mxu0 0
    %2848 = vmatmul.mubr.bf16.gmra.mxu0 %v1833
    %v2849 = vpop.f32.mrf.mxu0
    %v2850 = vadd.f32 0.0, %v2849
    %v2851 = vpop.f32.mrf.mxu0
    %v2852 = vpop.f32.mrf.mxu0
    %v2853 = vadd.f32 0.0, %v2852
    %v2854 = vpop.f32.mrf.mxu0
    %2855 = vdwg.mxu0
    %v2856 = vpack.c.bf16 %v2739, %v2736
    %v2857 = vpack.c.bf16 %v2796, %v2793
    %v2859 = vsel %vm191, %v2856, 0
    %v2862 = vsel %vm191, %v2857, 0
    %2864 = vmatprep.subr.bf16.mxu0 0
    %2865 = vmatpush1.bf16.xpose.msra.mxu0 0
    %2866 = vmatprep.subr.bf16.mxu0 0
    %2867 = vmatpush1.bf16.xpose.msra.mxu0 0
    %2868 = vmatprep.subr.bf16.mxu0 0
    %2869 = vmatpush1.bf16.xpose.msra.mxu0 0
    %2870 = vmatprep.subr.bf16.mxu0 0
    %2871 = vmatpush1.bf16.xpose.msra.mxu0 0
    %2872 = vmatprep.subr.bf16.mxu0 0
    %2873 = vmatpush1.bf16.xpose.msra.mxu0 0
    %2874 = vmatprep.subr.bf16.mxu0 0
    %2875 = vmatpush1.bf16.xpose.msra.mxu0 0
    %2876 = vmatprep.subr.bf16.mxu0 0
    %2877 = vmatpush1.bf16.xpose.msra.mxu0 0
    %2878 = vmatprep.subr.bf16.mxu0 0
    %2879 = vmatpush1.bf16.xpose.msra.mxu0 %v2862
    %2880 = vmatprep.subr.bf16.mxu0 0
    %2881 = vmatpush2.bf16.xpose.msra.mxu0 0
    %2882 = vmatprep.subr.bf16.mxu0 0
    %2883 = vmatpush2.bf16.xpose.msra.mxu0 0
    %2884 = vmatprep.subr.bf16.mxu0 0
    %2885 = vmatpush2.bf16.xpose.msra.mxu0 0
    %2886 = vmatprep.subr.bf16.mxu0 0
    %2887 = vmatpush2.bf16.xpose.msra.mxu0 0
    %2888 = vmatprep.subr.bf16.mxu0 0
    %2889 = vmatpush2.bf16.xpose.msra.mxu0 0
    %2890 = vmatprep.subr.bf16.mxu0 0
    %2891 = vmatpush2.bf16.xpose.msra.mxu0 0
    %2892 = vmatprep.subr.bf16.mxu0 0
    %2893 = vmatpush2.bf16.xpose.msra.mxu0 0
    %2894 = vmatprep.subr.bf16.mxu0 0
    %2895 = vmatpush2.bf16.xpose.msra.mxu0 0
    %2896 = vmatprep.mubr.bf16.mxu0 0
    %2897 = vmatmul.mubr.bf16.gmra.mxu0 %v2859
    %v2898 = vpop.f32.mrf.mxu0
    %v2899 = vadd.f32 %v244, %v2898
    %v2900 = vpop.f32.mrf.mxu0
    %v2901 = vpop.f32.mrf.mxu0
    %v2902 = vadd.f32 %v245, %v2901
    %v2903 = vpop.f32.mrf.mxu0
    %2904 = vdwg.mxu0
    %v2905 = vsel %vm78, %v2899, -inf
    %2906 = vmax.xlane.f32.xlu0 %v2905
    %v2907 = vpop.xlane.xlu0 %2906
    %v2908 = vsel %vm78, %v2902, -inf
    %2909 = vmax.xlane.f32.xlu0 %v2908
    %v2910 = vpop.xlane.xlu0 %2909
    %v2911 = vsub.f32 %v2899, %v2907
    %v2912 = vsub.f32 %v2902, %v2910
    %v2913 = vmul.f32 %v2911, 1.442695
    %v2914 = vpow.pop %v2913
    %v2915 = vmul.f32 %v2912, 1.442695
    %v2916 = vpow.pop %v2915
    %v2917 = vsel %vm78, %v2914, 0.0
    %2918 = vadd.xlane.f32.xlu0 %v2917
    %v2919 = vpop.xlane.xlu0 %2918
    %v2920 = vsel %vm78, %v2916, 0.0
    %2921 = vadd.xlane.f32.xlu0 %v2920
    %v2922 = vpop.xlane.xlu0 %2921
    %v2923 = vrcp.pop %v2919
    %v2924 = vrcp.pop %v2922
    %v2925 = vmul.f32 %v2914, %v2923
    %v2926 = vmul.f32 %v2916, %v2924
    %v2927 = vpack.c.bf16 %v2926, %v2925
    %v2928 = vpack.c.bf16 %v2853, %v2850
    %v2930 = vsel %vm78, %v2927, 0
    %2932 = vmatprep.subr.bf16.mxu0 0
    %2933 = vmatpush1.bf16.msra.mxu0 0
    %2934 = vmatprep.subr.bf16.mxu0 0
    %2935 = vmatpush1.bf16.msra.mxu0 0
    %2936 = vmatprep.subr.bf16.mxu0 0
    %2937 = vmatpush1.bf16.msra.mxu0 0
    %2938 = vmatprep.subr.bf16.mxu0 0
    %2939 = vmatpush1.bf16.msra.mxu0 0
    %2940 = vmatprep.subr.bf16.mxu0 0
    %2941 = vmatpush1.bf16.msra.mxu0 0
    %2942 = vmatprep.subr.bf16.mxu0 0
    %2943 = vmatpush1.bf16.msra.mxu0 0
    %2944 = vmatprep.subr.bf16.mxu0 0
    %2945 = vmatpush1.bf16.msra.mxu0 0
    %2946 = vmatprep.subr.bf16.mxu0 0
    %2947 = vmatpush1.bf16.msra.mxu0 %v2928
    %2948 = vmatprep.subr.bf16.mxu0 0
    %2949 = vmatpush2.bf16.msra.mxu0 0
    %2950 = vmatprep.subr.bf16.mxu0 0
    %2951 = vmatpush2.bf16.msra.mxu0 0
    %2952 = vmatprep.subr.bf16.mxu0 0
    %2953 = vmatpush2.bf16.msra.mxu0 0
    %2954 = vmatprep.subr.bf16.mxu0 0
    %2955 = vmatpush2.bf16.msra.mxu0 0
    %2956 = vmatprep.subr.bf16.mxu0 0
    %2957 = vmatpush2.bf16.msra.mxu0 0
    %2958 = vmatprep.subr.bf16.mxu0 0
    %2959 = vmatpush2.bf16.msra.mxu0 0
    %2960 = vmatprep.subr.bf16.mxu0 0
    %2961 = vmatpush2.bf16.msra.mxu0 0
    %2962 = vmatprep.subr.bf16.mxu0 0
    %2963 = vmatpush2.bf16.msra.mxu0 0
    %2964 = vmatprep.mubr.bf16.mxu0 0
    %2965 = vmatmul.mubr.bf16.gmra.mxu0 %v2930
    %v2966 = vpop.f32.mrf.mxu0
    %v2967 = vadd.f32 0.0, %v2966
    %v2968 = vpop.f32.mrf.mxu0
    %v2969 = vpop.f32.mrf.mxu0
    %v2970 = vadd.f32 0.0, %v2969
    %v2971 = vpop.f32.mrf.mxu0
    %2972 = vdwg.mxu0
    %v2973 = vadd.f32 %v2683, %v2967
    %v2974 = vadd.f32 %v2684, %v2970
    %v2975 = vpack.c.bf16 %v2974, %v2973
    %v2976 = vld [vmem:[#allocation2 + $0x238] sm:$0xf]
    %v2977 = vld [vmem:[#allocation2 + $0x23c] sm:$0xf]
    %v2978 = vld [vmem:[#allocation2 + $0x240] sm:$0xf]
    %v2979 = vld [vmem:[#allocation2 + $0x244] sm:$0xf]
    %v2980 = vld [vmem:[#allocation5 + $0x78] sm:$0x1]
    %v2981 = vlaneseq
    %v2982 = vshrl.u32 %v2981, 7
    %v2983 = vsub.s32 0, %v2982
    %v2984 = vrot.slane %v2980, %v2983
    %v2989 = vunpack.c.l.b16 %v2976
    %v2990 = vunpack.c.l.b16 %v2977
    %v2991 = vunpack.c.l.b16 %v2978
    %v2992 = vunpack.c.l.b16 %v2979
    %v2993 = vpack.c.b16 %v2990, %v2989
    %v2994 = vpack.c.b16 %v2992, %v2991
    %v2998 = vsel %vm262, %v2975, 0
    %3000 = vmatprep.subr.bf16.mxu0 0
    %3001 = vmatpush1.bf16.msra.mxu0 0
    %3002 = vmatprep.subr.bf16.mxu0 0
    %3003 = vmatpush1.bf16.msra.mxu0 0
    %3004 = vmatprep.subr.bf16.mxu0 0
    %3005 = vmatpush1.bf16.msra.mxu0 0
    %3006 = vmatprep.subr.bf16.mxu0 0
    %3007 = vmatpush1.bf16.msra.mxu0 0
    %3008 = vmatprep.subr.bf16.mxu0 0
    %3009 = vmatpush1.bf16.msra.mxu0 0
    %3010 = vmatprep.subr.bf16.mxu0 0
    %3011 = vmatpush1.bf16.msra.mxu0 0
    %3012 = vmatprep.subr.bf16.mxu0 0
    %3013 = vmatpush1.bf16.msra.mxu0 %v2994
    %3014 = vmatprep.subr.bf16.mxu0 0
    %3015 = vmatpush1.bf16.msra.mxu0 %v2993
    %3016 = vmatprep.subr.bf16.mxu0 0
    %3017 = vmatpush2.bf16.msra.mxu0 0
    %3018 = vmatprep.subr.bf16.mxu0 0
    %3019 = vmatpush2.bf16.msra.mxu0 0
    %3020 = vmatprep.subr.bf16.mxu0 0
    %3021 = vmatpush2.bf16.msra.mxu0 0
    %3022 = vmatprep.subr.bf16.mxu0 0
    %3023 = vmatpush2.bf16.msra.mxu0 0
    %3024 = vmatprep.subr.bf16.mxu0 0
    %3025 = vmatpush2.bf16.msra.mxu0 0
    %3026 = vmatprep.subr.bf16.mxu0 0
    %3027 = vmatpush2.bf16.msra.mxu0 0
    %3028 = vmatprep.subr.bf16.mxu0 0
    %3029 = vmatpush2.bf16.msra.mxu0 0
    %3030 = vmatprep.subr.bf16.mxu0 0
    %3031 = vmatpush2.bf16.msra.mxu0 0
    %3032 = vmatprep.mubr.bf16.mxu0 0
    %3033 = vmatmul.mubr.bf16.gmra.mxu0 %v2998
    %v3034 = vpop.f32.mrf.mxu0
    %v3035 = vadd.f32 %v2984, %v3034
    %v3036 = vpop.f32.mrf.mxu0
    %v3037 = vpop.f32.mrf.mxu0
    %v3038 = vadd.f32 %v2984, %v3037
    %v3039 = vpop.f32.mrf.mxu0
    %3040 = vdwg.mxu0
    %v3041 = vadd.f32 %v1773, %v3035
    %v3042 = vadd.f32 %v1774, %v3038
    %v3043 = vpack.c.bf16 %v3042, %v3041
    %v3044 = vunpack.c.l.bf16 %v3043
    %v3045 = vunpack.c.h.bf16 %v3043
    %v3046 = vsel %vm262, %v3044, 0.0
    %3047 = vadd.xlane.f32.xlu0 %v3046
    %v3048 = vpop.xlane.xlu0 %3047
    %v3049 = vsel %vm262, %v3045, 0.0
    %3050 = vadd.xlane.f32.xlu0 %v3049
    %v3051 = vpop.xlane.xlu0 %3050
    %v3052 = vmul.f32 %v3048, %v269
    %v3053 = vmul.f32 %v3051, %v269
    %v3054 = vsub.f32 %v3044, %v3052
    %v3055 = vsub.f32 %v3045, %v3053
    %v3056 = vmul.f32 %v3054, %v3054
    %v3057 = vmul.f32 %v3055, %v3055
    %v3058 = vsel %vm262, %v3056, 0.0
    %3059 = vadd.xlane.f32.xlu0 %v3058
    %v3060 = vpop.xlane.xlu0 %3059
    %v3061 = vsel %vm262, %v3057, 0.0
    %3062 = vadd.xlane.f32.xlu0 %v3061
    %v3063 = vpop.xlane.xlu0 %3062
    %v3064 = vmul.f32 %v3060, %v269
    %v3065 = vmul.f32 %v3063, %v269
    %v3066 = vadd.f32 %v3064, 1e-05
    %v3067 = vadd.f32 %v3065, 1e-05
    %v3068 = vrsqrt.pop %v3066
    %v3069 = vrsqrt.pop %v3067
    %v3070 = vmul.f32 %v3054, %v3068
    %v3071 = vmul.f32 %v3055, %v3069
    %v3072 = vld [vmem:[#allocation5 + $0x80] sm:$0x1]
    %v3073 = vlaneseq
    %v3074 = vshrl.u32 %v3073, 7
    %v3075 = vsub.s32 0, %v3074
    %v3076 = vrot.slane %v3072, %v3075
    %v3077 = vmul.f32 %v3070, %v3076
    %v3078 = vmul.f32 %v3071, %v3076
    %v3079 = vld [vmem:[#allocation5 + $0x88] sm:$0x1]
    %v3080 = vlaneseq
    %v3081 = vshrl.u32 %v3080, 7
    %v3082 = vsub.s32 0, %v3081
    %v3083 = vrot.slane %v3079, %v3082
    %v3084 = vadd.f32 %v3077, %v3083
    %v3085 = vadd.f32 %v3078, %v3083
    %v3086 = vpack.c.bf16 %v3085, %v3084
    %v3087 = vld [vmem:[#allocation2 + $0x248] sm:$0xf]
    %v3088 = vld [vmem:[#allocation2 + $0x24c] sm:$0xf]
    %v3089 = vld [vmem:[#allocation2 + $0x250] sm:$0xf]
    %v3090 = vld [vmem:[#allocation2 + $0x254] sm:$0xf]
    %v3091 = vld [vmem:[#allocation5 + $0x90] sm:$0x1]
    %v3092 = vlaneseq
    %v3093 = vshrl.u32 %v3092, 7
    %v3094 = vsub.s32 0, %v3093
    %v3095 = vrot.slane %v3091, %v3094
    %v3100 = vunpack.c.l.b16 %v3087
    %v3101 = vunpack.c.l.b16 %v3088
    %v3102 = vunpack.c.l.b16 %v3089
    %v3103 = vunpack.c.l.b16 %v3090
    %v3104 = vpack.c.b16 %v3101, %v3100
    %v3105 = vpack.c.b16 %v3103, %v3102
    %v3109 = vsel %vm262, %v3086, 0
    %3111 = vmatprep.subr.bf16.mxu0 0
    %3112 = vmatpush1.bf16.msra.mxu0 0
    %3113 = vmatprep.subr.bf16.mxu0 0
    %3114 = vmatpush1.bf16.msra.mxu0 0
    %3115 = vmatprep.subr.bf16.mxu0 0
    %3116 = vmatpush1.bf16.msra.mxu0 0
    %3117 = vmatprep.subr.bf16.mxu0 0
    %3118 = vmatpush1.bf16.msra.mxu0 0
    %3119 = vmatprep.subr.bf16.mxu0 0
    %3120 = vmatpush1.bf16.msra.mxu0 0
    %3121 = vmatprep.subr.bf16.mxu0 0
    %3122 = vmatpush1.bf16.msra.mxu0 0
    %3123 = vmatprep.subr.bf16.mxu0 0
    %3124 = vmatpush1.bf16.msra.mxu0 %v3105
    %3125 = vmatprep.subr.bf16.mxu0 0
    %3126 = vmatpush1.bf16.msra.mxu0 %v3104
    %3127 = vmatprep.subr.bf16.mxu0 0
    %3128 = vmatpush2.bf16.msra.mxu0 0
    %3129 = vmatprep.subr.bf16.mxu0 0
    %3130 = vmatpush2.bf16.msra.mxu0 0
    %3131 = vmatprep.subr.bf16.mxu0 0
    %3132 = vmatpush2.bf16.msra.mxu0 0
    %3133 = vmatprep.subr.bf16.mxu0 0
    %3134 = vmatpush2.bf16.msra.mxu0 0
    %3135 = vmatprep.subr.bf16.mxu0 0
    %3136 = vmatpush2.bf16.msra.mxu0 0
    %3137 = vmatprep.subr.bf16.mxu0 0
    %3138 = vmatpush2.bf16.msra.mxu0 0
    %3139 = vmatprep.subr.bf16.mxu0 0
    %3140 = vmatpush2.bf16.msra.mxu0 0
    %3141 = vmatprep.subr.bf16.mxu0 0
    %3142 = vmatpush2.bf16.msra.mxu0 0
    %3143 = vmatprep.mubr.bf16.mxu0 0
    %3144 = vmatmul.mubr.bf16.gmra.mxu0 %v3109
    %v3145 = vpop.f32.mrf.mxu0
    %v3146 = vadd.f32 %v3095, %v3145
    %v3147 = vpop.f32.mrf.mxu0
    %v3148 = vpop.f32.mrf.mxu0
    %v3149 = vadd.f32 %v3095, %v3148
    %v3150 = vpop.f32.mrf.mxu0
    %3151 = vdwg.mxu0
    %v3152 = vmul.f32 %v3146, 0.5
    %v3153 = vmul.f32 %v3149, 0.5
    %v3154 = vmul.f32 %v3146, 0.044715
    %v3155 = vmul.f32 %v3149, 0.044715
    %v3156 = vmul.f32 %v3154, %v3146
    %v3157 = vmul.f32 %v3155, %v3149
    %v3158 = vmul.f32 %v3156, %v3146
    %v3159 = vmul.f32 %v3157, %v3149
    %v3160 = vadd.f32 %v3146, %v3158
    %v3161 = vadd.f32 %v3149, %v3159
    %v3162 = vmul.f32 %v3160, 0.7978846
    %v3163 = vmul.f32 %v3161, 0.7978846
    %v3164 = vtanh.pop %v3162
    %v3165 = vtanh.pop %v3163
    %v3166 = vadd.f32 %v3164, 1.0
    %v3167 = vadd.f32 %v3165, 1.0
    %v3168 = vmul.f32 %v3152, %v3166
    %v3169 = vmul.f32 %v3153, %v3167
    %v3170 = vpack.c.bf16 %v3169, %v3168
    %v3171 = vld [vmem:[#allocation2 + $0x258] sm:$0xf]
    %v3172 = vld [vmem:[#allocation2 + $0x25c] sm:$0xf]
    %v3173 = vld [vmem:[#allocation2 + $0x260] sm:$0xf]
    %v3174 = vld [vmem:[#allocation2 + $0x264] sm:$0xf]
    %v3175 = vld [vmem:[#allocation2 + $0x268] sm:$0xf]
    %v3176 = vld [vmem:[#allocation2 + $0x26c] sm:$0xf]
    %v3177 = vld [vmem:[#allocation2 + $0x270] sm:$0xf]
    %v3178 = vld [vmem:[#allocation2 + $0x274] sm:$0xf]
    %v3179 = vld [vmem:[#allocation2 + $0x278] sm:$0xf]
    %v3180 = vld [vmem:[#allocation2 + $0x27c] sm:$0xf]
    %v3181 = vld [vmem:[#allocation2 + $0x280] sm:$0xf]
    %v3182 = vld [vmem:[#allocation2 + $0x284] sm:$0xf]
    %v3183 = vld [vmem:[#allocation2 + $0x288] sm:$0xf]
    %v3184 = vld [vmem:[#allocation2 + $0x28c] sm:$0xf]
    %v3185 = vld [vmem:[#allocation2 + $0x290] sm:$0xf]
    %v3186 = vld [vmem:[#allocation2 + $0x294] sm:$0xf]
    %v3187 = vld [vmem:[#allocation5 + $0x98] sm:$0x1]
    %v3188 = vlaneseq
    %v3189 = vshrl.u32 %v3188, 7
    %v3190 = vsub.s32 0, %v3189
    %v3191 = vrot.slane %v3187, %v3190
    %v3208 = vunpack.c.l.b16 %v3171
    %v3209 = vunpack.c.l.b16 %v3172
    %v3210 = vunpack.c.l.b16 %v3173
    %v3211 = vunpack.c.l.b16 %v3174
    %v3212 = vunpack.c.l.b16 %v3175
    %v3213 = vunpack.c.l.b16 %v3176
    %v3214 = vunpack.c.l.b16 %v3177
    %v3215 = vunpack.c.l.b16 %v3178
    %v3216 = vunpack.c.l.b16 %v3179
    %v3217 = vunpack.c.l.b16 %v3180
    %v3218 = vunpack.c.l.b16 %v3181
    %v3219 = vunpack.c.l.b16 %v3182
    %v3220 = vunpack.c.l.b16 %v3183
    %v3221 = vunpack.c.l.b16 %v3184
    %v3222 = vunpack.c.l.b16 %v3185
    %v3223 = vunpack.c.l.b16 %v3186
    %v3224 = vpack.c.b16 %v3209, %v3208
    %v3225 = vpack.c.b16 %v3211, %v3210
    %v3226 = vpack.c.b16 %v3213, %v3212
    %v3227 = vpack.c.b16 %v3215, %v3214
    %v3228 = vpack.c.b16 %v3217, %v3216
    %v3229 = vpack.c.b16 %v3219, %v3218
    %v3230 = vpack.c.b16 %v3221, %v3220
    %v3231 = vpack.c.b16 %v3223, %v3222
    %3240 = vmatprep.subr.bf16.mxu0 0
    %3241 = vmatpush1.bf16.msra.mxu0 %v3231
    %3242 = vmatprep.subr.bf16.mxu0 0
    %3243 = vmatpush1.bf16.msra.mxu0 %v3230
    %3244 = vmatprep.subr.bf16.mxu0 0
    %3245 = vmatpush1.bf16.msra.mxu0 %v3229
    %3246 = vmatprep.subr.bf16.mxu0 0
    %3247 = vmatpush1.bf16.msra.mxu0 %v3228
    %3248 = vmatprep.subr.bf16.mxu0 0
    %3249 = vmatpush1.bf16.msra.mxu0 %v3227
    %3250 = vmatprep.subr.bf16.mxu0 0
    %3251 = vmatpush1.bf16.msra.mxu0 %v3226
    %3252 = vmatprep.subr.bf16.mxu0 0
    %3253 = vmatpush1.bf16.msra.mxu0 %v3225
    %3254 = vmatprep.subr.bf16.mxu0 0
    %3255 = vmatpush1.bf16.msra.mxu0 %v3224
    %3256 = vmatprep.subr.bf16.mxu0 0
    %3257 = vmatpush2.bf16.msra.mxu0 0
    %3258 = vmatprep.subr.bf16.mxu0 0
    %3259 = vmatpush2.bf16.msra.mxu0 0
    %3260 = vmatprep.subr.bf16.mxu0 0
    %3261 = vmatpush2.bf16.msra.mxu0 0
    %3262 = vmatprep.subr.bf16.mxu0 0
    %3263 = vmatpush2.bf16.msra.mxu0 0
    %3264 = vmatprep.subr.bf16.mxu0 0
    %3265 = vmatpush2.bf16.msra.mxu0 0
    %3266 = vmatprep.subr.bf16.mxu0 0
    %3267 = vmatpush2.bf16.msra.mxu0 0
    %3268 = vmatprep.subr.bf16.mxu0 0
    %3269 = vmatpush2.bf16.msra.mxu0 0
    %3270 = vmatprep.subr.bf16.mxu0 0
    %3271 = vmatpush2.bf16.msra.mxu0 0
    %3272 = vmatprep.mubr.bf16.mxu0 0
    %3273 = vmatmul.mubr.bf16.gmra.mxu0 %v3170
    %v3274 = vpop.f32.mrf.mxu0
    %v3275 = vadd.f32 %v3191, %v3274
    %v3276 = vpop.f32.mrf.mxu0
    %v3277 = vpop.f32.mrf.mxu0
    %v3278 = vadd.f32 %v3191, %v3277
    %v3279 = vpop.f32.mrf.mxu0
    %3280 = vdwg.mxu0
    %v3281 = vadd.f32 %v3044, %v3275
    %v3282 = vadd.f32 %v3045, %v3278
    %v3283 = vpack.c.bf16 %v3282, %v3281
    %v3284 = vunpack.c.l.bf16 %v3283
    %v3285 = vunpack.c.h.bf16 %v3283
    %v3286 = vsel %vm262, %v3284, 0.0
    %3287 = vadd.xlane.f32.xlu0 %v3286
    %v3288 = vpop.xlane.xlu0 %3287
    %v3289 = vsel %vm262, %v3285, 0.0
    %3290 = vadd.xlane.f32.xlu0 %v3289
    %v3291 = vpop.xlane.xlu0 %3290
    %v3292 = vmul.f32 %v3288, %v269
    %v3293 = vmul.f32 %v3291, %v269
    %v3294 = vsub.f32 %v3284, %v3292
    %v3295 = vsub.f32 %v3285, %v3293
    %v3296 = vmul.f32 %v3294, %v3294
    %v3297 = vmul.f32 %v3295, %v3295
    %v3298 = vsel %vm262, %v3296, 0.0
    %3299 = vadd.xlane.f32.xlu0 %v3298
    %v3300 = vpop.xlane.xlu0 %3299
    %v3301 = vsel %vm262, %v3297, 0.0
    %3302 = vadd.xlane.f32.xlu0 %v3301
    %v3303 = vpop.xlane.xlu0 %3302
    %v3304 = vmul.f32 %v3300, %v269
    %v3305 = vmul.f32 %v3303, %v269
    %v3306 = vadd.f32 %v3304, 1e-05
    %v3307 = vadd.f32 %v3305, 1e-05
    %v3308 = vrsqrt.pop %v3306
    %v3309 = vrsqrt.pop %v3307
    %v3310 = vmul.f32 %v3294, %v3308
    %v3311 = vmul.f32 %v3295, %v3309
    %v3312 = vld [vmem:[#allocation5 + $0xa0] sm:$0x1]
    %v3313 = vlaneseq
    %v3314 = vshrl.u32 %v3313, 7
    %v3315 = vsub.s32 0, %v3314
    %v3316 = vrot.slane %v3312, %v3315
    %v3317 = vmul.f32 %v3310, %v3316
    %v3318 = vmul.f32 %v3311, %v3316
    %v3319 = vld [vmem:[#allocation5 + $0xa8] sm:$0x1]
    %v3320 = vlaneseq
    %v3321 = vshrl.u32 %v3320, 7
    %v3322 = vsub.s32 0, %v3321
    %v3323 = vrot.slane %v3319, %v3322
    %v3324 = vadd.f32 %v3317, %v3323
    %v3325 = vadd.f32 %v3318, %v3323
    %v3326 = vpack.c.bf16 %v3325, %v3324
    %v3327 = vpack.c.bf16 %v243, %v242
    %v3328 = vunpack.c.l.bf16 %v3327
    %v3329 = vunpack.c.h.bf16 %v3327
    %v3330 = vsel %vm262, %v3328, 0.0
    %3331 = vadd.xlane.f32.xlu0 %v3330
    %v3332 = vpop.xlane.xlu0 %3331
    %v3333 = vsel %vm262, %v3329, 0.0
    %3334 = vadd.xlane.f32.xlu0 %v3333
    %v3335 = vpop.xlane.xlu0 %3334
    %v3336 = vmul.f32 %v3332, %v269
    %v3337 = vmul.f32 %v3335, %v269
    %v3338 = vsub.f32 %v3328, %v3336
    %v3339 = vsub.f32 %v3329, %v3337
    %v3340 = vmul.f32 %v3338, %v3338
    %v3341 = vmul.f32 %v3339, %v3339
    %v3342 = vsel %vm262, %v3340, 0.0
    %3343 = vadd.xlane.f32.xlu0 %v3342
    %v3344 = vpop.xlane.xlu0 %3343
    %v3345 = vsel %vm262, %v3341, 0.0
    %3346 = vadd.xlane.f32.xlu0 %v3345
    %v3347 = vpop.xlane.xlu0 %3346
    %v3348 = vmul.f32 %v3344, %v269
    %v3349 = vmul.f32 %v3347, %v269
    %v3350 = vadd.f32 %v3348, 1e-05
    %v3351 = vadd.f32 %v3349, 1e-05
    %v3352 = vrsqrt.pop %v3350
    %v3353 = vrsqrt.pop %v3351
    %v3354 = vmul.f32 %v3338, %v3352
    %v3355 = vmul.f32 %v3339, %v3353
    %v3356 = vld [vmem:[#allocation5 + $0xb0] sm:$0x1]
    %v3357 = vlaneseq
    %v3358 = vshrl.u32 %v3357, 7
    %v3359 = vsub.s32 0, %v3358
    %v3360 = vrot.slane %v3356, %v3359
    %v3361 = vmul.f32 %v3354, %v3360
    %v3362 = vmul.f32 %v3355, %v3360
    %v3363 = vld [vmem:[#allocation5 + $0xb8] sm:$0x1]
    %v3364 = vlaneseq
    %v3365 = vshrl.u32 %v3364, 7
    %v3366 = vsub.s32 0, %v3365
    %v3367 = vrot.slane %v3363, %v3366
    %v3368 = vadd.f32 %v3361, %v3367
    %v3369 = vadd.f32 %v3362, %v3367
    %v3370 = vpack.c.bf16 %v3369, %v3368
    %v3371 = vld [vmem:[#allocation2 + $0x298] sm:$0xf]
    %v3372 = vld [vmem:[#allocation2 + $0x29c] sm:$0xf]
    %v3373 = vld [vmem:[#allocation2 + $0x2a0] sm:$0xf]
    %v3374 = vld [vmem:[#allocation2 + $0x2a4] sm:$0xf]
    %v3379 = vunpack.c.l.b16 %v3371
    %v3380 = vunpack.c.l.b16 %v3372
    %v3381 = vunpack.c.l.b16 %v3373
    %v3382 = vunpack.c.l.b16 %v3374
    %v3383 = vpack.c.b16 %v3380, %v3379
    %v3384 = vpack.c.b16 %v3382, %v3381
    %v3388 = vsel %vm262, %v3370, 0
    %3390 = vmatprep.subr.bf16.mxu0 0
    %3391 = vmatpush1.bf16.msra.mxu0 0
    %3392 = vmatprep.subr.bf16.mxu0 0
    %3393 = vmatpush1.bf16.msra.mxu0 0
    %3394 = vmatprep.subr.bf16.mxu0 0
    %3395 = vmatpush1.bf16.msra.mxu0 0
    %3396 = vmatprep.subr.bf16.mxu0 0
    %3397 = vmatpush1.bf16.msra.mxu0 0
    %3398 = vmatprep.subr.bf16.mxu0 0
    %3399 = vmatpush1.bf16.msra.mxu0 0
    %3400 = vmatprep.subr.bf16.mxu0 0
    %3401 = vmatpush1.bf16.msra.mxu0 0
    %3402 = vmatprep.subr.bf16.mxu0 0
    %3403 = vmatpush1.bf16.msra.mxu0 %v3384
    %3404 = vmatprep.subr.bf16.mxu0 0
    %3405 = vmatpush1.bf16.msra.mxu0 %v3383
    %3406 = vmatprep.subr.bf16.mxu0 0
    %3407 = vmatpush2.bf16.msra.mxu0 0
    %3408 = vmatprep.subr.bf16.mxu0 0
    %3409 = vmatpush2.bf16.msra.mxu0 0
    %3410 = vmatprep.subr.bf16.mxu0 0
    %3411 = vmatpush2.bf16.msra.mxu0 0
    %3412 = vmatprep.subr.bf16.mxu0 0
    %3413 = vmatpush2.bf16.msra.mxu0 0
    %3414 = vmatprep.subr.bf16.mxu0 0
    %3415 = vmatpush2.bf16.msra.mxu0 0
    %3416 = vmatprep.subr.bf16.mxu0 0
    %3417 = vmatpush2.bf16.msra.mxu0 0
    %3418 = vmatprep.subr.bf16.mxu0 0
    %3419 = vmatpush2.bf16.msra.mxu0 0
    %3420 = vmatprep.subr.bf16.mxu0 0
    %3421 = vmatpush2.bf16.msra.mxu0 0
    %3422 = vmatprep.mubr.bf16.mxu0 0
    %3423 = vmatmul.mubr.bf16.gmra.mxu0 %v3388
    %v3424 = vpop.f32.mrf.mxu0
    %v3425 = vadd.f32 0.0, %v3424
    %v3426 = vpop.f32.mrf.mxu0
    %v3427 = vpop.f32.mrf.mxu0
    %v3428 = vadd.f32 0.0, %v3427
    %v3429 = vpop.f32.mrf.mxu0
    %3430 = vdwg.mxu0
    %v3431 = vld [vmem:[#allocation2 + $0x2a8] sm:$0xf]
    %v3432 = vld [vmem:[#allocation2 + $0x2ac] sm:$0xf]
    %v3433 = vld [vmem:[#allocation2 + $0x2b0] sm:$0xf]
    %v3434 = vld [vmem:[#allocation2 + $0x2b4] sm:$0xf]
    %v3439 = vunpack.c.l.b16 %v3431
    %v3440 = vunpack.c.l.b16 %v3432
    %v3441 = vunpack.c.l.b16 %v3433
    %v3442 = vunpack.c.l.b16 %v3434
    %v3443 = vpack.c.b16 %v3440, %v3439
    %v3444 = vpack.c.b16 %v3442, %v3441
    %3447 = vmatprep.subr.bf16.mxu0 0
    %3448 = vmatpush1.bf16.msra.mxu0 0
    %3449 = vmatprep.subr.bf16.mxu0 0
    %3450 = vmatpush1.bf16.msra.mxu0 0
    %3451 = vmatprep.subr.bf16.mxu0 0
    %3452 = vmatpush1.bf16.msra.mxu0 0
    %3453 = vmatprep.subr.bf16.mxu0 0
    %3454 = vmatpush1.bf16.msra.mxu0 0
    %3455 = vmatprep.subr.bf16.mxu0 0
    %3456 = vmatpush1.bf16.msra.mxu0 0
    %3457 = vmatprep.subr.bf16.mxu0 0
    %3458 = vmatpush1.bf16.msra.mxu0 0
    %3459 = vmatprep.subr.bf16.mxu0 0
    %3460 = vmatpush1.bf16.msra.mxu0 %v3444
    %3461 = vmatprep.subr.bf16.mxu0 0
    %3462 = vmatpush1.bf16.msra.mxu0 %v3443
    %3463 = vmatprep.subr.bf16.mxu0 0
    %3464 = vmatpush2.bf16.msra.mxu0 0
    %3465 = vmatprep.subr.bf16.mxu0 0
    %3466 = vmatpush2.bf16.msra.mxu0 0
    %3467 = vmatprep.subr.bf16.mxu0 0
    %3468 = vmatpush2.bf16.msra.mxu0 0
    %3469 = vmatprep.subr.bf16.mxu0 0
    %3470 = vmatpush2.bf16.msra.mxu0 0
    %3471 = vmatprep.subr.bf16.mxu0 0
    %3472 = vmatpush2.bf16.msra.mxu0 0
    %3473 = vmatprep.subr.bf16.mxu0 0
    %3474 = vmatpush2.bf16.msra.mxu0 0
    %3475 = vmatprep.subr.bf16.mxu0 0
    %3476 = vmatpush2.bf16.msra.mxu0 0
    %3477 = vmatprep.subr.bf16.mxu0 0
    %3478 = vmatpush2.bf16.msra.mxu0 0
    %3479 = vmatprep.mubr.bf16.mxu0 0
    %3480 = vmatmul.mubr.bf16.gmra.mxu0 %v3388
    %v3481 = vpop.f32.mrf.mxu0
    %v3482 = vadd.f32 0.0, %v3481
    %v3483 = vpop.f32.mrf.mxu0
    %v3484 = vpop.f32.mrf.mxu0
    %v3485 = vadd.f32 0.0, %v3484
    %v3486 = vpop.f32.mrf.mxu0
    %3487 = vdwg.mxu0
    %v3488 = vld [vmem:[#allocation2 + $0x2b8] sm:$0xf]
    %v3489 = vld [vmem:[#allocation2 + $0x2bc] sm:$0xf]
    %v3490 = vld [vmem:[#allocation2 + $0x2c0] sm:$0xf]
    %v3491 = vld [vmem:[#allocation2 + $0x2c4] sm:$0xf]
    %v3496 = vunpack.c.l.b16 %v3488
    %v3497 = vunpack.c.l.b16 %v3489
    %v3498 = vunpack.c.l.b16 %v3490
    %v3499 = vunpack.c.l.b16 %v3491
    %v3500 = vpack.c.b16 %v3497, %v3496
    %v3501 = vpack.c.b16 %v3499, %v3498
    %3504 = vmatprep.subr.bf16.mxu0 0
    %3505 = vmatpush1.bf16.msra.mxu0 0
    %3506 = vmatprep.subr.bf16.mxu0 0
    %3507 = vmatpush1.bf16.msra.mxu0 0
    %3508 = vmatprep.subr.bf16.mxu0 0
    %3509 = vmatpush1.bf16.msra.mxu0 0
    %3510 = vmatprep.subr.bf16.mxu0 0
    %3511 = vmatpush1.bf16.msra.mxu0 0
    %3512 = vmatprep.subr.bf16.mxu0 0
    %3513 = vmatpush1.bf16.msra.mxu0 0
    %3514 = vmatprep.subr.bf16.mxu0 0
    %3515 = vmatpush1.bf16.msra.mxu0 0
    %3516 = vmatprep.subr.bf16.mxu0 0
    %3517 = vmatpush1.bf16.msra.mxu0 %v3501
    %3518 = vmatprep.subr.bf16.mxu0 0
    %3519 = vmatpush1.bf16.msra.mxu0 %v3500
    %3520 = vmatprep.subr.bf16.mxu0 0
    %3521 = vmatpush2.bf16.msra.mxu0 0
    %3522 = vmatprep.subr.bf16.mxu0 0
    %3523 = vmatpush2.bf16.msra.mxu0 0
    %3524 = vmatprep.subr.bf16.mxu0 0
    %3525 = vmatpush2.bf16.msra.mxu0 0
    %3526 = vmatprep.subr.bf16.mxu0 0
    %3527 = vmatpush2.bf16.msra.mxu0 0
    %3528 = vmatprep.subr.bf16.mxu0 0
    %3529 = vmatpush2.bf16.msra.mxu0 0
    %3530 = vmatprep.subr.bf16.mxu0 0
    %3531 = vmatpush2.bf16.msra.mxu0 0
    %3532 = vmatprep.subr.bf16.mxu0 0
    %3533 = vmatpush2.bf16.msra.mxu0 0
    %3534 = vmatprep.subr.bf16.mxu0 0
    %3535 = vmatpush2.bf16.msra.mxu0 0
    %3536 = vmatprep.mubr.bf16.mxu0 0
    %3537 = vmatmul.mubr.bf16.gmra.mxu0 %v3388
    %v3538 = vpop.f32.mrf.mxu0
    %v3539 = vadd.f32 0.0, %v3538
    %v3540 = vpop.f32.mrf.mxu0
    %v3541 = vpop.f32.mrf.mxu0
    %v3542 = vadd.f32 0.0, %v3541
    %v3543 = vpop.f32.mrf.mxu0
    %3544 = vdwg.mxu0
    %v3545 = vpack.c.bf16 %v3428, %v3425
    %v3546 = vpack.c.bf16 %v3485, %v3482
    %v3548 = vsel %vm191, %v3545, 0
    %v3551 = vsel %vm191, %v3546, 0
    %3553 = vmatprep.subr.bf16.mxu0 0
    %3554 = vmatpush1.bf16.xpose.msra.mxu0 0
    %3555 = vmatprep.subr.bf16.mxu0 0
    %3556 = vmatpush1.bf16.xpose.msra.mxu0 0
    %3557 = vmatprep.subr.bf16.mxu0 0
    %3558 = vmatpush1.bf16.xpose.msra.mxu0 0
    %3559 = vmatprep.subr.bf16.mxu0 0
    %3560 = vmatpush1.bf16.xpose.msra.mxu0 0
    %3561 = vmatprep.subr.bf16.mxu0 0
    %3562 = vmatpush1.bf16.xpose.msra.mxu0 0
    %3563 = vmatprep.subr.bf16.mxu0 0
    %3564 = vmatpush1.bf16.xpose.msra.mxu0 0
    %3565 = vmatprep.subr.bf16.mxu0 0
    %3566 = vmatpush1.bf16.xpose.msra.mxu0 0
    %3567 = vmatprep.subr.bf16.mxu0 0
    %3568 = vmatpush1.bf16.xpose.msra.mxu0 %v3551
    %3569 = vmatprep.subr.bf16.mxu0 0
    %3570 = vmatpush2.bf16.xpose.msra.mxu0 0
    %3571 = vmatprep.subr.bf16.mxu0 0
    %3572 = vmatpush2.bf16.xpose.msra.mxu0 0
    %3573 = vmatprep.subr.bf16.mxu0 0
    %3574 = vmatpush2.bf16.xpose.msra.mxu0 0
    %3575 = vmatprep.subr.bf16.mxu0 0
    %3576 = vmatpush2.bf16.xpose.msra.mxu0 0
    %3577 = vmatprep.subr.bf16.mxu0 0
    %3578 = vmatpush2.bf16.xpose.msra.mxu0 0
    %3579 = vmatprep.subr.bf16.mxu0 0
    %3580 = vmatpush2.bf16.xpose.msra.mxu0 0
    %3581 = vmatprep.subr.bf16.mxu0 0
    %3582 = vmatpush2.bf16.xpose.msra.mxu0 0
    %3583 = vmatprep.subr.bf16.mxu0 0
    %3584 = vmatpush2.bf16.xpose.msra.mxu0 0
    %3585 = vmatprep.mubr.bf16.mxu0 0
    %3586 = vmatmul.mubr.bf16.gmra.mxu0 %v3548
    %v3587 = vpop.f32.mrf.mxu0
    %v3588 = vadd.f32 %v246, %v3587
    %v3589 = vpop.f32.mrf.mxu0
    %v3590 = vpop.f32.mrf.mxu0
    %v3591 = vadd.f32 %v247, %v3590
    %v3592 = vpop.f32.mrf.mxu0
    %3593 = vdwg.mxu0
    %v3594 = vsel %vm78, %v3588, -inf
    %3595 = vmax.xlane.f32.xlu0 %v3594
    %v3596 = vpop.xlane.xlu0 %3595
    %v3597 = vsel %vm78, %v3591, -inf
    %3598 = vmax.xlane.f32.xlu0 %v3597
    %v3599 = vpop.xlane.xlu0 %3598
    %v3600 = vsub.f32 %v3588, %v3596
    %v3601 = vsub.f32 %v3591, %v3599
    %v3602 = vmul.f32 %v3600, 1.442695
    %v3603 = vpow.pop %v3602
    %v3604 = vmul.f32 %v3601, 1.442695
    %v3605 = vpow.pop %v3604
    %v3606 = vsel %vm78, %v3603, 0.0
    %3607 = vadd.xlane.f32.xlu0 %v3606
    %v3608 = vpop.xlane.xlu0 %3607
    %v3609 = vsel %vm78, %v3605, 0.0
    %3610 = vadd.xlane.f32.xlu0 %v3609
    %v3611 = vpop.xlane.xlu0 %3610
    %v3612 = vrcp.pop %v3608
    %v3613 = vrcp.pop %v3611
    %v3614 = vmul.f32 %v3603, %v3612
    %v3615 = vmul.f32 %v3605, %v3613
    %v3616 = vpack.c.bf16 %v3615, %v3614
    %v3617 = vpack.c.bf16 %v3542, %v3539
    %v3618 = vld [vmem:[#allocation2 + $0x2c8] sm:$0xf]
    %v3619 = vld [vmem:[#allocation2 + $0x2cc] sm:$0xf]
    %v3620 = vld [vmem:[#allocation2 + $0x2d0] sm:$0xf]
    %v3621 = vld [vmem:[#allocation2 + $0x2d4] sm:$0xf]
    %v3626 = vunpack.c.l.b16 %v3618
    %v3627 = vunpack.c.l.b16 %v3619
    %v3628 = vunpack.c.l.b16 %v3620
    %v3629 = vunpack.c.l.b16 %v3621
    %v3630 = vpack.c.b16 %v3627, %v3626
    %v3631 = vpack.c.b16 %v3629, %v3628
    %3634 = vmatprep.subr.bf16.mxu0 0
    %3635 = vmatpush1.bf16.msra.mxu0 0
    %3636 = vmatprep.subr.bf16.mxu0 0
    %3637 = vmatpush1.bf16.msra.mxu0 0
    %3638 = vmatprep.subr.bf16.mxu0 0
    %3639 = vmatpush1.bf16.msra.mxu0 0
    %3640 = vmatprep.subr.bf16.mxu0 0
    %3641 = vmatpush1.bf16.msra.mxu0 0
    %3642 = vmatprep.subr.bf16.mxu0 0
    %3643 = vmatpush1.bf16.msra.mxu0 0
    %3644 = vmatprep.subr.bf16.mxu0 0
    %3645 = vmatpush1.bf16.msra.mxu0 0
    %3646 = vmatprep.subr.bf16.mxu0 0
    %3647 = vmatpush1.bf16.msra.mxu0 %v3631
    %3648 = vmatprep.subr.bf16.mxu0 0
    %3649 = vmatpush1.bf16.msra.mxu0 %v3630
    %3650 = vmatprep.subr.bf16.mxu0 0
    %3651 = vmatpush2.bf16.msra.mxu0 0
    %3652 = vmatprep.subr.bf16.mxu0 0
    %3653 = vmatpush2.bf16.msra.mxu0 0
    %3654 = vmatprep.subr.bf16.mxu0 0
    %3655 = vmatpush2.bf16.msra.mxu0 0
    %3656 = vmatprep.subr.bf16.mxu0 0
    %3657 = vmatpush2.bf16.msra.mxu0 0
    %3658 = vmatprep.subr.bf16.mxu0 0
    %3659 = vmatpush2.bf16.msra.mxu0 0
    %3660 = vmatprep.subr.bf16.mxu0 0
    %3661 = vmatpush2.bf16.msra.mxu0 0
    %3662 = vmatprep.subr.bf16.mxu0 0
    %3663 = vmatpush2.bf16.msra.mxu0 0
    %3664 = vmatprep.subr.bf16.mxu0 0
    %3665 = vmatpush2.bf16.msra.mxu0 0
    %3666 = vmatprep.mubr.bf16.mxu0 0
    %3667 = vmatmul.mubr.bf16.gmra.mxu0 %v3388
    %v3668 = vpop.f32.mrf.mxu0
    %v3669 = vadd.f32 0.0, %v3668
    %v3670 = vpop.f32.mrf.mxu0
    %v3671 = vpop.f32.mrf.mxu0
    %v3672 = vadd.f32 0.0, %v3671
    %v3673 = vpop.f32.mrf.mxu0
    %3674 = vdwg.mxu0
    %v3675 = vld [vmem:[#allocation2 + $0x2d8] sm:$0xf]
    %v3676 = vld [vmem:[#allocation2 + $0x2dc] sm:$0xf]
    %v3677 = vld [vmem:[#allocation2 + $0x2e0] sm:$0xf]
    %v3678 = vld [vmem:[#allocation2 + $0x2e4] sm:$0xf]
    %v3683 = vunpack.c.l.b16 %v3675
    %v3684 = vunpack.c.l.b16 %v3676
    %v3685 = vunpack.c.l.b16 %v3677
    %v3686 = vunpack.c.l.b16 %v3678
    %v3687 = vpack.c.b16 %v3684, %v3683
    %v3688 = vpack.c.b16 %v3686, %v3685
    %3691 = vmatprep.subr.bf16.mxu0 0
    %3692 = vmatpush1.bf16.msra.mxu0 0
    %3693 = vmatprep.subr.bf16.mxu0 0
    %3694 = vmatpush1.bf16.msra.mxu0 0
    %3695 = vmatprep.subr.bf16.mxu0 0
    %3696 = vmatpush1.bf16.msra.mxu0 0
    %3697 = vmatprep.subr.bf16.mxu0 0
    %3698 = vmatpush1.bf16.msra.mxu0 0
    %3699 = vmatprep.subr.bf16.mxu0 0
    %3700 = vmatpush1.bf16.msra.mxu0 0
    %3701 = vmatprep.subr.bf16.mxu0 0
    %3702 = vmatpush1.bf16.msra.mxu0 0
    %3703 = vmatprep.subr.bf16.mxu0 0
    %3704 = vmatpush1.bf16.msra.mxu0 %v3688
    %3705 = vmatprep.subr.bf16.mxu0 0
    %3706 = vmatpush1.bf16.msra.mxu0 %v3687
    %3707 = vmatprep.subr.bf16.mxu0 0
    %3708 = vmatpush2.bf16.msra.mxu0 0
    %3709 = vmatprep.subr.bf16.mxu0 0
    %3710 = vmatpush2.bf16.msra.mxu0 0
    %3711 = vmatprep.subr.bf16.mxu0 0
    %3712 = vmatpush2.bf16.msra.mxu0 0
    %3713 = vmatprep.subr.bf16.mxu0 0
    %3714 = vmatpush2.bf16.msra.mxu0 0
    %3715 = vmatprep.subr.bf16.mxu0 0
    %3716 = vmatpush2.bf16.msra.mxu0 0
    %3717 = vmatprep.subr.bf16.mxu0 0
    %3718 = vmatpush2.bf16.msra.mxu0 0
    %3719 = vmatprep.subr.bf16.mxu0 0
    %3720 = vmatpush2.bf16.msra.mxu0 0
    %3721 = vmatprep.subr.bf16.mxu0 0
    %3722 = vmatpush2.bf16.msra.mxu0 0
    %3723 = vmatprep.mubr.bf16.mxu0 0
    %3724 = vmatmul.mubr.bf16.gmra.mxu0 %v3388
    %v3725 = vpop.f32.mrf.mxu0
    %v3726 = vadd.f32 0.0, %v3725
    %v3727 = vpop.f32.mrf.mxu0
    %v3728 = vpop.f32.mrf.mxu0
    %v3729 = vadd.f32 0.0, %v3728
    %v3730 = vpop.f32.mrf.mxu0
    %3731 = vdwg.mxu0
    %v3732 = vld [vmem:[#allocation2 + $0x2e8] sm:$0xf]
    %v3733 = vld [vmem:[#allocation2 + $0x2ec] sm:$0xf]
    %v3734 = vld [vmem:[#allocation2 + $0x2f0] sm:$0xf]
    %v3735 = vld [vmem:[#allocation2 + $0x2f4] sm:$0xf]
    %v3740 = vunpack.c.l.b16 %v3732
    %v3741 = vunpack.c.l.b16 %v3733
    %v3742 = vunpack.c.l.b16 %v3734
    %v3743 = vunpack.c.l.b16 %v3735
    %v3744 = vpack.c.b16 %v3741, %v3740
    %v3745 = vpack.c.b16 %v3743, %v3742
    %3748 = vmatprep.subr.bf16.mxu0 0
    %3749 = vmatpush1.bf16.msra.mxu0 0
    %3750 = vmatprep.subr.bf16.mxu0 0
    %3751 = vmatpush1.bf16.msra.mxu0 0
    %3752 = vmatprep.subr.bf16.mxu0 0
    %3753 = vmatpush1.bf16.msra.mxu0 0
    %3754 = vmatprep.subr.bf16.mxu0 0
    %3755 = vmatpush1.bf16.msra.mxu0 0
    %3756 = vmatprep.subr.bf16.mxu0 0
    %3757 = vmatpush1.bf16.msra.mxu0 0
    %3758 = vmatprep.subr.bf16.mxu0 0
    %3759 = vmatpush1.bf16.msra.mxu0 0
    %3760 = vmatprep.subr.bf16.mxu0 0
    %3761 = vmatpush1.bf16.msra.mxu0 %v3745
    %3762 = vmatprep.subr.bf16.mxu0 0
    %3763 = vmatpush1.bf16.msra.mxu0 %v3744
    %3764 = vmatprep.subr.bf16.mxu0 0
    %3765 = vmatpush2.bf16.msra.mxu0 0
    %3766 = vmatprep.subr.bf16.mxu0 0
    %3767 = vmatpush2.bf16.msra.mxu0 0
    %3768 = vmatprep.subr.bf16.mxu0 0
    %3769 = vmatpush2.bf16.msra.mxu0 0
    %3770 = vmatprep.subr.bf16.mxu0 0
    %3771 = vmatpush2.bf16.msra.mxu0 0
    %3772 = vmatprep.subr.bf16.mxu0 0
    %3773 = vmatpush2.bf16.msra.mxu0 0
    %3774 = vmatprep.subr.bf16.mxu0 0
    %3775 = vmatpush2.bf16.msra.mxu0 0
    %3776 = vmatprep.subr.bf16.mxu0 0
    %3777 = vmatpush2.bf16.msra.mxu0 0
    %3778 = vmatprep.subr.bf16.mxu0 0
    %3779 = vmatpush2.bf16.msra.mxu0 0
    %3780 = vmatprep.mubr.bf16.mxu0 0
    %3781 = vmatmul.mubr.bf16.gmra.mxu0 %v3388
    %v3782 = vpop.f32.mrf.mxu0
    %v3783 = vadd.f32 0.0, %v3782
    %v3784 = vpop.f32.mrf.mxu0
    %v3785 = vpop.f32.mrf.mxu0
    %v3786 = vadd.f32 0.0, %v3785
    %v3787 = vpop.f32.mrf.mxu0
    %3788 = vdwg.mxu0
    %v3789 = vpack.c.bf16 %v3672, %v3669
    %v3790 = vpack.c.bf16 %v3729, %v3726
    %v3792 = vsel %vm191, %v3789, 0
    %v3795 = vsel %vm191, %v3790, 0
    %3797 = vmatprep.subr.bf16.mxu0 0
    %3798 = vmatpush1.bf16.xpose.msra.mxu0 0
    %3799 = vmatprep.subr.bf16.mxu0 0
    %3800 = vmatpush1.bf16.xpose.msra.mxu0 0
    %3801 = vmatprep.subr.bf16.mxu0 0
    %3802 = vmatpush1.bf16.xpose.msra.mxu0 0
    %3803 = vmatprep.subr.bf16.mxu0 0
    %3804 = vmatpush1.bf16.xpose.msra.mxu0 0
    %3805 = vmatprep.subr.bf16.mxu0 0
    %3806 = vmatpush1.bf16.xpose.msra.mxu0 0
    %3807 = vmatprep.subr.bf16.mxu0 0
    %3808 = vmatpush1.bf16.xpose.msra.mxu0 0
    %3809 = vmatprep.subr.bf16.mxu0 0
    %3810 = vmatpush1.bf16.xpose.msra.mxu0 0
    %3811 = vmatprep.subr.bf16.mxu0 0
    %3812 = vmatpush1.bf16.xpose.msra.mxu0 %v3795
    %3813 = vmatprep.subr.bf16.mxu0 0
    %3814 = vmatpush2.bf16.xpose.msra.mxu0 0
    %3815 = vmatprep.subr.bf16.mxu0 0
    %3816 = vmatpush2.bf16.xpose.msra.mxu0 0
    %3817 = vmatprep.subr.bf16.mxu0 0
    %3818 = vmatpush2.bf16.xpose.msra.mxu0 0
    %3819 = vmatprep.subr.bf16.mxu0 0
    %3820 = vmatpush2.bf16.xpose.msra.mxu0 0
    %3821 = vmatprep.subr.bf16.mxu0 0
    %3822 = vmatpush2.bf16.xpose.msra.mxu0 0
    %3823 = vmatprep.subr.bf16.mxu0 0
    %3824 = vmatpush2.bf16.xpose.msra.mxu0 0
    %3825 = vmatprep.subr.bf16.mxu0 0
    %3826 = vmatpush2.bf16.xpose.msra.mxu0 0
    %3827 = vmatprep.subr.bf16.mxu0 0
    %3828 = vmatpush2.bf16.xpose.msra.mxu0 0
    %3829 = vmatprep.mubr.bf16.mxu0 0
    %3830 = vmatmul.mubr.bf16.gmra.mxu0 %v3792
    %v3831 = vpop.f32.mrf.mxu0
    %v3832 = vadd.f32 %v246, %v3831
    %v3833 = vpop.f32.mrf.mxu0
    %v3834 = vpop.f32.mrf.mxu0
    %v3835 = vadd.f32 %v247, %v3834
    %v3836 = vpop.f32.mrf.mxu0
    %3837 = vdwg.mxu0
    %v3838 = vsel %vm78, %v3832, -inf
    %3839 = vmax.xlane.f32.xlu0 %v3838
    %v3840 = vpop.xlane.xlu0 %3839
    %v3841 = vsel %vm78, %v3835, -inf
    %3842 = vmax.xlane.f32.xlu0 %v3841
    %v3843 = vpop.xlane.xlu0 %3842
    %v3844 = vsub.f32 %v3832, %v3840
    %v3845 = vsub.f32 %v3835, %v3843
    %v3846 = vmul.f32 %v3844, 1.442695
    %v3847 = vpow.pop %v3846
    %v3848 = vmul.f32 %v3845, 1.442695
    %v3849 = vpow.pop %v3848
    %v3850 = vsel %vm78, %v3847, 0.0
    %3851 = vadd.xlane.f32.xlu0 %v3850
    %v3852 = vpop.xlane.xlu0 %3851
    %v3853 = vsel %vm78, %v3849, 0.0
    %3854 = vadd.xlane.f32.xlu0 %v3853
    %v3855 = vpop.xlane.xlu0 %3854
    %v3856 = vrcp.pop %v3852
    %v3857 = vrcp.pop %v3855
    %v3858 = vmul.f32 %v3847, %v3856
    %v3859 = vmul.f32 %v3849, %v3857
    %v3860 = vpack.c.bf16 %v3859, %v3858
    %v3861 = vpack.c.bf16 %v3786, %v3783
    %v3863 = vsel %vm78, %v3860, 0
    %3865 = vmatprep.subr.bf16.mxu0 0
    %3866 = vmatpush1.bf16.msra.mxu0 0
    %3867 = vmatprep.subr.bf16.mxu0 0
    %3868 = vmatpush1.bf16.msra.mxu0 0
    %3869 = vmatprep.subr.bf16.mxu0 0
    %3870 = vmatpush1.bf16.msra.mxu0 0
    %3871 = vmatprep.subr.bf16.mxu0 0
    %3872 = vmatpush1.bf16.msra.mxu0 0
    %3873 = vmatprep.subr.bf16.mxu0 0
    %3874 = vmatpush1.bf16.msra.mxu0 0
    %3875 = vmatprep.subr.bf16.mxu0 0
    %3876 = vmatpush1.bf16.msra.mxu0 0
    %3877 = vmatprep.subr.bf16.mxu0 0
    %3878 = vmatpush1.bf16.msra.mxu0 0
    %3879 = vmatprep.subr.bf16.mxu0 0
    %3880 = vmatpush1.bf16.msra.mxu0 %v3861
    %3881 = vmatprep.subr.bf16.mxu0 0
    %3882 = vmatpush2.bf16.msra.mxu0 0
    %3883 = vmatprep.subr.bf16.mxu0 0
    %3884 = vmatpush2.bf16.msra.mxu0 0
    %3885 = vmatprep.subr.bf16.mxu0 0
    %3886 = vmatpush2.bf16.msra.mxu0 0
    %3887 = vmatprep.subr.bf16.mxu0 0
    %3888 = vmatpush2.bf16.msra.mxu0 0
    %3889 = vmatprep.subr.bf16.mxu0 0
    %3890 = vmatpush2.bf16.msra.mxu0 0
    %3891 = vmatprep.subr.bf16.mxu0 0
    %3892 = vmatpush2.bf16.msra.mxu0 0
    %3893 = vmatprep.subr.bf16.mxu0 0
    %3894 = vmatpush2.bf16.msra.mxu0 0
    %3895 = vmatprep.subr.bf16.mxu0 0
    %3896 = vmatpush2.bf16.msra.mxu0 0
    %3897 = vmatprep.mubr.bf16.mxu0 0
    %3898 = vmatmul.mubr.bf16.gmra.mxu0 %v3863
    %v3899 = vpop.f32.mrf.mxu0
    %v3900 = vadd.f32 0.0, %v3899
    %v3901 = vpop.f32.mrf.mxu0
    %v3902 = vpop.f32.mrf.mxu0
    %v3903 = vadd.f32 0.0, %v3902
    %v3904 = vpop.f32.mrf.mxu0
    %3905 = vdwg.mxu0
    %v3907 = vsel %vm78, %v3616, 0
    %3909 = vmatprep.subr.bf16.mxu0 0
    %3910 = vmatpush1.bf16.msra.mxu0 0
    %3911 = vmatprep.subr.bf16.mxu0 0
    %3912 = vmatpush1.bf16.msra.mxu0 0
    %3913 = vmatprep.subr.bf16.mxu0 0
    %3914 = vmatpush1.bf16.msra.mxu0 0
    %3915 = vmatprep.subr.bf16.mxu0 0
    %3916 = vmatpush1.bf16.msra.mxu0 0
    %3917 = vmatprep.subr.bf16.mxu0 0
    %3918 = vmatpush1.bf16.msra.mxu0 0
    %3919 = vmatprep.subr.bf16.mxu0 0
    %3920 = vmatpush1.bf16.msra.mxu0 0
    %3921 = vmatprep.subr.bf16.mxu0 0
    %3922 = vmatpush1.bf16.msra.mxu0 0
    %3923 = vmatprep.subr.bf16.mxu0 0
    %3924 = vmatpush1.bf16.msra.mxu0 %v3617
    %3925 = vmatprep.subr.bf16.mxu0 0
    %3926 = vmatpush2.bf16.msra.mxu0 0
    %3927 = vmatprep.subr.bf16.mxu0 0
    %3928 = vmatpush2.bf16.msra.mxu0 0
    %3929 = vmatprep.subr.bf16.mxu0 0
    %3930 = vmatpush2.bf16.msra.mxu0 0
    %3931 = vmatprep.subr.bf16.mxu0 0
    %3932 = vmatpush2.bf16.msra.mxu0 0
    %3933 = vmatprep.subr.bf16.mxu0 0
    %3934 = vmatpush2.bf16.msra.mxu0 0
    %3935 = vmatprep.subr.bf16.mxu0 0
    %3936 = vmatpush2.bf16.msra.mxu0 0
    %3937 = vmatprep.subr.bf16.mxu0 0
    %3938 = vmatpush2.bf16.msra.mxu0 0
    %3939 = vmatprep.subr.bf16.mxu0 0
    %3940 = vmatpush2.bf16.msra.mxu0 0
    %3941 = vmatprep.mubr.bf16.mxu0 0
    %3942 = vmatmul.mubr.bf16.gmra.mxu0 %v3907
    %v3943 = vpop.f32.mrf.mxu0
    %v3944 = vadd.f32 %v3900, %v3943
    %v3945 = vpop.f32.mrf.mxu0
    %v3946 = vpop.f32.mrf.mxu0
    %v3947 = vadd.f32 %v3903, %v3946
    %v3948 = vpop.f32.mrf.mxu0
    %3949 = vdwg.mxu0
    %v3950 = vld [vmem:[#allocation2 + $0x2f8] sm:$0xf]
    %v3951 = vld [vmem:[#allocation2 + $0x2fc] sm:$0xf]
    %v3952 = vld [vmem:[#allocation2 + $0x300] sm:$0xf]
    %v3953 = vld [vmem:[#allocation2 + $0x304] sm:$0xf]
    %v3958 = vunpack.c.l.b16 %v3950
    %v3959 = vunpack.c.l.b16 %v3951
    %v3960 = vunpack.c.l.b16 %v3952
    %v3961 = vunpack.c.l.b16 %v3953
    %v3962 = vpack.c.b16 %v3959, %v3958
    %v3963 = vpack.c.b16 %v3961, %v3960
    %3966 = vmatprep.subr.bf16.mxu0 0
    %3967 = vmatpush1.bf16.msra.mxu0 0
    %3968 = vmatprep.subr.bf16.mxu0 0
    %3969 = vmatpush1.bf16.msra.mxu0 0
    %3970 = vmatprep.subr.bf16.mxu0 0
    %3971 = vmatpush1.bf16.msra.mxu0 0
    %3972 = vmatprep.subr.bf16.mxu0 0
    %3973 = vmatpush1.bf16.msra.mxu0 0
    %3974 = vmatprep.subr.bf16.mxu0 0
    %3975 = vmatpush1.bf16.msra.mxu0 0
    %3976 = vmatprep.subr.bf16.mxu0 0
    %3977 = vmatpush1.bf16.msra.mxu0 0
    %3978 = vmatprep.subr.bf16.mxu0 0
    %3979 = vmatpush1.bf16.msra.mxu0 %v3963
    %3980 = vmatprep.subr.bf16.mxu0 0
    %3981 = vmatpush1.bf16.msra.mxu0 %v3962
    %3982 = vmatprep.subr.bf16.mxu0 0
    %3983 = vmatpush2.bf16.msra.mxu0 0
    %3984 = vmatprep.subr.bf16.mxu0 0
    %3985 = vmatpush2.bf16.msra.mxu0 0
    %3986 = vmatprep.subr.bf16.mxu0 0
    %3987 = vmatpush2.bf16.msra.mxu0 0
    %3988 = vmatprep.subr.bf16.mxu0 0
    %3989 = vmatpush2.bf16.msra.mxu0 0
    %3990 = vmatprep.subr.bf16.mxu0 0
    %3991 = vmatpush2.bf16.msra.mxu0 0
    %3992 = vmatprep.subr.bf16.mxu0 0
    %3993 = vmatpush2.bf16.msra.mxu0 0
    %3994 = vmatprep.subr.bf16.mxu0 0
    %3995 = vmatpush2.bf16.msra.mxu0 0
    %3996 = vmatprep.subr.bf16.mxu0 0
    %3997 = vmatpush2.bf16.msra.mxu0 0
    %3998 = vmatprep.mubr.bf16.mxu0 0
    %3999 = vmatmul.mubr.bf16.gmra.mxu0 %v3388
    %v4000 = vpop.f32.mrf.mxu0
    %v4001 = vadd.f32 0.0, %v4000
    %v4002 = vpop.f32.mrf.mxu0
    %v4003 = vpop.f32.mrf.mxu0
    %v4004 = vadd.f32 0.0, %v4003
    %v4005 = vpop.f32.mrf.mxu0
    %4006 = vdwg.mxu0
    %v4007 = vld [vmem:[#allocation2 + $0x308] sm:$0xf]
    %v4008 = vld [vmem:[#allocation2 + $0x30c] sm:$0xf]
    %v4009 = vld [vmem:[#allocation2 + $0x310] sm:$0xf]
    %v4010 = vld [vmem:[#allocation2 + $0x314] sm:$0xf]
    %v4015 = vunpack.c.l.b16 %v4007
    %v4016 = vunpack.c.l.b16 %v4008
    %v4017 = vunpack.c.l.b16 %v4009
    %v4018 = vunpack.c.l.b16 %v4010
    %v4019 = vpack.c.b16 %v4016, %v4015
    %v4020 = vpack.c.b16 %v4018, %v4017
    %4023 = vmatprep.subr.bf16.mxu0 0
    %4024 = vmatpush1.bf16.msra.mxu0 0
    %4025 = vmatprep.subr.bf16.mxu0 0
    %4026 = vmatpush1.bf16.msra.mxu0 0
    %4027 = vmatprep.subr.bf16.mxu0 0
    %4028 = vmatpush1.bf16.msra.mxu0 0
    %4029 = vmatprep.subr.bf16.mxu0 0
    %4030 = vmatpush1.bf16.msra.mxu0 0
    %4031 = vmatprep.subr.bf16.mxu0 0
    %4032 = vmatpush1.bf16.msra.mxu0 0
    %4033 = vmatprep.subr.bf16.mxu0 0
    %4034 = vmatpush1.bf16.msra.mxu0 0
    %4035 = vmatprep.subr.bf16.mxu0 0
    %4036 = vmatpush1.bf16.msra.mxu0 %v4020
    %4037 = vmatprep.subr.bf16.mxu0 0
    %4038 = vmatpush1.bf16.msra.mxu0 %v4019
    %4039 = vmatprep.subr.bf16.mxu0 0
    %4040 = vmatpush2.bf16.msra.mxu0 0
    %4041 = vmatprep.subr.bf16.mxu0 0
    %4042 = vmatpush2.bf16.msra.mxu0 0
    %4043 = vmatprep.subr.bf16.mxu0 0
    %4044 = vmatpush2.bf16.msra.mxu0 0
    %4045 = vmatprep.subr.bf16.mxu0 0
    %4046 = vmatpush2.bf16.msra.mxu0 0
    %4047 = vmatprep.subr.bf16.mxu0 0
    %4048 = vmatpush2.bf16.msra.mxu0 0
    %4049 = vmatprep.subr.bf16.mxu0 0
    %4050 = vmatpush2.bf16.msra.mxu0 0
    %4051 = vmatprep.subr.bf16.mxu0 0
    %4052 = vmatpush2.bf16.msra.mxu0 0
    %4053 = vmatprep.subr.bf16.mxu0 0
    %4054 = vmatpush2.bf16.msra.mxu0 0
    %4055 = vmatprep.mubr.bf16.mxu0 0
    %4056 = vmatmul.mubr.bf16.gmra.mxu0 %v3388
    %v4057 = vpop.f32.mrf.mxu0
    %v4058 = vadd.f32 0.0, %v4057
    %v4059 = vpop.f32.mrf.mxu0
    %v4060 = vpop.f32.mrf.mxu0
    %v4061 = vadd.f32 0.0, %v4060
    %v4062 = vpop.f32.mrf.mxu0
    %4063 = vdwg.mxu0
    %v4064 = vld [vmem:[#allocation2 + $0x318] sm:$0xf]
    %v4065 = vld [vmem:[#allocation2 + $0x31c] sm:$0xf]
    %v4066 = vld [vmem:[#allocation2 + $0x320] sm:$0xf]
    %v4067 = vld [vmem:[#allocation2 + $0x324] sm:$0xf]
    %v4072 = vunpack.c.l.b16 %v4064
    %v4073 = vunpack.c.l.b16 %v4065
    %v4074 = vunpack.c.l.b16 %v4066
    %v4075 = vunpack.c.l.b16 %v4067
    %v4076 = vpack.c.b16 %v4073, %v4072
    %v4077 = vpack.c.b16 %v4075, %v4074
    %4080 = vmatprep.subr.bf16.mxu0 0
    %4081 = vmatpush1.bf16.msra.mxu0 0
    %4082 = vmatprep.subr.bf16.mxu0 0
    %4083 = vmatpush1.bf16.msra.mxu0 0
    %4084 = vmatprep.subr.bf16.mxu0 0
    %4085 = vmatpush1.bf16.msra.mxu0 0
    %4086 = vmatprep.subr.bf16.mxu0 0
    %4087 = vmatpush1.bf16.msra.mxu0 0
    %4088 = vmatprep.subr.bf16.mxu0 0
    %4089 = vmatpush1.bf16.msra.mxu0 0
    %4090 = vmatprep.subr.bf16.mxu0 0
    %4091 = vmatpush1.bf16.msra.mxu0 0
    %4092 = vmatprep.subr.bf16.mxu0 0
    %4093 = vmatpush1.bf16.msra.mxu0 %v4077
    %4094 = vmatprep.subr.bf16.mxu0 0
    %4095 = vmatpush1.bf16.msra.mxu0 %v4076
    %4096 = vmatprep.subr.bf16.mxu0 0
    %4097 = vmatpush2.bf16.msra.mxu0 0
    %4098 = vmatprep.subr.bf16.mxu0 0
    %4099 = vmatpush2.bf16.msra.mxu0 0
    %4100 = vmatprep.subr.bf16.mxu0 0
    %4101 = vmatpush2.bf16.msra.mxu0 0
    %4102 = vmatprep.subr.bf16.mxu0 0
    %4103 = vmatpush2.bf16.msra.mxu0 0
    %4104 = vmatprep.subr.bf16.mxu0 0
    %4105 = vmatpush2.bf16.msra.mxu0 0
    %4106 = vmatprep.subr.bf16.mxu0 0
    %4107 = vmatpush2.bf16.msra.mxu0 0
    %4108 = vmatprep.subr.bf16.mxu0 0
    %4109 = vmatpush2.bf16.msra.mxu0 0
    %4110 = vmatprep.subr.bf16.mxu0 0
    %4111 = vmatpush2.bf16.msra.mxu0 0
    %4112 = vmatprep.mubr.bf16.mxu0 0
    %4113 = vmatmul.mubr.bf16.gmra.mxu0 %v3388
    %v4114 = vpop.f32.mrf.mxu0
    %v4115 = vadd.f32 0.0, %v4114
    %v4116 = vpop.f32.mrf.mxu0
    %v4117 = vpop.f32.mrf.mxu0
    %v4118 = vadd.f32 0.0, %v4117
    %v4119 = vpop.f32.mrf.mxu0
    %4120 = vdwg.mxu0
    %v4121 = vpack.c.bf16 %v4004, %v4001
    %v4122 = vpack.c.bf16 %v4061, %v4058
    %v4124 = vsel %vm191, %v4121, 0
    %v4127 = vsel %vm191, %v4122, 0
    %4129 = vmatprep.subr.bf16.mxu0 0
    %4130 = vmatpush1.bf16.xpose.msra.mxu0 0
    %4131 = vmatprep.subr.bf16.mxu0 0
    %4132 = vmatpush1.bf16.xpose.msra.mxu0 0
    %4133 = vmatprep.subr.bf16.mxu0 0
    %4134 = vmatpush1.bf16.xpose.msra.mxu0 0
    %4135 = vmatprep.subr.bf16.mxu0 0
    %4136 = vmatpush1.bf16.xpose.msra.mxu0 0
    %4137 = vmatprep.subr.bf16.mxu0 0
    %4138 = vmatpush1.bf16.xpose.msra.mxu0 0
    %4139 = vmatprep.subr.bf16.mxu0 0
    %4140 = vmatpush1.bf16.xpose.msra.mxu0 0
    %4141 = vmatprep.subr.bf16.mxu0 0
    %4142 = vmatpush1.bf16.xpose.msra.mxu0 0
    %4143 = vmatprep.subr.bf16.mxu0 0
    %4144 = vmatpush1.bf16.xpose.msra.mxu0 %v4127
    %4145 = vmatprep.subr.bf16.mxu0 0
    %4146 = vmatpush2.bf16.xpose.msra.mxu0 0
    %4147 = vmatprep.subr.bf16.mxu0 0
    %4148 = vmatpush2.bf16.xpose.msra.mxu0 0
    %4149 = vmatprep.subr.bf16.mxu0 0
    %4150 = vmatpush2.bf16.xpose.msra.mxu0 0
    %4151 = vmatprep.subr.bf16.mxu0 0
    %4152 = vmatpush2.bf16.xpose.msra.mxu0 0
    %4153 = vmatprep.subr.bf16.mxu0 0
    %4154 = vmatpush2.bf16.xpose.msra.mxu0 0
    %4155 = vmatprep.subr.bf16.mxu0 0
    %4156 = vmatpush2.bf16.xpose.msra.mxu0 0
    %4157 = vmatprep.subr.bf16.mxu0 0
    %4158 = vmatpush2.bf16.xpose.msra.mxu0 0
    %4159 = vmatprep.subr.bf16.mxu0 0
    %4160 = vmatpush2.bf16.xpose.msra.mxu0 0
    %4161 = vmatprep.mubr.bf16.mxu0 0
    %4162 = vmatmul.mubr.bf16.gmra.mxu0 %v4124
    %v4163 = vpop.f32.mrf.mxu0
    %v4164 = vadd.f32 %v246, %v4163
    %v4165 = vpop.f32.mrf.mxu0
    %v4166 = vpop.f32.mrf.mxu0
    %v4167 = vadd.f32 %v247, %v4166
    %v4168 = vpop.f32.mrf.mxu0
    %4169 = vdwg.mxu0
    %v4170 = vsel %vm78, %v4164, -inf
    %4171 = vmax.xlane.f32.xlu0 %v4170
    %v4172 = vpop.xlane.xlu0 %4171
    %v4173 = vsel %vm78, %v4167, -inf
    %4174 = vmax.xlane.f32.xlu0 %v4173
    %v4175 = vpop.xlane.xlu0 %4174
    %v4176 = vsub.f32 %v4164, %v4172
    %v4177 = vsub.f32 %v4167, %v4175
    %v4178 = vmul.f32 %v4176, 1.442695
    %v4179 = vpow.pop %v4178
    %v4180 = vmul.f32 %v4177, 1.442695
    %v4181 = vpow.pop %v4180
    %v4182 = vsel %vm78, %v4179, 0.0
    %4183 = vadd.xlane.f32.xlu0 %v4182
    %v4184 = vpop.xlane.xlu0 %4183
    %v4185 = vsel %vm78, %v4181, 0.0
    %4186 = vadd.xlane.f32.xlu0 %v4185
    %v4187 = vpop.xlane.xlu0 %4186
    %v4188 = vrcp.pop %v4184
    %v4189 = vrcp.pop %v4187
    %v4190 = vmul.f32 %v4179, %v4188
    %v4191 = vmul.f32 %v4181, %v4189
    %v4192 = vpack.c.bf16 %v4191, %v4190
    %v4193 = vpack.c.bf16 %v4118, %v4115
    %v4195 = vsel %vm78, %v4192, 0
    %4197 = vmatprep.subr.bf16.mxu0 0
    %4198 = vmatpush1.bf16.msra.mxu0 0
    %4199 = vmatprep.subr.bf16.mxu0 0
    %4200 = vmatpush1.bf16.msra.mxu0 0
    %4201 = vmatprep.subr.bf16.mxu0 0
    %4202 = vmatpush1.bf16.msra.mxu0 0
    %4203 = vmatprep.subr.bf16.mxu0 0
    %4204 = vmatpush1.bf16.msra.mxu0 0
    %4205 = vmatprep.subr.bf16.mxu0 0
    %4206 = vmatpush1.bf16.msra.mxu0 0
    %4207 = vmatprep.subr.bf16.mxu0 0
    %4208 = vmatpush1.bf16.msra.mxu0 0
    %4209 = vmatprep.subr.bf16.mxu0 0
    %4210 = vmatpush1.bf16.msra.mxu0 0
    %4211 = vmatprep.subr.bf16.mxu0 0
    %4212 = vmatpush1.bf16.msra.mxu0 %v4193
    %4213 = vmatprep.subr.bf16.mxu0 0
    %4214 = vmatpush2.bf16.msra.mxu0 0
    %4215 = vmatprep.subr.bf16.mxu0 0
    %4216 = vmatpush2.bf16.msra.mxu0 0
    %4217 = vmatprep.subr.bf16.mxu0 0
    %4218 = vmatpush2.bf16.msra.mxu0 0
    %4219 = vmatprep.subr.bf16.mxu0 0
    %4220 = vmatpush2.bf16.msra.mxu0 0
    %4221 = vmatprep.subr.bf16.mxu0 0
    %4222 = vmatpush2.bf16.msra.mxu0 0
    %4223 = vmatprep.subr.bf16.mxu0 0
    %4224 = vmatpush2.bf16.msra.mxu0 0
    %4225 = vmatprep.subr.bf16.mxu0 0
    %4226 = vmatpush2.bf16.msra.mxu0 0
    %4227 = vmatprep.subr.bf16.mxu0 0
    %4228 = vmatpush2.bf16.msra.mxu0 0
    %4229 = vmatprep.mubr.bf16.mxu0 0
    %4230 = vmatmul.mubr.bf16.gmra.mxu0 %v4195
    %v4231 = vpop.f32.mrf.mxu0
    %v4232 = vadd.f32 0.0, %v4231
    %v4233 = vpop.f32.mrf.mxu0
    %v4234 = vpop.f32.mrf.mxu0
    %v4235 = vadd.f32 0.0, %v4234
    %v4236 = vpop.f32.mrf.mxu0
    %4237 = vdwg.mxu0
    %v4238 = vadd.f32 %v3944, %v4232
    %v4239 = vadd.f32 %v3947, %v4235
    %v4240 = vld [vmem:[#allocation2 + $0x328] sm:$0xf]
    %v4241 = vld [vmem:[#allocation2 + $0x32c] sm:$0xf]
    %v4242 = vld [vmem:[#allocation2 + $0x330] sm:$0xf]
    %v4243 = vld [vmem:[#allocation2 + $0x334] sm:$0xf]
    %v4248 = vunpack.c.l.b16 %v4240
    %v4249 = vunpack.c.l.b16 %v4241
    %v4250 = vunpack.c.l.b16 %v4242
    %v4251 = vunpack.c.l.b16 %v4243
    %v4252 = vpack.c.b16 %v4249, %v4248
    %v4253 = vpack.c.b16 %v4251, %v4250
    %4256 = vmatprep.subr.bf16.mxu0 0
    %4257 = vmatpush1.bf16.msra.mxu0 0
    %4258 = vmatprep.subr.bf16.mxu0 0
    %4259 = vmatpush1.bf16.msra.mxu0 0
    %4260 = vmatprep.subr.bf16.mxu0 0
    %4261 = vmatpush1.bf16.msra.mxu0 0
    %4262 = vmatprep.subr.bf16.mxu0 0
    %4263 = vmatpush1.bf16.msra.mxu0 0
    %4264 = vmatprep.subr.bf16.mxu0 0
    %4265 = vmatpush1.bf16.msra.mxu0 0
    %4266 = vmatprep.subr.bf16.mxu0 0
    %4267 = vmatpush1.bf16.msra.mxu0 0
    %4268 = vmatprep.subr.bf16.mxu0 0
    %4269 = vmatpush1.bf16.msra.mxu0 %v4253
    %4270 = vmatprep.subr.bf16.mxu0 0
    %4271 = vmatpush1.bf16.msra.mxu0 %v4252
    %4272 = vmatprep.subr.bf16.mxu0 0
    %4273 = vmatpush2.bf16.msra.mxu0 0
    %4274 = vmatprep.subr.bf16.mxu0 0
    %4275 = vmatpush2.bf16.msra.mxu0 0
    %4276 = vmatprep.subr.bf16.mxu0 0
    %4277 = vmatpush2.bf16.msra.mxu0 0
    %4278 = vmatprep.subr.bf16.mxu0 0
    %4279 = vmatpush2.bf16.msra.mxu0 0
    %4280 = vmatprep.subr.bf16.mxu0 0
    %4281 = vmatpush2.bf16.msra.mxu0 0
    %4282 = vmatprep.subr.bf16.mxu0 0
    %4283 = vmatpush2.bf16.msra.mxu0 0
    %4284 = vmatprep.subr.bf16.mxu0 0
    %4285 = vmatpush2.bf16.msra.mxu0 0
    %4286 = vmatprep.subr.bf16.mxu0 0
    %4287 = vmatpush2.bf16.msra.mxu0 0
    %4288 = vmatprep.mubr.bf16.mxu0 0
    %4289 = vmatmul.mubr.bf16.gmra.mxu0 %v3388
    %v4290 = vpop.f32.mrf.mxu0
    %v4291 = vadd.f32 0.0, %v4290
    %v4292 = vpop.f32.mrf.mxu0
    %v4293 = vpop.f32.mrf.mxu0
    %v4294 = vadd.f32 0.0, %v4293
    %v4295 = vpop.f32.mrf.mxu0
    %4296 = vdwg.mxu0
    %v4297 = vld [vmem:[#allocation2 + $0x338] sm:$0xf]
    %v4298 = vld [vmem:[#allocation2 + $0x33c] sm:$0xf]
    %v4299 = vld [vmem:[#allocation2 + $0x340] sm:$0xf]
    %v4300 = vld [vmem:[#allocation2 + $0x344] sm:$0xf]
    %v4305 = vunpack.c.l.b16 %v4297
    %v4306 = vunpack.c.l.b16 %v4298
    %v4307 = vunpack.c.l.b16 %v4299
    %v4308 = vunpack.c.l.b16 %v4300
    %v4309 = vpack.c.b16 %v4306, %v4305
    %v4310 = vpack.c.b16 %v4308, %v4307
    %4313 = vmatprep.subr.bf16.mxu0 0
    %4314 = vmatpush1.bf16.msra.mxu0 0
    %4315 = vmatprep.subr.bf16.mxu0 0
    %4316 = vmatpush1.bf16.msra.mxu0 0
    %4317 = vmatprep.subr.bf16.mxu0 0
    %4318 = vmatpush1.bf16.msra.mxu0 0
    %4319 = vmatprep.subr.bf16.mxu0 0
    %4320 = vmatpush1.bf16.msra.mxu0 0
    %4321 = vmatprep.subr.bf16.mxu0 0
    %4322 = vmatpush1.bf16.msra.mxu0 0
    %4323 = vmatprep.subr.bf16.mxu0 0
    %4324 = vmatpush1.bf16.msra.mxu0 0
    %4325 = vmatprep.subr.bf16.mxu0 0
    %4326 = vmatpush1.bf16.msra.mxu0 %v4310
    %4327 = vmatprep.subr.bf16.mxu0 0
    %4328 = vmatpush1.bf16.msra.mxu0 %v4309
    %4329 = vmatprep.subr.bf16.mxu0 0
    %4330 = vmatpush2.bf16.msra.mxu0 0
    %4331 = vmatprep.subr.bf16.mxu0 0
    %4332 = vmatpush2.bf16.msra.mxu0 0
    %4333 = vmatprep.subr.bf16.mxu0 0
    %4334 = vmatpush2.bf16.msra.mxu0 0
    %4335 = vmatprep.subr.bf16.mxu0 0
    %4336 = vmatpush2.bf16.msra.mxu0 0
    %4337 = vmatprep.subr.bf16.mxu0 0
    %4338 = vmatpush2.bf16.msra.mxu0 0
    %4339 = vmatprep.subr.bf16.mxu0 0
    %4340 = vmatpush2.bf16.msra.mxu0 0
    %4341 = vmatprep.subr.bf16.mxu0 0
    %4342 = vmatpush2.bf16.msra.mxu0 0
    %4343 = vmatprep.subr.bf16.mxu0 0
    %4344 = vmatpush2.bf16.msra.mxu0 0
    %4345 = vmatprep.mubr.bf16.mxu0 0
    %4346 = vmatmul.mubr.bf16.gmra.mxu0 %v3388
    %v4347 = vpop.f32.mrf.mxu0
    %v4348 = vadd.f32 0.0, %v4347
    %v4349 = vpop.f32.mrf.mxu0
    %v4350 = vpop.f32.mrf.mxu0
    %v4351 = vadd.f32 0.0, %v4350
    %v4352 = vpop.f32.mrf.mxu0
    %4353 = vdwg.mxu0
    %v4354 = vld [vmem:[#allocation2 + $0x348] sm:$0xf]
    %v4355 = vld [vmem:[#allocation2 + $0x34c] sm:$0xf]
    %v4356 = vld [vmem:[#allocation2 + $0x350] sm:$0xf]
    %v4357 = vld [vmem:[#allocation2 + $0x354] sm:$0xf]
    %v4362 = vunpack.c.l.b16 %v4354
    %v4363 = vunpack.c.l.b16 %v4355
    %v4364 = vunpack.c.l.b16 %v4356
    %v4365 = vunpack.c.l.b16 %v4357
    %v4366 = vpack.c.b16 %v4363, %v4362
    %v4367 = vpack.c.b16 %v4365, %v4364
    %4370 = vmatprep.subr.bf16.mxu0 0
    %4371 = vmatpush1.bf16.msra.mxu0 0
    %4372 = vmatprep.subr.bf16.mxu0 0
    %4373 = vmatpush1.bf16.msra.mxu0 0
    %4374 = vmatprep.subr.bf16.mxu0 0
    %4375 = vmatpush1.bf16.msra.mxu0 0
    %4376 = vmatprep.subr.bf16.mxu0 0
    %4377 = vmatpush1.bf16.msra.mxu0 0
    %4378 = vmatprep.subr.bf16.mxu0 0
    %4379 = vmatpush1.bf16.msra.mxu0 0
    %4380 = vmatprep.subr.bf16.mxu0 0
    %4381 = vmatpush1.bf16.msra.mxu0 0
    %4382 = vmatprep.subr.bf16.mxu0 0
    %4383 = vmatpush1.bf16.msra.mxu0 %v4367
    %4384 = vmatprep.subr.bf16.mxu0 0
    %4385 = vmatpush1.bf16.msra.mxu0 %v4366
    %4386 = vmatprep.subr.bf16.mxu0 0
    %4387 = vmatpush2.bf16.msra.mxu0 0
    %4388 = vmatprep.subr.bf16.mxu0 0
    %4389 = vmatpush2.bf16.msra.mxu0 0
    %4390 = vmatprep.subr.bf16.mxu0 0
    %4391 = vmatpush2.bf16.msra.mxu0 0
    %4392 = vmatprep.subr.bf16.mxu0 0
    %4393 = vmatpush2.bf16.msra.mxu0 0
    %4394 = vmatprep.subr.bf16.mxu0 0
    %4395 = vmatpush2.bf16.msra.mxu0 0
    %4396 = vmatprep.subr.bf16.mxu0 0
    %4397 = vmatpush2.bf16.msra.mxu0 0
    %4398 = vmatprep.subr.bf16.mxu0 0
    %4399 = vmatpush2.bf16.msra.mxu0 0
    %4400 = vmatprep.subr.bf16.mxu0 0
    %4401 = vmatpush2.bf16.msra.mxu0 0
    %4402 = vmatprep.mubr.bf16.mxu0 0
    %4403 = vmatmul.mubr.bf16.gmra.mxu0 %v3388
    %v4404 = vpop.f32.mrf.mxu0
    %v4405 = vadd.f32 0.0, %v4404
    %v4406 = vpop.f32.mrf.mxu0
    %v4407 = vpop.f32.mrf.mxu0
    %v4408 = vadd.f32 0.0, %v4407
    %v4409 = vpop.f32.mrf.mxu0
    %4410 = vdwg.mxu0
    %v4411 = vpack.c.bf16 %v4294, %v4291
    %v4412 = vpack.c.bf16 %v4351, %v4348
    %v4414 = vsel %vm191, %v4411, 0
    %v4417 = vsel %vm191, %v4412, 0
    %4419 = vmatprep.subr.bf16.mxu0 0
    %4420 = vmatpush1.bf16.xpose.msra.mxu0 0
    %4421 = vmatprep.subr.bf16.mxu0 0
    %4422 = vmatpush1.bf16.xpose.msra.mxu0 0
    %4423 = vmatprep.subr.bf16.mxu0 0
    %4424 = vmatpush1.bf16.xpose.msra.mxu0 0
    %4425 = vmatprep.subr.bf16.mxu0 0
    %4426 = vmatpush1.bf16.xpose.msra.mxu0 0
    %4427 = vmatprep.subr.bf16.mxu0 0
    %4428 = vmatpush1.bf16.xpose.msra.mxu0 0
    %4429 = vmatprep.subr.bf16.mxu0 0
    %4430 = vmatpush1.bf16.xpose.msra.mxu0 0
    %4431 = vmatprep.subr.bf16.mxu0 0
    %4432 = vmatpush1.bf16.xpose.msra.mxu0 0
    %4433 = vmatprep.subr.bf16.mxu0 0
    %4434 = vmatpush1.bf16.xpose.msra.mxu0 %v4417
    %4435 = vmatprep.subr.bf16.mxu0 0
    %4436 = vmatpush2.bf16.xpose.msra.mxu0 0
    %4437 = vmatprep.subr.bf16.mxu0 0
    %4438 = vmatpush2.bf16.xpose.msra.mxu0 0
    %4439 = vmatprep.subr.bf16.mxu0 0
    %4440 = vmatpush2.bf16.xpose.msra.mxu0 0
    %4441 = vmatprep.subr.bf16.mxu0 0
    %4442 = vmatpush2.bf16.xpose.msra.mxu0 0
    %4443 = vmatprep.subr.bf16.mxu0 0
    %4444 = vmatpush2.bf16.xpose.msra.mxu0 0
    %4445 = vmatprep.subr.bf16.mxu0 0
    %4446 = vmatpush2.bf16.xpose.msra.mxu0 0
    %4447 = vmatprep.subr.bf16.mxu0 0
    %4448 = vmatpush2.bf16.xpose.msra.mxu0 0
    %4449 = vmatprep.subr.bf16.mxu0 0
    %4450 = vmatpush2.bf16.xpose.msra.mxu0 0
    %4451 = vmatprep.mubr.bf16.mxu0 0
    %4452 = vmatmul.mubr.bf16.gmra.mxu0 %v4414
    %v4453 = vpop.f32.mrf.mxu0
    %v4454 = vadd.f32 %v246, %v4453
    %v4455 = vpop.f32.mrf.mxu0
    %v4456 = vpop.f32.mrf.mxu0
    %v4457 = vadd.f32 %v247, %v4456
    %v4458 = vpop.f32.mrf.mxu0
    %4459 = vdwg.mxu0
    %v4460 = vsel %vm78, %v4454, -inf
    %4461 = vmax.xlane.f32.xlu0 %v4460
    %v4462 = vpop.xlane.xlu0 %4461
    %v4463 = vsel %vm78, %v4457, -inf
    %4464 = vmax.xlane.f32.xlu0 %v4463
    %v4465 = vpop.xlane.xlu0 %4464
    %v4466 = vsub.f32 %v4454, %v4462
    %v4467 = vsub.f32 %v4457, %v4465
    %v4468 = vmul.f32 %v4466, 1.442695
    %v4469 = vpow.pop %v4468
    %v4470 = vmul.f32 %v4467, 1.442695
    %v4471 = vpow.pop %v4470
    %v4472 = vsel %vm78, %v4469, 0.0
    %4473 = vadd.xlane.f32.xlu0 %v4472
    %v4474 = vpop.xlane.xlu0 %4473
    %v4475 = vsel %vm78, %v4471, 0.0
    %4476 = vadd.xlane.f32.xlu0 %v4475
    %v4477 = vpop.xlane.xlu0 %4476
    %v4478 = vrcp.pop %v4474
    %v4479 = vrcp.pop %v4477
    %v4480 = vmul.f32 %v4469, %v4478
    %v4481 = vmul.f32 %v4471, %v4479
    %v4482 = vpack.c.bf16 %v4481, %v4480
    %v4483 = vpack.c.bf16 %v4408, %v4405
    %v4485 = vsel %vm78, %v4482, 0
    %4487 = vmatprep.subr.bf16.mxu0 0
    %4488 = vmatpush1.bf16.msra.mxu0 0
    %4489 = vmatprep.subr.bf16.mxu0 0
    %4490 = vmatpush1.bf16.msra.mxu0 0
    %4491 = vmatprep.subr.bf16.mxu0 0
    %4492 = vmatpush1.bf16.msra.mxu0 0
    %4493 = vmatprep.subr.bf16.mxu0 0
    %4494 = vmatpush1.bf16.msra.mxu0 0
    %4495 = vmatprep.subr.bf16.mxu0 0
    %4496 = vmatpush1.bf16.msra.mxu0 0
    %4497 = vmatprep.subr.bf16.mxu0 0
    %4498 = vmatpush1.bf16.msra.mxu0 0
    %4499 = vmatprep.subr.bf16.mxu0 0
    %4500 = vmatpush1.bf16.msra.mxu0 0
    %4501 = vmatprep.subr.bf16.mxu0 0
    %4502 = vmatpush1.bf16.msra.mxu0 %v4483
    %4503 = vmatprep.subr.bf16.mxu0 0
    %4504 = vmatpush2.bf16.msra.mxu0 0
    %4505 = vmatprep.subr.bf16.mxu0 0
    %4506 = vmatpush2.bf16.msra.mxu0 0
    %4507 = vmatprep.subr.bf16.mxu0 0
    %4508 = vmatpush2.bf16.msra.mxu0 0
    %4509 = vmatprep.subr.bf16.mxu0 0
    %4510 = vmatpush2.bf16.msra.mxu0 0
    %4511 = vmatprep.subr.bf16.mxu0 0
    %4512 = vmatpush2.bf16.msra.mxu0 0
    %4513 = vmatprep.subr.bf16.mxu0 0
    %4514 = vmatpush2.bf16.msra.mxu0 0
    %4515 = vmatprep.subr.bf16.mxu0 0
    %4516 = vmatpush2.bf16.msra.mxu0 0
    %4517 = vmatprep.subr.bf16.mxu0 0
    %4518 = vmatpush2.bf16.msra.mxu0 0
    %4519 = vmatprep.mubr.bf16.mxu0 0
    %4520 = vmatmul.mubr.bf16.gmra.mxu0 %v4485
    %v4521 = vpop.f32.mrf.mxu0
    %v4522 = vadd.f32 0.0, %v4521
    %v4523 = vpop.f32.mrf.mxu0
    %v4524 = vpop.f32.mrf.mxu0
    %v4525 = vadd.f32 0.0, %v4524
    %v4526 = vpop.f32.mrf.mxu0
    %4527 = vdwg.mxu0
    %v4528 = vadd.f32 %v4238, %v4522
    %v4529 = vadd.f32 %v4239, %v4525
    %v4530 = vpack.c.bf16 %v4529, %v4528
    %v4531 = vld [vmem:[#allocation2 + $0x358] sm:$0xf]
    %v4532 = vld [vmem:[#allocation2 + $0x35c] sm:$0xf]
    %v4533 = vld [vmem:[#allocation2 + $0x360] sm:$0xf]
    %v4534 = vld [vmem:[#allocation2 + $0x364] sm:$0xf]
    %v4535 = vld [vmem:[#allocation5 + $0xc0] sm:$0x1]
    %v4536 = vlaneseq
    %v4537 = vshrl.u32 %v4536, 7
    %v4538 = vsub.s32 0, %v4537
    %v4539 = vrot.slane %v4535, %v4538
    %v4544 = vunpack.c.l.b16 %v4531
    %v4545 = vunpack.c.l.b16 %v4532
    %v4546 = vunpack.c.l.b16 %v4533
    %v4547 = vunpack.c.l.b16 %v4534
    %v4548 = vpack.c.b16 %v4545, %v4544
    %v4549 = vpack.c.b16 %v4547, %v4546
    %v4553 = vsel %vm262, %v4530, 0
    %4555 = vmatprep.subr.bf16.mxu0 0
    %4556 = vmatpush1.bf16.msra.mxu0 0
    %4557 = vmatprep.subr.bf16.mxu0 0
    %4558 = vmatpush1.bf16.msra.mxu0 0
    %4559 = vmatprep.subr.bf16.mxu0 0
    %4560 = vmatpush1.bf16.msra.mxu0 0
    %4561 = vmatprep.subr.bf16.mxu0 0
    %4562 = vmatpush1.bf16.msra.mxu0 0
    %4563 = vmatprep.subr.bf16.mxu0 0
    %4564 = vmatpush1.bf16.msra.mxu0 0
    %4565 = vmatprep.subr.bf16.mxu0 0
    %4566 = vmatpush1.bf16.msra.mxu0 0
    %4567 = vmatprep.subr.bf16.mxu0 0
    %4568 = vmatpush1.bf16.msra.mxu0 %v4549
    %4569 = vmatprep.subr.bf16.mxu0 0
    %4570 = vmatpush1.bf16.msra.mxu0 %v4548
    %4571 = vmatprep.subr.bf16.mxu0 0
    %4572 = vmatpush2.bf16.msra.mxu0 0
    %4573 = vmatprep.subr.bf16.mxu0 0
    %4574 = vmatpush2.bf16.msra.mxu0 0
    %4575 = vmatprep.subr.bf16.mxu0 0
    %4576 = vmatpush2.bf16.msra.mxu0 0
    %4577 = vmatprep.subr.bf16.mxu0 0
    %4578 = vmatpush2.bf16.msra.mxu0 0
    %4579 = vmatprep.subr.bf16.mxu0 0
    %4580 = vmatpush2.bf16.msra.mxu0 0
    %4581 = vmatprep.subr.bf16.mxu0 0
    %4582 = vmatpush2.bf16.msra.mxu0 0
    %4583 = vmatprep.subr.bf16.mxu0 0
    %4584 = vmatpush2.bf16.msra.mxu0 0
    %4585 = vmatprep.subr.bf16.mxu0 0
    %4586 = vmatpush2.bf16.msra.mxu0 0
    %4587 = vmatprep.mubr.bf16.mxu0 0
    %4588 = vmatmul.mubr.bf16.gmra.mxu0 %v4553
    %v4589 = vpop.f32.mrf.mxu0
    %v4590 = vadd.f32 %v4539, %v4589
    %v4591 = vpop.f32.mrf.mxu0
    %v4592 = vpop.f32.mrf.mxu0
    %v4593 = vadd.f32 %v4539, %v4592
    %v4594 = vpop.f32.mrf.mxu0
    %4595 = vdwg.mxu0
    %v4596 = vadd.f32 %v3328, %v4590
    %v4597 = vadd.f32 %v3329, %v4593
    %v4598 = vpack.c.bf16 %v4597, %v4596
    %v4599 = vunpack.c.l.bf16 %v4598
    %v4600 = vunpack.c.h.bf16 %v4598
    %v4601 = vsel %vm262, %v4599, 0.0
    %4602 = vadd.xlane.f32.xlu0 %v4601
    %v4603 = vpop.xlane.xlu0 %4602
    %v4604 = vsel %vm262, %v4600, 0.0
    %4605 = vadd.xlane.f32.xlu0 %v4604
    %v4606 = vpop.xlane.xlu0 %4605
    %v4607 = vmul.f32 %v4603, %v269
    %v4608 = vmul.f32 %v4606, %v269
    %v4609 = vsub.f32 %v4599, %v4607
    %v4610 = vsub.f32 %v4600, %v4608
    %v4611 = vmul.f32 %v4609, %v4609
    %v4612 = vmul.f32 %v4610, %v4610
    %v4613 = vsel %vm262, %v4611, 0.0
    %4614 = vadd.xlane.f32.xlu0 %v4613
    %v4615 = vpop.xlane.xlu0 %4614
    %v4616 = vsel %vm262, %v4612, 0.0
    %4617 = vadd.xlane.f32.xlu0 %v4616
    %v4618 = vpop.xlane.xlu0 %4617
    %v4619 = vmul.f32 %v4615, %v269
    %v4620 = vmul.f32 %v4618, %v269
    %v4621 = vadd.f32 %v4619, 1e-05
    %v4622 = vadd.f32 %v4620, 1e-05
    %v4623 = vrsqrt.pop %v4621
    %v4624 = vrsqrt.pop %v4622
    %v4625 = vmul.f32 %v4609, %v4623
    %v4626 = vmul.f32 %v4610, %v4624
    %v4627 = vld [vmem:[#allocation5 + $0xc8] sm:$0x1]
    %v4628 = vlaneseq
    %v4629 = vshrl.u32 %v4628, 7
    %v4630 = vsub.s32 0, %v4629
    %v4631 = vrot.slane %v4627, %v4630
    %v4632 = vmul.f32 %v4625, %v4631
    %v4633 = vmul.f32 %v4626, %v4631
    %v4634 = vld [vmem:[#allocation5 + $0xd0] sm:$0x1]
    %v4635 = vlaneseq
    %v4636 = vshrl.u32 %v4635, 7
    %v4637 = vsub.s32 0, %v4636
    %v4638 = vrot.slane %v4634, %v4637
    %v4639 = vadd.f32 %v4632, %v4638
    %v4640 = vadd.f32 %v4633, %v4638
    %v4641 = vpack.c.bf16 %v4640, %v4639
    %v4642 = vld [vmem:[#allocation2 + $0x368] sm:$0xf]
    %v4643 = vld [vmem:[#allocation2 + $0x36c] sm:$0xf]
    %v4644 = vld [vmem:[#allocation2 + $0x370] sm:$0xf]
    %v4645 = vld [vmem:[#allocation2 + $0x374] sm:$0xf]
    %v4650 = vunpack.c.l.b16 %v4642
    %v4651 = vunpack.c.l.b16 %v4643
    %v4652 = vunpack.c.l.b16 %v4644
    %v4653 = vunpack.c.l.b16 %v4645
    %v4654 = vpack.c.b16 %v4651, %v4650
    %v4655 = vpack.c.b16 %v4653, %v4652
    %v4659 = vsel %vm262, %v4641, 0
    %4661 = vmatprep.subr.bf16.mxu0 0
    %4662 = vmatpush1.bf16.msra.mxu0 0
    %4663 = vmatprep.subr.bf16.mxu0 0
    %4664 = vmatpush1.bf16.msra.mxu0 0
    %4665 = vmatprep.subr.bf16.mxu0 0
    %4666 = vmatpush1.bf16.msra.mxu0 0
    %4667 = vmatprep.subr.bf16.mxu0 0
    %4668 = vmatpush1.bf16.msra.mxu0 0
    %4669 = vmatprep.subr.bf16.mxu0 0
    %4670 = vmatpush1.bf16.msra.mxu0 0
    %4671 = vmatprep.subr.bf16.mxu0 0
    %4672 = vmatpush1.bf16.msra.mxu0 0
    %4673 = vmatprep.subr.bf16.mxu0 0
    %4674 = vmatpush1.bf16.msra.mxu0 %v4655
    %4675 = vmatprep.subr.bf16.mxu0 0
    %4676 = vmatpush1.bf16.msra.mxu0 %v4654
    %4677 = vmatprep.subr.bf16.mxu0 0
    %4678 = vmatpush2.bf16.msra.mxu0 0
    %4679 = vmatprep.subr.bf16.mxu0 0
    %4680 = vmatpush2.bf16.msra.mxu0 0
    %4681 = vmatprep.subr.bf16.mxu0 0
    %4682 = vmatpush2.bf16.msra.mxu0 0
    %4683 = vmatprep.subr.bf16.mxu0 0
    %4684 = vmatpush2.bf16.msra.mxu0 0
    %4685 = vmatprep.subr.bf16.mxu0 0
    %4686 = vmatpush2.bf16.msra.mxu0 0
    %4687 = vmatprep.subr.bf16.mxu0 0
    %4688 = vmatpush2.bf16.msra.mxu0 0
    %4689 = vmatprep.subr.bf16.mxu0 0
    %4690 = vmatpush2.bf16.msra.mxu0 0
    %4691 = vmatprep.subr.bf16.mxu0 0
    %4692 = vmatpush2.bf16.msra.mxu0 0
    %4693 = vmatprep.mubr.bf16.mxu0 0
    %4694 = vmatmul.mubr.bf16.gmra.mxu0 %v4659
    %v4695 = vpop.f32.mrf.mxu0
    %v4696 = vadd.f32 0.0, %v4695
    %v4697 = vpop.f32.mrf.mxu0
    %v4698 = vpop.f32.mrf.mxu0
    %v4699 = vadd.f32 0.0, %v4698
    %v4700 = vpop.f32.mrf.mxu0
    %4701 = vdwg.mxu0
    %v4702 = vld [vmem:[#allocation2 + $0x378] sm:$0xf]
    %v4703 = vld [vmem:[#allocation2 + $0x37c] sm:$0xf]
    %v4704 = vld [vmem:[#allocation2 + $0x380] sm:$0xf]
    %v4705 = vld [vmem:[#allocation2 + $0x384] sm:$0xf]
    %v4710 = vunpack.c.l.b16 %v4702
    %v4711 = vunpack.c.l.b16 %v4703
    %v4712 = vunpack.c.l.b16 %v4704
    %v4713 = vunpack.c.l.b16 %v4705
    %v4714 = vpack.c.b16 %v4711, %v4710
    %v4715 = vpack.c.b16 %v4713, %v4712
    %v4719 = vsel %vm262, %v3326, 0
    %4721 = vmatprep.subr.bf16.mxu0 0
    %4722 = vmatpush1.bf16.msra.mxu0 0
    %4723 = vmatprep.subr.bf16.mxu0 0
    %4724 = vmatpush1.bf16.msra.mxu0 0
    %4725 = vmatprep.subr.bf16.mxu0 0
    %4726 = vmatpush1.bf16.msra.mxu0 0
    %4727 = vmatprep.subr.bf16.mxu0 0
    %4728 = vmatpush1.bf16.msra.mxu0 0
    %4729 = vmatprep.subr.bf16.mxu0 0
    %4730 = vmatpush1.bf16.msra.mxu0 0
    %4731 = vmatprep.subr.bf16.mxu0 0
    %4732 = vmatpush1.bf16.msra.mxu0 0
    %4733 = vmatprep.subr.bf16.mxu0 0
    %4734 = vmatpush1.bf16.msra.mxu0 %v4715
    %4735 = vmatprep.subr.bf16.mxu0 0
    %4736 = vmatpush1.bf16.msra.mxu0 %v4714
    %4737 = vmatprep.subr.bf16.mxu0 0
    %4738 = vmatpush2.bf16.msra.mxu0 0
    %4739 = vmatprep.subr.bf16.mxu0 0
    %4740 = vmatpush2.bf16.msra.mxu0 0
    %4741 = vmatprep.subr.bf16.mxu0 0
    %4742 = vmatpush2.bf16.msra.mxu0 0
    %4743 = vmatprep.subr.bf16.mxu0 0
    %4744 = vmatpush2.bf16.msra.mxu0 0
    %4745 = vmatprep.subr.bf16.mxu0 0
    %4746 = vmatpush2.bf16.msra.mxu0 0
    %4747 = vmatprep.subr.bf16.mxu0 0
    %4748 = vmatpush2.bf16.msra.mxu0 0
    %4749 = vmatprep.subr.bf16.mxu0 0
    %4750 = vmatpush2.bf16.msra.mxu0 0
    %4751 = vmatprep.subr.bf16.mxu0 0
    %4752 = vmatpush2.bf16.msra.mxu0 0
    %4753 = vmatprep.mubr.bf16.mxu0 0
    %4754 = vmatmul.mubr.bf16.gmra.mxu0 %v4719
    %v4755 = vpop.f32.mrf.mxu0
    %v4756 = vadd.f32 0.0, %v4755
    %v4757 = vpop.f32.mrf.mxu0
    %v4758 = vpop.f32.mrf.mxu0
    %v4759 = vadd.f32 0.0, %v4758
    %v4760 = vpop.f32.mrf.mxu0
    %4761 = vdwg.mxu0
    %v4762 = vld [vmem:[#allocation2 + $0x388] sm:$0xf]
    %v4763 = vld [vmem:[#allocation2 + $0x38c] sm:$0xf]
    %v4764 = vld [vmem:[#allocation2 + $0x390] sm:$0xf]
    %v4765 = vld [vmem:[#allocation2 + $0x394] sm:$0xf]
    %v4770 = vunpack.c.l.b16 %v4762
    %v4771 = vunpack.c.l.b16 %v4763
    %v4772 = vunpack.c.l.b16 %v4764
    %v4773 = vunpack.c.l.b16 %v4765
    %v4774 = vpack.c.b16 %v4771, %v4770
    %v4775 = vpack.c.b16 %v4773, %v4772
    %4778 = vmatprep.subr.bf16.mxu0 0
    %4779 = vmatpush1.bf16.msra.mxu0 0
    %4780 = vmatprep.subr.bf16.mxu0 0
    %4781 = vmatpush1.bf16.msra.mxu0 0
    %4782 = vmatprep.subr.bf16.mxu0 0
    %4783 = vmatpush1.bf16.msra.mxu0 0
    %4784 = vmatprep.subr.bf16.mxu0 0
    %4785 = vmatpush1.bf16.msra.mxu0 0
    %4786 = vmatprep.subr.bf16.mxu0 0
    %4787 = vmatpush1.bf16.msra.mxu0 0
    %4788 = vmatprep.subr.bf16.mxu0 0
    %4789 = vmatpush1.bf16.msra.mxu0 0
    %4790 = vmatprep.subr.bf16.mxu0 0
    %4791 = vmatpush1.bf16.msra.mxu0 %v4775
    %4792 = vmatprep.subr.bf16.mxu0 0
    %4793 = vmatpush1.bf16.msra.mxu0 %v4774
    %4794 = vmatprep.subr.bf16.mxu0 0
    %4795 = vmatpush2.bf16.msra.mxu0 0
    %4796 = vmatprep.subr.bf16.mxu0 0
    %4797 = vmatpush2.bf16.msra.mxu0 0
    %4798 = vmatprep.subr.bf16.mxu0 0
    %4799 = vmatpush2.bf16.msra.mxu0 0
    %4800 = vmatprep.subr.bf16.mxu0 0
    %4801 = vmatpush2.bf16.msra.mxu0 0
    %4802 = vmatprep.subr.bf16.mxu0 0
    %4803 = vmatpush2.bf16.msra.mxu0 0
    %4804 = vmatprep.subr.bf16.mxu0 0
    %4805 = vmatpush2.bf16.msra.mxu0 0
    %4806 = vmatprep.subr.bf16.mxu0 0
    %4807 = vmatpush2.bf16.msra.mxu0 0
    %4808 = vmatprep.subr.bf16.mxu0 0
    %4809 = vmatpush2.bf16.msra.mxu0 0
    %4810 = vmatprep.mubr.bf16.mxu0 0
    %4811 = vmatmul.mubr.bf16.gmra.mxu0 %v4719
    %v4812 = vpop.f32.mrf.mxu0
    %v4813 = vadd.f32 0.0, %v4812
    %v4814 = vpop.f32.mrf.mxu0
    %v4815 = vpop.f32.mrf.mxu0
    %v4816 = vadd.f32 0.0, %v4815
    %v4817 = vpop.f32.mrf.mxu0
    %4818 = vdwg.mxu0
    %v4819 = vpack.c.bf16 %v4699, %v4696
    %v4820 = vpack.c.bf16 %v4759, %v4756
    %v4822 = vsel %vm191, %v4819, 0
    %v4825 = vsel %vm191, %v4820, 0
    %4827 = vmatprep.subr.bf16.mxu0 0
    %4828 = vmatpush1.bf16.xpose.msra.mxu0 0
    %4829 = vmatprep.subr.bf16.mxu0 0
    %4830 = vmatpush1.bf16.xpose.msra.mxu0 0
    %4831 = vmatprep.subr.bf16.mxu0 0
    %4832 = vmatpush1.bf16.xpose.msra.mxu0 0
    %4833 = vmatprep.subr.bf16.mxu0 0
    %4834 = vmatpush1.bf16.xpose.msra.mxu0 0
    %4835 = vmatprep.subr.bf16.mxu0 0
    %4836 = vmatpush1.bf16.xpose.msra.mxu0 0
    %4837 = vmatprep.subr.bf16.mxu0 0
    %4838 = vmatpush1.bf16.xpose.msra.mxu0 0
    %4839 = vmatprep.subr.bf16.mxu0 0
    %4840 = vmatpush1.bf16.xpose.msra.mxu0 0
    %4841 = vmatprep.subr.bf16.mxu0 0
    %4842 = vmatpush1.bf16.xpose.msra.mxu0 %v4825
    %4843 = vmatprep.subr.bf16.mxu0 0
    %4844 = vmatpush2.bf16.xpose.msra.mxu0 0
    %4845 = vmatprep.subr.bf16.mxu0 0
    %4846 = vmatpush2.bf16.xpose.msra.mxu0 0
    %4847 = vmatprep.subr.bf16.mxu0 0
    %4848 = vmatpush2.bf16.xpose.msra.mxu0 0
    %4849 = vmatprep.subr.bf16.mxu0 0
    %4850 = vmatpush2.bf16.xpose.msra.mxu0 0
    %4851 = vmatprep.subr.bf16.mxu0 0
    %4852 = vmatpush2.bf16.xpose.msra.mxu0 0
    %4853 = vmatprep.subr.bf16.mxu0 0
    %4854 = vmatpush2.bf16.xpose.msra.mxu0 0
    %4855 = vmatprep.subr.bf16.mxu0 0
    %4856 = vmatpush2.bf16.xpose.msra.mxu0 0
    %4857 = vmatprep.subr.bf16.mxu0 0
    %4858 = vmatpush2.bf16.xpose.msra.mxu0 0
    %4859 = vmatprep.mubr.bf16.mxu0 0
    %4860 = vmatmul.mubr.bf16.gmra.mxu0 %v4822
    %v4861 = vpop.f32.mrf.mxu0
    %v4862 = vadd.f32 %v248, %v4861
    %v4863 = vpop.f32.mrf.mxu0
    %v4864 = vpop.f32.mrf.mxu0
    %v4865 = vadd.f32 %v249, %v4864
    %v4866 = vpop.f32.mrf.mxu0
    %4867 = vdwg.mxu0
    %v4868 = vsel %vm78, %v4862, -inf
    %4869 = vmax.xlane.f32.xlu0 %v4868
    %v4870 = vpop.xlane.xlu0 %4869
    %v4871 = vsel %vm78, %v4865, -inf
    %4872 = vmax.xlane.f32.xlu0 %v4871
    %v4873 = vpop.xlane.xlu0 %4872
    %v4874 = vsub.f32 %v4862, %v4870
    %v4875 = vsub.f32 %v4865, %v4873
    %v4876 = vmul.f32 %v4874, 1.442695
    %v4877 = vpow.pop %v4876
    %v4878 = vmul.f32 %v4875, 1.442695
    %v4879 = vpow.pop %v4878
    %v4880 = vsel %vm78, %v4877, 0.0
    %4881 = vadd.xlane.f32.xlu0 %v4880
    %v4882 = vpop.xlane.xlu0 %4881
    %v4883 = vsel %vm78, %v4879, 0.0
    %4884 = vadd.xlane.f32.xlu0 %v4883
    %v4885 = vpop.xlane.xlu0 %4884
    %v4886 = vrcp.pop %v4882
    %v4887 = vrcp.pop %v4885
    %v4888 = vmul.f32 %v4877, %v4886
    %v4889 = vmul.f32 %v4879, %v4887
    %v4890 = vpack.c.bf16 %v4889, %v4888
    %v4891 = vpack.c.bf16 %v4816, %v4813
    %v4892 = vld [vmem:[#allocation2 + $0x398] sm:$0xf]
    %v4893 = vld [vmem:[#allocation2 + $0x39c] sm:$0xf]
    %v4894 = vld [vmem:[#allocation2 + $0x3a0] sm:$0xf]
    %v4895 = vld [vmem:[#allocation2 + $0x3a4] sm:$0xf]
    %v4900 = vunpack.c.l.b16 %v4892
    %v4901 = vunpack.c.l.b16 %v4893
    %v4902 = vunpack.c.l.b16 %v4894
    %v4903 = vunpack.c.l.b16 %v4895
    %v4904 = vpack.c.b16 %v4901, %v4900
    %v4905 = vpack.c.b16 %v4903, %v4902
    %4908 = vmatprep.subr.bf16.mxu0 0
    %4909 = vmatpush1.bf16.msra.mxu0 0
    %4910 = vmatprep.subr.bf16.mxu0 0
    %4911 = vmatpush1.bf16.msra.mxu0 0
    %4912 = vmatprep.subr.bf16.mxu0 0
    %4913 = vmatpush1.bf16.msra.mxu0 0
    %4914 = vmatprep.subr.bf16.mxu0 0
    %4915 = vmatpush1.bf16.msra.mxu0 0
    %4916 = vmatprep.subr.bf16.mxu0 0
    %4917 = vmatpush1.bf16.msra.mxu0 0
    %4918 = vmatprep.subr.bf16.mxu0 0
    %4919 = vmatpush1.bf16.msra.mxu0 0
    %4920 = vmatprep.subr.bf16.mxu0 0
    %4921 = vmatpush1.bf16.msra.mxu0 %v4905
    %4922 = vmatprep.subr.bf16.mxu0 0
    %4923 = vmatpush1.bf16.msra.mxu0 %v4904
    %4924 = vmatprep.subr.bf16.mxu0 0
    %4925 = vmatpush2.bf16.msra.mxu0 0
    %4926 = vmatprep.subr.bf16.mxu0 0
    %4927 = vmatpush2.bf16.msra.mxu0 0
    %4928 = vmatprep.subr.bf16.mxu0 0
    %4929 = vmatpush2.bf16.msra.mxu0 0
    %4930 = vmatprep.subr.bf16.mxu0 0
    %4931 = vmatpush2.bf16.msra.mxu0 0
    %4932 = vmatprep.subr.bf16.mxu0 0
    %4933 = vmatpush2.bf16.msra.mxu0 0
    %4934 = vmatprep.subr.bf16.mxu0 0
    %4935 = vmatpush2.bf16.msra.mxu0 0
    %4936 = vmatprep.subr.bf16.mxu0 0
    %4937 = vmatpush2.bf16.msra.mxu0 0
    %4938 = vmatprep.subr.bf16.mxu0 0
    %4939 = vmatpush2.bf16.msra.mxu0 0
    %4940 = vmatprep.mubr.bf16.mxu0 0
    %4941 = vmatmul.mubr.bf16.gmra.mxu0 %v4659
    %v4942 = vpop.f32.mrf.mxu0
    %v4943 = vadd.f32 0.0, %v4942
    %v4944 = vpop.f32.mrf.mxu0
    %v4945 = vpop.f32.mrf.mxu0
    %v4946 = vadd.f32 0.0, %v4945
    %v4947 = vpop.f32.mrf.mxu0
    %4948 = vdwg.mxu0
    %v4949 = vld [vmem:[#allocation2 + $0x3a8] sm:$0xf]
    %v4950 = vld [vmem:[#allocation2 + $0x3ac] sm:$0xf]
    %v4951 = vld [vmem:[#allocation2 + $0x3b0] sm:$0xf]
    %v4952 = vld [vmem:[#allocation2 + $0x3b4] sm:$0xf]
    %v4957 = vunpack.c.l.b16 %v4949
    %v4958 = vunpack.c.l.b16 %v4950
    %v4959 = vunpack.c.l.b16 %v4951
    %v4960 = vunpack.c.l.b16 %v4952
    %v4961 = vpack.c.b16 %v4958, %v4957
    %v4962 = vpack.c.b16 %v4960, %v4959
    %4965 = vmatprep.subr.bf16.mxu0 0
    %4966 = vmatpush1.bf16.msra.mxu0 0
    %4967 = vmatprep.subr.bf16.mxu0 0
    %4968 = vmatpush1.bf16.msra.mxu0 0
    %4969 = vmatprep.subr.bf16.mxu0 0
    %4970 = vmatpush1.bf16.msra.mxu0 0
    %4971 = vmatprep.subr.bf16.mxu0 0
    %4972 = vmatpush1.bf16.msra.mxu0 0
    %4973 = vmatprep.subr.bf16.mxu0 0
    %4974 = vmatpush1.bf16.msra.mxu0 0
    %4975 = vmatprep.subr.bf16.mxu0 0
    %4976 = vmatpush1.bf16.msra.mxu0 0
    %4977 = vmatprep.subr.bf16.mxu0 0
    %4978 = vmatpush1.bf16.msra.mxu0 %v4962
    %4979 = vmatprep.subr.bf16.mxu0 0
    %4980 = vmatpush1.bf16.msra.mxu0 %v4961
    %4981 = vmatprep.subr.bf16.mxu0 0
    %4982 = vmatpush2.bf16.msra.mxu0 0
    %4983 = vmatprep.subr.bf16.mxu0 0
    %4984 = vmatpush2.bf16.msra.mxu0 0
    %4985 = vmatprep.subr.bf16.mxu0 0
    %4986 = vmatpush2.bf16.msra.mxu0 0
    %4987 = vmatprep.subr.bf16.mxu0 0
    %4988 = vmatpush2.bf16.msra.mxu0 0
    %4989 = vmatprep.subr.bf16.mxu0 0
    %4990 = vmatpush2.bf16.msra.mxu0 0
    %4991 = vmatprep.subr.bf16.mxu0 0
    %4992 = vmatpush2.bf16.msra.mxu0 0
    %4993 = vmatprep.subr.bf16.mxu0 0
    %4994 = vmatpush2.bf16.msra.mxu0 0
    %4995 = vmatprep.subr.bf16.mxu0 0
    %4996 = vmatpush2.bf16.msra.mxu0 0
    %4997 = vmatprep.mubr.bf16.mxu0 0
    %4998 = vmatmul.mubr.bf16.gmra.mxu0 %v4719
    %v4999 = vpop.f32.mrf.mxu0
    %v5000 = vadd.f32 0.0, %v4999
    %v5001 = vpop.f32.mrf.mxu0
    %v5002 = vpop.f32.mrf.mxu0
    %v5003 = vadd.f32 0.0, %v5002
    %v5004 = vpop.f32.mrf.mxu0
    %5005 = vdwg.mxu0
    %v5006 = vld [vmem:[#allocation2 + $0x3b8] sm:$0xf]
    %v5007 = vld [vmem:[#allocation2 + $0x3bc] sm:$0xf]
    %v5008 = vld [vmem:[#allocation2 + $0x3c0] sm:$0xf]
    %v5009 = vld [vmem:[#allocation2 + $0x3c4] sm:$0xf]
    %v5014 = vunpack.c.l.b16 %v5006
    %v5015 = vunpack.c.l.b16 %v5007
    %v5016 = vunpack.c.l.b16 %v5008
    %v5017 = vunpack.c.l.b16 %v5009
    %v5018 = vpack.c.b16 %v5015, %v5014
    %v5019 = vpack.c.b16 %v5017, %v5016
    %5022 = vmatprep.subr.bf16.mxu0 0
    %5023 = vmatpush1.bf16.msra.mxu0 0
    %5024 = vmatprep.subr.bf16.mxu0 0
    %5025 = vmatpush1.bf16.msra.mxu0 0
    %5026 = vmatprep.subr.bf16.mxu0 0
    %5027 = vmatpush1.bf16.msra.mxu0 0
    %5028 = vmatprep.subr.bf16.mxu0 0
    %5029 = vmatpush1.bf16.msra.mxu0 0
    %5030 = vmatprep.subr.bf16.mxu0 0
    %5031 = vmatpush1.bf16.msra.mxu0 0
    %5032 = vmatprep.subr.bf16.mxu0 0
    %5033 = vmatpush1.bf16.msra.mxu0 0
    %5034 = vmatprep.subr.bf16.mxu0 0
    %5035 = vmatpush1.bf16.msra.mxu0 %v5019
    %5036 = vmatprep.subr.bf16.mxu0 0
    %5037 = vmatpush1.bf16.msra.mxu0 %v5018
    %5038 = vmatprep.subr.bf16.mxu0 0
    %5039 = vmatpush2.bf16.msra.mxu0 0
    %5040 = vmatprep.subr.bf16.mxu0 0
    %5041 = vmatpush2.bf16.msra.mxu0 0
    %5042 = vmatprep.subr.bf16.mxu0 0
    %5043 = vmatpush2.bf16.msra.mxu0 0
    %5044 = vmatprep.subr.bf16.mxu0 0
    %5045 = vmatpush2.bf16.msra.mxu0 0
    %5046 = vmatprep.subr.bf16.mxu0 0
    %5047 = vmatpush2.bf16.msra.mxu0 0
    %5048 = vmatprep.subr.bf16.mxu0 0
    %5049 = vmatpush2.bf16.msra.mxu0 0
    %5050 = vmatprep.subr.bf16.mxu0 0
    %5051 = vmatpush2.bf16.msra.mxu0 0
    %5052 = vmatprep.subr.bf16.mxu0 0
    %5053 = vmatpush2.bf16.msra.mxu0 0
    %5054 = vmatprep.mubr.bf16.mxu0 0
    %5055 = vmatmul.mubr.bf16.gmra.mxu0 %v4719
    %v5056 = vpop.f32.mrf.mxu0
    %v5057 = vadd.f32 0.0, %v5056
    %v5058 = vpop.f32.mrf.mxu0
    %v5059 = vpop.f32.mrf.mxu0
    %v5060 = vadd.f32 0.0, %v5059
    %v5061 = vpop.f32.mrf.mxu0
    %5062 = vdwg.mxu0
    %v5063 = vpack.c.bf16 %v4946, %v4943
    %v5064 = vpack.c.bf16 %v5003, %v5000
    %v5066 = vsel %vm191, %v5063, 0
    %v5069 = vsel %vm191, %v5064, 0
    %5071 = vmatprep.subr.bf16.mxu0 0
    %5072 = vmatpush1.bf16.xpose.msra.mxu0 0
    %5073 = vmatprep.subr.bf16.mxu0 0
    %5074 = vmatpush1.bf16.xpose.msra.mxu0 0
    %5075 = vmatprep.subr.bf16.mxu0 0
    %5076 = vmatpush1.bf16.xpose.msra.mxu0 0
    %5077 = vmatprep.subr.bf16.mxu0 0
    %5078 = vmatpush1.bf16.xpose.msra.mxu0 0
    %5079 = vmatprep.subr.bf16.mxu0 0
    %5080 = vmatpush1.bf16.xpose.msra.mxu0 0
    %5081 = vmatprep.subr.bf16.mxu0 0
    %5082 = vmatpush1.bf16.xpose.msra.mxu0 0
    %5083 = vmatprep.subr.bf16.mxu0 0
    %5084 = vmatpush1.bf16.xpose.msra.mxu0 0
    %5085 = vmatprep.subr.bf16.mxu0 0
    %5086 = vmatpush1.bf16.xpose.msra.mxu0 %v5069
    %5087 = vmatprep.subr.bf16.mxu0 0
    %5088 = vmatpush2.bf16.xpose.msra.mxu0 0
    %5089 = vmatprep.subr.bf16.mxu0 0
    %5090 = vmatpush2.bf16.xpose.msra.mxu0 0
    %5091 = vmatprep.subr.bf16.mxu0 0
    %5092 = vmatpush2.bf16.xpose.msra.mxu0 0
    %5093 = vmatprep.subr.bf16.mxu0 0
    %5094 = vmatpush2.bf16.xpose.msra.mxu0 0
    %5095 = vmatprep.subr.bf16.mxu0 0
    %5096 = vmatpush2.bf16.xpose.msra.mxu0 0
    %5097 = vmatprep.subr.bf16.mxu0 0
    %5098 = vmatpush2.bf16.xpose.msra.mxu0 0
    %5099 = vmatprep.subr.bf16.mxu0 0
    %5100 = vmatpush2.bf16.xpose.msra.mxu0 0
    %5101 = vmatprep.subr.bf16.mxu0 0
    %5102 = vmatpush2.bf16.xpose.msra.mxu0 0
    %5103 = vmatprep.mubr.bf16.mxu0 0
    %5104 = vmatmul.mubr.bf16.gmra.mxu0 %v5066
    %v5105 = vpop.f32.mrf.mxu0
    %v5106 = vadd.f32 %v248, %v5105
    %v5107 = vpop.f32.mrf.mxu0
    %v5108 = vpop.f32.mrf.mxu0
    %v5109 = vadd.f32 %v249, %v5108
    %v5110 = vpop.f32.mrf.mxu0
    %5111 = vdwg.mxu0
    %v5112 = vsel %vm78, %v5106, -inf
    %5113 = vmax.xlane.f32.xlu0 %v5112
    %v5114 = vpop.xlane.xlu0 %5113
    %v5115 = vsel %vm78, %v5109, -inf
    %5116 = vmax.xlane.f32.xlu0 %v5115
    %v5117 = vpop.xlane.xlu0 %5116
    %v5118 = vsub.f32 %v5106, %v5114
    %v5119 = vsub.f32 %v5109, %v5117
    %v5120 = vmul.f32 %v5118, 1.442695
    %v5121 = vpow.pop %v5120
    %v5122 = vmul.f32 %v5119, 1.442695
    %v5123 = vpow.pop %v5122
    %v5124 = vsel %vm78, %v5121, 0.0
    %5125 = vadd.xlane.f32.xlu0 %v5124
    %v5126 = vpop.xlane.xlu0 %5125
    %v5127 = vsel %vm78, %v5123, 0.0
    %5128 = vadd.xlane.f32.xlu0 %v5127
    %v5129 = vpop.xlane.xlu0 %5128
    %v5130 = vrcp.pop %v5126
    %v5131 = vrcp.pop %v5129
    %v5132 = vmul.f32 %v5121, %v5130
    %v5133 = vmul.f32 %v5123, %v5131
    %v5134 = vpack.c.bf16 %v5133, %v5132
    %v5135 = vpack.c.bf16 %v5060, %v5057
    %v5137 = vsel %vm78, %v5134, 0
    %5139 = vmatprep.subr.bf16.mxu0 0
    %5140 = vmatpush1.bf16.msra.mxu0 0
    %5141 = vmatprep.subr.bf16.mxu0 0
    %5142 = vmatpush1.bf16.msra.mxu0 0
    %5143 = vmatprep.subr.bf16.mxu0 0
    %5144 = vmatpush1.bf16.msra.mxu0 0
    %5145 = vmatprep.subr.bf16.mxu0 0
    %5146 = vmatpush1.bf16.msra.mxu0 0
    %5147 = vmatprep.subr.bf16.mxu0 0
    %5148 = vmatpush1.bf16.msra.mxu0 0
    %5149 = vmatprep.subr.bf16.mxu0 0
    %5150 = vmatpush1.bf16.msra.mxu0 0
    %5151 = vmatprep.subr.bf16.mxu0 0
    %5152 = vmatpush1.bf16.msra.mxu0 0
    %5153 = vmatprep.subr.bf16.mxu0 0
    %5154 = vmatpush1.bf16.msra.mxu0 %v5135
    %5155 = vmatprep.subr.bf16.mxu0 0
    %5156 = vmatpush2.bf16.msra.mxu0 0
    %5157 = vmatprep.subr.bf16.mxu0 0
    %5158 = vmatpush2.bf16.msra.mxu0 0
    %5159 = vmatprep.subr.bf16.mxu0 0
    %5160 = vmatpush2.bf16.msra.mxu0 0
    %5161 = vmatprep.subr.bf16.mxu0 0
    %5162 = vmatpush2.bf16.msra.mxu0 0
    %5163 = vmatprep.subr.bf16.mxu0 0
    %5164 = vmatpush2.bf16.msra.mxu0 0
    %5165 = vmatprep.subr.bf16.mxu0 0
    %5166 = vmatpush2.bf16.msra.mxu0 0
    %5167 = vmatprep.subr.bf16.mxu0 0
    %5168 = vmatpush2.bf16.msra.mxu0 0
    %5169 = vmatprep.subr.bf16.mxu0 0
    %5170 = vmatpush2.bf16.msra.mxu0 0
    %5171 = vmatprep.mubr.bf16.mxu0 0
    %5172 = vmatmul.mubr.bf16.gmra.mxu0 %v5137
    %v5173 = vpop.f32.mrf.mxu0
    %v5174 = vadd.f32 0.0, %v5173
    %v5175 = vpop.f32.mrf.mxu0
    %v5176 = vpop.f32.mrf.mxu0
    %v5177 = vadd.f32 0.0, %v5176
    %v5178 = vpop.f32.mrf.mxu0
    %5179 = vdwg.mxu0
    %v5181 = vsel %vm78, %v4890, 0
    %5183 = vmatprep.subr.bf16.mxu0 0
    %5184 = vmatpush1.bf16.msra.mxu0 0
    %5185 = vmatprep.subr.bf16.mxu0 0
    %5186 = vmatpush1.bf16.msra.mxu0 0
    %5187 = vmatprep.subr.bf16.mxu0 0
    %5188 = vmatpush1.bf16.msra.mxu0 0
    %5189 = vmatprep.subr.bf16.mxu0 0
    %5190 = vmatpush1.bf16.msra.mxu0 0
    %5191 = vmatprep.subr.bf16.mxu0 0
    %5192 = vmatpush1.bf16.msra.mxu0 0
    %5193 = vmatprep.subr.bf16.mxu0 0
    %5194 = vmatpush1.bf16.msra.mxu0 0
    %5195 = vmatprep.subr.bf16.mxu0 0
    %5196 = vmatpush1.bf16.msra.mxu0 0
    %5197 = vmatprep.subr.bf16.mxu0 0
    %5198 = vmatpush1.bf16.msra.mxu0 %v4891
    %5199 = vmatprep.subr.bf16.mxu0 0
    %5200 = vmatpush2.bf16.msra.mxu0 0
    %5201 = vmatprep.subr.bf16.mxu0 0
    %5202 = vmatpush2.bf16.msra.mxu0 0
    %5203 = vmatprep.subr.bf16.mxu0 0
    %5204 = vmatpush2.bf16.msra.mxu0 0
    %5205 = vmatprep.subr.bf16.mxu0 0
    %5206 = vmatpush2.bf16.msra.mxu0 0
    %5207 = vmatprep.subr.bf16.mxu0 0
    %5208 = vmatpush2.bf16.msra.mxu0 0
    %5209 = vmatprep.subr.bf16.mxu0 0
    %5210 = vmatpush2.bf16.msra.mxu0 0
    %5211 = vmatprep.subr.bf16.mxu0 0
    %5212 = vmatpush2.bf16.msra.mxu0 0
    %5213 = vmatprep.subr.bf16.mxu0 0
    %5214 = vmatpush2.bf16.msra.mxu0 0
    %5215 = vmatprep.mubr.bf16.mxu0 0
    %5216 = vmatmul.mubr.bf16.gmra.mxu0 %v5181
    %v5217 = vpop.f32.mrf.mxu0
    %v5218 = vadd.f32 %v5174, %v5217
    %v5219 = vpop.f32.mrf.mxu0
    %v5220 = vpop.f32.mrf.mxu0
    %v5221 = vadd.f32 %v5177, %v5220
    %v5222 = vpop.f32.mrf.mxu0
    %5223 = vdwg.mxu0
    %v5224 = vld [vmem:[#allocation2 + $0x3c8] sm:$0xf]
    %v5225 = vld [vmem:[#allocation2 + $0x3cc] sm:$0xf]
    %v5226 = vld [vmem:[#allocation2 + $0x3d0] sm:$0xf]
    %v5227 = vld [vmem:[#allocation2 + $0x3d4] sm:$0xf]
    %v5232 = vunpack.c.l.b16 %v5224
    %v5233 = vunpack.c.l.b16 %v5225
    %v5234 = vunpack.c.l.b16 %v5226
    %v5235 = vunpack.c.l.b16 %v5227
    %v5236 = vpack.c.b16 %v5233, %v5232
    %v5237 = vpack.c.b16 %v5235, %v5234
    %5240 = vmatprep.subr.bf16.mxu0 0
    %5241 = vmatpush1.bf16.msra.mxu0 0
    %5242 = vmatprep.subr.bf16.mxu0 0
    %5243 = vmatpush1.bf16.msra.mxu0 0
    %5244 = vmatprep.subr.bf16.mxu0 0
    %5245 = vmatpush1.bf16.msra.mxu0 0
    %5246 = vmatprep.subr.bf16.mxu0 0
    %5247 = vmatpush1.bf16.msra.mxu0 0
    %5248 = vmatprep.subr.bf16.mxu0 0
    %5249 = vmatpush1.bf16.msra.mxu0 0
    %5250 = vmatprep.subr.bf16.mxu0 0
    %5251 = vmatpush1.bf16.msra.mxu0 0
    %5252 = vmatprep.subr.bf16.mxu0 0
    %5253 = vmatpush1.bf16.msra.mxu0 %v5237
    %5254 = vmatprep.subr.bf16.mxu0 0
    %5255 = vmatpush1.bf16.msra.mxu0 %v5236
    %5256 = vmatprep.subr.bf16.mxu0 0
    %5257 = vmatpush2.bf16.msra.mxu0 0
    %5258 = vmatprep.subr.bf16.mxu0 0
    %5259 = vmatpush2.bf16.msra.mxu0 0
    %5260 = vmatprep.subr.bf16.mxu0 0
    %5261 = vmatpush2.bf16.msra.mxu0 0
    %5262 = vmatprep.subr.bf16.mxu0 0
    %5263 = vmatpush2.bf16.msra.mxu0 0
    %5264 = vmatprep.subr.bf16.mxu0 0
    %5265 = vmatpush2.bf16.msra.mxu0 0
    %5266 = vmatprep.subr.bf16.mxu0 0
    %5267 = vmatpush2.bf16.msra.mxu0 0
    %5268 = vmatprep.subr.bf16.mxu0 0
    %5269 = vmatpush2.bf16.msra.mxu0 0
    %5270 = vmatprep.subr.bf16.mxu0 0
    %5271 = vmatpush2.bf16.msra.mxu0 0
    %5272 = vmatprep.mubr.bf16.mxu0 0
    %5273 = vmatmul.mubr.bf16.gmra.mxu0 %v4659
    %v5274 = vpop.f32.mrf.mxu0
    %v5275 = vadd.f32 0.0, %v5274
    %v5276 = vpop.f32.mrf.mxu0
    %v5277 = vpop.f32.mrf.mxu0
    %v5278 = vadd.f32 0.0, %v5277
    %v5279 = vpop.f32.mrf.mxu0
    %5280 = vdwg.mxu0
    %v5281 = vld [vmem:[#allocation2 + $0x3d8] sm:$0xf]
    %v5282 = vld [vmem:[#allocation2 + $0x3dc] sm:$0xf]
    %v5283 = vld [vmem:[#allocation2 + $0x3e0] sm:$0xf]
    %v5284 = vld [vmem:[#allocation2 + $0x3e4] sm:$0xf]
    %v5289 = vunpack.c.l.b16 %v5281
    %v5290 = vunpack.c.l.b16 %v5282
    %v5291 = vunpack.c.l.b16 %v5283
    %v5292 = vunpack.c.l.b16 %v5284
    %v5293 = vpack.c.b16 %v5290, %v5289
    %v5294 = vpack.c.b16 %v5292, %v5291
    %5297 = vmatprep.subr.bf16.mxu0 0
    %5298 = vmatpush1.bf16.msra.mxu0 0
    %5299 = vmatprep.subr.bf16.mxu0 0
    %5300 = vmatpush1.bf16.msra.mxu0 0
    %5301 = vmatprep.subr.bf16.mxu0 0
    %5302 = vmatpush1.bf16.msra.mxu0 0
    %5303 = vmatprep.subr.bf16.mxu0 0
    %5304 = vmatpush1.bf16.msra.mxu0 0
    %5305 = vmatprep.subr.bf16.mxu0 0
    %5306 = vmatpush1.bf16.msra.mxu0 0
    %5307 = vmatprep.subr.bf16.mxu0 0
    %5308 = vmatpush1.bf16.msra.mxu0 0
    %5309 = vmatprep.subr.bf16.mxu0 0
    %5310 = vmatpush1.bf16.msra.mxu0 %v5294
    %5311 = vmatprep.subr.bf16.mxu0 0
    %5312 = vmatpush1.bf16.msra.mxu0 %v5293
    %5313 = vmatprep.subr.bf16.mxu0 0
    %5314 = vmatpush2.bf16.msra.mxu0 0
    %5315 = vmatprep.subr.bf16.mxu0 0
    %5316 = vmatpush2.bf16.msra.mxu0 0
    %5317 = vmatprep.subr.bf16.mxu0 0
    %5318 = vmatpush2.bf16.msra.mxu0 0
    %5319 = vmatprep.subr.bf16.mxu0 0
    %5320 = vmatpush2.bf16.msra.mxu0 0
    %5321 = vmatprep.subr.bf16.mxu0 0
    %5322 = vmatpush2.bf16.msra.mxu0 0
    %5323 = vmatprep.subr.bf16.mxu0 0
    %5324 = vmatpush2.bf16.msra.mxu0 0
    %5325 = vmatprep.subr.bf16.mxu0 0
    %5326 = vmatpush2.bf16.msra.mxu0 0
    %5327 = vmatprep.subr.bf16.mxu0 0
    %5328 = vmatpush2.bf16.msra.mxu0 0
    %5329 = vmatprep.mubr.bf16.mxu0 0
    %5330 = vmatmul.mubr.bf16.gmra.mxu0 %v4719
    %v5331 = vpop.f32.mrf.mxu0
    %v5332 = vadd.f32 0.0, %v5331
    %v5333 = vpop.f32.mrf.mxu0
    %v5334 = vpop.f32.mrf.mxu0
    %v5335 = vadd.f32 0.0, %v5334
    %v5336 = vpop.f32.mrf.mxu0
    %5337 = vdwg.mxu0
    %v5338 = vld [vmem:[#allocation2 + $0x3e8] sm:$0xf]
    %v5339 = vld [vmem:[#allocation2 + $0x3ec] sm:$0xf]
    %v5340 = vld [vmem:[#allocation2 + $0x3f0] sm:$0xf]
    %v5341 = vld [vmem:[#allocation2 + $0x3f4] sm:$0xf]
    %v5346 = vunpack.c.l.b16 %v5338
    %v5347 = vunpack.c.l.b16 %v5339
    %v5348 = vunpack.c.l.b16 %v5340
    %v5349 = vunpack.c.l.b16 %v5341
    %v5350 = vpack.c.b16 %v5347, %v5346
    %v5351 = vpack.c.b16 %v5349, %v5348
    %5354 = vmatprep.subr.bf16.mxu0 0
    %5355 = vmatpush1.bf16.msra.mxu0 0
    %5356 = vmatprep.subr.bf16.mxu0 0
    %5357 = vmatpush1.bf16.msra.mxu0 0
    %5358 = vmatprep.subr.bf16.mxu0 0
    %5359 = vmatpush1.bf16.msra.mxu0 0
    %5360 = vmatprep.subr.bf16.mxu0 0
    %5361 = vmatpush1.bf16.msra.mxu0 0
    %5362 = vmatprep.subr.bf16.mxu0 0
    %5363 = vmatpush1.bf16.msra.mxu0 0
    %5364 = vmatprep.subr.bf16.mxu0 0
    %5365 = vmatpush1.bf16.msra.mxu0 0
    %5366 = vmatprep.subr.bf16.mxu0 0
    %5367 = vmatpush1.bf16.msra.mxu0 %v5351
    %5368 = vmatprep.subr.bf16.mxu0 0
    %5369 = vmatpush1.bf16.msra.mxu0 %v5350
    %5370 = vmatprep.subr.bf16.mxu0 0
    %5371 = vmatpush2.bf16.msra.mxu0 0
    %5372 = vmatprep.subr.bf16.mxu0 0
    %5373 = vmatpush2.bf16.msra.mxu0 0
    %5374 = vmatprep.subr.bf16.mxu0 0
    %5375 = vmatpush2.bf16.msra.mxu0 0
    %5376 = vmatprep.subr.bf16.mxu0 0
    %5377 = vmatpush2.bf16.msra.mxu0 0
    %5378 = vmatprep.subr.bf16.mxu0 0
    %5379 = vmatpush2.bf16.msra.mxu0 0
    %5380 = vmatprep.subr.bf16.mxu0 0
    %5381 = vmatpush2.bf16.msra.mxu0 0
    %5382 = vmatprep.subr.bf16.mxu0 0
    %5383 = vmatpush2.bf16.msra.mxu0 0
    %5384 = vmatprep.subr.bf16.mxu0 0
    %5385 = vmatpush2.bf16.msra.mxu0 0
    %5386 = vmatprep.mubr.bf16.mxu0 0
    %5387 = vmatmul.mubr.bf16.gmra.mxu0 %v4719
    %v5388 = vpop.f32.mrf.mxu0
    %v5389 = vadd.f32 0.0, %v5388
    %v5390 = vpop.f32.mrf.mxu0
    %v5391 = vpop.f32.mrf.mxu0
    %v5392 = vadd.f32 0.0, %v5391
    %v5393 = vpop.f32.mrf.mxu0
    %5394 = vdwg.mxu0
    %v5395 = vpack.c.bf16 %v5278, %v5275
    %v5396 = vpack.c.bf16 %v5335, %v5332
    %v5398 = vsel %vm191, %v5395, 0
    %v5401 = vsel %vm191, %v5396, 0
    %5403 = vmatprep.subr.bf16.mxu0 0
    %5404 = vmatpush1.bf16.xpose.msra.mxu0 0
    %5405 = vmatprep.subr.bf16.mxu0 0
    %5406 = vmatpush1.bf16.xpose.msra.mxu0 0
    %5407 = vmatprep.subr.bf16.mxu0 0
    %5408 = vmatpush1.bf16.xpose.msra.mxu0 0
    %5409 = vmatprep.subr.bf16.mxu0 0
    %5410 = vmatpush1.bf16.xpose.msra.mxu0 0
    %5411 = vmatprep.subr.bf16.mxu0 0
    %5412 = vmatpush1.bf16.xpose.msra.mxu0 0
    %5413 = vmatprep.subr.bf16.mxu0 0
    %5414 = vmatpush1.bf16.xpose.msra.mxu0 0
    %5415 = vmatprep.subr.bf16.mxu0 0
    %5416 = vmatpush1.bf16.xpose.msra.mxu0 0
    %5417 = vmatprep.subr.bf16.mxu0 0
    %5418 = vmatpush1.bf16.xpose.msra.mxu0 %v5401
    %5419 = vmatprep.subr.bf16.mxu0 0
    %5420 = vmatpush2.bf16.xpose.msra.mxu0 0
    %5421 = vmatprep.subr.bf16.mxu0 0
    %5422 = vmatpush2.bf16.xpose.msra.mxu0 0
    %5423 = vmatprep.subr.bf16.mxu0 0
    %5424 = vmatpush2.bf16.xpose.msra.mxu0 0
    %5425 = vmatprep.subr.bf16.mxu0 0
    %5426 = vmatpush2.bf16.xpose.msra.mxu0 0
    %5427 = vmatprep.subr.bf16.mxu0 0
    %5428 = vmatpush2.bf16.xpose.msra.mxu0 0
    %5429 = vmatprep.subr.bf16.mxu0 0
    %5430 = vmatpush2.bf16.xpose.msra.mxu0 0
    %5431 = vmatprep.subr.bf16.mxu0 0
    %5432 = vmatpush2.bf16.xpose.msra.mxu0 0
    %5433 = vmatprep.subr.bf16.mxu0 0
    %5434 = vmatpush2.bf16.xpose.msra.mxu0 0
    %5435 = vmatprep.mubr.bf16.mxu0 0
    %5436 = vmatmul.mubr.bf16.gmra.mxu0 %v5398
    %v5437 = vpop.f32.mrf.mxu0
    %v5438 = vadd.f32 %v248, %v5437
    %v5439 = vpop.f32.mrf.mxu0
    %v5440 = vpop.f32.mrf.mxu0
    %v5441 = vadd.f32 %v249, %v5440
    %v5442 = vpop.f32.mrf.mxu0
    %5443 = vdwg.mxu0
    %v5444 = vsel %vm78, %v5438, -inf
    %5445 = vmax.xlane.f32.xlu0 %v5444
    %v5446 = vpop.xlane.xlu0 %5445
    %v5447 = vsel %vm78, %v5441, -inf
    %5448 = vmax.xlane.f32.xlu0 %v5447
    %v5449 = vpop.xlane.xlu0 %5448
    %v5450 = vsub.f32 %v5438, %v5446
    %v5451 = vsub.f32 %v5441, %v5449
    %v5452 = vmul.f32 %v5450, 1.442695
    %v5453 = vpow.pop %v5452
    %v5454 = vmul.f32 %v5451, 1.442695
    %v5455 = vpow.pop %v5454
    %v5456 = vsel %vm78, %v5453, 0.0
    %5457 = vadd.xlane.f32.xlu0 %v5456
    %v5458 = vpop.xlane.xlu0 %5457
    %v5459 = vsel %vm78, %v5455, 0.0
    %5460 = vadd.xlane.f32.xlu0 %v5459
    %v5461 = vpop.xlane.xlu0 %5460
    %v5462 = vrcp.pop %v5458
    %v5463 = vrcp.pop %v5461
    %v5464 = vmul.f32 %v5453, %v5462
    %v5465 = vmul.f32 %v5455, %v5463
    %v5466 = vpack.c.bf16 %v5465, %v5464
    %v5467 = vpack.c.bf16 %v5392, %v5389
    %v5469 = vsel %vm78, %v5466, 0
    %5471 = vmatprep.subr.bf16.mxu0 0
    %5472 = vmatpush1.bf16.msra.mxu0 0
    %5473 = vmatprep.subr.bf16.mxu0 0
    %5474 = vmatpush1.bf16.msra.mxu0 0
    %5475 = vmatprep.subr.bf16.mxu0 0
    %5476 = vmatpush1.bf16.msra.mxu0 0
    %5477 = vmatprep.subr.bf16.mxu0 0
    %5478 = vmatpush1.bf16.msra.mxu0 0
    %5479 = vmatprep.subr.bf16.mxu0 0
    %5480 = vmatpush1.bf16.msra.mxu0 0
    %5481 = vmatprep.subr.bf16.mxu0 0
    %5482 = vmatpush1.bf16.msra.mxu0 0
    %5483 = vmatprep.subr.bf16.mxu0 0
    %5484 = vmatpush1.bf16.msra.mxu0 0
    %5485 = vmatprep.subr.bf16.mxu0 0
    %5486 = vmatpush1.bf16.msra.mxu0 %v5467
    %5487 = vmatprep.subr.bf16.mxu0 0
    %5488 = vmatpush2.bf16.msra.mxu0 0
    %5489 = vmatprep.subr.bf16.mxu0 0
    %5490 = vmatpush2.bf16.msra.mxu0 0
    %5491 = vmatprep.subr.bf16.mxu0 0
    %5492 = vmatpush2.bf16.msra.mxu0 0
    %5493 = vmatprep.subr.bf16.mxu0 0
    %5494 = vmatpush2.bf16.msra.mxu0 0
    %5495 = vmatprep.subr.bf16.mxu0 0
    %5496 = vmatpush2.bf16.msra.mxu0 0
    %5497 = vmatprep.subr.bf16.mxu0 0
    %5498 = vmatpush2.bf16.msra.mxu0 0
    %5499 = vmatprep.subr.bf16.mxu0 0
    %5500 = vmatpush2.bf16.msra.mxu0 0
    %5501 = vmatprep.subr.bf16.mxu0 0
    %5502 = vmatpush2.bf16.msra.mxu0 0
    %5503 = vmatprep.mubr.bf16.mxu0 0
    %5504 = vmatmul.mubr.bf16.gmra.mxu0 %v5469
    %v5505 = vpop.f32.mrf.mxu0
    %v5506 = vadd.f32 0.0, %v5505
    %v5507 = vpop.f32.mrf.mxu0
    %v5508 = vpop.f32.mrf.mxu0
    %v5509 = vadd.f32 0.0, %v5508
    %v5510 = vpop.f32.mrf.mxu0
    %5511 = vdwg.mxu0
    %v5512 = vadd.f32 %v5218, %v5506
    %v5513 = vadd.f32 %v5221, %v5509
    %v5514 = vld [vmem:[#allocation2 + $0x3f8] sm:$0xf]
    %v5515 = vld [vmem:[#allocation2 + $0x3fc] sm:$0xf]
    %v5516 = vld [vmem:[#allocation2 + $0x400] sm:$0xf]
    %v5517 = vld [vmem:[#allocation2 + $0x404] sm:$0xf]
    %v5522 = vunpack.c.l.b16 %v5514
    %v5523 = vunpack.c.l.b16 %v5515
    %v5524 = vunpack.c.l.b16 %v5516
    %v5525 = vunpack.c.l.b16 %v5517
    %v5526 = vpack.c.b16 %v5523, %v5522
    %v5527 = vpack.c.b16 %v5525, %v5524
    %5530 = vmatprep.subr.bf16.mxu0 0
    %5531 = vmatpush1.bf16.msra.mxu0 0
    %5532 = vmatprep.subr.bf16.mxu0 0
    %5533 = vmatpush1.bf16.msra.mxu0 0
    %5534 = vmatprep.subr.bf16.mxu0 0
    %5535 = vmatpush1.bf16.msra.mxu0 0
    %5536 = vmatprep.subr.bf16.mxu0 0
    %5537 = vmatpush1.bf16.msra.mxu0 0
    %5538 = vmatprep.subr.bf16.mxu0 0
    %5539 = vmatpush1.bf16.msra.mxu0 0
    %5540 = vmatprep.subr.bf16.mxu0 0
    %5541 = vmatpush1.bf16.msra.mxu0 0
    %5542 = vmatprep.subr.bf16.mxu0 0
    %5543 = vmatpush1.bf16.msra.mxu0 %v5527
    %5544 = vmatprep.subr.bf16.mxu0 0
    %5545 = vmatpush1.bf16.msra.mxu0 %v5526
    %5546 = vmatprep.subr.bf16.mxu0 0
    %5547 = vmatpush2.bf16.msra.mxu0 0
    %5548 = vmatprep.subr.bf16.mxu0 0
    %5549 = vmatpush2.bf16.msra.mxu0 0
    %5550 = vmatprep.subr.bf16.mxu0 0
    %5551 = vmatpush2.bf16.msra.mxu0 0
    %5552 = vmatprep.subr.bf16.mxu0 0
    %5553 = vmatpush2.bf16.msra.mxu0 0
    %5554 = vmatprep.subr.bf16.mxu0 0
    %5555 = vmatpush2.bf16.msra.mxu0 0
    %5556 = vmatprep.subr.bf16.mxu0 0
    %5557 = vmatpush2.bf16.msra.mxu0 0
    %5558 = vmatprep.subr.bf16.mxu0 0
    %5559 = vmatpush2.bf16.msra.mxu0 0
    %5560 = vmatprep.subr.bf16.mxu0 0
    %5561 = vmatpush2.bf16.msra.mxu0 0
    %5562 = vmatprep.mubr.bf16.mxu0 0
    %5563 = vmatmul.mubr.bf16.gmra.mxu0 %v4659
    %v5564 = vpop.f32.mrf.mxu0
    %v5565 = vadd.f32 0.0, %v5564
    %v5566 = vpop.f32.mrf.mxu0
    %v5567 = vpop.f32.mrf.mxu0
    %v5568 = vadd.f32 0.0, %v5567
    %v5569 = vpop.f32.mrf.mxu0
    %5570 = vdwg.mxu0
    %v5571 = vld [vmem:[#allocation2 + $0x408] sm:$0xf]
    %v5572 = vld [vmem:[#allocation2 + $0x40c] sm:$0xf]
    %v5573 = vld [vmem:[#allocation2 + $0x410] sm:$0xf]
    %v5574 = vld [vmem:[#allocation2 + $0x414] sm:$0xf]
    %v5579 = vunpack.c.l.b16 %v5571
    %v5580 = vunpack.c.l.b16 %v5572
    %v5581 = vunpack.c.l.b16 %v5573
    %v5582 = vunpack.c.l.b16 %v5574
    %v5583 = vpack.c.b16 %v5580, %v5579
    %v5584 = vpack.c.b16 %v5582, %v5581
    %5587 = vmatprep.subr.bf16.mxu0 0
    %5588 = vmatpush1.bf16.msra.mxu0 0
    %5589 = vmatprep.subr.bf16.mxu0 0
    %5590 = vmatpush1.bf16.msra.mxu0 0
    %5591 = vmatprep.subr.bf16.mxu0 0
    %5592 = vmatpush1.bf16.msra.mxu0 0
    %5593 = vmatprep.subr.bf16.mxu0 0
    %5594 = vmatpush1.bf16.msra.mxu0 0
    %5595 = vmatprep.subr.bf16.mxu0 0
    %5596 = vmatpush1.bf16.msra.mxu0 0
    %5597 = vmatprep.subr.bf16.mxu0 0
    %5598 = vmatpush1.bf16.msra.mxu0 0
    %5599 = vmatprep.subr.bf16.mxu0 0
    %5600 = vmatpush1.bf16.msra.mxu0 %v5584
    %5601 = vmatprep.subr.bf16.mxu0 0
    %5602 = vmatpush1.bf16.msra.mxu0 %v5583
    %5603 = vmatprep.subr.bf16.mxu0 0
    %5604 = vmatpush2.bf16.msra.mxu0 0
    %5605 = vmatprep.subr.bf16.mxu0 0
    %5606 = vmatpush2.bf16.msra.mxu0 0
    %5607 = vmatprep.subr.bf16.mxu0 0
    %5608 = vmatpush2.bf16.msra.mxu0 0
    %5609 = vmatprep.subr.bf16.mxu0 0
    %5610 = vmatpush2.bf16.msra.mxu0 0
    %5611 = vmatprep.subr.bf16.mxu0 0
    %5612 = vmatpush2.bf16.msra.mxu0 0
    %5613 = vmatprep.subr.bf16.mxu0 0
    %5614 = vmatpush2.bf16.msra.mxu0 0
    %5615 = vmatprep.subr.bf16.mxu0 0
    %5616 = vmatpush2.bf16.msra.mxu0 0
    %5617 = vmatprep.subr.bf16.mxu0 0
    %5618 = vmatpush2.bf16.msra.mxu0 0
    %5619 = vmatprep.mubr.bf16.mxu0 0
    %5620 = vmatmul.mubr.bf16.gmra.mxu0 %v4719
    %v5621 = vpop.f32.mrf.mxu0
    %v5622 = vadd.f32 0.0, %v5621
    %v5623 = vpop.f32.mrf.mxu0
    %v5624 = vpop.f32.mrf.mxu0
    %v5625 = vadd.f32 0.0, %v5624
    %v5626 = vpop.f32.mrf.mxu0
    %5627 = vdwg.mxu0
    %v5628 = vld [vmem:[#allocation2 + $0x418] sm:$0xf]
    %v5629 = vld [vmem:[#allocation2 + $0x41c] sm:$0xf]
    %v5630 = vld [vmem:[#allocation2 + $0x420] sm:$0xf]
    %v5631 = vld [vmem:[#allocation2 + $0x424] sm:$0xf]
    %v5636 = vunpack.c.l.b16 %v5628
    %v5637 = vunpack.c.l.b16 %v5629
    %v5638 = vunpack.c.l.b16 %v5630
    %v5639 = vunpack.c.l.b16 %v5631
    %v5640 = vpack.c.b16 %v5637, %v5636
    %v5641 = vpack.c.b16 %v5639, %v5638
    %5644 = vmatprep.subr.bf16.mxu0 0
    %5645 = vmatpush1.bf16.msra.mxu0 0
    %5646 = vmatprep.subr.bf16.mxu0 0
    %5647 = vmatpush1.bf16.msra.mxu0 0
    %5648 = vmatprep.subr.bf16.mxu0 0
    %5649 = vmatpush1.bf16.msra.mxu0 0
    %5650 = vmatprep.subr.bf16.mxu0 0
    %5651 = vmatpush1.bf16.msra.mxu0 0
    %5652 = vmatprep.subr.bf16.mxu0 0
    %5653 = vmatpush1.bf16.msra.mxu0 0
    %5654 = vmatprep.subr.bf16.mxu0 0
    %5655 = vmatpush1.bf16.msra.mxu0 0
    %5656 = vmatprep.subr.bf16.mxu0 0
    %5657 = vmatpush1.bf16.msra.mxu0 %v5641
    %5658 = vmatprep.subr.bf16.mxu0 0
    %5659 = vmatpush1.bf16.msra.mxu0 %v5640
    %5660 = vmatprep.subr.bf16.mxu0 0
    %5661 = vmatpush2.bf16.msra.mxu0 0
    %5662 = vmatprep.subr.bf16.mxu0 0
    %5663 = vmatpush2.bf16.msra.mxu0 0
    %5664 = vmatprep.subr.bf16.mxu0 0
    %5665 = vmatpush2.bf16.msra.mxu0 0
    %5666 = vmatprep.subr.bf16.mxu0 0
    %5667 = vmatpush2.bf16.msra.mxu0 0
    %5668 = vmatprep.subr.bf16.mxu0 0
    %5669 = vmatpush2.bf16.msra.mxu0 0
    %5670 = vmatprep.subr.bf16.mxu0 0
    %5671 = vmatpush2.bf16.msra.mxu0 0
    %5672 = vmatprep.subr.bf16.mxu0 0
    %5673 = vmatpush2.bf16.msra.mxu0 0
    %5674 = vmatprep.subr.bf16.mxu0 0
    %5675 = vmatpush2.bf16.msra.mxu0 0
    %5676 = vmatprep.mubr.bf16.mxu0 0
    %5677 = vmatmul.mubr.bf16.gmra.mxu0 %v4719
    %v5678 = vpop.f32.mrf.mxu0
    %v5679 = vadd.f32 0.0, %v5678
    %v5680 = vpop.f32.mrf.mxu0
    %v5681 = vpop.f32.mrf.mxu0
    %v5682 = vadd.f32 0.0, %v5681
    %v5683 = vpop.f32.mrf.mxu0
    %5684 = vdwg.mxu0
    %v5685 = vpack.c.bf16 %v5568, %v5565
    %v5686 = vpack.c.bf16 %v5625, %v5622
    %v5688 = vsel %vm191, %v5685, 0
    %v5691 = vsel %vm191, %v5686, 0
    %5693 = vmatprep.subr.bf16.mxu0 0
    %5694 = vmatpush1.bf16.xpose.msra.mxu0 0
    %5695 = vmatprep.subr.bf16.mxu0 0
    %5696 = vmatpush1.bf16.xpose.msra.mxu0 0
    %5697 = vmatprep.subr.bf16.mxu0 0
    %5698 = vmatpush1.bf16.xpose.msra.mxu0 0
    %5699 = vmatprep.subr.bf16.mxu0 0
    %5700 = vmatpush1.bf16.xpose.msra.mxu0 0
    %5701 = vmatprep.subr.bf16.mxu0 0
    %5702 = vmatpush1.bf16.xpose.msra.mxu0 0
    %5703 = vmatprep.subr.bf16.mxu0 0
    %5704 = vmatpush1.bf16.xpose.msra.mxu0 0
    %5705 = vmatprep.subr.bf16.mxu0 0
    %5706 = vmatpush1.bf16.xpose.msra.mxu0 0
    %5707 = vmatprep.subr.bf16.mxu0 0
    %5708 = vmatpush1.bf16.xpose.msra.mxu0 %v5691
    %5709 = vmatprep.subr.bf16.mxu0 0
    %5710 = vmatpush2.bf16.xpose.msra.mxu0 0
    %5711 = vmatprep.subr.bf16.mxu0 0
    %5712 = vmatpush2.bf16.xpose.msra.mxu0 0
    %5713 = vmatprep.subr.bf16.mxu0 0
    %5714 = vmatpush2.bf16.xpose.msra.mxu0 0
    %5715 = vmatprep.subr.bf16.mxu0 0
    %5716 = vmatpush2.bf16.xpose.msra.mxu0 0
    %5717 = vmatprep.subr.bf16.mxu0 0
    %5718 = vmatpush2.bf16.xpose.msra.mxu0 0
    %5719 = vmatprep.subr.bf16.mxu0 0
    %5720 = vmatpush2.bf16.xpose.msra.mxu0 0
    %5721 = vmatprep.subr.bf16.mxu0 0
    %5722 = vmatpush2.bf16.xpose.msra.mxu0 0
    %5723 = vmatprep.subr.bf16.mxu0 0
    %5724 = vmatpush2.bf16.xpose.msra.mxu0 0
    %5725 = vmatprep.mubr.bf16.mxu0 0
    %5726 = vmatmul.mubr.bf16.gmra.mxu0 %v5688
    %v5727 = vpop.f32.mrf.mxu0
    %v5728 = vadd.f32 %v248, %v5727
    %v5729 = vpop.f32.mrf.mxu0
    %v5730 = vpop.f32.mrf.mxu0
    %v5731 = vadd.f32 %v249, %v5730
    %v5732 = vpop.f32.mrf.mxu0
    %5733 = vdwg.mxu0
    %v5734 = vsel %vm78, %v5728, -inf
    %5735 = vmax.xlane.f32.xlu0 %v5734
    %v5736 = vpop.xlane.xlu0 %5735
    %v5737 = vsel %vm78, %v5731, -inf
    %5738 = vmax.xlane.f32.xlu0 %v5737
    %v5739 = vpop.xlane.xlu0 %5738
    %v5740 = vsub.f32 %v5728, %v5736
    %v5741 = vsub.f32 %v5731, %v5739
    %v5742 = vmul.f32 %v5740, 1.442695
    %v5743 = vpow.pop %v5742
    %v5744 = vmul.f32 %v5741, 1.442695
    %v5745 = vpow.pop %v5744
    %v5746 = vsel %vm78, %v5743, 0.0
    %5747 = vadd.xlane.f32.xlu0 %v5746
    %v5748 = vpop.xlane.xlu0 %5747
    %v5749 = vsel %vm78, %v5745, 0.0
    %5750 = vadd.xlane.f32.xlu0 %v5749
    %v5751 = vpop.xlane.xlu0 %5750
    %v5752 = vrcp.pop %v5748
    %v5753 = vrcp.pop %v5751
    %v5754 = vmul.f32 %v5743, %v5752
    %v5755 = vmul.f32 %v5745, %v5753
    %v5756 = vpack.c.bf16 %v5755, %v5754
    %v5757 = vpack.c.bf16 %v5682, %v5679
    %v5759 = vsel %vm78, %v5756, 0
    %5761 = vmatprep.subr.bf16.mxu0 0
    %5762 = vmatpush1.bf16.msra.mxu0 0
    %5763 = vmatprep.subr.bf16.mxu0 0
    %5764 = vmatpush1.bf16.msra.mxu0 0
    %5765 = vmatprep.subr.bf16.mxu0 0
    %5766 = vmatpush1.bf16.msra.mxu0 0
    %5767 = vmatprep.subr.bf16.mxu0 0
    %5768 = vmatpush1.bf16.msra.mxu0 0
    %5769 = vmatprep.subr.bf16.mxu0 0
    %5770 = vmatpush1.bf16.msra.mxu0 0
    %5771 = vmatprep.subr.bf16.mxu0 0
    %5772 = vmatpush1.bf16.msra.mxu0 0
    %5773 = vmatprep.subr.bf16.mxu0 0
    %5774 = vmatpush1.bf16.msra.mxu0 0
    %5775 = vmatprep.subr.bf16.mxu0 0
    %5776 = vmatpush1.bf16.msra.mxu0 %v5757
    %5777 = vmatprep.subr.bf16.mxu0 0
    %5778 = vmatpush2.bf16.msra.mxu0 0
    %5779 = vmatprep.subr.bf16.mxu0 0
    %5780 = vmatpush2.bf16.msra.mxu0 0
    %5781 = vmatprep.subr.bf16.mxu0 0
    %5782 = vmatpush2.bf16.msra.mxu0 0
    %5783 = vmatprep.subr.bf16.mxu0 0
    %5784 = vmatpush2.bf16.msra.mxu0 0
    %5785 = vmatprep.subr.bf16.mxu0 0
    %5786 = vmatpush2.bf16.msra.mxu0 0
    %5787 = vmatprep.subr.bf16.mxu0 0
    %5788 = vmatpush2.bf16.msra.mxu0 0
    %5789 = vmatprep.subr.bf16.mxu0 0
    %5790 = vmatpush2.bf16.msra.mxu0 0
    %5791 = vmatprep.subr.bf16.mxu0 0
    %5792 = vmatpush2.bf16.msra.mxu0 0
    %5793 = vmatprep.mubr.bf16.mxu0 0
    %5794 = vmatmul.mubr.bf16.gmra.mxu0 %v5759
    %v5795 = vpop.f32.mrf.mxu0
    %v5796 = vadd.f32 0.0, %v5795
    %v5797 = vpop.f32.mrf.mxu0
    %v5798 = vpop.f32.mrf.mxu0
    %v5799 = vadd.f32 0.0, %v5798
    %v5800 = vpop.f32.mrf.mxu0
    %5801 = vdwg.mxu0
    %v5802 = vadd.f32 %v5512, %v5796
    %v5803 = vadd.f32 %v5513, %v5799
    %v5804 = vpack.c.bf16 %v5803, %v5802
    %v5805 = vld [vmem:[#allocation2 + $0x428] sm:$0xf]
    %v5806 = vld [vmem:[#allocation2 + $0x42c] sm:$0xf]
    %v5807 = vld [vmem:[#allocation2 + $0x430] sm:$0xf]
    %v5808 = vld [vmem:[#allocation2 + $0x434] sm:$0xf]
    %v5809 = vld [vmem:[#allocation5 + $0xd8] sm:$0x1]
    %v5810 = vlaneseq
    %v5811 = vshrl.u32 %v5810, 7
    %v5812 = vsub.s32 0, %v5811
    %v5813 = vrot.slane %v5809, %v5812
    %v5818 = vunpack.c.l.b16 %v5805
    %v5819 = vunpack.c.l.b16 %v5806
    %v5820 = vunpack.c.l.b16 %v5807
    %v5821 = vunpack.c.l.b16 %v5808
    %v5822 = vpack.c.b16 %v5819, %v5818
    %v5823 = vpack.c.b16 %v5821, %v5820
    %v5827 = vsel %vm262, %v5804, 0
    %5829 = vmatprep.subr.bf16.mxu0 0
    %5830 = vmatpush1.bf16.msra.mxu0 0
    %5831 = vmatprep.subr.bf16.mxu0 0
    %5832 = vmatpush1.bf16.msra.mxu0 0
    %5833 = vmatprep.subr.bf16.mxu0 0
    %5834 = vmatpush1.bf16.msra.mxu0 0
    %5835 = vmatprep.subr.bf16.mxu0 0
    %5836 = vmatpush1.bf16.msra.mxu0 0
    %5837 = vmatprep.subr.bf16.mxu0 0
    %5838 = vmatpush1.bf16.msra.mxu0 0
    %5839 = vmatprep.subr.bf16.mxu0 0
    %5840 = vmatpush1.bf16.msra.mxu0 0
    %5841 = vmatprep.subr.bf16.mxu0 0
    %5842 = vmatpush1.bf16.msra.mxu0 %v5823
    %5843 = vmatprep.subr.bf16.mxu0 0
    %5844 = vmatpush1.bf16.msra.mxu0 %v5822
    %5845 = vmatprep.subr.bf16.mxu0 0
    %5846 = vmatpush2.bf16.msra.mxu0 0
    %5847 = vmatprep.subr.bf16.mxu0 0
    %5848 = vmatpush2.bf16.msra.mxu0 0
    %5849 = vmatprep.subr.bf16.mxu0 0
    %5850 = vmatpush2.bf16.msra.mxu0 0
    %5851 = vmatprep.subr.bf16.mxu0 0
    %5852 = vmatpush2.bf16.msra.mxu0 0
    %5853 = vmatprep.subr.bf16.mxu0 0
    %5854 = vmatpush2.bf16.msra.mxu0 0
    %5855 = vmatprep.subr.bf16.mxu0 0
    %5856 = vmatpush2.bf16.msra.mxu0 0
    %5857 = vmatprep.subr.bf16.mxu0 0
    %5858 = vmatpush2.bf16.msra.mxu0 0
    %5859 = vmatprep.subr.bf16.mxu0 0
    %5860 = vmatpush2.bf16.msra.mxu0 0
    %5861 = vmatprep.mubr.bf16.mxu0 0
    %5862 = vmatmul.mubr.bf16.gmra.mxu0 %v5827
    %v5863 = vpop.f32.mrf.mxu0
    %v5864 = vadd.f32 %v5813, %v5863
    %v5865 = vpop.f32.mrf.mxu0
    %v5866 = vpop.f32.mrf.mxu0
    %v5867 = vadd.f32 %v5813, %v5866
    %v5868 = vpop.f32.mrf.mxu0
    %5869 = vdwg.mxu0
    %v5870 = vadd.f32 %v4599, %v5864
    %v5871 = vadd.f32 %v4600, %v5867
    %v5872 = vpack.c.bf16 %v5871, %v5870
    %v5873 = vunpack.c.l.bf16 %v5872
    %v5874 = vunpack.c.h.bf16 %v5872
    %v5875 = vsel %vm262, %v5873, 0.0
    %5876 = vadd.xlane.f32.xlu0 %v5875
    %v5877 = vpop.xlane.xlu0 %5876
    %v5878 = vsel %vm262, %v5874, 0.0
    %5879 = vadd.xlane.f32.xlu0 %v5878
    %v5880 = vpop.xlane.xlu0 %5879
    %v5881 = vmul.f32 %v5877, %v269
    %v5882 = vmul.f32 %v5880, %v269
    %v5883 = vsub.f32 %v5873, %v5881
    %v5884 = vsub.f32 %v5874, %v5882
    %v5885 = vmul.f32 %v5883, %v5883
    %v5886 = vmul.f32 %v5884, %v5884
    %v5887 = vsel %vm262, %v5885, 0.0
    %5888 = vadd.xlane.f32.xlu0 %v5887
    %v5889 = vpop.xlane.xlu0 %5888
    %v5890 = vsel %vm262, %v5886, 0.0
    %5891 = vadd.xlane.f32.xlu0 %v5890
    %v5892 = vpop.xlane.xlu0 %5891
    %v5893 = vmul.f32 %v5889, %v269
    %v5894 = vmul.f32 %v5892, %v269
    %v5895 = vadd.f32 %v5893, 1e-05
    %v5896 = vadd.f32 %v5894, 1e-05
    %v5897 = vrsqrt.pop %v5895
    %v5898 = vrsqrt.pop %v5896
    %v5899 = vmul.f32 %v5883, %v5897
    %v5900 = vmul.f32 %v5884, %v5898
    %v5901 = vld [vmem:[#allocation5 + $0xe0] sm:$0x1]
    %v5902 = vlaneseq
    %v5903 = vshrl.u32 %v5902, 7
    %v5904 = vsub.s32 0, %v5903
    %v5905 = vrot.slane %v5901, %v5904
    %v5906 = vmul.f32 %v5899, %v5905
    %v5907 = vmul.f32 %v5900, %v5905
    %v5908 = vld [vmem:[#allocation5 + $0xe8] sm:$0x1]
    %v5909 = vlaneseq
    %v5910 = vshrl.u32 %v5909, 7
    %v5911 = vsub.s32 0, %v5910
    %v5912 = vrot.slane %v5908, %v5911
    %v5913 = vadd.f32 %v5906, %v5912
    %v5914 = vadd.f32 %v5907, %v5912
    %v5915 = vpack.c.bf16 %v5914, %v5913
    %v5916 = vld [vmem:[#allocation2 + $0x438] sm:$0xf]
    %v5917 = vld [vmem:[#allocation2 + $0x43c] sm:$0xf]
    %v5918 = vld [vmem:[#allocation2 + $0x440] sm:$0xf]
    %v5919 = vld [vmem:[#allocation2 + $0x444] sm:$0xf]
    %v5920 = vld [vmem:[#allocation5 + $0xf0] sm:$0x1]
    %v5921 = vlaneseq
    %v5922 = vshrl.u32 %v5921, 7
    %v5923 = vsub.s32 0, %v5922
    %v5924 = vrot.slane %v5920, %v5923
    %v5929 = vunpack.c.l.b16 %v5916
    %v5930 = vunpack.c.l.b16 %v5917
    %v5931 = vunpack.c.l.b16 %v5918
    %v5932 = vunpack.c.l.b16 %v5919
    %v5933 = vpack.c.b16 %v5930, %v5929
    %v5934 = vpack.c.b16 %v5932, %v5931
    %v5938 = vsel %vm262, %v5915, 0
    %5940 = vmatprep.subr.bf16.mxu0 0
    %5941 = vmatpush1.bf16.msra.mxu0 0
    %5942 = vmatprep.subr.bf16.mxu0 0
    %5943 = vmatpush1.bf16.msra.mxu0 0
    %5944 = vmatprep.subr.bf16.mxu0 0
    %5945 = vmatpush1.bf16.msra.mxu0 0
    %5946 = vmatprep.subr.bf16.mxu0 0
    %5947 = vmatpush1.bf16.msra.mxu0 0
    %5948 = vmatprep.subr.bf16.mxu0 0
    %5949 = vmatpush1.bf16.msra.mxu0 0
    %5950 = vmatprep.subr.bf16.mxu0 0
    %5951 = vmatpush1.bf16.msra.mxu0 0
    %5952 = vmatprep.subr.bf16.mxu0 0
    %5953 = vmatpush1.bf16.msra.mxu0 %v5934
    %5954 = vmatprep.subr.bf16.mxu0 0
    %5955 = vmatpush1.bf16.msra.mxu0 %v5933
    %5956 = vmatprep.subr.bf16.mxu0 0
    %5957 = vmatpush2.bf16.msra.mxu0 0
    %5958 = vmatprep.subr.bf16.mxu0 0
    %5959 = vmatpush2.bf16.msra.mxu0 0
    %5960 = vmatprep.subr.bf16.mxu0 0
    %5961 = vmatpush2.bf16.msra.mxu0 0
    %5962 = vmatprep.subr.bf16.mxu0 0
    %5963 = vmatpush2.bf16.msra.mxu0 0
    %5964 = vmatprep.subr.bf16.mxu0 0
    %5965 = vmatpush2.bf16.msra.mxu0 0
    %5966 = vmatprep.subr.bf16.mxu0 0
    %5967 = vmatpush2.bf16.msra.mxu0 0
    %5968 = vmatprep.subr.bf16.mxu0 0
    %5969 = vmatpush2.bf16.msra.mxu0 0
    %5970 = vmatprep.subr.bf16.mxu0 0
    %5971 = vmatpush2.bf16.msra.mxu0 0
    %5972 = vmatprep.mubr.bf16.mxu0 0
    %5973 = vmatmul.mubr.bf16.gmra.mxu0 %v5938
    %v5974 = vpop.f32.mrf.mxu0
    %v5975 = vadd.f32 %v5924, %v5974
    %v5976 = vpop.f32.mrf.mxu0
    %v5977 = vpop.f32.mrf.mxu0
    %v5978 = vadd.f32 %v5924, %v5977
    %v5979 = vpop.f32.mrf.mxu0
    %5980 = vdwg.mxu0
    %v5981 = vmul.f32 %v5975, 0.5
    %v5982 = vmul.f32 %v5978, 0.5
    %v5983 = vmul.f32 %v5975, 0.044715
    %v5984 = vmul.f32 %v5978, 0.044715
    %v5985 = vmul.f32 %v5983, %v5975
    %v5986 = vmul.f32 %v5984, %v5978
    %v5987 = vmul.f32 %v5985, %v5975
    %v5988 = vmul.f32 %v5986, %v5978
    %v5989 = vadd.f32 %v5975, %v5987
    %v5990 = vadd.f32 %v5978, %v5988
    %v5991 = vmul.f32 %v5989, 0.7978846
    %v5992 = vmul.f32 %v5990, 0.7978846
    %v5993 = vtanh.pop %v5991
    %v5994 = vtanh.pop %v5992
    %v5995 = vadd.f32 %v5993, 1.0
    %v5996 = vadd.f32 %v5994, 1.0
    %v5997 = vmul.f32 %v5981, %v5995
    %v5998 = vmul.f32 %v5982, %v5996
    %v5999 = vpack.c.bf16 %v5998, %v5997
    %v6000 = vld [vmem:[#allocation2 + $0x448] sm:$0xf]
    %v6001 = vld [vmem:[#allocation2 + $0x44c] sm:$0xf]
    %v6002 = vld [vmem:[#allocation2 + $0x450] sm:$0xf]
    %v6003 = vld [vmem:[#allocation2 + $0x454] sm:$0xf]
    %v6004 = vld [vmem:[#allocation2 + $0x458] sm:$0xf]
    %v6005 = vld [vmem:[#allocation2 + $0x45c] sm:$0xf]
    %v6006 = vld [vmem:[#allocation2 + $0x460] sm:$0xf]
    %v6007 = vld [vmem:[#allocation2 + $0x464] sm:$0xf]
    %v6008 = vld [vmem:[#allocation2 + $0x468] sm:$0xf]
    %v6009 = vld [vmem:[#allocation2 + $0x46c] sm:$0xf]
    %v6010 = vld [vmem:[#allocation2 + $0x470] sm:$0xf]
    %v6011 = vld [vmem:[#allocation2 + $0x474] sm:$0xf]
    %v6012 = vld [vmem:[#allocation2 + $0x478] sm:$0xf]
    %v6013 = vld [vmem:[#allocation2 + $0x47c] sm:$0xf]
    %v6014 = vld [vmem:[#allocation2 + $0x480] sm:$0xf]
    %v6015 = vld [vmem:[#allocation2 + $0x484] sm:$0xf]
    %v6016 = vld [vmem:[#allocation5 + $0xf8] sm:$0x1]
    %v6017 = vlaneseq
    %v6018 = vshrl.u32 %v6017, 7
    %v6019 = vsub.s32 0, %v6018
    %v6020 = vrot.slane %v6016, %v6019
    %v6037 = vunpack.c.l.b16 %v6000
    %v6038 = vunpack.c.l.b16 %v6001
    %v6039 = vunpack.c.l.b16 %v6002
    %v6040 = vunpack.c.l.b16 %v6003
    %v6041 = vunpack.c.l.b16 %v6004
    %v6042 = vunpack.c.l.b16 %v6005
    %v6043 = vunpack.c.l.b16 %v6006
    %v6044 = vunpack.c.l.b16 %v6007
    %v6045 = vunpack.c.l.b16 %v6008
    %v6046 = vunpack.c.l.b16 %v6009
    %v6047 = vunpack.c.l.b16 %v6010
    %v6048 = vunpack.c.l.b16 %v6011
    %v6049 = vunpack.c.l.b16 %v6012
    %v6050 = vunpack.c.l.b16 %v6013
    %v6051 = vunpack.c.l.b16 %v6014
    %v6052 = vunpack.c.l.b16 %v6015
    %v6053 = vpack.c.b16 %v6038, %v6037
    %v6054 = vpack.c.b16 %v6040, %v6039
    %v6055 = vpack.c.b16 %v6042, %v6041
    %v6056 = vpack.c.b16 %v6044, %v6043
    %v6057 = vpack.c.b16 %v6046, %v6045
    %v6058 = vpack.c.b16 %v6048, %v6047
    %v6059 = vpack.c.b16 %v6050, %v6049
    %v6060 = vpack.c.b16 %v6052, %v6051
    %6069 = vmatprep.subr.bf16.mxu0 0
    %6070 = vmatpush1.bf16.msra.mxu0 %v6060
    %6071 = vmatprep.subr.bf16.mxu0 0
    %6072 = vmatpush1.bf16.msra.mxu0 %v6059
    %6073 = vmatprep.subr.bf16.mxu0 0
    %6074 = vmatpush1.bf16.msra.mxu0 %v6058
    %6075 = vmatprep.subr.bf16.mxu0 0
    %6076 = vmatpush1.bf16.msra.mxu0 %v6057
    %6077 = vmatprep.subr.bf16.mxu0 0
    %6078 = vmatpush1.bf16.msra.mxu0 %v6056
    %6079 = vmatprep.subr.bf16.mxu0 0
    %6080 = vmatpush1.bf16.msra.mxu0 %v6055
    %6081 = vmatprep.subr.bf16.mxu0 0
    %6082 = vmatpush1.bf16.msra.mxu0 %v6054
    %6083 = vmatprep.subr.bf16.mxu0 0
    %6084 = vmatpush1.bf16.msra.mxu0 %v6053
    %6085 = vmatprep.subr.bf16.mxu0 0
    %6086 = vmatpush2.bf16.msra.mxu0 0
    %6087 = vmatprep.subr.bf16.mxu0 0
    %6088 = vmatpush2.bf16.msra.mxu0 0
    %6089 = vmatprep.subr.bf16.mxu0 0
    %6090 = vmatpush2.bf16.msra.mxu0 0
    %6091 = vmatprep.subr.bf16.mxu0 0
    %6092 = vmatpush2.bf16.msra.mxu0 0
    %6093 = vmatprep.subr.bf16.mxu0 0
    %6094 = vmatpush2.bf16.msra.mxu0 0
    %6095 = vmatprep.subr.bf16.mxu0 0
    %6096 = vmatpush2.bf16.msra.mxu0 0
    %6097 = vmatprep.subr.bf16.mxu0 0
    %6098 = vmatpush2.bf16.msra.mxu0 0
    %6099 = vmatprep.subr.bf16.mxu0 0
    %6100 = vmatpush2.bf16.msra.mxu0 0
    %6101 = vmatprep.mubr.bf16.mxu0 0
    %6102 = vmatmul.mubr.bf16.gmra.mxu0 %v5999
    %v6103 = vpop.f32.mrf.mxu0
    %v6104 = vadd.f32 %v6020, %v6103
    %v6105 = vpop.f32.mrf.mxu0
    %v6106 = vpop.f32.mrf.mxu0
    %v6107 = vadd.f32 %v6020, %v6106
    %v6108 = vpop.f32.mrf.mxu0
    %6109 = vdwg.mxu0
    %v6110 = vadd.f32 %v5873, %v6104
    %v6111 = vadd.f32 %v5874, %v6107
    %v6112 = vpack.c.bf16 %v6111, %v6110
    %v6113 = vunpack.c.l.bf16 %v6112
    %v6114 = vunpack.c.h.bf16 %v6112
    %v6115 = vsel %vm262, %v6113, 0.0
    %6116 = vadd.xlane.f32.xlu0 %v6115
    %v6117 = vpop.xlane.xlu0 %6116
    %v6118 = vsel %vm262, %v6114, 0.0
    %6119 = vadd.xlane.f32.xlu0 %v6118
    %v6120 = vpop.xlane.xlu0 %6119
    %v6121 = vmul.f32 %v6117, %v269
    %v6122 = vmul.f32 %v6120, %v269
    %v6123 = vsub.f32 %v6113, %v6121
    %v6124 = vsub.f32 %v6114, %v6122
    %v6125 = vmul.f32 %v6123, %v6123
    %v6126 = vmul.f32 %v6124, %v6124
    %v6127 = vsel %vm262, %v6125, 0.0
    %6128 = vadd.xlane.f32.xlu0 %v6127
    %v6129 = vpop.xlane.xlu0 %6128
    %v6130 = vsel %vm262, %v6126, 0.0
    %6131 = vadd.xlane.f32.xlu0 %v6130
    %v6132 = vpop.xlane.xlu0 %6131
    %v6133 = vmul.f32 %v6129, %v269
    %v6134 = vmul.f32 %v6132, %v269
    %v6135 = vadd.f32 %v6133, 1e-05
    %v6136 = vadd.f32 %v6134, 1e-05
    %v6137 = vrsqrt.pop %v6135
    %v6138 = vrsqrt.pop %v6136
    %v6139 = vmul.f32 %v6123, %v6137
    %v6140 = vmul.f32 %v6124, %v6138
    %v6141 = vld [vmem:[#allocation5 + $0x100] sm:$0x1]
    %v6142 = vlaneseq
    %v6143 = vshrl.u32 %v6142, 7
    %v6144 = vsub.s32 0, %v6143
    %v6145 = vrot.slane %v6141, %v6144
    %v6146 = vmul.f32 %v6139, %v6145
    %v6147 = vmul.f32 %v6140, %v6145
    %v6148 = vld [vmem:[#allocation5 + $0x108] sm:$0x1]
    %v6149 = vlaneseq
    %v6150 = vshrl.u32 %v6149, 7
    %v6151 = vsub.s32 0, %v6150
    %v6152 = vrot.slane %v6148, %v6151
    %v6153 = vadd.f32 %v6146, %v6152
    %v6154 = vadd.f32 %v6147, %v6152
    %v6155 = vpack.c.bf16 %v6154, %v6153
    %v6156 = vld [vmem:[#allocation2 + $0x488] sm:$0xf]
    %v6157 = vld [vmem:[#allocation2 + $0x48c] sm:$0xf]
    %v6158 = vld [vmem:[#allocation2 + $0x490] sm:$0xf]
    %v6159 = vld [vmem:[#allocation2 + $0x494] sm:$0xf]
    %v6164 = vunpack.c.l.b16 %v6156
    %v6165 = vunpack.c.l.b16 %v6157
    %v6166 = vunpack.c.l.b16 %v6158
    %v6167 = vunpack.c.l.b16 %v6159
    %v6168 = vpack.c.b16 %v6165, %v6164
    %v6169 = vpack.c.b16 %v6167, %v6166
    %v6173 = vsel %vm262, %v6155, 0
    %6175 = vmatprep.subr.bf16.mxu0 0
    %6176 = vmatpush1.bf16.msra.mxu0 0
    %6177 = vmatprep.subr.bf16.mxu0 0
    %6178 = vmatpush1.bf16.msra.mxu0 0
    %6179 = vmatprep.subr.bf16.mxu0 0
    %6180 = vmatpush1.bf16.msra.mxu0 0
    %6181 = vmatprep.subr.bf16.mxu0 0
    %6182 = vmatpush1.bf16.msra.mxu0 0
    %6183 = vmatprep.subr.bf16.mxu0 0
    %6184 = vmatpush1.bf16.msra.mxu0 0
    %6185 = vmatprep.subr.bf16.mxu0 0
    %6186 = vmatpush1.bf16.msra.mxu0 0
    %6187 = vmatprep.subr.bf16.mxu0 0
    %6188 = vmatpush1.bf16.msra.mxu0 %v6169
    %6189 = vmatprep.subr.bf16.mxu0 0
    %6190 = vmatpush1.bf16.msra.mxu0 %v6168
    %6191 = vmatprep.subr.bf16.mxu0 0
    %6192 = vmatpush2.bf16.msra.mxu0 0
    %6193 = vmatprep.subr.bf16.mxu0 0
    %6194 = vmatpush2.bf16.msra.mxu0 0
    %6195 = vmatprep.subr.bf16.mxu0 0
    %6196 = vmatpush2.bf16.msra.mxu0 0
    %6197 = vmatprep.subr.bf16.mxu0 0
    %6198 = vmatpush2.bf16.msra.mxu0 0
    %6199 = vmatprep.subr.bf16.mxu0 0
    %6200 = vmatpush2.bf16.msra.mxu0 0
    %6201 = vmatprep.subr.bf16.mxu0 0
    %6202 = vmatpush2.bf16.msra.mxu0 0
    %6203 = vmatprep.subr.bf16.mxu0 0
    %6204 = vmatpush2.bf16.msra.mxu0 0
    %6205 = vmatprep.subr.bf16.mxu0 0
    %6206 = vmatpush2.bf16.msra.mxu0 0
    %6207 = vmatprep.mubr.bf16.mxu0 0
    %6208 = vmatmul.mubr.bf16.gmra.mxu0 %v6173
    %v6209 = vpop.f32.mrf.mxu0
    %v6210 = vadd.f32 0.0, %v6209
    %v6211 = vpop.f32.mrf.mxu0
    %v6212 = vpop.f32.mrf.mxu0
    %v6213 = vadd.f32 0.0, %v6212
    %v6214 = vpop.f32.mrf.mxu0
    %6215 = vdwg.mxu0
    %v6216 = vld [vmem:[#allocation2 + $0x498] sm:$0xf]
    %v6217 = vld [vmem:[#allocation2 + $0x49c] sm:$0xf]
    %v6218 = vld [vmem:[#allocation2 + $0x4a0] sm:$0xf]
    %v6219 = vld [vmem:[#allocation2 + $0x4a4] sm:$0xf]
    %v6224 = vunpack.c.l.b16 %v6216
    %v6225 = vunpack.c.l.b16 %v6217
    %v6226 = vunpack.c.l.b16 %v6218
    %v6227 = vunpack.c.l.b16 %v6219
    %v6228 = vpack.c.b16 %v6225, %v6224
    %v6229 = vpack.c.b16 %v6227, %v6226
    %6232 = vmatprep.subr.bf16.mxu0 0
    %6233 = vmatpush1.bf16.msra.mxu0 0
    %6234 = vmatprep.subr.bf16.mxu0 0
    %6235 = vmatpush1.bf16.msra.mxu0 0
    %6236 = vmatprep.subr.bf16.mxu0 0
    %6237 = vmatpush1.bf16.msra.mxu0 0
    %6238 = vmatprep.subr.bf16.mxu0 0
    %6239 = vmatpush1.bf16.msra.mxu0 0
    %6240 = vmatprep.subr.bf16.mxu0 0
    %6241 = vmatpush1.bf16.msra.mxu0 0
    %6242 = vmatprep.subr.bf16.mxu0 0
    %6243 = vmatpush1.bf16.msra.mxu0 0
    %6244 = vmatprep.subr.bf16.mxu0 0
    %6245 = vmatpush1.bf16.msra.mxu0 %v6229
    %6246 = vmatprep.subr.bf16.mxu0 0
    %6247 = vmatpush1.bf16.msra.mxu0 %v6228
    %6248 = vmatprep.subr.bf16.mxu0 0
    %6249 = vmatpush2.bf16.msra.mxu0 0
    %6250 = vmatprep.subr.bf16.mxu0 0
    %6251 = vmatpush2.bf16.msra.mxu0 0
    %6252 = vmatprep.subr.bf16.mxu0 0
    %6253 = vmatpush2.bf16.msra.mxu0 0
    %6254 = vmatprep.subr.bf16.mxu0 0
    %6255 = vmatpush2.bf16.msra.mxu0 0
    %6256 = vmatprep.subr.bf16.mxu0 0
    %6257 = vmatpush2.bf16.msra.mxu0 0
    %6258 = vmatprep.subr.bf16.mxu0 0
    %6259 = vmatpush2.bf16.msra.mxu0 0
    %6260 = vmatprep.subr.bf16.mxu0 0
    %6261 = vmatpush2.bf16.msra.mxu0 0
    %6262 = vmatprep.subr.bf16.mxu0 0
    %6263 = vmatpush2.bf16.msra.mxu0 0
    %6264 = vmatprep.mubr.bf16.mxu0 0
    %6265 = vmatmul.mubr.bf16.gmra.mxu0 %v6173
    %v6266 = vpop.f32.mrf.mxu0
    %v6267 = vadd.f32 0.0, %v6266
    %v6268 = vpop.f32.mrf.mxu0
    %v6269 = vpop.f32.mrf.mxu0
    %v6270 = vadd.f32 0.0, %v6269
    %v6271 = vpop.f32.mrf.mxu0
    %6272 = vdwg.mxu0
    %v6273 = vld [vmem:[#allocation2 + $0x4a8] sm:$0xf]
    %v6274 = vld [vmem:[#allocation2 + $0x4ac] sm:$0xf]
    %v6275 = vld [vmem:[#allocation2 + $0x4b0] sm:$0xf]
    %v6276 = vld [vmem:[#allocation2 + $0x4b4] sm:$0xf]
    %v6281 = vunpack.c.l.b16 %v6273
    %v6282 = vunpack.c.l.b16 %v6274
    %v6283 = vunpack.c.l.b16 %v6275
    %v6284 = vunpack.c.l.b16 %v6276
    %v6285 = vpack.c.b16 %v6282, %v6281
    %v6286 = vpack.c.b16 %v6284, %v6283
    %6289 = vmatprep.subr.bf16.mxu0 0
    %6290 = vmatpush1.bf16.msra.mxu0 0
    %6291 = vmatprep.subr.bf16.mxu0 0
    %6292 = vmatpush1.bf16.msra.mxu0 0
    %6293 = vmatprep.subr.bf16.mxu0 0
    %6294 = vmatpush1.bf16.msra.mxu0 0
    %6295 = vmatprep.subr.bf16.mxu0 0
    %6296 = vmatpush1.bf16.msra.mxu0 0
    %6297 = vmatprep.subr.bf16.mxu0 0
    %6298 = vmatpush1.bf16.msra.mxu0 0
    %6299 = vmatprep.subr.bf16.mxu0 0
    %6300 = vmatpush1.bf16.msra.mxu0 0
    %6301 = vmatprep.subr.bf16.mxu0 0
    %6302 = vmatpush1.bf16.msra.mxu0 %v6286
    %6303 = vmatprep.subr.bf16.mxu0 0
    %6304 = vmatpush1.bf16.msra.mxu0 %v6285
    %6305 = vmatprep.subr.bf16.mxu0 0
    %6306 = vmatpush2.bf16.msra.mxu0 0
    %6307 = vmatprep.subr.bf16.mxu0 0
    %6308 = vmatpush2.bf16.msra.mxu0 0
    %6309 = vmatprep.subr.bf16.mxu0 0
    %6310 = vmatpush2.bf16.msra.mxu0 0
    %6311 = vmatprep.subr.bf16.mxu0 0
    %6312 = vmatpush2.bf16.msra.mxu0 0
    %6313 = vmatprep.subr.bf16.mxu0 0
    %6314 = vmatpush2.bf16.msra.mxu0 0
    %6315 = vmatprep.subr.bf16.mxu0 0
    %6316 = vmatpush2.bf16.msra.mxu0 0
    %6317 = vmatprep.subr.bf16.mxu0 0
    %6318 = vmatpush2.bf16.msra.mxu0 0
    %6319 = vmatprep.subr.bf16.mxu0 0
    %6320 = vmatpush2.bf16.msra.mxu0 0
    %6321 = vmatprep.mubr.bf16.mxu0 0
    %6322 = vmatmul.mubr.bf16.gmra.mxu0 %v6173
    %v6323 = vpop.f32.mrf.mxu0
    %v6324 = vadd.f32 0.0, %v6323
    %v6325 = vpop.f32.mrf.mxu0
    %v6326 = vpop.f32.mrf.mxu0
    %v6327 = vadd.f32 0.0, %v6326
    %v6328 = vpop.f32.mrf.mxu0
    %6329 = vdwg.mxu0
    %v6330 = vpack.c.bf16 %v6213, %v6210
    %v6331 = vpack.c.bf16 %v6270, %v6267
    %v6333 = vsel %vm191, %v6330, 0
    %v6336 = vsel %vm191, %v6331, 0
    %6338 = vmatprep.subr.bf16.mxu0 0
    %6339 = vmatpush1.bf16.xpose.msra.mxu0 0
    %6340 = vmatprep.subr.bf16.mxu0 0
    %6341 = vmatpush1.bf16.xpose.msra.mxu0 0
    %6342 = vmatprep.subr.bf16.mxu0 0
    %6343 = vmatpush1.bf16.xpose.msra.mxu0 0
    %6344 = vmatprep.subr.bf16.mxu0 0
    %6345 = vmatpush1.bf16.xpose.msra.mxu0 0
    %6346 = vmatprep.subr.bf16.mxu0 0
    %6347 = vmatpush1.bf16.xpose.msra.mxu0 0
    %6348 = vmatprep.subr.bf16.mxu0 0
    %6349 = vmatpush1.bf16.xpose.msra.mxu0 0
    %6350 = vmatprep.subr.bf16.mxu0 0
    %6351 = vmatpush1.bf16.xpose.msra.mxu0 0
    %6352 = vmatprep.subr.bf16.mxu0 0
    %6353 = vmatpush1.bf16.xpose.msra.mxu0 %v6336
    %6354 = vmatprep.subr.bf16.mxu0 0
    %6355 = vmatpush2.bf16.xpose.msra.mxu0 0
    %6356 = vmatprep.subr.bf16.mxu0 0
    %6357 = vmatpush2.bf16.xpose.msra.mxu0 0
    %6358 = vmatprep.subr.bf16.mxu0 0
    %6359 = vmatpush2.bf16.xpose.msra.mxu0 0
    %6360 = vmatprep.subr.bf16.mxu0 0
    %6361 = vmatpush2.bf16.xpose.msra.mxu0 0
    %6362 = vmatprep.subr.bf16.mxu0 0
    %6363 = vmatpush2.bf16.xpose.msra.mxu0 0
    %6364 = vmatprep.subr.bf16.mxu0 0
    %6365 = vmatpush2.bf16.xpose.msra.mxu0 0
    %6366 = vmatprep.subr.bf16.mxu0 0
    %6367 = vmatpush2.bf16.xpose.msra.mxu0 0
    %6368 = vmatprep.subr.bf16.mxu0 0
    %6369 = vmatpush2.bf16.xpose.msra.mxu0 0
    %6370 = vmatprep.mubr.bf16.mxu0 0
    %6371 = vmatmul.mubr.bf16.gmra.mxu0 %v6333
    %v6372 = vpop.f32.mrf.mxu0
    %v6373 = vadd.f32 %v246, %v6372
    %v6374 = vpop.f32.mrf.mxu0
    %v6375 = vpop.f32.mrf.mxu0
    %v6376 = vadd.f32 %v247, %v6375
    %v6377 = vpop.f32.mrf.mxu0
    %6378 = vdwg.mxu0
    %v6379 = vsel %vm78, %v6373, -inf
    %6380 = vmax.xlane.f32.xlu0 %v6379
    %v6381 = vpop.xlane.xlu0 %6380
    %v6382 = vsel %vm78, %v6376, -inf
    %6383 = vmax.xlane.f32.xlu0 %v6382
    %v6384 = vpop.xlane.xlu0 %6383
    %v6385 = vsub.f32 %v6373, %v6381
    %v6386 = vsub.f32 %v6376, %v6384
    %v6387 = vmul.f32 %v6385, 1.442695
    %v6388 = vpow.pop %v6387
    %v6389 = vmul.f32 %v6386, 1.442695
    %v6390 = vpow.pop %v6389
    %v6391 = vsel %vm78, %v6388, 0.0
    %6392 = vadd.xlane.f32.xlu0 %v6391
    %v6393 = vpop.xlane.xlu0 %6392
    %v6394 = vsel %vm78, %v6390, 0.0
    %6395 = vadd.xlane.f32.xlu0 %v6394
    %v6396 = vpop.xlane.xlu0 %6395
    %v6397 = vrcp.pop %v6393
    %v6398 = vrcp.pop %v6396
    %v6399 = vmul.f32 %v6388, %v6397
    %v6400 = vmul.f32 %v6390, %v6398
    %v6401 = vpack.c.bf16 %v6400, %v6399
    %v6402 = vpack.c.bf16 %v6327, %v6324
    %v6403 = vld [vmem:[#allocation2 + $0x4b8] sm:$0xf]
    %v6404 = vld [vmem:[#allocation2 + $0x4bc] sm:$0xf]
    %v6405 = vld [vmem:[#allocation2 + $0x4c0] sm:$0xf]
    %v6406 = vld [vmem:[#allocation2 + $0x4c4] sm:$0xf]
    %v6411 = vunpack.c.l.b16 %v6403
    %v6412 = vunpack.c.l.b16 %v6404
    %v6413 = vunpack.c.l.b16 %v6405
    %v6414 = vunpack.c.l.b16 %v6406
    %v6415 = vpack.c.b16 %v6412, %v6411
    %v6416 = vpack.c.b16 %v6414, %v6413
    %6419 = vmatprep.subr.bf16.mxu0 0
    %6420 = vmatpush1.bf16.msra.mxu0 0
    %6421 = vmatprep.subr.bf16.mxu0 0
    %6422 = vmatpush1.bf16.msra.mxu0 0
    %6423 = vmatprep.subr.bf16.mxu0 0
    %6424 = vmatpush1.bf16.msra.mxu0 0
    %6425 = vmatprep.subr.bf16.mxu0 0
    %6426 = vmatpush1.bf16.msra.mxu0 0
    %6427 = vmatprep.subr.bf16.mxu0 0
    %6428 = vmatpush1.bf16.msra.mxu0 0
    %6429 = vmatprep.subr.bf16.mxu0 0
    %6430 = vmatpush1.bf16.msra.mxu0 0
    %6431 = vmatprep.subr.bf16.mxu0 0
    %6432 = vmatpush1.bf16.msra.mxu0 %v6416
    %6433 = vmatprep.subr.bf16.mxu0 0
    %6434 = vmatpush1.bf16.msra.mxu0 %v6415
    %6435 = vmatprep.subr.bf16.mxu0 0
    %6436 = vmatpush2.bf16.msra.mxu0 0
    %6437 = vmatprep.subr.bf16.mxu0 0
    %6438 = vmatpush2.bf16.msra.mxu0 0
    %6439 = vmatprep.subr.bf16.mxu0 0
    %6440 = vmatpush2.bf16.msra.mxu0 0
    %6441 = vmatprep.subr.bf16.mxu0 0
    %6442 = vmatpush2.bf16.msra.mxu0 0
    %6443 = vmatprep.subr.bf16.mxu0 0
    %6444 = vmatpush2.bf16.msra.mxu0 0
    %6445 = vmatprep.subr.bf16.mxu0 0
    %6446 = vmatpush2.bf16.msra.mxu0 0
    %6447 = vmatprep.subr.bf16.mxu0 0
    %6448 = vmatpush2.bf16.msra.mxu0 0
    %6449 = vmatprep.subr.bf16.mxu0 0
    %6450 = vmatpush2.bf16.msra.mxu0 0
    %6451 = vmatprep.mubr.bf16.mxu0 0
    %6452 = vmatmul.mubr.bf16.gmra.mxu0 %v6173
    %v6453 = vpop.f32.mrf.mxu0
    %v6454 = vadd.f32 0.0, %v6453
    %v6455 = vpop.f32.mrf.mxu0
    %v6456 = vpop.f32.mrf.mxu0
    %v6457 = vadd.f32 0.0, %v6456
    %v6458 = vpop.f32.mrf.mxu0
    %6459 = vdwg.mxu0
    %v6460 = vld [vmem:[#allocation2 + $0x4c8] sm:$0xf]
    %v6461 = vld [vmem:[#allocation2 + $0x4cc] sm:$0xf]
    %v6462 = vld [vmem:[#allocation2 + $0x4d0] sm:$0xf]
    %v6463 = vld [vmem:[#allocation2 + $0x4d4] sm:$0xf]
    %v6468 = vunpack.c.l.b16 %v6460
    %v6469 = vunpack.c.l.b16 %v6461
    %v6470 = vunpack.c.l.b16 %v6462
    %v6471 = vunpack.c.l.b16 %v6463
    %v6472 = vpack.c.b16 %v6469, %v6468
    %v6473 = vpack.c.b16 %v6471, %v6470
    %6476 = vmatprep.subr.bf16.mxu0 0
    %6477 = vmatpush1.bf16.msra.mxu0 0
    %6478 = vmatprep.subr.bf16.mxu0 0
    %6479 = vmatpush1.bf16.msra.mxu0 0
    %6480 = vmatprep.subr.bf16.mxu0 0
    %6481 = vmatpush1.bf16.msra.mxu0 0
    %6482 = vmatprep.subr.bf16.mxu0 0
    %6483 = vmatpush1.bf16.msra.mxu0 0
    %6484 = vmatprep.subr.bf16.mxu0 0
    %6485 = vmatpush1.bf16.msra.mxu0 0
    %6486 = vmatprep.subr.bf16.mxu0 0
    %6487 = vmatpush1.bf16.msra.mxu0 0
    %6488 = vmatprep.subr.bf16.mxu0 0
    %6489 = vmatpush1.bf16.msra.mxu0 %v6473
    %6490 = vmatprep.subr.bf16.mxu0 0
    %6491 = vmatpush1.bf16.msra.mxu0 %v6472
    %6492 = vmatprep.subr.bf16.mxu0 0
    %6493 = vmatpush2.bf16.msra.mxu0 0
    %6494 = vmatprep.subr.bf16.mxu0 0
    %6495 = vmatpush2.bf16.msra.mxu0 0
    %6496 = vmatprep.subr.bf16.mxu0 0
    %6497 = vmatpush2.bf16.msra.mxu0 0
    %6498 = vmatprep.subr.bf16.mxu0 0
    %6499 = vmatpush2.bf16.msra.mxu0 0
    %6500 = vmatprep.subr.bf16.mxu0 0
    %6501 = vmatpush2.bf16.msra.mxu0 0
    %6502 = vmatprep.subr.bf16.mxu0 0
    %6503 = vmatpush2.bf16.msra.mxu0 0
    %6504 = vmatprep.subr.bf16.mxu0 0
    %6505 = vmatpush2.bf16.msra.mxu0 0
    %6506 = vmatprep.subr.bf16.mxu0 0
    %6507 = vmatpush2.bf16.msra.mxu0 0
    %6508 = vmatprep.mubr.bf16.mxu0 0
    %6509 = vmatmul.mubr.bf16.gmra.mxu0 %v6173
    %v6510 = vpop.f32.mrf.mxu0
    %v6511 = vadd.f32 0.0, %v6510
    %v6512 = vpop.f32.mrf.mxu0
    %v6513 = vpop.f32.mrf.mxu0
    %v6514 = vadd.f32 0.0, %v6513
    %v6515 = vpop.f32.mrf.mxu0
    %6516 = vdwg.mxu0
    %v6517 = vld [vmem:[#allocation2 + $0x4d8] sm:$0xf]
    %v6518 = vld [vmem:[#allocation2 + $0x4dc] sm:$0xf]
    %v6519 = vld [vmem:[#allocation2 + $0x4e0] sm:$0xf]
    %v6520 = vld [vmem:[#allocation2 + $0x4e4] sm:$0xf]
    %v6525 = vunpack.c.l.b16 %v6517
    %v6526 = vunpack.c.l.b16 %v6518
    %v6527 = vunpack.c.l.b16 %v6519
    %v6528 = vunpack.c.l.b16 %v6520
    %v6529 = vpack.c.b16 %v6526, %v6525
    %v6530 = vpack.c.b16 %v6528, %v6527
    %6533 = vmatprep.subr.bf16.mxu0 0
    %6534 = vmatpush1.bf16.msra.mxu0 0
    %6535 = vmatprep.subr.bf16.mxu0 0
    %6536 = vmatpush1.bf16.msra.mxu0 0
    %6537 = vmatprep.subr.bf16.mxu0 0
    %6538 = vmatpush1.bf16.msra.mxu0 0
    %6539 = vmatprep.subr.bf16.mxu0 0
    %6540 = vmatpush1.bf16.msra.mxu0 0
    %6541 = vmatprep.subr.bf16.mxu0 0
    %6542 = vmatpush1.bf16.msra.mxu0 0
    %6543 = vmatprep.subr.bf16.mxu0 0
    %6544 = vmatpush1.bf16.msra.mxu0 0
    %6545 = vmatprep.subr.bf16.mxu0 0
    %6546 = vmatpush1.bf16.msra.mxu0 %v6530
    %6547 = vmatprep.subr.bf16.mxu0 0
    %6548 = vmatpush1.bf16.msra.mxu0 %v6529
    %6549 = vmatprep.subr.bf16.mxu0 0
    %6550 = vmatpush2.bf16.msra.mxu0 0
    %6551 = vmatprep.subr.bf16.mxu0 0
    %6552 = vmatpush2.bf16.msra.mxu0 0
    %6553 = vmatprep.subr.bf16.mxu0 0
    %6554 = vmatpush2.bf16.msra.mxu0 0
    %6555 = vmatprep.subr.bf16.mxu0 0
    %6556 = vmatpush2.bf16.msra.mxu0 0
    %6557 = vmatprep.subr.bf16.mxu0 0
    %6558 = vmatpush2.bf16.msra.mxu0 0
    %6559 = vmatprep.subr.bf16.mxu0 0
    %6560 = vmatpush2.bf16.msra.mxu0 0
    %6561 = vmatprep.subr.bf16.mxu0 0
    %6562 = vmatpush2.bf16.msra.mxu0 0
    %6563 = vmatprep.subr.bf16.mxu0 0
    %6564 = vmatpush2.bf16.msra.mxu0 0
    %6565 = vmatprep.mubr.bf16.mxu0 0
    %6566 = vmatmul.mubr.bf16.gmra.mxu0 %v6173
    %v6567 = vpop.f32.mrf.mxu0
    %v6568 = vadd.f32 0.0, %v6567
    %v6569 = vpop.f32.mrf.mxu0
    %v6570 = vpop.f32.mrf.mxu0
    %v6571 = vadd.f32 0.0, %v6570
    %v6572 = vpop.f32.mrf.mxu0
    %6573 = vdwg.mxu0
    %v6574 = vpack.c.bf16 %v6457, %v6454
    %v6575 = vpack.c.bf16 %v6514, %v6511
    %v6577 = vsel %vm191, %v6574, 0
    %v6580 = vsel %vm191, %v6575, 0
    %6582 = vmatprep.subr.bf16.mxu0 0
    %6583 = vmatpush1.bf16.xpose.msra.mxu0 0
    %6584 = vmatprep.subr.bf16.mxu0 0
    %6585 = vmatpush1.bf16.xpose.msra.mxu0 0
    %6586 = vmatprep.subr.bf16.mxu0 0
    %6587 = vmatpush1.bf16.xpose.msra.mxu0 0
    %6588 = vmatprep.subr.bf16.mxu0 0
    %6589 = vmatpush1.bf16.xpose.msra.mxu0 0
    %6590 = vmatprep.subr.bf16.mxu0 0
    %6591 = vmatpush1.bf16.xpose.msra.mxu0 0
    %6592 = vmatprep.subr.bf16.mxu0 0
    %6593 = vmatpush1.bf16.xpose.msra.mxu0 0
    %6594 = vmatprep.subr.bf16.mxu0 0
    %6595 = vmatpush1.bf16.xpose.msra.mxu0 0
    %6596 = vmatprep.subr.bf16.mxu0 0
    %6597 = vmatpush1.bf16.xpose.msra.mxu0 %v6580
    %6598 = vmatprep.subr.bf16.mxu0 0
    %6599 = vmatpush2.bf16.xpose.msra.mxu0 0
    %6600 = vmatprep.subr.bf16.mxu0 0
    %6601 = vmatpush2.bf16.xpose.msra.mxu0 0
    %6602 = vmatprep.subr.bf16.mxu0 0
    %6603 = vmatpush2.bf16.xpose.msra.mxu0 0
    %6604 = vmatprep.subr.bf16.mxu0 0
    %6605 = vmatpush2.bf16.xpose.msra.mxu0 0
    %6606 = vmatprep.subr.bf16.mxu0 0
    %6607 = vmatpush2.bf16.xpose.msra.mxu0 0
    %6608 = vmatprep.subr.bf16.mxu0 0
    %6609 = vmatpush2.bf16.xpose.msra.mxu0 0
    %6610 = vmatprep.subr.bf16.mxu0 0
    %6611 = vmatpush2.bf16.xpose.msra.mxu0 0
    %6612 = vmatprep.subr.bf16.mxu0 0
    %6613 = vmatpush2.bf16.xpose.msra.mxu0 0
    %6614 = vmatprep.mubr.bf16.mxu0 0
    %6615 = vmatmul.mubr.bf16.gmra.mxu0 %v6577
    %v6616 = vpop.f32.mrf.mxu0
    %v6617 = vadd.f32 %v246, %v6616
    %v6618 = vpop.f32.mrf.mxu0
    %v6619 = vpop.f32.mrf.mxu0
    %v6620 = vadd.f32 %v247, %v6619
    %v6621 = vpop.f32.mrf.mxu0
    %6622 = vdwg.mxu0
    %v6623 = vsel %vm78, %v6617, -inf
    %6624 = vmax.xlane.f32.xlu0 %v6623
    %v6625 = vpop.xlane.xlu0 %6624
    %v6626 = vsel %vm78, %v6620, -inf
    %6627 = vmax.xlane.f32.xlu0 %v6626
    %v6628 = vpop.xlane.xlu0 %6627
    %v6629 = vsub.f32 %v6617, %v6625
    %v6630 = vsub.f32 %v6620, %v6628
    %v6631 = vmul.f32 %v6629, 1.442695
    %v6632 = vpow.pop %v6631
    %v6633 = vmul.f32 %v6630, 1.442695
    %v6634 = vpow.pop %v6633
    %v6635 = vsel %vm78, %v6632, 0.0
    %6636 = vadd.xlane.f32.xlu0 %v6635
    %v6637 = vpop.xlane.xlu0 %6636
    %v6638 = vsel %vm78, %v6634, 0.0
    %6639 = vadd.xlane.f32.xlu0 %v6638
    %v6640 = vpop.xlane.xlu0 %6639
    %v6641 = vrcp.pop %v6637
    %v6642 = vrcp.pop %v6640
    %v6643 = vmul.f32 %v6632, %v6641
    %v6644 = vmul.f32 %v6634, %v6642
    %v6645 = vpack.c.bf16 %v6644, %v6643
    %v6646 = vpack.c.bf16 %v6571, %v6568
    %v6648 = vsel %vm78, %v6645, 0
    %6650 = vmatprep.subr.bf16.mxu0 0
    %6651 = vmatpush1.bf16.msra.mxu0 0
    %6652 = vmatprep.subr.bf16.mxu0 0
    %6653 = vmatpush1.bf16.msra.mxu0 0
    %6654 = vmatprep.subr.bf16.mxu0 0
    %6655 = vmatpush1.bf16.msra.mxu0 0
    %6656 = vmatprep.subr.bf16.mxu0 0
    %6657 = vmatpush1.bf16.msra.mxu0 0
    %6658 = vmatprep.subr.bf16.mxu0 0
    %6659 = vmatpush1.bf16.msra.mxu0 0
    %6660 = vmatprep.subr.bf16.mxu0 0
    %6661 = vmatpush1.bf16.msra.mxu0 0
    %6662 = vmatprep.subr.bf16.mxu0 0
    %6663 = vmatpush1.bf16.msra.mxu0 0
    %6664 = vmatprep.subr.bf16.mxu0 0
    %6665 = vmatpush1.bf16.msra.mxu0 %v6646
    %6666 = vmatprep.subr.bf16.mxu0 0
    %6667 = vmatpush2.bf16.msra.mxu0 0
    %6668 = vmatprep.subr.bf16.mxu0 0
    %6669 = vmatpush2.bf16.msra.mxu0 0
    %6670 = vmatprep.subr.bf16.mxu0 0
    %6671 = vmatpush2.bf16.msra.mxu0 0
    %6672 = vmatprep.subr.bf16.mxu0 0
    %6673 = vmatpush2.bf16.msra.mxu0 0
    %6674 = vmatprep.subr.bf16.mxu0 0
    %6675 = vmatpush2.bf16.msra.mxu0 0
    %6676 = vmatprep.subr.bf16.mxu0 0
    %6677 = vmatpush2.bf16.msra.mxu0 0
    %6678 = vmatprep.subr.bf16.mxu0 0
    %6679 = vmatpush2.bf16.msra.mxu0 0
    %6680 = vmatprep.subr.bf16.mxu0 0
    %6681 = vmatpush2.bf16.msra.mxu0 0
    %6682 = vmatprep.mubr.bf16.mxu0 0
    %6683 = vmatmul.mubr.bf16.gmra.mxu0 %v6648
    %v6684 = vpop.f32.mrf.mxu0
    %v6685 = vadd.f32 0.0, %v6684
    %v6686 = vpop.f32.mrf.mxu0
    %v6687 = vpop.f32.mrf.mxu0
    %v6688 = vadd.f32 0.0, %v6687
    %v6689 = vpop.f32.mrf.mxu0
    %6690 = vdwg.mxu0
    %v6692 = vsel %vm78, %v6401, 0
    %6694 = vmatprep.subr.bf16.mxu0 0
    %6695 = vmatpush1.bf16.msra.mxu0 0
    %6696 = vmatprep.subr.bf16.mxu0 0
    %6697 = vmatpush1.bf16.msra.mxu0 0
    %6698 = vmatprep.subr.bf16.mxu0 0
    %6699 = vmatpush1.bf16.msra.mxu0 0
    %6700 = vmatprep.subr.bf16.mxu0 0
    %6701 = vmatpush1.bf16.msra.mxu0 0
    %6702 = vmatprep.subr.bf16.mxu0 0
    %6703 = vmatpush1.bf16.msra.mxu0 0
    %6704 = vmatprep.subr.bf16.mxu0 0
    %6705 = vmatpush1.bf16.msra.mxu0 0
    %6706 = vmatprep.subr.bf16.mxu0 0
    %6707 = vmatpush1.bf16.msra.mxu0 0
    %6708 = vmatprep.subr.bf16.mxu0 0
    %6709 = vmatpush1.bf16.msra.mxu0 %v6402
    %6710 = vmatprep.subr.bf16.mxu0 0
    %6711 = vmatpush2.bf16.msra.mxu0 0
    %6712 = vmatprep.subr.bf16.mxu0 0
    %6713 = vmatpush2.bf16.msra.mxu0 0
    %6714 = vmatprep.subr.bf16.mxu0 0
    %6715 = vmatpush2.bf16.msra.mxu0 0
    %6716 = vmatprep.subr.bf16.mxu0 0
    %6717 = vmatpush2.bf16.msra.mxu0 0
    %6718 = vmatprep.subr.bf16.mxu0 0
    %6719 = vmatpush2.bf16.msra.mxu0 0
    %6720 = vmatprep.subr.bf16.mxu0 0
    %6721 = vmatpush2.bf16.msra.mxu0 0
    %6722 = vmatprep.subr.bf16.mxu0 0
    %6723 = vmatpush2.bf16.msra.mxu0 0
    %6724 = vmatprep.subr.bf16.mxu0 0
    %6725 = vmatpush2.bf16.msra.mxu0 0
    %6726 = vmatprep.mubr.bf16.mxu0 0
    %6727 = vmatmul.mubr.bf16.gmra.mxu0 %v6692
    %v6728 = vpop.f32.mrf.mxu0
    %v6729 = vadd.f32 %v6685, %v6728
    %v6730 = vpop.f32.mrf.mxu0
    %v6731 = vpop.f32.mrf.mxu0
    %v6732 = vadd.f32 %v6688, %v6731
    %v6733 = vpop.f32.mrf.mxu0
    %6734 = vdwg.mxu0
    %v6735 = vld [vmem:[#allocation2 + $0x4e8] sm:$0xf]
    %v6736 = vld [vmem:[#allocation2 + $0x4ec] sm:$0xf]
    %v6737 = vld [vmem:[#allocation2 + $0x4f0] sm:$0xf]
    %v6738 = vld [vmem:[#allocation2 + $0x4f4] sm:$0xf]
    %v6743 = vunpack.c.l.b16 %v6735
    %v6744 = vunpack.c.l.b16 %v6736
    %v6745 = vunpack.c.l.b16 %v6737
    %v6746 = vunpack.c.l.b16 %v6738
    %v6747 = vpack.c.b16 %v6744, %v6743
    %v6748 = vpack.c.b16 %v6746, %v6745
    %6751 = vmatprep.subr.bf16.mxu0 0
    %6752 = vmatpush1.bf16.msra.mxu0 0
    %6753 = vmatprep.subr.bf16.mxu0 0
    %6754 = vmatpush1.bf16.msra.mxu0 0
    %6755 = vmatprep.subr.bf16.mxu0 0
    %6756 = vmatpush1.bf16.msra.mxu0 0
    %6757 = vmatprep.subr.bf16.mxu0 0
    %6758 = vmatpush1.bf16.msra.mxu0 0
    %6759 = vmatprep.subr.bf16.mxu0 0
    %6760 = vmatpush1.bf16.msra.mxu0 0
    %6761 = vmatprep.subr.bf16.mxu0 0
    %6762 = vmatpush1.bf16.msra.mxu0 0
    %6763 = vmatprep.subr.bf16.mxu0 0
    %6764 = vmatpush1.bf16.msra.mxu0 %v6748
    %6765 = vmatprep.subr.bf16.mxu0 0
    %6766 = vmatpush1.bf16.msra.mxu0 %v6747
    %6767 = vmatprep.subr.bf16.mxu0 0
    %6768 = vmatpush2.bf16.msra.mxu0 0
    %6769 = vmatprep.subr.bf16.mxu0 0
    %6770 = vmatpush2.bf16.msra.mxu0 0
    %6771 = vmatprep.subr.bf16.mxu0 0
    %6772 = vmatpush2.bf16.msra.mxu0 0
    %6773 = vmatprep.subr.bf16.mxu0 0
    %6774 = vmatpush2.bf16.msra.mxu0 0
    %6775 = vmatprep.subr.bf16.mxu0 0
    %6776 = vmatpush2.bf16.msra.mxu0 0
    %6777 = vmatprep.subr.bf16.mxu0 0
    %6778 = vmatpush2.bf16.msra.mxu0 0
    %6779 = vmatprep.subr.bf16.mxu0 0
    %6780 = vmatpush2.bf16.msra.mxu0 0
    %6781 = vmatprep.subr.bf16.mxu0 0
    %6782 = vmatpush2.bf16.msra.mxu0 0
    %6783 = vmatprep.mubr.bf16.mxu0 0
    %6784 = vmatmul.mubr.bf16.gmra.mxu0 %v6173
    %v6785 = vpop.f32.mrf.mxu0
    %v6786 = vadd.f32 0.0, %v6785
    %v6787 = vpop.f32.mrf.mxu0
    %v6788 = vpop.f32.mrf.mxu0
    %v6789 = vadd.f32 0.0, %v6788
    %v6790 = vpop.f32.mrf.mxu0
    %6791 = vdwg.mxu0
    %v6792 = vld [vmem:[#allocation2 + $0x4f8] sm:$0xf]
    %v6793 = vld [vmem:[#allocation2 + $0x4fc] sm:$0xf]
    %v6794 = vld [vmem:[#allocation2 + $0x500] sm:$0xf]
    %v6795 = vld [vmem:[#allocation2 + $0x504] sm:$0xf]
    %v6800 = vunpack.c.l.b16 %v6792
    %v6801 = vunpack.c.l.b16 %v6793
    %v6802 = vunpack.c.l.b16 %v6794
    %v6803 = vunpack.c.l.b16 %v6795
    %v6804 = vpack.c.b16 %v6801, %v6800
    %v6805 = vpack.c.b16 %v6803, %v6802
    %6808 = vmatprep.subr.bf16.mxu0 0
    %6809 = vmatpush1.bf16.msra.mxu0 0
    %6810 = vmatprep.subr.bf16.mxu0 0
    %6811 = vmatpush1.bf16.msra.mxu0 0
    %6812 = vmatprep.subr.bf16.mxu0 0
    %6813 = vmatpush1.bf16.msra.mxu0 0
    %6814 = vmatprep.subr.bf16.mxu0 0
    %6815 = vmatpush1.bf16.msra.mxu0 0
    %6816 = vmatprep.subr.bf16.mxu0 0
    %6817 = vmatpush1.bf16.msra.mxu0 0
    %6818 = vmatprep.subr.bf16.mxu0 0
    %6819 = vmatpush1.bf16.msra.mxu0 0
    %6820 = vmatprep.subr.bf16.mxu0 0
    %6821 = vmatpush1.bf16.msra.mxu0 %v6805
    %6822 = vmatprep.subr.bf16.mxu0 0
    %6823 = vmatpush1.bf16.msra.mxu0 %v6804
    %6824 = vmatprep.subr.bf16.mxu0 0
    %6825 = vmatpush2.bf16.msra.mxu0 0
    %6826 = vmatprep.subr.bf16.mxu0 0
    %6827 = vmatpush2.bf16.msra.mxu0 0
    %6828 = vmatprep.subr.bf16.mxu0 0
    %6829 = vmatpush2.bf16.msra.mxu0 0
    %6830 = vmatprep.subr.bf16.mxu0 0
    %6831 = vmatpush2.bf16.msra.mxu0 0
    %6832 = vmatprep.subr.bf16.mxu0 0
    %6833 = vmatpush2.bf16.msra.mxu0 0
    %6834 = vmatprep.subr.bf16.mxu0 0
    %6835 = vmatpush2.bf16.msra.mxu0 0
    %6836 = vmatprep.subr.bf16.mxu0 0
    %6837 = vmatpush2.bf16.msra.mxu0 0
    %6838 = vmatprep.subr.bf16.mxu0 0
    %6839 = vmatpush2.bf16.msra.mxu0 0
    %6840 = vmatprep.mubr.bf16.mxu0 0
    %6841 = vmatmul.mubr.bf16.gmra.mxu0 %v6173
    %v6842 = vpop.f32.mrf.mxu0
    %v6843 = vadd.f32 0.0, %v6842
    %v6844 = vpop.f32.mrf.mxu0
    %v6845 = vpop.f32.mrf.mxu0
    %v6846 = vadd.f32 0.0, %v6845
    %v6847 = vpop.f32.mrf.mxu0
    %6848 = vdwg.mxu0
    %v6849 = vld [vmem:[#allocation2 + $0x508] sm:$0xf]
    %v6850 = vld [vmem:[#allocation2 + $0x50c] sm:$0xf]
    %v6851 = vld [vmem:[#allocation2 + $0x510] sm:$0xf]
    %v6852 = vld [vmem:[#allocation2 + $0x514] sm:$0xf]
    %v6857 = vunpack.c.l.b16 %v6849
    %v6858 = vunpack.c.l.b16 %v6850
    %v6859 = vunpack.c.l.b16 %v6851
    %v6860 = vunpack.c.l.b16 %v6852
    %v6861 = vpack.c.b16 %v6858, %v6857
    %v6862 = vpack.c.b16 %v6860, %v6859
    %6865 = vmatprep.subr.bf16.mxu0 0
    %6866 = vmatpush1.bf16.msra.mxu0 0
    %6867 = vmatprep.subr.bf16.mxu0 0
    %6868 = vmatpush1.bf16.msra.mxu0 0
    %6869 = vmatprep.subr.bf16.mxu0 0
    %6870 = vmatpush1.bf16.msra.mxu0 0
    %6871 = vmatprep.subr.bf16.mxu0 0
    %6872 = vmatpush1.bf16.msra.mxu0 0
    %6873 = vmatprep.subr.bf16.mxu0 0
    %6874 = vmatpush1.bf16.msra.mxu0 0
    %6875 = vmatprep.subr.bf16.mxu0 0
    %6876 = vmatpush1.bf16.msra.mxu0 0
    %6877 = vmatprep.subr.bf16.mxu0 0
    %6878 = vmatpush1.bf16.msra.mxu0 %v6862
    %6879 = vmatprep.subr.bf16.mxu0 0
    %6880 = vmatpush1.bf16.msra.mxu0 %v6861
    %6881 = vmatprep.subr.bf16.mxu0 0
    %6882 = vmatpush2.bf16.msra.mxu0 0
    %6883 = vmatprep.subr.bf16.mxu0 0
    %6884 = vmatpush2.bf16.msra.mxu0 0
    %6885 = vmatprep.subr.bf16.mxu0 0
    %6886 = vmatpush2.bf16.msra.mxu0 0
    %6887 = vmatprep.subr.bf16.mxu0 0
    %6888 = vmatpush2.bf16.msra.mxu0 0
    %6889 = vmatprep.subr.bf16.mxu0 0
    %6890 = vmatpush2.bf16.msra.mxu0 0
    %6891 = vmatprep.subr.bf16.mxu0 0
    %6892 = vmatpush2.bf16.msra.mxu0 0
    %6893 = vmatprep.subr.bf16.mxu0 0
    %6894 = vmatpush2.bf16.msra.mxu0 0
    %6895 = vmatprep.subr.bf16.mxu0 0
    %6896 = vmatpush2.bf16.msra.mxu0 0
    %6897 = vmatprep.mubr.bf16.mxu0 0
    %6898 = vmatmul.mubr.bf16.gmra.mxu0 %v6173
    %v6899 = vpop.f32.mrf.mxu0
    %v6900 = vadd.f32 0.0, %v6899
    %v6901 = vpop.f32.mrf.mxu0
    %v6902 = vpop.f32.mrf.mxu0
    %v6903 = vadd.f32 0.0, %v6902
    %v6904 = vpop.f32.mrf.mxu0
    %6905 = vdwg.mxu0
    %v6906 = vpack.c.bf16 %v6789, %v6786
    %v6907 = vpack.c.bf16 %v6846, %v6843
    %v6909 = vsel %vm191, %v6906, 0
    %v6912 = vsel %vm191, %v6907, 0
    %6914 = vmatprep.subr.bf16.mxu0 0
    %6915 = vmatpush1.bf16.xpose.msra.mxu0 0
    %6916 = vmatprep.subr.bf16.mxu0 0
    %6917 = vmatpush1.bf16.xpose.msra.mxu0 0
    %6918 = vmatprep.subr.bf16.mxu0 0
    %6919 = vmatpush1.bf16.xpose.msra.mxu0 0
    %6920 = vmatprep.subr.bf16.mxu0 0
    %6921 = vmatpush1.bf16.xpose.msra.mxu0 0
    %6922 = vmatprep.subr.bf16.mxu0 0
    %6923 = vmatpush1.bf16.xpose.msra.mxu0 0
    %6924 = vmatprep.subr.bf16.mxu0 0
    %6925 = vmatpush1.bf16.xpose.msra.mxu0 0
    %6926 = vmatprep.subr.bf16.mxu0 0
    %6927 = vmatpush1.bf16.xpose.msra.mxu0 0
    %6928 = vmatprep.subr.bf16.mxu0 0
    %6929 = vmatpush1.bf16.xpose.msra.mxu0 %v6912
    %6930 = vmatprep.subr.bf16.mxu0 0
    %6931 = vmatpush2.bf16.xpose.msra.mxu0 0
    %6932 = vmatprep.subr.bf16.mxu0 0
    %6933 = vmatpush2.bf16.xpose.msra.mxu0 0
    %6934 = vmatprep.subr.bf16.mxu0 0
    %6935 = vmatpush2.bf16.xpose.msra.mxu0 0
    %6936 = vmatprep.subr.bf16.mxu0 0
    %6937 = vmatpush2.bf16.xpose.msra.mxu0 0
    %6938 = vmatprep.subr.bf16.mxu0 0
    %6939 = vmatpush2.bf16.xpose.msra.mxu0 0
    %6940 = vmatprep.subr.bf16.mxu0 0
    %6941 = vmatpush2.bf16.xpose.msra.mxu0 0
    %6942 = vmatprep.subr.bf16.mxu0 0
    %6943 = vmatpush2.bf16.xpose.msra.mxu0 0
    %6944 = vmatprep.subr.bf16.mxu0 0
    %6945 = vmatpush2.bf16.xpose.msra.mxu0 0
    %6946 = vmatprep.mubr.bf16.mxu0 0
    %6947 = vmatmul.mubr.bf16.gmra.mxu0 %v6909
    %v6948 = vpop.f32.mrf.mxu0
    %v6949 = vadd.f32 %v246, %v6948
    %v6950 = vpop.f32.mrf.mxu0
    %v6951 = vpop.f32.mrf.mxu0
    %v6952 = vadd.f32 %v247, %v6951
    %v6953 = vpop.f32.mrf.mxu0
    %6954 = vdwg.mxu0
    %v6955 = vsel %vm78, %v6949, -inf
    %6956 = vmax.xlane.f32.xlu0 %v6955
    %v6957 = vpop.xlane.xlu0 %6956
    %v6958 = vsel %vm78, %v6952, -inf
    %6959 = vmax.xlane.f32.xlu0 %v6958
    %v6960 = vpop.xlane.xlu0 %6959
    %v6961 = vsub.f32 %v6949, %v6957
    %v6962 = vsub.f32 %v6952, %v6960
    %v6963 = vmul.f32 %v6961, 1.442695
    %v6964 = vpow.pop %v6963
    %v6965 = vmul.f32 %v6962, 1.442695
    %v6966 = vpow.pop %v6965
    %v6967 = vsel %vm78, %v6964, 0.0
    %6968 = vadd.xlane.f32.xlu0 %v6967
    %v6969 = vpop.xlane.xlu0 %6968
    %v6970 = vsel %vm78, %v6966, 0.0
    %6971 = vadd.xlane.f32.xlu0 %v6970
    %v6972 = vpop.xlane.xlu0 %6971
    %v6973 = vrcp.pop %v6969
    %v6974 = vrcp.pop %v6972
    %v6975 = vmul.f32 %v6964, %v6973
    %v6976 = vmul.f32 %v6966, %v6974
    %v6977 = vpack.c.bf16 %v6976, %v6975
    %v6978 = vpack.c.bf16 %v6903, %v6900
    %v6980 = vsel %vm78, %v6977, 0
    %6982 = vmatprep.subr.bf16.mxu0 0
    %6983 = vmatpush1.bf16.msra.mxu0 0
    %6984 = vmatprep.subr.bf16.mxu0 0
    %6985 = vmatpush1.bf16.msra.mxu0 0
    %6986 = vmatprep.subr.bf16.mxu0 0
    %6987 = vmatpush1.bf16.msra.mxu0 0
    %6988 = vmatprep.subr.bf16.mxu0 0
    %6989 = vmatpush1.bf16.msra.mxu0 0
    %6990 = vmatprep.subr.bf16.mxu0 0
    %6991 = vmatpush1.bf16.msra.mxu0 0
    %6992 = vmatprep.subr.bf16.mxu0 0
    %6993 = vmatpush1.bf16.msra.mxu0 0
    %6994 = vmatprep.subr.bf16.mxu0 0
    %6995 = vmatpush1.bf16.msra.mxu0 0
    %6996 = vmatprep.subr.bf16.mxu0 0
    %6997 = vmatpush1.bf16.msra.mxu0 %v6978
    %6998 = vmatprep.subr.bf16.mxu0 0
    %6999 = vmatpush2.bf16.msra.mxu0 0
    %7000 = vmatprep.subr.bf16.mxu0 0
    %7001 = vmatpush2.bf16.msra.mxu0 0
    %7002 = vmatprep.subr.bf16.mxu0 0
    %7003 = vmatpush2.bf16.msra.mxu0 0
    %7004 = vmatprep.subr.bf16.mxu0 0
    %7005 = vmatpush2.bf16.msra.mxu0 0
    %7006 = vmatprep.subr.bf16.mxu0 0
    %7007 = vmatpush2.bf16.msra.mxu0 0
    %7008 = vmatprep.subr.bf16.mxu0 0
    %7009 = vmatpush2.bf16.msra.mxu0 0
    %7010 = vmatprep.subr.bf16.mxu0 0
    %7011 = vmatpush2.bf16.msra.mxu0 0
    %7012 = vmatprep.subr.bf16.mxu0 0
    %7013 = vmatpush2.bf16.msra.mxu0 0
    %7014 = vmatprep.mubr.bf16.mxu0 0
    %7015 = vmatmul.mubr.bf16.gmra.mxu0 %v6980
    %v7016 = vpop.f32.mrf.mxu0
    %v7017 = vadd.f32 0.0, %v7016
    %v7018 = vpop.f32.mrf.mxu0
    %v7019 = vpop.f32.mrf.mxu0
    %v7020 = vadd.f32 0.0, %v7019
    %v7021 = vpop.f32.mrf.mxu0
    %7022 = vdwg.mxu0
    %v7023 = vadd.f32 %v6729, %v7017
    %v7024 = vadd.f32 %v6732, %v7020
    %v7025 = vld [vmem:[#allocation2 + $0x518] sm:$0xf]
    %v7026 = vld [vmem:[#allocation2 + $0x51c] sm:$0xf]
    %v7027 = vld [vmem:[#allocation2 + $0x520] sm:$0xf]
    %v7028 = vld [vmem:[#allocation2 + $0x524] sm:$0xf]
    %v7033 = vunpack.c.l.b16 %v7025
    %v7034 = vunpack.c.l.b16 %v7026
    %v7035 = vunpack.c.l.b16 %v7027
    %v7036 = vunpack.c.l.b16 %v7028
    %v7037 = vpack.c.b16 %v7034, %v7033
    %v7038 = vpack.c.b16 %v7036, %v7035
    %7041 = vmatprep.subr.bf16.mxu0 0
    %7042 = vmatpush1.bf16.msra.mxu0 0
    %7043 = vmatprep.subr.bf16.mxu0 0
    %7044 = vmatpush1.bf16.msra.mxu0 0
    %7045 = vmatprep.subr.bf16.mxu0 0
    %7046 = vmatpush1.bf16.msra.mxu0 0
    %7047 = vmatprep.subr.bf16.mxu0 0
    %7048 = vmatpush1.bf16.msra.mxu0 0
    %7049 = vmatprep.subr.bf16.mxu0 0
    %7050 = vmatpush1.bf16.msra.mxu0 0
    %7051 = vmatprep.subr.bf16.mxu0 0
    %7052 = vmatpush1.bf16.msra.mxu0 0
    %7053 = vmatprep.subr.bf16.mxu0 0
    %7054 = vmatpush1.bf16.msra.mxu0 %v7038
    %7055 = vmatprep.subr.bf16.mxu0 0
    %7056 = vmatpush1.bf16.msra.mxu0 %v7037
    %7057 = vmatprep.subr.bf16.mxu0 0
    %7058 = vmatpush2.bf16.msra.mxu0 0
    %7059 = vmatprep.subr.bf16.mxu0 0
    %7060 = vmatpush2.bf16.msra.mxu0 0
    %7061 = vmatprep.subr.bf16.mxu0 0
    %7062 = vmatpush2.bf16.msra.mxu0 0
    %7063 = vmatprep.subr.bf16.mxu0 0
    %7064 = vmatpush2.bf16.msra.mxu0 0
    %7065 = vmatprep.subr.bf16.mxu0 0
    %7066 = vmatpush2.bf16.msra.mxu0 0
    %7067 = vmatprep.subr.bf16.mxu0 0
    %7068 = vmatpush2.bf16.msra.mxu0 0
    %7069 = vmatprep.subr.bf16.mxu0 0
    %7070 = vmatpush2.bf16.msra.mxu0 0
    %7071 = vmatprep.subr.bf16.mxu0 0
    %7072 = vmatpush2.bf16.msra.mxu0 0
    %7073 = vmatprep.mubr.bf16.mxu0 0
    %7074 = vmatmul.mubr.bf16.gmra.mxu0 %v6173
    %v7075 = vpop.f32.mrf.mxu0
    %v7076 = vadd.f32 0.0, %v7075
    %v7077 = vpop.f32.mrf.mxu0
    %v7078 = vpop.f32.mrf.mxu0
    %v7079 = vadd.f32 0.0, %v7078
    %v7080 = vpop.f32.mrf.mxu0
    %7081 = vdwg.mxu0
    %v7082 = vld [vmem:[#allocation2 + $0x528] sm:$0xf]
    %v7083 = vld [vmem:[#allocation2 + $0x52c] sm:$0xf]
    %v7084 = vld [vmem:[#allocation2 + $0x530] sm:$0xf]
    %v7085 = vld [vmem:[#allocation2 + $0x534] sm:$0xf]
    %v7090 = vunpack.c.l.b16 %v7082
    %v7091 = vunpack.c.l.b16 %v7083
    %v7092 = vunpack.c.l.b16 %v7084
    %v7093 = vunpack.c.l.b16 %v7085
    %v7094 = vpack.c.b16 %v7091, %v7090
    %v7095 = vpack.c.b16 %v7093, %v7092
    %7098 = vmatprep.subr.bf16.mxu0 0
    %7099 = vmatpush1.bf16.msra.mxu0 0
    %7100 = vmatprep.subr.bf16.mxu0 0
    %7101 = vmatpush1.bf16.msra.mxu0 0
    %7102 = vmatprep.subr.bf16.mxu0 0
    %7103 = vmatpush1.bf16.msra.mxu0 0
    %7104 = vmatprep.subr.bf16.mxu0 0
    %7105 = vmatpush1.bf16.msra.mxu0 0
    %7106 = vmatprep.subr.bf16.mxu0 0
    %7107 = vmatpush1.bf16.msra.mxu0 0
    %7108 = vmatprep.subr.bf16.mxu0 0
    %7109 = vmatpush1.bf16.msra.mxu0 0
    %7110 = vmatprep.subr.bf16.mxu0 0
    %7111 = vmatpush1.bf16.msra.mxu0 %v7095
    %7112 = vmatprep.subr.bf16.mxu0 0
    %7113 = vmatpush1.bf16.msra.mxu0 %v7094
    %7114 = vmatprep.subr.bf16.mxu0 0
    %7115 = vmatpush2.bf16.msra.mxu0 0
    %7116 = vmatprep.subr.bf16.mxu0 0
    %7117 = vmatpush2.bf16.msra.mxu0 0
    %7118 = vmatprep.subr.bf16.mxu0 0
    %7119 = vmatpush2.bf16.msra.mxu0 0
    %7120 = vmatprep.subr.bf16.mxu0 0
    %7121 = vmatpush2.bf16.msra.mxu0 0
    %7122 = vmatprep.subr.bf16.mxu0 0
    %7123 = vmatpush2.bf16.msra.mxu0 0
    %7124 = vmatprep.subr.bf16.mxu0 0
    %7125 = vmatpush2.bf16.msra.mxu0 0
    %7126 = vmatprep.subr.bf16.mxu0 0
    %7127 = vmatpush2.bf16.msra.mxu0 0
    %7128 = vmatprep.subr.bf16.mxu0 0
    %7129 = vmatpush2.bf16.msra.mxu0 0
    %7130 = vmatprep.mubr.bf16.mxu0 0
    %7131 = vmatmul.mubr.bf16.gmra.mxu0 %v6173
    %v7132 = vpop.f32.mrf.mxu0
    %v7133 = vadd.f32 0.0, %v7132
    %v7134 = vpop.f32.mrf.mxu0
    %v7135 = vpop.f32.mrf.mxu0
    %v7136 = vadd.f32 0.0, %v7135
    %v7137 = vpop.f32.mrf.mxu0
    %7138 = vdwg.mxu0
    %v7139 = vld [vmem:[#allocation2 + $0x538] sm:$0xf]
    %v7140 = vld [vmem:[#allocation2 + $0x53c] sm:$0xf]
    %v7141 = vld [vmem:[#allocation2 + $0x540] sm:$0xf]
    %v7142 = vld [vmem:[#allocation2 + $0x544] sm:$0xf]
    %v7147 = vunpack.c.l.b16 %v7139
    %v7148 = vunpack.c.l.b16 %v7140
    %v7149 = vunpack.c.l.b16 %v7141
    %v7150 = vunpack.c.l.b16 %v7142
    %v7151 = vpack.c.b16 %v7148, %v7147
    %v7152 = vpack.c.b16 %v7150, %v7149
    %7155 = vmatprep.subr.bf16.mxu0 0
    %7156 = vmatpush1.bf16.msra.mxu0 0
    %7157 = vmatprep.subr.bf16.mxu0 0
    %7158 = vmatpush1.bf16.msra.mxu0 0
    %7159 = vmatprep.subr.bf16.mxu0 0
    %7160 = vmatpush1.bf16.msra.mxu0 0
    %7161 = vmatprep.subr.bf16.mxu0 0
    %7162 = vmatpush1.bf16.msra.mxu0 0
    %7163 = vmatprep.subr.bf16.mxu0 0
    %7164 = vmatpush1.bf16.msra.mxu0 0
    %7165 = vmatprep.subr.bf16.mxu0 0
    %7166 = vmatpush1.bf16.msra.mxu0 0
    %7167 = vmatprep.subr.bf16.mxu0 0
    %7168 = vmatpush1.bf16.msra.mxu0 %v7152
    %7169 = vmatprep.subr.bf16.mxu0 0
    %7170 = vmatpush1.bf16.msra.mxu0 %v7151
    %7171 = vmatprep.subr.bf16.mxu0 0
    %7172 = vmatpush2.bf16.msra.mxu0 0
    %7173 = vmatprep.subr.bf16.mxu0 0
    %7174 = vmatpush2.bf16.msra.mxu0 0
    %7175 = vmatprep.subr.bf16.mxu0 0
    %7176 = vmatpush2.bf16.msra.mxu0 0
    %7177 = vmatprep.subr.bf16.mxu0 0
    %7178 = vmatpush2.bf16.msra.mxu0 0
    %7179 = vmatprep.subr.bf16.mxu0 0
    %7180 = vmatpush2.bf16.msra.mxu0 0
    %7181 = vmatprep.subr.bf16.mxu0 0
    %7182 = vmatpush2.bf16.msra.mxu0 0
    %7183 = vmatprep.subr.bf16.mxu0 0
    %7184 = vmatpush2.bf16.msra.mxu0 0
    %7185 = vmatprep.subr.bf16.mxu0 0
    %7186 = vmatpush2.bf16.msra.mxu0 0
    %7187 = vmatprep.mubr.bf16.mxu0 0
    %7188 = vmatmul.mubr.bf16.gmra.mxu0 %v6173
    %v7189 = vpop.f32.mrf.mxu0
    %v7190 = vadd.f32 0.0, %v7189
    %v7191 = vpop.f32.mrf.mxu0
    %v7192 = vpop.f32.mrf.mxu0
    %v7193 = vadd.f32 0.0, %v7192
    %v7194 = vpop.f32.mrf.mxu0
    %7195 = vdwg.mxu0
    %v7196 = vpack.c.bf16 %v7079, %v7076
    %v7197 = vpack.c.bf16 %v7136, %v7133
    %v7199 = vsel %vm191, %v7196, 0
    %v7202 = vsel %vm191, %v7197, 0
    %7204 = vmatprep.subr.bf16.mxu0 0
    %7205 = vmatpush1.bf16.xpose.msra.mxu0 0
    %7206 = vmatprep.subr.bf16.mxu0 0
    %7207 = vmatpush1.bf16.xpose.msra.mxu0 0
    %7208 = vmatprep.subr.bf16.mxu0 0
    %7209 = vmatpush1.bf16.xpose.msra.mxu0 0
    %7210 = vmatprep.subr.bf16.mxu0 0
    %7211 = vmatpush1.bf16.xpose.msra.mxu0 0
    %7212 = vmatprep.subr.bf16.mxu0 0
    %7213 = vmatpush1.bf16.xpose.msra.mxu0 0
    %7214 = vmatprep.subr.bf16.mxu0 0
    %7215 = vmatpush1.bf16.xpose.msra.mxu0 0
    %7216 = vmatprep.subr.bf16.mxu0 0
    %7217 = vmatpush1.bf16.xpose.msra.mxu0 0
    %7218 = vmatprep.subr.bf16.mxu0 0
    %7219 = vmatpush1.bf16.xpose.msra.mxu0 %v7202
    %7220 = vmatprep.subr.bf16.mxu0 0
    %7221 = vmatpush2.bf16.xpose.msra.mxu0 0
    %7222 = vmatprep.subr.bf16.mxu0 0
    %7223 = vmatpush2.bf16.xpose.msra.mxu0 0
    %7224 = vmatprep.subr.bf16.mxu0 0
    %7225 = vmatpush2.bf16.xpose.msra.mxu0 0
    %7226 = vmatprep.subr.bf16.mxu0 0
    %7227 = vmatpush2.bf16.xpose.msra.mxu0 0
    %7228 = vmatprep.subr.bf16.mxu0 0
    %7229 = vmatpush2.bf16.xpose.msra.mxu0 0
    %7230 = vmatprep.subr.bf16.mxu0 0
    %7231 = vmatpush2.bf16.xpose.msra.mxu0 0
    %7232 = vmatprep.subr.bf16.mxu0 0
    %7233 = vmatpush2.bf16.xpose.msra.mxu0 0
    %7234 = vmatprep.subr.bf16.mxu0 0
    %7235 = vmatpush2.bf16.xpose.msra.mxu0 0
    %7236 = vmatprep.mubr.bf16.mxu0 0
    %7237 = vmatmul.mubr.bf16.gmra.mxu0 %v7199
    %v7238 = vpop.f32.mrf.mxu0
    %v7239 = vadd.f32 %v246, %v7238
    %v7240 = vpop.f32.mrf.mxu0
    %v7241 = vpop.f32.mrf.mxu0
    %v7242 = vadd.f32 %v247, %v7241
    %v7243 = vpop.f32.mrf.mxu0
    %7244 = vdwg.mxu0
    %v7245 = vsel %vm78, %v7239, -inf
    %7246 = vmax.xlane.f32.xlu0 %v7245
    %v7247 = vpop.xlane.xlu0 %7246
    %v7248 = vsel %vm78, %v7242, -inf
    %7249 = vmax.xlane.f32.xlu0 %v7248
    %v7250 = vpop.xlane.xlu0 %7249
    %v7251 = vsub.f32 %v7239, %v7247
    %v7252 = vsub.f32 %v7242, %v7250
    %v7253 = vmul.f32 %v7251, 1.442695
    %v7254 = vpow.pop %v7253
    %v7255 = vmul.f32 %v7252, 1.442695
    %v7256 = vpow.pop %v7255
    %v7257 = vsel %vm78, %v7254, 0.0
    %7258 = vadd.xlane.f32.xlu0 %v7257
    %v7259 = vpop.xlane.xlu0 %7258
    %v7260 = vsel %vm78, %v7256, 0.0
    %7261 = vadd.xlane.f32.xlu0 %v7260
    %v7262 = vpop.xlane.xlu0 %7261
    %v7263 = vrcp.pop %v7259
    %v7264 = vrcp.pop %v7262
    %v7265 = vmul.f32 %v7254, %v7263
    %v7266 = vmul.f32 %v7256, %v7264
    %v7267 = vpack.c.bf16 %v7266, %v7265
    %v7268 = vpack.c.bf16 %v7193, %v7190
    %v7270 = vsel %vm78, %v7267, 0
    %7272 = vmatprep.subr.bf16.mxu0 0
    %7273 = vmatpush1.bf16.msra.mxu0 0
    %7274 = vmatprep.subr.bf16.mxu0 0
    %7275 = vmatpush1.bf16.msra.mxu0 0
    %7276 = vmatprep.subr.bf16.mxu0 0
    %7277 = vmatpush1.bf16.msra.mxu0 0
    %7278 = vmatprep.subr.bf16.mxu0 0
    %7279 = vmatpush1.bf16.msra.mxu0 0
    %7280 = vmatprep.subr.bf16.mxu0 0
    %7281 = vmatpush1.bf16.msra.mxu0 0
    %7282 = vmatprep.subr.bf16.mxu0 0
    %7283 = vmatpush1.bf16.msra.mxu0 0
    %7284 = vmatprep.subr.bf16.mxu0 0
    %7285 = vmatpush1.bf16.msra.mxu0 0
    %7286 = vmatprep.subr.bf16.mxu0 0
    %7287 = vmatpush1.bf16.msra.mxu0 %v7268
    %7288 = vmatprep.subr.bf16.mxu0 0
    %7289 = vmatpush2.bf16.msra.mxu0 0
    %7290 = vmatprep.subr.bf16.mxu0 0
    %7291 = vmatpush2.bf16.msra.mxu0 0
    %7292 = vmatprep.subr.bf16.mxu0 0
    %7293 = vmatpush2.bf16.msra.mxu0 0
    %7294 = vmatprep.subr.bf16.mxu0 0
    %7295 = vmatpush2.bf16.msra.mxu0 0
    %7296 = vmatprep.subr.bf16.mxu0 0
    %7297 = vmatpush2.bf16.msra.mxu0 0
    %7298 = vmatprep.subr.bf16.mxu0 0
    %7299 = vmatpush2.bf16.msra.mxu0 0
    %7300 = vmatprep.subr.bf16.mxu0 0
    %7301 = vmatpush2.bf16.msra.mxu0 0
    %7302 = vmatprep.subr.bf16.mxu0 0
    %7303 = vmatpush2.bf16.msra.mxu0 0
    %7304 = vmatprep.mubr.bf16.mxu0 0
    %7305 = vmatmul.mubr.bf16.gmra.mxu0 %v7270
    %v7306 = vpop.f32.mrf.mxu0
    %v7307 = vadd.f32 0.0, %v7306
    %v7308 = vpop.f32.mrf.mxu0
    %v7309 = vpop.f32.mrf.mxu0
    %v7310 = vadd.f32 0.0, %v7309
    %v7311 = vpop.f32.mrf.mxu0
    %7312 = vdwg.mxu0
    %v7313 = vadd.f32 %v7023, %v7307
    %v7314 = vadd.f32 %v7024, %v7310
    %v7315 = vpack.c.bf16 %v7314, %v7313
    %v7316 = vld [vmem:[#allocation2 + $0x548] sm:$0xf]
    %v7317 = vld [vmem:[#allocation2 + $0x54c] sm:$0xf]
    %v7318 = vld [vmem:[#allocation2 + $0x550] sm:$0xf]
    %v7319 = vld [vmem:[#allocation2 + $0x554] sm:$0xf]
    %v7320 = vld [vmem:[#allocation5 + $0x110] sm:$0x1]
    %v7321 = vlaneseq
    %v7322 = vshrl.u32 %v7321, 7
    %v7323 = vsub.s32 0, %v7322
    %v7324 = vrot.slane %v7320, %v7323
    %v7329 = vunpack.c.l.b16 %v7316
    %v7330 = vunpack.c.l.b16 %v7317
    %v7331 = vunpack.c.l.b16 %v7318
    %v7332 = vunpack.c.l.b16 %v7319
    %v7333 = vpack.c.b16 %v7330, %v7329
    %v7334 = vpack.c.b16 %v7332, %v7331
    %v7338 = vsel %vm262, %v7315, 0
    %7340 = vmatprep.subr.bf16.mxu0 0
    %7341 = vmatpush1.bf16.msra.mxu0 0
    %7342 = vmatprep.subr.bf16.mxu0 0
    %7343 = vmatpush1.bf16.msra.mxu0 0
    %7344 = vmatprep.subr.bf16.mxu0 0
    %7345 = vmatpush1.bf16.msra.mxu0 0
    %7346 = vmatprep.subr.bf16.mxu0 0
    %7347 = vmatpush1.bf16.msra.mxu0 0
    %7348 = vmatprep.subr.bf16.mxu0 0
    %7349 = vmatpush1.bf16.msra.mxu0 0
    %7350 = vmatprep.subr.bf16.mxu0 0
    %7351 = vmatpush1.bf16.msra.mxu0 0
    %7352 = vmatprep.subr.bf16.mxu0 0
    %7353 = vmatpush1.bf16.msra.mxu0 %v7334
    %7354 = vmatprep.subr.bf16.mxu0 0
    %7355 = vmatpush1.bf16.msra.mxu0 %v7333
    %7356 = vmatprep.subr.bf16.mxu0 0
    %7357 = vmatpush2.bf16.msra.mxu0 0
    %7358 = vmatprep.subr.bf16.mxu0 0
    %7359 = vmatpush2.bf16.msra.mxu0 0
    %7360 = vmatprep.subr.bf16.mxu0 0
    %7361 = vmatpush2.bf16.msra.mxu0 0
    %7362 = vmatprep.subr.bf16.mxu0 0
    %7363 = vmatpush2.bf16.msra.mxu0 0
    %7364 = vmatprep.subr.bf16.mxu0 0
    %7365 = vmatpush2.bf16.msra.mxu0 0
    %7366 = vmatprep.subr.bf16.mxu0 0
    %7367 = vmatpush2.bf16.msra.mxu0 0
    %7368 = vmatprep.subr.bf16.mxu0 0
    %7369 = vmatpush2.bf16.msra.mxu0 0
    %7370 = vmatprep.subr.bf16.mxu0 0
    %7371 = vmatpush2.bf16.msra.mxu0 0
    %7372 = vmatprep.mubr.bf16.mxu0 0
    %7373 = vmatmul.mubr.bf16.gmra.mxu0 %v7338
    %v7374 = vpop.f32.mrf.mxu0
    %v7375 = vadd.f32 %v7324, %v7374
    %v7376 = vpop.f32.mrf.mxu0
    %v7377 = vpop.f32.mrf.mxu0
    %v7378 = vadd.f32 %v7324, %v7377
    %v7379 = vpop.f32.mrf.mxu0
    %7380 = vdwg.mxu0
    %v7381 = vadd.f32 %v6113, %v7375
    %v7382 = vadd.f32 %v6114, %v7378
    %v7383 = vpack.c.bf16 %v7382, %v7381
    %v7384 = vunpack.c.l.bf16 %v7383
    %v7385 = vunpack.c.h.bf16 %v7383
    %v7386 = vsel %vm262, %v7384, 0.0
    %7387 = vadd.xlane.f32.xlu0 %v7386
    %v7388 = vpop.xlane.xlu0 %7387
    %v7389 = vsel %vm262, %v7385, 0.0
    %7390 = vadd.xlane.f32.xlu0 %v7389
    %v7391 = vpop.xlane.xlu0 %7390
    %v7392 = vmul.f32 %v7388, %v269
    %v7393 = vmul.f32 %v7391, %v269
    %v7394 = vsub.f32 %v7384, %v7392
    %v7395 = vsub.f32 %v7385, %v7393
    %v7396 = vmul.f32 %v7394, %v7394
    %v7397 = vmul.f32 %v7395, %v7395
    %v7398 = vsel %vm262, %v7396, 0.0
    %7399 = vadd.xlane.f32.xlu0 %v7398
    %v7400 = vpop.xlane.xlu0 %7399
    %v7401 = vsel %vm262, %v7397, 0.0
    %7402 = vadd.xlane.f32.xlu0 %v7401
    %v7403 = vpop.xlane.xlu0 %7402
    %v7404 = vmul.f32 %v7400, %v269
    %v7405 = vmul.f32 %v7403, %v269
    %v7406 = vadd.f32 %v7404, 1e-05
    %v7407 = vadd.f32 %v7405, 1e-05
    %v7408 = vrsqrt.pop %v7406
    %v7409 = vrsqrt.pop %v7407
    %v7410 = vmul.f32 %v7394, %v7408
    %v7411 = vmul.f32 %v7395, %v7409
    %v7412 = vld [vmem:[#allocation5 + $0x118] sm:$0x1]
    %v7413 = vlaneseq
    %v7414 = vshrl.u32 %v7413, 7
    %v7415 = vsub.s32 0, %v7414
    %v7416 = vrot.slane %v7412, %v7415
    %v7417 = vmul.f32 %v7410, %v7416
    %v7418 = vmul.f32 %v7411, %v7416
    %v7419 = vld [vmem:[#allocation5 + $0x120] sm:$0x1]
    %v7420 = vlaneseq
    %v7421 = vshrl.u32 %v7420, 7
    %v7422 = vsub.s32 0, %v7421
    %v7423 = vrot.slane %v7419, %v7422
    %v7424 = vadd.f32 %v7417, %v7423
    %v7425 = vadd.f32 %v7418, %v7423
    %v7426 = vpack.c.bf16 %v7425, %v7424
    %v7427 = vld [vmem:[#allocation2 + $0x558] sm:$0xf]
    %v7428 = vld [vmem:[#allocation2 + $0x55c] sm:$0xf]
    %v7429 = vld [vmem:[#allocation2 + $0x560] sm:$0xf]
    %v7430 = vld [vmem:[#allocation2 + $0x564] sm:$0xf]
    %v7435 = vunpack.c.l.b16 %v7427
    %v7436 = vunpack.c.l.b16 %v7428
    %v7437 = vunpack.c.l.b16 %v7429
    %v7438 = vunpack.c.l.b16 %v7430
    %v7439 = vpack.c.b16 %v7436, %v7435
    %v7440 = vpack.c.b16 %v7438, %v7437
    %v7444 = vsel %vm262, %v7426, 0
    %7446 = vmatprep.subr.bf16.mxu0 0
    %7447 = vmatpush1.bf16.msra.mxu0 0
    %7448 = vmatprep.subr.bf16.mxu0 0
    %7449 = vmatpush1.bf16.msra.mxu0 0
    %7450 = vmatprep.subr.bf16.mxu0 0
    %7451 = vmatpush1.bf16.msra.mxu0 0
    %7452 = vmatprep.subr.bf16.mxu0 0
    %7453 = vmatpush1.bf16.msra.mxu0 0
    %7454 = vmatprep.subr.bf16.mxu0 0
    %7455 = vmatpush1.bf16.msra.mxu0 0
    %7456 = vmatprep.subr.bf16.mxu0 0
    %7457 = vmatpush1.bf16.msra.mxu0 0
    %7458 = vmatprep.subr.bf16.mxu0 0
    %7459 = vmatpush1.bf16.msra.mxu0 %v7440
    %7460 = vmatprep.subr.bf16.mxu0 0
    %7461 = vmatpush1.bf16.msra.mxu0 %v7439
    %7462 = vmatprep.subr.bf16.mxu0 0
    %7463 = vmatpush2.bf16.msra.mxu0 0
    %7464 = vmatprep.subr.bf16.mxu0 0
    %7465 = vmatpush2.bf16.msra.mxu0 0
    %7466 = vmatprep.subr.bf16.mxu0 0
    %7467 = vmatpush2.bf16.msra.mxu0 0
    %7468 = vmatprep.subr.bf16.mxu0 0
    %7469 = vmatpush2.bf16.msra.mxu0 0
    %7470 = vmatprep.subr.bf16.mxu0 0
    %7471 = vmatpush2.bf16.msra.mxu0 0
    %7472 = vmatprep.subr.bf16.mxu0 0
    %7473 = vmatpush2.bf16.msra.mxu0 0
    %7474 = vmatprep.subr.bf16.mxu0 0
    %7475 = vmatpush2.bf16.msra.mxu0 0
    %7476 = vmatprep.subr.bf16.mxu0 0
    %7477 = vmatpush2.bf16.msra.mxu0 0
    %7478 = vmatprep.mubr.bf16.mxu0 0
    %7479 = vmatmul.mubr.bf16.gmra.mxu0 %v7444
    %v7480 = vpop.f32.mrf.mxu0
    %v7481 = vadd.f32 0.0, %v7480
    %v7482 = vpop.f32.mrf.mxu0
    %v7483 = vpop.f32.mrf.mxu0
    %v7484 = vadd.f32 0.0, %v7483
    %v7485 = vpop.f32.mrf.mxu0
    %7486 = vdwg.mxu0
    %v7487 = vld [vmem:[#allocation2 + $0x568] sm:$0xf]
    %v7488 = vld [vmem:[#allocation2 + $0x56c] sm:$0xf]
    %v7489 = vld [vmem:[#allocation2 + $0x570] sm:$0xf]
    %v7490 = vld [vmem:[#allocation2 + $0x574] sm:$0xf]
    %v7495 = vunpack.c.l.b16 %v7487
    %v7496 = vunpack.c.l.b16 %v7488
    %v7497 = vunpack.c.l.b16 %v7489
    %v7498 = vunpack.c.l.b16 %v7490
    %v7499 = vpack.c.b16 %v7496, %v7495
    %v7500 = vpack.c.b16 %v7498, %v7497
    %7503 = vmatprep.subr.bf16.mxu0 0
    %7504 = vmatpush1.bf16.msra.mxu0 0
    %7505 = vmatprep.subr.bf16.mxu0 0
    %7506 = vmatpush1.bf16.msra.mxu0 0
    %7507 = vmatprep.subr.bf16.mxu0 0
    %7508 = vmatpush1.bf16.msra.mxu0 0
    %7509 = vmatprep.subr.bf16.mxu0 0
    %7510 = vmatpush1.bf16.msra.mxu0 0
    %7511 = vmatprep.subr.bf16.mxu0 0
    %7512 = vmatpush1.bf16.msra.mxu0 0
    %7513 = vmatprep.subr.bf16.mxu0 0
    %7514 = vmatpush1.bf16.msra.mxu0 0
    %7515 = vmatprep.subr.bf16.mxu0 0
    %7516 = vmatpush1.bf16.msra.mxu0 %v7500
    %7517 = vmatprep.subr.bf16.mxu0 0
    %7518 = vmatpush1.bf16.msra.mxu0 %v7499
    %7519 = vmatprep.subr.bf16.mxu0 0
    %7520 = vmatpush2.bf16.msra.mxu0 0
    %7521 = vmatprep.subr.bf16.mxu0 0
    %7522 = vmatpush2.bf16.msra.mxu0 0
    %7523 = vmatprep.subr.bf16.mxu0 0
    %7524 = vmatpush2.bf16.msra.mxu0 0
    %7525 = vmatprep.subr.bf16.mxu0 0
    %7526 = vmatpush2.bf16.msra.mxu0 0
    %7527 = vmatprep.subr.bf16.mxu0 0
    %7528 = vmatpush2.bf16.msra.mxu0 0
    %7529 = vmatprep.subr.bf16.mxu0 0
    %7530 = vmatpush2.bf16.msra.mxu0 0
    %7531 = vmatprep.subr.bf16.mxu0 0
    %7532 = vmatpush2.bf16.msra.mxu0 0
    %7533 = vmatprep.subr.bf16.mxu0 0
    %7534 = vmatpush2.bf16.msra.mxu0 0
    %7535 = vmatprep.mubr.bf16.mxu0 0
    %7536 = vmatmul.mubr.bf16.gmra.mxu0 %v4719
    %v7537 = vpop.f32.mrf.mxu0
    %v7538 = vadd.f32 0.0, %v7537
    %v7539 = vpop.f32.mrf.mxu0
    %v7540 = vpop.f32.mrf.mxu0
    %v7541 = vadd.f32 0.0, %v7540
    %v7542 = vpop.f32.mrf.mxu0
    %7543 = vdwg.mxu0
    %v7544 = vld [vmem:[#allocation2 + $0x578] sm:$0xf]
    %v7545 = vld [vmem:[#allocation2 + $0x57c] sm:$0xf]
    %v7546 = vld [vmem:[#allocation2 + $0x580] sm:$0xf]
    %v7547 = vld [vmem:[#allocation2 + $0x584] sm:$0xf]
    %v7552 = vunpack.c.l.b16 %v7544
    %v7553 = vunpack.c.l.b16 %v7545
    %v7554 = vunpack.c.l.b16 %v7546
    %v7555 = vunpack.c.l.b16 %v7547
    %v7556 = vpack.c.b16 %v7553, %v7552
    %v7557 = vpack.c.b16 %v7555, %v7554
    %7560 = vmatprep.subr.bf16.mxu0 0
    %7561 = vmatpush1.bf16.msra.mxu0 0
    %7562 = vmatprep.subr.bf16.mxu0 0
    %7563 = vmatpush1.bf16.msra.mxu0 0
    %7564 = vmatprep.subr.bf16.mxu0 0
    %7565 = vmatpush1.bf16.msra.mxu0 0
    %7566 = vmatprep.subr.bf16.mxu0 0
    %7567 = vmatpush1.bf16.msra.mxu0 0
    %7568 = vmatprep.subr.bf16.mxu0 0
    %7569 = vmatpush1.bf16.msra.mxu0 0
    %7570 = vmatprep.subr.bf16.mxu0 0
    %7571 = vmatpush1.bf16.msra.mxu0 0
    %7572 = vmatprep.subr.bf16.mxu0 0
    %7573 = vmatpush1.bf16.msra.mxu0 %v7557
    %7574 = vmatprep.subr.bf16.mxu0 0
    %7575 = vmatpush1.bf16.msra.mxu0 %v7556
    %7576 = vmatprep.subr.bf16.mxu0 0
    %7577 = vmatpush2.bf16.msra.mxu0 0
    %7578 = vmatprep.subr.bf16.mxu0 0
    %7579 = vmatpush2.bf16.msra.mxu0 0
    %7580 = vmatprep.subr.bf16.mxu0 0
    %7581 = vmatpush2.bf16.msra.mxu0 0
    %7582 = vmatprep.subr.bf16.mxu0 0
    %7583 = vmatpush2.bf16.msra.mxu0 0
    %7584 = vmatprep.subr.bf16.mxu0 0
    %7585 = vmatpush2.bf16.msra.mxu0 0
    %7586 = vmatprep.subr.bf16.mxu0 0
    %7587 = vmatpush2.bf16.msra.mxu0 0
    %7588 = vmatprep.subr.bf16.mxu0 0
    %7589 = vmatpush2.bf16.msra.mxu0 0
    %7590 = vmatprep.subr.bf16.mxu0 0
    %7591 = vmatpush2.bf16.msra.mxu0 0
    %7592 = vmatprep.mubr.bf16.mxu0 0
    %7593 = vmatmul.mubr.bf16.gmra.mxu0 %v4719
    %v7594 = vpop.f32.mrf.mxu0
    %v7595 = vadd.f32 0.0, %v7594
    %v7596 = vpop.f32.mrf.mxu0
    %v7597 = vpop.f32.mrf.mxu0
    %v7598 = vadd.f32 0.0, %v7597
    %v7599 = vpop.f32.mrf.mxu0
    %7600 = vdwg.mxu0
    %v7601 = vpack.c.bf16 %v7484, %v7481
    %v7602 = vpack.c.bf16 %v7541, %v7538
    %v7604 = vsel %vm191, %v7601, 0
    %v7607 = vsel %vm191, %v7602, 0
    %7609 = vmatprep.subr.bf16.mxu0 0
    %7610 = vmatpush1.bf16.xpose.msra.mxu0 0
    %7611 = vmatprep.subr.bf16.mxu0 0
    %7612 = vmatpush1.bf16.xpose.msra.mxu0 0
    %7613 = vmatprep.subr.bf16.mxu0 0
    %7614 = vmatpush1.bf16.xpose.msra.mxu0 0
    %7615 = vmatprep.subr.bf16.mxu0 0
    %7616 = vmatpush1.bf16.xpose.msra.mxu0 0
    %7617 = vmatprep.subr.bf16.mxu0 0
    %7618 = vmatpush1.bf16.xpose.msra.mxu0 0
    %7619 = vmatprep.subr.bf16.mxu0 0
    %7620 = vmatpush1.bf16.xpose.msra.mxu0 0
    %7621 = vmatprep.subr.bf16.mxu0 0
    %7622 = vmatpush1.bf16.xpose.msra.mxu0 0
    %7623 = vmatprep.subr.bf16.mxu0 0
    %7624 = vmatpush1.bf16.xpose.msra.mxu0 %v7607
    %7625 = vmatprep.subr.bf16.mxu0 0
    %7626 = vmatpush2.bf16.xpose.msra.mxu0 0
    %7627 = vmatprep.subr.bf16.mxu0 0
    %7628 = vmatpush2.bf16.xpose.msra.mxu0 0
    %7629 = vmatprep.subr.bf16.mxu0 0
    %7630 = vmatpush2.bf16.xpose.msra.mxu0 0
    %7631 = vmatprep.subr.bf16.mxu0 0
    %7632 = vmatpush2.bf16.xpose.msra.mxu0 0
    %7633 = vmatprep.subr.bf16.mxu0 0
    %7634 = vmatpush2.bf16.xpose.msra.mxu0 0
    %7635 = vmatprep.subr.bf16.mxu0 0
    %7636 = vmatpush2.bf16.xpose.msra.mxu0 0
    %7637 = vmatprep.subr.bf16.mxu0 0
    %7638 = vmatpush2.bf16.xpose.msra.mxu0 0
    %7639 = vmatprep.subr.bf16.mxu0 0
    %7640 = vmatpush2.bf16.xpose.msra.mxu0 0
    %7641 = vmatprep.mubr.bf16.mxu0 0
    %7642 = vmatmul.mubr.bf16.gmra.mxu0 %v7604
    %v7643 = vpop.f32.mrf.mxu0
    %v7644 = vadd.f32 %v248, %v7643
    %v7645 = vpop.f32.mrf.mxu0
    %v7646 = vpop.f32.mrf.mxu0
    %v7647 = vadd.f32 %v249, %v7646
    %v7648 = vpop.f32.mrf.mxu0
    %7649 = vdwg.mxu0
    %v7650 = vsel %vm78, %v7644, -inf
    %7651 = vmax.xlane.f32.xlu0 %v7650
    %v7652 = vpop.xlane.xlu0 %7651
    %v7653 = vsel %vm78, %v7647, -inf
    %7654 = vmax.xlane.f32.xlu0 %v7653
    %v7655 = vpop.xlane.xlu0 %7654
    %v7656 = vsub.f32 %v7644, %v7652
    %v7657 = vsub.f32 %v7647, %v7655
    %v7658 = vmul.f32 %v7656, 1.442695
    %v7659 = vpow.pop %v7658
    %v7660 = vmul.f32 %v7657, 1.442695
    %v7661 = vpow.pop %v7660
    %v7662 = vsel %vm78, %v7659, 0.0
    %7663 = vadd.xlane.f32.xlu0 %v7662
    %v7664 = vpop.xlane.xlu0 %7663
    %v7665 = vsel %vm78, %v7661, 0.0
    %7666 = vadd.xlane.f32.xlu0 %v7665
    %v7667 = vpop.xlane.xlu0 %7666
    %v7668 = vrcp.pop %v7664
    %v7669 = vrcp.pop %v7667
    %v7670 = vmul.f32 %v7659, %v7668
    %v7671 = vmul.f32 %v7661, %v7669
    %v7672 = vpack.c.bf16 %v7671, %v7670
    %v7673 = vpack.c.bf16 %v7598, %v7595
    %v7674 = vld [vmem:[#allocation2 + $0x588] sm:$0xf]
    %v7675 = vld [vmem:[#allocation2 + $0x58c] sm:$0xf]
    %v7676 = vld [vmem:[#allocation2 + $0x590] sm:$0xf]
    %v7677 = vld [vmem:[#allocation2 + $0x594] sm:$0xf]
    %v7682 = vunpack.c.l.b16 %v7674
    %v7683 = vunpack.c.l.b16 %v7675
    %v7684 = vunpack.c.l.b16 %v7676
    %v7685 = vunpack.c.l.b16 %v7677
    %v7686 = vpack.c.b16 %v7683, %v7682
    %v7687 = vpack.c.b16 %v7685, %v7684
    %7690 = vmatprep.subr.bf16.mxu0 0
    %7691 = vmatpush1.bf16.msra.mxu0 0
    %7692 = vmatprep.subr.bf16.mxu0 0
    %7693 = vmatpush1.bf16.msra.mxu0 0
    %7694 = vmatprep.subr.bf16.mxu0 0
    %7695 = vmatpush1.bf16.msra.mxu0 0
    %7696 = vmatprep.subr.bf16.mxu0 0
    %7697 = vmatpush1.bf16.msra.mxu0 0
    %7698 = vmatprep.subr.bf16.mxu0 0
    %7699 = vmatpush1.bf16.msra.mxu0 0
    %7700 = vmatprep.subr.bf16.mxu0 0
    %7701 = vmatpush1.bf16.msra.mxu0 0
    %7702 = vmatprep.subr.bf16.mxu0 0
    %7703 = vmatpush1.bf16.msra.mxu0 %v7687
    %7704 = vmatprep.subr.bf16.mxu0 0
    %7705 = vmatpush1.bf16.msra.mxu0 %v7686
    %7706 = vmatprep.subr.bf16.mxu0 0
    %7707 = vmatpush2.bf16.msra.mxu0 0
    %7708 = vmatprep.subr.bf16.mxu0 0
    %7709 = vmatpush2.bf16.msra.mxu0 0
    %7710 = vmatprep.subr.bf16.mxu0 0
    %7711 = vmatpush2.bf16.msra.mxu0 0
    %7712 = vmatprep.subr.bf16.mxu0 0
    %7713 = vmatpush2.bf16.msra.mxu0 0
    %7714 = vmatprep.subr.bf16.mxu0 0
    %7715 = vmatpush2.bf16.msra.mxu0 0
    %7716 = vmatprep.subr.bf16.mxu0 0
    %7717 = vmatpush2.bf16.msra.mxu0 0
    %7718 = vmatprep.subr.bf16.mxu0 0
    %7719 = vmatpush2.bf16.msra.mxu0 0
    %7720 = vmatprep.subr.bf16.mxu0 0
    %7721 = vmatpush2.bf16.msra.mxu0 0
    %7722 = vmatprep.mubr.bf16.mxu0 0
    %7723 = vmatmul.mubr.bf16.gmra.mxu0 %v7444
    %v7724 = vpop.f32.mrf.mxu0
    %v7725 = vadd.f32 0.0, %v7724
    %v7726 = vpop.f32.mrf.mxu0
    %v7727 = vpop.f32.mrf.mxu0
    %v7728 = vadd.f32 0.0, %v7727
    %v7729 = vpop.f32.mrf.mxu0
    %7730 = vdwg.mxu0
    %v7731 = vld [vmem:[#allocation2 + $0x598] sm:$0xf]
    %v7732 = vld [vmem:[#allocation2 + $0x59c] sm:$0xf]
    %v7733 = vld [vmem:[#allocation2 + $0x5a0] sm:$0xf]
    %v7734 = vld [vmem:[#allocation2 + $0x5a4] sm:$0xf]
    %v7739 = vunpack.c.l.b16 %v7731
    %v7740 = vunpack.c.l.b16 %v7732
    %v7741 = vunpack.c.l.b16 %v7733
    %v7742 = vunpack.c.l.b16 %v7734
    %v7743 = vpack.c.b16 %v7740, %v7739
    %v7744 = vpack.c.b16 %v7742, %v7741
    %7747 = vmatprep.subr.bf16.mxu0 0
    %7748 = vmatpush1.bf16.msra.mxu0 0
    %7749 = vmatprep.subr.bf16.mxu0 0
    %7750 = vmatpush1.bf16.msra.mxu0 0
    %7751 = vmatprep.subr.bf16.mxu0 0
    %7752 = vmatpush1.bf16.msra.mxu0 0
    %7753 = vmatprep.subr.bf16.mxu0 0
    %7754 = vmatpush1.bf16.msra.mxu0 0
    %7755 = vmatprep.subr.bf16.mxu0 0
    %7756 = vmatpush1.bf16.msra.mxu0 0
    %7757 = vmatprep.subr.bf16.mxu0 0
    %7758 = vmatpush1.bf16.msra.mxu0 0
    %7759 = vmatprep.subr.bf16.mxu0 0
    %7760 = vmatpush1.bf16.msra.mxu0 %v7744
    %7761 = vmatprep.subr.bf16.mxu0 0
    %7762 = vmatpush1.bf16.msra.mxu0 %v7743
    %7763 = vmatprep.subr.bf16.mxu0 0
    %7764 = vmatpush2.bf16.msra.mxu0 0
    %7765 = vmatprep.subr.bf16.mxu0 0
    %7766 = vmatpush2.bf16.msra.mxu0 0
    %7767 = vmatprep.subr.bf16.mxu0 0
    %7768 = vmatpush2.bf16.msra.mxu0 0
    %7769 = vmatprep.subr.bf16.mxu0 0
    %7770 = vmatpush2.bf16.msra.mxu0 0
    %7771 = vmatprep.subr.bf16.mxu0 0
    %7772 = vmatpush2.bf16.msra.mxu0 0
    %7773 = vmatprep.subr.bf16.mxu0 0
    %7774 = vmatpush2.bf16.msra.mxu0 0
    %7775 = vmatprep.subr.bf16.mxu0 0
    %7776 = vmatpush2.bf16.msra.mxu0 0
    %7777 = vmatprep.subr.bf16.mxu0 0
    %7778 = vmatpush2.bf16.msra.mxu0 0
    %7779 = vmatprep.mubr.bf16.mxu0 0
    %7780 = vmatmul.mubr.bf16.gmra.mxu0 %v4719
    %v7781 = vpop.f32.mrf.mxu0
    %v7782 = vadd.f32 0.0, %v7781
    %v7783 = vpop.f32.mrf.mxu0
    %v7784 = vpop.f32.mrf.mxu0
    %v7785 = vadd.f32 0.0, %v7784
    %v7786 = vpop.f32.mrf.mxu0
    %7787 = vdwg.mxu0
    %v7788 = vld [vmem:[#allocation2 + $0x5a8] sm:$0xf]
    %v7789 = vld [vmem:[#allocation2 + $0x5ac] sm:$0xf]
    %v7790 = vld [vmem:[#allocation2 + $0x5b0] sm:$0xf]
    %v7791 = vld [vmem:[#allocation2 + $0x5b4] sm:$0xf]
    %v7796 = vunpack.c.l.b16 %v7788
    %v7797 = vunpack.c.l.b16 %v7789
    %v7798 = vunpack.c.l.b16 %v7790
    %v7799 = vunpack.c.l.b16 %v7791
    %v7800 = vpack.c.b16 %v7797, %v7796
    %v7801 = vpack.c.b16 %v7799, %v7798
    %7804 = vmatprep.subr.bf16.mxu0 0
    %7805 = vmatpush1.bf16.msra.mxu0 0
    %7806 = vmatprep.subr.bf16.mxu0 0
    %7807 = vmatpush1.bf16.msra.mxu0 0
    %7808 = vmatprep.subr.bf16.mxu0 0
    %7809 = vmatpush1.bf16.msra.mxu0 0
    %7810 = vmatprep.subr.bf16.mxu0 0
    %7811 = vmatpush1.bf16.msra.mxu0 0
    %7812 = vmatprep.subr.bf16.mxu0 0
    %7813 = vmatpush1.bf16.msra.mxu0 0
    %7814 = vmatprep.subr.bf16.mxu0 0
    %7815 = vmatpush1.bf16.msra.mxu0 0
    %7816 = vmatprep.subr.bf16.mxu0 0
    %7817 = vmatpush1.bf16.msra.mxu0 %v7801
    %7818 = vmatprep.subr.bf16.mxu0 0
    %7819 = vmatpush1.bf16.msra.mxu0 %v7800
    %7820 = vmatprep.subr.bf16.mxu0 0
    %7821 = vmatpush2.bf16.msra.mxu0 0
    %7822 = vmatprep.subr.bf16.mxu0 0
    %7823 = vmatpush2.bf16.msra.mxu0 0
    %7824 = vmatprep.subr.bf16.mxu0 0
    %7825 = vmatpush2.bf16.msra.mxu0 0
    %7826 = vmatprep.subr.bf16.mxu0 0
    %7827 = vmatpush2.bf16.msra.mxu0 0
    %7828 = vmatprep.subr.bf16.mxu0 0
    %7829 = vmatpush2.bf16.msra.mxu0 0
    %7830 = vmatprep.subr.bf16.mxu0 0
    %7831 = vmatpush2.bf16.msra.mxu0 0
    %7832 = vmatprep.subr.bf16.mxu0 0
    %7833 = vmatpush2.bf16.msra.mxu0 0
    %7834 = vmatprep.subr.bf16.mxu0 0
    %7835 = vmatpush2.bf16.msra.mxu0 0
    %7836 = vmatprep.mubr.bf16.mxu0 0
    %7837 = vmatmul.mubr.bf16.gmra.mxu0 %v4719
    %v7838 = vpop.f32.mrf.mxu0
    %v7839 = vadd.f32 0.0, %v7838
    %v7840 = vpop.f32.mrf.mxu0
    %v7841 = vpop.f32.mrf.mxu0
    %v7842 = vadd.f32 0.0, %v7841
    %v7843 = vpop.f32.mrf.mxu0
    %7844 = vdwg.mxu0
    %v7845 = vpack.c.bf16 %v7728, %v7725
    %v7846 = vpack.c.bf16 %v7785, %v7782
    %v7848 = vsel %vm191, %v7845, 0
    %v7851 = vsel %vm191, %v7846, 0
    %7853 = vmatprep.subr.bf16.mxu0 0
    %7854 = vmatpush1.bf16.xpose.msra.mxu0 0
    %7855 = vmatprep.subr.bf16.mxu0 0
    %7856 = vmatpush1.bf16.xpose.msra.mxu0 0
    %7857 = vmatprep.subr.bf16.mxu0 0
    %7858 = vmatpush1.bf16.xpose.msra.mxu0 0
    %7859 = vmatprep.subr.bf16.mxu0 0
    %7860 = vmatpush1.bf16.xpose.msra.mxu0 0
    %7861 = vmatprep.subr.bf16.mxu0 0
    %7862 = vmatpush1.bf16.xpose.msra.mxu0 0
    %7863 = vmatprep.subr.bf16.mxu0 0
    %7864 = vmatpush1.bf16.xpose.msra.mxu0 0
    %7865 = vmatprep.subr.bf16.mxu0 0
    %7866 = vmatpush1.bf16.xpose.msra.mxu0 0
    %7867 = vmatprep.subr.bf16.mxu0 0
    %7868 = vmatpush1.bf16.xpose.msra.mxu0 %v7851
    %7869 = vmatprep.subr.bf16.mxu0 0
    %7870 = vmatpush2.bf16.xpose.msra.mxu0 0
    %7871 = vmatprep.subr.bf16.mxu0 0
    %7872 = vmatpush2.bf16.xpose.msra.mxu0 0
    %7873 = vmatprep.subr.bf16.mxu0 0
    %7874 = vmatpush2.bf16.xpose.msra.mxu0 0
    %7875 = vmatprep.subr.bf16.mxu0 0
    %7876 = vmatpush2.bf16.xpose.msra.mxu0 0
    %7877 = vmatprep.subr.bf16.mxu0 0
    %7878 = vmatpush2.bf16.xpose.msra.mxu0 0
    %7879 = vmatprep.subr.bf16.mxu0 0
    %7880 = vmatpush2.bf16.xpose.msra.mxu0 0
    %7881 = vmatprep.subr.bf16.mxu0 0
    %7882 = vmatpush2.bf16.xpose.msra.mxu0 0
    %7883 = vmatprep.subr.bf16.mxu0 0
    %7884 = vmatpush2.bf16.xpose.msra.mxu0 0
    %7885 = vmatprep.mubr.bf16.mxu0 0
    %7886 = vmatmul.mubr.bf16.gmra.mxu0 %v7848
    %v7887 = vpop.f32.mrf.mxu0
    %v7888 = vadd.f32 %v248, %v7887
    %v7889 = vpop.f32.mrf.mxu0
    %v7890 = vpop.f32.mrf.mxu0
    %v7891 = vadd.f32 %v249, %v7890
    %v7892 = vpop.f32.mrf.mxu0
    %7893 = vdwg.mxu0
    %v7894 = vsel %vm78, %v7888, -inf
    %7895 = vmax.xlane.f32.xlu0 %v7894
    %v7896 = vpop.xlane.xlu0 %7895
    %v7897 = vsel %vm78, %v7891, -inf
    %7898 = vmax.xlane.f32.xlu0 %v7897
    %v7899 = vpop.xlane.xlu0 %7898
    %v7900 = vsub.f32 %v7888, %v7896
    %v7901 = vsub.f32 %v7891, %v7899
    %v7902 = vmul.f32 %v7900, 1.442695
    %v7903 = vpow.pop %v7902
    %v7904 = vmul.f32 %v7901, 1.442695
    %v7905 = vpow.pop %v7904
    %v7906 = vsel %vm78, %v7903, 0.0
    %7907 = vadd.xlane.f32.xlu0 %v7906
    %v7908 = vpop.xlane.xlu0 %7907
    %v7909 = vsel %vm78, %v7905, 0.0
    %7910 = vadd.xlane.f32.xlu0 %v7909
    %v7911 = vpop.xlane.xlu0 %7910
    %v7912 = vrcp.pop %v7908
    %v7913 = vrcp.pop %v7911
    %v7914 = vmul.f32 %v7903, %v7912
    %v7915 = vmul.f32 %v7905, %v7913
    %v7916 = vpack.c.bf16 %v7915, %v7914
    %v7917 = vpack.c.bf16 %v7842, %v7839
    %v7919 = vsel %vm78, %v7916, 0
    %7921 = vmatprep.subr.bf16.mxu0 0
    %7922 = vmatpush1.bf16.msra.mxu0 0
    %7923 = vmatprep.subr.bf16.mxu0 0
    %7924 = vmatpush1.bf16.msra.mxu0 0
    %7925 = vmatprep.subr.bf16.mxu0 0
    %7926 = vmatpush1.bf16.msra.mxu0 0
    %7927 = vmatprep.subr.bf16.mxu0 0
    %7928 = vmatpush1.bf16.msra.mxu0 0
    %7929 = vmatprep.subr.bf16.mxu0 0
    %7930 = vmatpush1.bf16.msra.mxu0 0
    %7931 = vmatprep.subr.bf16.mxu0 0
    %7932 = vmatpush1.bf16.msra.mxu0 0
    %7933 = vmatprep.subr.bf16.mxu0 0
    %7934 = vmatpush1.bf16.msra.mxu0 0
    %7935 = vmatprep.subr.bf16.mxu0 0
    %7936 = vmatpush1.bf16.msra.mxu0 %v7917
    %7937 = vmatprep.subr.bf16.mxu0 0
    %7938 = vmatpush2.bf16.msra.mxu0 0
    %7939 = vmatprep.subr.bf16.mxu0 0
    %7940 = vmatpush2.bf16.msra.mxu0 0
    %7941 = vmatprep.subr.bf16.mxu0 0
    %7942 = vmatpush2.bf16.msra.mxu0 0
    %7943 = vmatprep.subr.bf16.mxu0 0
    %7944 = vmatpush2.bf16.msra.mxu0 0
    %7945 = vmatprep.subr.bf16.mxu0 0
    %7946 = vmatpush2.bf16.msra.mxu0 0
    %7947 = vmatprep.subr.bf16.mxu0 0
    %7948 = vmatpush2.bf16.msra.mxu0 0
    %7949 = vmatprep.subr.bf16.mxu0 0
    %7950 = vmatpush2.bf16.msra.mxu0 0
    %7951 = vmatprep.subr.bf16.mxu0 0
    %7952 = vmatpush2.bf16.msra.mxu0 0
    %7953 = vmatprep.mubr.bf16.mxu0 0
    %7954 = vmatmul.mubr.bf16.gmra.mxu0 %v7919
    %v7955 = vpop.f32.mrf.mxu0
    %v7956 = vadd.f32 0.0, %v7955
    %v7957 = vpop.f32.mrf.mxu0
    %v7958 = vpop.f32.mrf.mxu0
    %v7959 = vadd.f32 0.0, %v7958
    %v7960 = vpop.f32.mrf.mxu0
    %7961 = vdwg.mxu0
    %v7963 = vsel %vm78, %v7672, 0
    %7965 = vmatprep.subr.bf16.mxu0 0
    %7966 = vmatpush1.bf16.msra.mxu0 0
    %7967 = vmatprep.subr.bf16.mxu0 0
    %7968 = vmatpush1.bf16.msra.mxu0 0
    %7969 = vmatprep.subr.bf16.mxu0 0
    %7970 = vmatpush1.bf16.msra.mxu0 0
    %7971 = vmatprep.subr.bf16.mxu0 0
    %7972 = vmatpush1.bf16.msra.mxu0 0
    %7973 = vmatprep.subr.bf16.mxu0 0
    %7974 = vmatpush1.bf16.msra.mxu0 0
    %7975 = vmatprep.subr.bf16.mxu0 0
    %7976 = vmatpush1.bf16.msra.mxu0 0
    %7977 = vmatprep.subr.bf16.mxu0 0
    %7978 = vmatpush1.bf16.msra.mxu0 0
    %7979 = vmatprep.subr.bf16.mxu0 0
    %7980 = vmatpush1.bf16.msra.mxu0 %v7673
    %7981 = vmatprep.subr.bf16.mxu0 0
    %7982 = vmatpush2.bf16.msra.mxu0 0
    %7983 = vmatprep.subr.bf16.mxu0 0
    %7984 = vmatpush2.bf16.msra.mxu0 0
    %7985 = vmatprep.subr.bf16.mxu0 0
    %7986 = vmatpush2.bf16.msra.mxu0 0
    %7987 = vmatprep.subr.bf16.mxu0 0
    %7988 = vmatpush2.bf16.msra.mxu0 0
    %7989 = vmatprep.subr.bf16.mxu0 0
    %7990 = vmatpush2.bf16.msra.mxu0 0
    %7991 = vmatprep.subr.bf16.mxu0 0
    %7992 = vmatpush2.bf16.msra.mxu0 0
    %7993 = vmatprep.subr.bf16.mxu0 0
    %7994 = vmatpush2.bf16.msra.mxu0 0
    %7995 = vmatprep.subr.bf16.mxu0 0
    %7996 = vmatpush2.bf16.msra.mxu0 0
    %7997 = vmatprep.mubr.bf16.mxu0 0
    %7998 = vmatmul.mubr.bf16.gmra.mxu0 %v7963
    %v7999 = vpop.f32.mrf.mxu0
    %v8000 = vadd.f32 %v7956, %v7999
    %v8001 = vpop.f32.mrf.mxu0
    %v8002 = vpop.f32.mrf.mxu0
    %v8003 = vadd.f32 %v7959, %v8002
    %v8004 = vpop.f32.mrf.mxu0
    %8005 = vdwg.mxu0
    %v8006 = vld [vmem:[#allocation2 + $0x5b8] sm:$0xf]
    %v8007 = vld [vmem:[#allocation2 + $0x5bc] sm:$0xf]
    %v8008 = vld [vmem:[#allocation2 + $0x5c0] sm:$0xf]
    %v8009 = vld [vmem:[#allocation2 + $0x5c4] sm:$0xf]
    %v8014 = vunpack.c.l.b16 %v8006
    %v8015 = vunpack.c.l.b16 %v8007
    %v8016 = vunpack.c.l.b16 %v8008
    %v8017 = vunpack.c.l.b16 %v8009
    %v8018 = vpack.c.b16 %v8015, %v8014
    %v8019 = vpack.c.b16 %v8017, %v8016
    %8022 = vmatprep.subr.bf16.mxu0 0
    %8023 = vmatpush1.bf16.msra.mxu0 0
    %8024 = vmatprep.subr.bf16.mxu0 0
    %8025 = vmatpush1.bf16.msra.mxu0 0
    %8026 = vmatprep.subr.bf16.mxu0 0
    %8027 = vmatpush1.bf16.msra.mxu0 0
    %8028 = vmatprep.subr.bf16.mxu0 0
    %8029 = vmatpush1.bf16.msra.mxu0 0
    %8030 = vmatprep.subr.bf16.mxu0 0
    %8031 = vmatpush1.bf16.msra.mxu0 0
    %8032 = vmatprep.subr.bf16.mxu0 0
    %8033 = vmatpush1.bf16.msra.mxu0 0
    %8034 = vmatprep.subr.bf16.mxu0 0
    %8035 = vmatpush1.bf16.msra.mxu0 %v8019
    %8036 = vmatprep.subr.bf16.mxu0 0
    %8037 = vmatpush1.bf16.msra.mxu0 %v8018
    %8038 = vmatprep.subr.bf16.mxu0 0
    %8039 = vmatpush2.bf16.msra.mxu0 0
    %8040 = vmatprep.subr.bf16.mxu0 0
    %8041 = vmatpush2.bf16.msra.mxu0 0
    %8042 = vmatprep.subr.bf16.mxu0 0
    %8043 = vmatpush2.bf16.msra.mxu0 0
    %8044 = vmatprep.subr.bf16.mxu0 0
    %8045 = vmatpush2.bf16.msra.mxu0 0
    %8046 = vmatprep.subr.bf16.mxu0 0
    %8047 = vmatpush2.bf16.msra.mxu0 0
    %8048 = vmatprep.subr.bf16.mxu0 0
    %8049 = vmatpush2.bf16.msra.mxu0 0
    %8050 = vmatprep.subr.bf16.mxu0 0
    %8051 = vmatpush2.bf16.msra.mxu0 0
    %8052 = vmatprep.subr.bf16.mxu0 0
    %8053 = vmatpush2.bf16.msra.mxu0 0
    %8054 = vmatprep.mubr.bf16.mxu0 0
    %8055 = vmatmul.mubr.bf16.gmra.mxu0 %v7444
    %v8056 = vpop.f32.mrf.mxu0
    %v8057 = vadd.f32 0.0, %v8056
    %v8058 = vpop.f32.mrf.mxu0
    %v8059 = vpop.f32.mrf.mxu0
    %v8060 = vadd.f32 0.0, %v8059
    %v8061 = vpop.f32.mrf.mxu0
    %8062 = vdwg.mxu0
    %v8063 = vld [vmem:[#allocation2 + $0x5c8] sm:$0xf]
    %v8064 = vld [vmem:[#allocation2 + $0x5cc] sm:$0xf]
    %v8065 = vld [vmem:[#allocation2 + $0x5d0] sm:$0xf]
    %v8066 = vld [vmem:[#allocation2 + $0x5d4] sm:$0xf]
    %v8071 = vunpack.c.l.b16 %v8063
    %v8072 = vunpack.c.l.b16 %v8064
    %v8073 = vunpack.c.l.b16 %v8065
    %v8074 = vunpack.c.l.b16 %v8066
    %v8075 = vpack.c.b16 %v8072, %v8071
    %v8076 = vpack.c.b16 %v8074, %v8073
    %8079 = vmatprep.subr.bf16.mxu0 0
    %8080 = vmatpush1.bf16.msra.mxu0 0
    %8081 = vmatprep.subr.bf16.mxu0 0
    %8082 = vmatpush1.bf16.msra.mxu0 0
    %8083 = vmatprep.subr.bf16.mxu0 0
    %8084 = vmatpush1.bf16.msra.mxu0 0
    %8085 = vmatprep.subr.bf16.mxu0 0
    %8086 = vmatpush1.bf16.msra.mxu0 0
    %8087 = vmatprep.subr.bf16.mxu0 0
    %8088 = vmatpush1.bf16.msra.mxu0 0
    %8089 = vmatprep.subr.bf16.mxu0 0
    %8090 = vmatpush1.bf16.msra.mxu0 0
    %8091 = vmatprep.subr.bf16.mxu0 0
    %8092 = vmatpush1.bf16.msra.mxu0 %v8076
    %8093 = vmatprep.subr.bf16.mxu0 0
    %8094 = vmatpush1.bf16.msra.mxu0 %v8075
    %8095 = vmatprep.subr.bf16.mxu0 0
    %8096 = vmatpush2.bf16.msra.mxu0 0
    %8097 = vmatprep.subr.bf16.mxu0 0
    %8098 = vmatpush2.bf16.msra.mxu0 0
    %8099 = vmatprep.subr.bf16.mxu0 0
    %8100 = vmatpush2.bf16.msra.mxu0 0
    %8101 = vmatprep.subr.bf16.mxu0 0
    %8102 = vmatpush2.bf16.msra.mxu0 0
    %8103 = vmatprep.subr.bf16.mxu0 0
    %8104 = vmatpush2.bf16.msra.mxu0 0
    %8105 = vmatprep.subr.bf16.mxu0 0
    %8106 = vmatpush2.bf16.msra.mxu0 0
    %8107 = vmatprep.subr.bf16.mxu0 0
    %8108 = vmatpush2.bf16.msra.mxu0 0
    %8109 = vmatprep.subr.bf16.mxu0 0
    %8110 = vmatpush2.bf16.msra.mxu0 0
    %8111 = vmatprep.mubr.bf16.mxu0 0
    %8112 = vmatmul.mubr.bf16.gmra.mxu0 %v4719
    %v8113 = vpop.f32.mrf.mxu0
    %v8114 = vadd.f32 0.0, %v8113
    %v8115 = vpop.f32.mrf.mxu0
    %v8116 = vpop.f32.mrf.mxu0
    %v8117 = vadd.f32 0.0, %v8116
    %v8118 = vpop.f32.mrf.mxu0
    %8119 = vdwg.mxu0
    %v8120 = vld [vmem:[#allocation2 + $0x5d8] sm:$0xf]
    %v8121 = vld [vmem:[#allocation2 + $0x5dc] sm:$0xf]
    %v8122 = vld [vmem:[#allocation2 + $0x5e0] sm:$0xf]
    %v8123 = vld [vmem:[#allocation2 + $0x5e4] sm:$0xf]
    %v8128 = vunpack.c.l.b16 %v8120
    %v8129 = vunpack.c.l.b16 %v8121
    %v8130 = vunpack.c.l.b16 %v8122
    %v8131 = vunpack.c.l.b16 %v8123
    %v8132 = vpack.c.b16 %v8129, %v8128
    %v8133 = vpack.c.b16 %v8131, %v8130
    %8136 = vmatprep.subr.bf16.mxu0 0
    %8137 = vmatpush1.bf16.msra.mxu0 0
    %8138 = vmatprep.subr.bf16.mxu0 0
    %8139 = vmatpush1.bf16.msra.mxu0 0
    %8140 = vmatprep.subr.bf16.mxu0 0
    %8141 = vmatpush1.bf16.msra.mxu0 0
    %8142 = vmatprep.subr.bf16.mxu0 0
    %8143 = vmatpush1.bf16.msra.mxu0 0
    %8144 = vmatprep.subr.bf16.mxu0 0
    %8145 = vmatpush1.bf16.msra.mxu0 0
    %8146 = vmatprep.subr.bf16.mxu0 0
    %8147 = vmatpush1.bf16.msra.mxu0 0
    %8148 = vmatprep.subr.bf16.mxu0 0
    %8149 = vmatpush1.bf16.msra.mxu0 %v8133
    %8150 = vmatprep.subr.bf16.mxu0 0
    %8151 = vmatpush1.bf16.msra.mxu0 %v8132
    %8152 = vmatprep.subr.bf16.mxu0 0
    %8153 = vmatpush2.bf16.msra.mxu0 0
    %8154 = vmatprep.subr.bf16.mxu0 0
    %8155 = vmatpush2.bf16.msra.mxu0 0
    %8156 = vmatprep.subr.bf16.mxu0 0
    %8157 = vmatpush2.bf16.msra.mxu0 0
    %8158 = vmatprep.subr.bf16.mxu0 0
    %8159 = vmatpush2.bf16.msra.mxu0 0
    %8160 = vmatprep.subr.bf16.mxu0 0
    %8161 = vmatpush2.bf16.msra.mxu0 0
    %8162 = vmatprep.subr.bf16.mxu0 0
    %8163 = vmatpush2.bf16.msra.mxu0 0
    %8164 = vmatprep.subr.bf16.mxu0 0
    %8165 = vmatpush2.bf16.msra.mxu0 0
    %8166 = vmatprep.subr.bf16.mxu0 0
    %8167 = vmatpush2.bf16.msra.mxu0 0
    %8168 = vmatprep.mubr.bf16.mxu0 0
    %8169 = vmatmul.mubr.bf16.gmra.mxu0 %v4719
    %v8170 = vpop.f32.mrf.mxu0
    %v8171 = vadd.f32 0.0, %v8170
    %v8172 = vpop.f32.mrf.mxu0
    %v8173 = vpop.f32.mrf.mxu0
    %v8174 = vadd.f32 0.0, %v8173
    %v8175 = vpop.f32.mrf.mxu0
    %8176 = vdwg.mxu0
    %v8177 = vpack.c.bf16 %v8060, %v8057
    %v8178 = vpack.c.bf16 %v8117, %v8114
    %v8180 = vsel %vm191, %v8177, 0
    %v8183 = vsel %vm191, %v8178, 0
    %8185 = vmatprep.subr.bf16.mxu0 0
    %8186 = vmatpush1.bf16.xpose.msra.mxu0 0
    %8187 = vmatprep.subr.bf16.mxu0 0
    %8188 = vmatpush1.bf16.xpose.msra.mxu0 0
    %8189 = vmatprep.subr.bf16.mxu0 0
    %8190 = vmatpush1.bf16.xpose.msra.mxu0 0
    %8191 = vmatprep.subr.bf16.mxu0 0
    %8192 = vmatpush1.bf16.xpose.msra.mxu0 0
    %8193 = vmatprep.subr.bf16.mxu0 0
    %8194 = vmatpush1.bf16.xpose.msra.mxu0 0
    %8195 = vmatprep.subr.bf16.mxu0 0
    %8196 = vmatpush1.bf16.xpose.msra.mxu0 0
    %8197 = vmatprep.subr.bf16.mxu0 0
    %8198 = vmatpush1.bf16.xpose.msra.mxu0 0
    %8199 = vmatprep.subr.bf16.mxu0 0
    %8200 = vmatpush1.bf16.xpose.msra.mxu0 %v8183
    %8201 = vmatprep.subr.bf16.mxu0 0
    %8202 = vmatpush2.bf16.xpose.msra.mxu0 0
    %8203 = vmatprep.subr.bf16.mxu0 0
    %8204 = vmatpush2.bf16.xpose.msra.mxu0 0
    %8205 = vmatprep.subr.bf16.mxu0 0
    %8206 = vmatpush2.bf16.xpose.msra.mxu0 0
    %8207 = vmatprep.subr.bf16.mxu0 0
    %8208 = vmatpush2.bf16.xpose.msra.mxu0 0
    %8209 = vmatprep.subr.bf16.mxu0 0
    %8210 = vmatpush2.bf16.xpose.msra.mxu0 0
    %8211 = vmatprep.subr.bf16.mxu0 0
    %8212 = vmatpush2.bf16.xpose.msra.mxu0 0
    %8213 = vmatprep.subr.bf16.mxu0 0
    %8214 = vmatpush2.bf16.xpose.msra.mxu0 0
    %8215 = vmatprep.subr.bf16.mxu0 0
    %8216 = vmatpush2.bf16.xpose.msra.mxu0 0
    %8217 = vmatprep.mubr.bf16.mxu0 0
    %8218 = vmatmul.mubr.bf16.gmra.mxu0 %v8180
    %v8219 = vpop.f32.mrf.mxu0
    %v8220 = vadd.f32 %v248, %v8219
    %v8221 = vpop.f32.mrf.mxu0
    %v8222 = vpop.f32.mrf.mxu0
    %v8223 = vadd.f32 %v249, %v8222
    %v8224 = vpop.f32.mrf.mxu0
    %8225 = vdwg.mxu0
    %v8226 = vsel %vm78, %v8220, -inf
    %8227 = vmax.xlane.f32.xlu0 %v8226
    %v8228 = vpop.xlane.xlu0 %8227
    %v8229 = vsel %vm78, %v8223, -inf
    %8230 = vmax.xlane.f32.xlu0 %v8229
    %v8231 = vpop.xlane.xlu0 %8230
    %v8232 = vsub.f32 %v8220, %v8228
    %v8233 = vsub.f32 %v8223, %v8231
    %v8234 = vmul.f32 %v8232, 1.442695
    %v8235 = vpow.pop %v8234
    %v8236 = vmul.f32 %v8233, 1.442695
    %v8237 = vpow.pop %v8236
    %v8238 = vsel %vm78, %v8235, 0.0
    %8239 = vadd.xlane.f32.xlu0 %v8238
    %v8240 = vpop.xlane.xlu0 %8239
    %v8241 = vsel %vm78, %v8237, 0.0
    %8242 = vadd.xlane.f32.xlu0 %v8241
    %v8243 = vpop.xlane.xlu0 %8242
    %v8244 = vrcp.pop %v8240
    %v8245 = vrcp.pop %v8243
    %v8246 = vmul.f32 %v8235, %v8244
    %v8247 = vmul.f32 %v8237, %v8245
    %v8248 = vpack.c.bf16 %v8247, %v8246
    %v8249 = vpack.c.bf16 %v8174, %v8171
    %v8251 = vsel %vm78, %v8248, 0
    %8253 = vmatprep.subr.bf16.mxu0 0
    %8254 = vmatpush1.bf16.msra.mxu0 0
    %8255 = vmatprep.subr.bf16.mxu0 0
    %8256 = vmatpush1.bf16.msra.mxu0 0
    %8257 = vmatprep.subr.bf16.mxu0 0
    %8258 = vmatpush1.bf16.msra.mxu0 0
    %8259 = vmatprep.subr.bf16.mxu0 0
    %8260 = vmatpush1.bf16.msra.mxu0 0
    %8261 = vmatprep.subr.bf16.mxu0 0
    %8262 = vmatpush1.bf16.msra.mxu0 0
    %8263 = vmatprep.subr.bf16.mxu0 0
    %8264 = vmatpush1.bf16.msra.mxu0 0
    %8265 = vmatprep.subr.bf16.mxu0 0
    %8266 = vmatpush1.bf16.msra.mxu0 0
    %8267 = vmatprep.subr.bf16.mxu0 0
    %8268 = vmatpush1.bf16.msra.mxu0 %v8249
    %8269 = vmatprep.subr.bf16.mxu0 0
    %8270 = vmatpush2.bf16.msra.mxu0 0
    %8271 = vmatprep.subr.bf16.mxu0 0
    %8272 = vmatpush2.bf16.msra.mxu0 0
    %8273 = vmatprep.subr.bf16.mxu0 0
    %8274 = vmatpush2.bf16.msra.mxu0 0
    %8275 = vmatprep.subr.bf16.mxu0 0
    %8276 = vmatpush2.bf16.msra.mxu0 0
    %8277 = vmatprep.subr.bf16.mxu0 0
    %8278 = vmatpush2.bf16.msra.mxu0 0
    %8279 = vmatprep.subr.bf16.mxu0 0
    %8280 = vmatpush2.bf16.msra.mxu0 0
    %8281 = vmatprep.subr.bf16.mxu0 0
    %8282 = vmatpush2.bf16.msra.mxu0 0
    %8283 = vmatprep.subr.bf16.mxu0 0
    %8284 = vmatpush2.bf16.msra.mxu0 0
    %8285 = vmatprep.mubr.bf16.mxu0 0
    %8286 = vmatmul.mubr.bf16.gmra.mxu0 %v8251
    %v8287 = vpop.f32.mrf.mxu0
    %v8288 = vadd.f32 0.0, %v8287
    %v8289 = vpop.f32.mrf.mxu0
    %v8290 = vpop.f32.mrf.mxu0
    %v8291 = vadd.f32 0.0, %v8290
    %v8292 = vpop.f32.mrf.mxu0
    %8293 = vdwg.mxu0
    %v8294 = vadd.f32 %v8000, %v8288
    %v8295 = vadd.f32 %v8003, %v8291
    %v8296 = vld [vmem:[#allocation2 + $0x5e8] sm:$0xf]
    %v8297 = vld [vmem:[#allocation2 + $0x5ec] sm:$0xf]
    %v8298 = vld [vmem:[#allocation2 + $0x5f0] sm:$0xf]
    %v8299 = vld [vmem:[#allocation2 + $0x5f4] sm:$0xf]
    %v8304 = vunpack.c.l.b16 %v8296
    %v8305 = vunpack.c.l.b16 %v8297
    %v8306 = vunpack.c.l.b16 %v8298
    %v8307 = vunpack.c.l.b16 %v8299
    %v8308 = vpack.c.b16 %v8305, %v8304
    %v8309 = vpack.c.b16 %v8307, %v8306
    %8312 = vmatprep.subr.bf16.mxu0 0
    %8313 = vmatpush1.bf16.msra.mxu0 0
    %8314 = vmatprep.subr.bf16.mxu0 0
    %8315 = vmatpush1.bf16.msra.mxu0 0
    %8316 = vmatprep.subr.bf16.mxu0 0
    %8317 = vmatpush1.bf16.msra.mxu0 0
    %8318 = vmatprep.subr.bf16.mxu0 0
    %8319 = vmatpush1.bf16.msra.mxu0 0
    %8320 = vmatprep.subr.bf16.mxu0 0
    %8321 = vmatpush1.bf16.msra.mxu0 0
    %8322 = vmatprep.subr.bf16.mxu0 0
    %8323 = vmatpush1.bf16.msra.mxu0 0
    %8324 = vmatprep.subr.bf16.mxu0 0
    %8325 = vmatpush1.bf16.msra.mxu0 %v8309
    %8326 = vmatprep.subr.bf16.mxu0 0
    %8327 = vmatpush1.bf16.msra.mxu0 %v8308
    %8328 = vmatprep.subr.bf16.mxu0 0
    %8329 = vmatpush2.bf16.msra.mxu0 0
    %8330 = vmatprep.subr.bf16.mxu0 0
    %8331 = vmatpush2.bf16.msra.mxu0 0
    %8332 = vmatprep.subr.bf16.mxu0 0
    %8333 = vmatpush2.bf16.msra.mxu0 0
    %8334 = vmatprep.subr.bf16.mxu0 0
    %8335 = vmatpush2.bf16.msra.mxu0 0
    %8336 = vmatprep.subr.bf16.mxu0 0
    %8337 = vmatpush2.bf16.msra.mxu0 0
    %8338 = vmatprep.subr.bf16.mxu0 0
    %8339 = vmatpush2.bf16.msra.mxu0 0
    %8340 = vmatprep.subr.bf16.mxu0 0
    %8341 = vmatpush2.bf16.msra.mxu0 0
    %8342 = vmatprep.subr.bf16.mxu0 0
    %8343 = vmatpush2.bf16.msra.mxu0 0
    %8344 = vmatprep.mubr.bf16.mxu0 0
    %8345 = vmatmul.mubr.bf16.gmra.mxu0 %v7444
    %v8346 = vpop.f32.mrf.mxu0
    %v8347 = vadd.f32 0.0, %v8346
    %v8348 = vpop.f32.mrf.mxu0
    %v8349 = vpop.f32.mrf.mxu0
    %v8350 = vadd.f32 0.0, %v8349
    %v8351 = vpop.f32.mrf.mxu0
    %8352 = vdwg.mxu0
    %v8353 = vld [vmem:[#allocation2 + $0x5f8] sm:$0xf]
    %v8354 = vld [vmem:[#allocation2 + $0x5fc] sm:$0xf]
    %v8355 = vld [vmem:[#allocation2 + $0x600] sm:$0xf]
    %v8356 = vld [vmem:[#allocation2 + $0x604] sm:$0xf]
    %v8361 = vunpack.c.l.b16 %v8353
    %v8362 = vunpack.c.l.b16 %v8354
    %v8363 = vunpack.c.l.b16 %v8355
    %v8364 = vunpack.c.l.b16 %v8356
    %v8365 = vpack.c.b16 %v8362, %v8361
    %v8366 = vpack.c.b16 %v8364, %v8363
    %8369 = vmatprep.subr.bf16.mxu0 0
    %8370 = vmatpush1.bf16.msra.mxu0 0
    %8371 = vmatprep.subr.bf16.mxu0 0
    %8372 = vmatpush1.bf16.msra.mxu0 0
    %8373 = vmatprep.subr.bf16.mxu0 0
    %8374 = vmatpush1.bf16.msra.mxu0 0
    %8375 = vmatprep.subr.bf16.mxu0 0
    %8376 = vmatpush1.bf16.msra.mxu0 0
    %8377 = vmatprep.subr.bf16.mxu0 0
    %8378 = vmatpush1.bf16.msra.mxu0 0
    %8379 = vmatprep.subr.bf16.mxu0 0
    %8380 = vmatpush1.bf16.msra.mxu0 0
    %8381 = vmatprep.subr.bf16.mxu0 0
    %8382 = vmatpush1.bf16.msra.mxu0 %v8366
    %8383 = vmatprep.subr.bf16.mxu0 0
    %8384 = vmatpush1.bf16.msra.mxu0 %v8365
    %8385 = vmatprep.subr.bf16.mxu0 0
    %8386 = vmatpush2.bf16.msra.mxu0 0
    %8387 = vmatprep.subr.bf16.mxu0 0
    %8388 = vmatpush2.bf16.msra.mxu0 0
    %8389 = vmatprep.subr.bf16.mxu0 0
    %8390 = vmatpush2.bf16.msra.mxu0 0
    %8391 = vmatprep.subr.bf16.mxu0 0
    %8392 = vmatpush2.bf16.msra.mxu0 0
    %8393 = vmatprep.subr.bf16.mxu0 0
    %8394 = vmatpush2.bf16.msra.mxu0 0
    %8395 = vmatprep.subr.bf16.mxu0 0
    %8396 = vmatpush2.bf16.msra.mxu0 0
    %8397 = vmatprep.subr.bf16.mxu0 0
    %8398 = vmatpush2.bf16.msra.mxu0 0
    %8399 = vmatprep.subr.bf16.mxu0 0
    %8400 = vmatpush2.bf16.msra.mxu0 0
    %8401 = vmatprep.mubr.bf16.mxu0 0
    %8402 = vmatmul.mubr.bf16.gmra.mxu0 %v4719
    %v8403 = vpop.f32.mrf.mxu0
    %v8404 = vadd.f32 0.0, %v8403
    %v8405 = vpop.f32.mrf.mxu0
    %v8406 = vpop.f32.mrf.mxu0
    %v8407 = vadd.f32 0.0, %v8406
    %v8408 = vpop.f32.mrf.mxu0
    %8409 = vdwg.mxu0
    %v8410 = vld [vmem:[#allocation2 + $0x608] sm:$0xf]
    %v8411 = vld [vmem:[#allocation2 + $0x60c] sm:$0xf]
    %v8412 = vld [vmem:[#allocation2 + $0x610] sm:$0xf]
    %v8413 = vld [vmem:[#allocation2 + $0x614] sm:$0xf]
    %v8418 = vunpack.c.l.b16 %v8410
    %v8419 = vunpack.c.l.b16 %v8411
    %v8420 = vunpack.c.l.b16 %v8412
    %v8421 = vunpack.c.l.b16 %v8413
    %v8422 = vpack.c.b16 %v8419, %v8418
    %v8423 = vpack.c.b16 %v8421, %v8420
    %8426 = vmatprep.subr.bf16.mxu0 0
    %8427 = vmatpush1.bf16.msra.mxu0 0
    %8428 = vmatprep.subr.bf16.mxu0 0
    %8429 = vmatpush1.bf16.msra.mxu0 0
    %8430 = vmatprep.subr.bf16.mxu0 0
    %8431 = vmatpush1.bf16.msra.mxu0 0
    %8432 = vmatprep.subr.bf16.mxu0 0
    %8433 = vmatpush1.bf16.msra.mxu0 0
    %8434 = vmatprep.subr.bf16.mxu0 0
    %8435 = vmatpush1.bf16.msra.mxu0 0
    %8436 = vmatprep.subr.bf16.mxu0 0
    %8437 = vmatpush1.bf16.msra.mxu0 0
    %8438 = vmatprep.subr.bf16.mxu0 0
    %8439 = vmatpush1.bf16.msra.mxu0 %v8423
    %8440 = vmatprep.subr.bf16.mxu0 0
    %8441 = vmatpush1.bf16.msra.mxu0 %v8422
    %8442 = vmatprep.subr.bf16.mxu0 0
    %8443 = vmatpush2.bf16.msra.mxu0 0
    %8444 = vmatprep.subr.bf16.mxu0 0
    %8445 = vmatpush2.bf16.msra.mxu0 0
    %8446 = vmatprep.subr.bf16.mxu0 0
    %8447 = vmatpush2.bf16.msra.mxu0 0
    %8448 = vmatprep.subr.bf16.mxu0 0
    %8449 = vmatpush2.bf16.msra.mxu0 0
    %8450 = vmatprep.subr.bf16.mxu0 0
    %8451 = vmatpush2.bf16.msra.mxu0 0
    %8452 = vmatprep.subr.bf16.mxu0 0
    %8453 = vmatpush2.bf16.msra.mxu0 0
    %8454 = vmatprep.subr.bf16.mxu0 0
    %8455 = vmatpush2.bf16.msra.mxu0 0
    %8456 = vmatprep.subr.bf16.mxu0 0
    %8457 = vmatpush2.bf16.msra.mxu0 0
    %8458 = vmatprep.mubr.bf16.mxu0 0
    %8459 = vmatmul.mubr.bf16.gmra.mxu0 %v4719
    %v8460 = vpop.f32.mrf.mxu0
    %v8461 = vadd.f32 0.0, %v8460
    %v8462 = vpop.f32.mrf.mxu0
    %v8463 = vpop.f32.mrf.mxu0
    %v8464 = vadd.f32 0.0, %v8463
    %v8465 = vpop.f32.mrf.mxu0
    %8466 = vdwg.mxu0
    %v8467 = vpack.c.bf16 %v8350, %v8347
    %v8468 = vpack.c.bf16 %v8407, %v8404
    %v8470 = vsel %vm191, %v8467, 0
    %v8473 = vsel %vm191, %v8468, 0
    %8475 = vmatprep.subr.bf16.mxu0 0
    %8476 = vmatpush1.bf16.xpose.msra.mxu0 0
    %8477 = vmatprep.subr.bf16.mxu0 0
    %8478 = vmatpush1.bf16.xpose.msra.mxu0 0
    %8479 = vmatprep.subr.bf16.mxu0 0
    %8480 = vmatpush1.bf16.xpose.msra.mxu0 0
    %8481 = vmatprep.subr.bf16.mxu0 0
    %8482 = vmatpush1.bf16.xpose.msra.mxu0 0
    %8483 = vmatprep.subr.bf16.mxu0 0
    %8484 = vmatpush1.bf16.xpose.msra.mxu0 0
    %8485 = vmatprep.subr.bf16.mxu0 0
    %8486 = vmatpush1.bf16.xpose.msra.mxu0 0
    %8487 = vmatprep.subr.bf16.mxu0 0
    %8488 = vmatpush1.bf16.xpose.msra.mxu0 0
    %8489 = vmatprep.subr.bf16.mxu0 0
    %8490 = vmatpush1.bf16.xpose.msra.mxu0 %v8473
    %8491 = vmatprep.subr.bf16.mxu0 0
    %8492 = vmatpush2.bf16.xpose.msra.mxu0 0
    %8493 = vmatprep.subr.bf16.mxu0 0
    %8494 = vmatpush2.bf16.xpose.msra.mxu0 0
    %8495 = vmatprep.subr.bf16.mxu0 0
    %8496 = vmatpush2.bf16.xpose.msra.mxu0 0
    %8497 = vmatprep.subr.bf16.mxu0 0
    %8498 = vmatpush2.bf16.xpose.msra.mxu0 0
    %8499 = vmatprep.subr.bf16.mxu0 0
    %8500 = vmatpush2.bf16.xpose.msra.mxu0 0
    %8501 = vmatprep.subr.bf16.mxu0 0
    %8502 = vmatpush2.bf16.xpose.msra.mxu0 0
    %8503 = vmatprep.subr.bf16.mxu0 0
    %8504 = vmatpush2.bf16.xpose.msra.mxu0 0
    %8505 = vmatprep.subr.bf16.mxu0 0
    %8506 = vmatpush2.bf16.xpose.msra.mxu0 0
    %8507 = vmatprep.mubr.bf16.mxu0 0
    %8508 = vmatmul.mubr.bf16.gmra.mxu0 %v8470
    %v8509 = vpop.f32.mrf.mxu0
    %v8510 = vadd.f32 %v248, %v8509
    %v8511 = vpop.f32.mrf.mxu0
    %v8512 = vpop.f32.mrf.mxu0
    %v8513 = vadd.f32 %v249, %v8512
    %v8514 = vpop.f32.mrf.mxu0
    %8515 = vdwg.mxu0
    %v8516 = vsel %vm78, %v8510, -inf
    %8517 = vmax.xlane.f32.xlu0 %v8516
    %v8518 = vpop.xlane.xlu0 %8517
    %v8519 = vsel %vm78, %v8513, -inf
    %8520 = vmax.xlane.f32.xlu0 %v8519
    %v8521 = vpop.xlane.xlu0 %8520
    %v8522 = vsub.f32 %v8510, %v8518
    %v8523 = vsub.f32 %v8513, %v8521
    %v8524 = vmul.f32 %v8522, 1.442695
    %v8525 = vpow.pop %v8524
    %v8526 = vmul.f32 %v8523, 1.442695
    %v8527 = vpow.pop %v8526
    %v8528 = vsel %vm78, %v8525, 0.0
    %8529 = vadd.xlane.f32.xlu0 %v8528
    %v8530 = vpop.xlane.xlu0 %8529
    %v8531 = vsel %vm78, %v8527, 0.0
    %8532 = vadd.xlane.f32.xlu0 %v8531
    %v8533 = vpop.xlane.xlu0 %8532
    %v8534 = vrcp.pop %v8530
    %v8535 = vrcp.pop %v8533
    %v8536 = vmul.f32 %v8525, %v8534
    %v8537 = vmul.f32 %v8527, %v8535
    %v8538 = vpack.c.bf16 %v8537, %v8536
    %v8539 = vpack.c.bf16 %v8464, %v8461
    %v8541 = vsel %vm78, %v8538, 0
    %8543 = vmatprep.subr.bf16.mxu0 0
    %8544 = vmatpush1.bf16.msra.mxu0 0
    %8545 = vmatprep.subr.bf16.mxu0 0
    %8546 = vmatpush1.bf16.msra.mxu0 0
    %8547 = vmatprep.subr.bf16.mxu0 0
    %8548 = vmatpush1.bf16.msra.mxu0 0
    %8549 = vmatprep.subr.bf16.mxu0 0
    %8550 = vmatpush1.bf16.msra.mxu0 0
    %8551 = vmatprep.subr.bf16.mxu0 0
    %8552 = vmatpush1.bf16.msra.mxu0 0
    %8553 = vmatprep.subr.bf16.mxu0 0
    %8554 = vmatpush1.bf16.msra.mxu0 0
    %8555 = vmatprep.subr.bf16.mxu0 0
    %8556 = vmatpush1.bf16.msra.mxu0 0
    %8557 = vmatprep.subr.bf16.mxu0 0
    %8558 = vmatpush1.bf16.msra.mxu0 %v8539
    %8559 = vmatprep.subr.bf16.mxu0 0
    %8560 = vmatpush2.bf16.msra.mxu0 0
    %8561 = vmatprep.subr.bf16.mxu0 0
    %8562 = vmatpush2.bf16.msra.mxu0 0
    %8563 = vmatprep.subr.bf16.mxu0 0
    %8564 = vmatpush2.bf16.msra.mxu0 0
    %8565 = vmatprep.subr.bf16.mxu0 0
    %8566 = vmatpush2.bf16.msra.mxu0 0
    %8567 = vmatprep.subr.bf16.mxu0 0
    %8568 = vmatpush2.bf16.msra.mxu0 0
    %8569 = vmatprep.subr.bf16.mxu0 0
    %8570 = vmatpush2.bf16.msra.mxu0 0
    %8571 = vmatprep.subr.bf16.mxu0 0
    %8572 = vmatpush2.bf16.msra.mxu0 0
    %8573 = vmatprep.subr.bf16.mxu0 0
    %8574 = vmatpush2.bf16.msra.mxu0 0
    %8575 = vmatprep.mubr.bf16.mxu0 0
    %8576 = vmatmul.mubr.bf16.gmra.mxu0 %v8541
    %v8577 = vpop.f32.mrf.mxu0
    %v8578 = vadd.f32 0.0, %v8577
    %v8579 = vpop.f32.mrf.mxu0
    %v8580 = vpop.f32.mrf.mxu0
    %v8581 = vadd.f32 0.0, %v8580
    %v8582 = vpop.f32.mrf.mxu0
    %8583 = vdwg.mxu0
    %v8584 = vadd.f32 %v8294, %v8578
    %v8585 = vadd.f32 %v8295, %v8581
    %v8586 = vpack.c.bf16 %v8585, %v8584
    %v8587 = vld [vmem:[#allocation2 + $0x618] sm:$0xf]
    %v8588 = vld [vmem:[#allocation2 + $0x61c] sm:$0xf]
    %v8589 = vld [vmem:[#allocation2 + $0x620] sm:$0xf]
    %v8590 = vld [vmem:[#allocation2 + $0x624] sm:$0xf]
    %v8591 = vld [vmem:[#allocation5 + $0x128] sm:$0x1]
    %v8592 = vlaneseq
    %v8593 = vshrl.u32 %v8592, 7
    %v8594 = vsub.s32 0, %v8593
    %v8595 = vrot.slane %v8591, %v8594
    %v8600 = vunpack.c.l.b16 %v8587
    %v8601 = vunpack.c.l.b16 %v8588
    %v8602 = vunpack.c.l.b16 %v8589
    %v8603 = vunpack.c.l.b16 %v8590
    %v8604 = vpack.c.b16 %v8601, %v8600
    %v8605 = vpack.c.b16 %v8603, %v8602
    %v8609 = vsel %vm262, %v8586, 0
    %8611 = vmatprep.subr.bf16.mxu0 0
    %8612 = vmatpush1.bf16.msra.mxu0 0
    %8613 = vmatprep.subr.bf16.mxu0 0
    %8614 = vmatpush1.bf16.msra.mxu0 0
    %8615 = vmatprep.subr.bf16.mxu0 0
    %8616 = vmatpush1.bf16.msra.mxu0 0
    %8617 = vmatprep.subr.bf16.mxu0 0
    %8618 = vmatpush1.bf16.msra.mxu0 0
    %8619 = vmatprep.subr.bf16.mxu0 0
    %8620 = vmatpush1.bf16.msra.mxu0 0
    %8621 = vmatprep.subr.bf16.mxu0 0
    %8622 = vmatpush1.bf16.msra.mxu0 0
    %8623 = vmatprep.subr.bf16.mxu0 0
    %8624 = vmatpush1.bf16.msra.mxu0 %v8605
    %8625 = vmatprep.subr.bf16.mxu0 0
    %8626 = vmatpush1.bf16.msra.mxu0 %v8604
    %8627 = vmatprep.subr.bf16.mxu0 0
    %8628 = vmatpush2.bf16.msra.mxu0 0
    %8629 = vmatprep.subr.bf16.mxu0 0
    %8630 = vmatpush2.bf16.msra.mxu0 0
    %8631 = vmatprep.subr.bf16.mxu0 0
    %8632 = vmatpush2.bf16.msra.mxu0 0
    %8633 = vmatprep.subr.bf16.mxu0 0
    %8634 = vmatpush2.bf16.msra.mxu0 0
    %8635 = vmatprep.subr.bf16.mxu0 0
    %8636 = vmatpush2.bf16.msra.mxu0 0
    %8637 = vmatprep.subr.bf16.mxu0 0
    %8638 = vmatpush2.bf16.msra.mxu0 0
    %8639 = vmatprep.subr.bf16.mxu0 0
    %8640 = vmatpush2.bf16.msra.mxu0 0
    %8641 = vmatprep.subr.bf16.mxu0 0
    %8642 = vmatpush2.bf16.msra.mxu0 0
    %8643 = vmatprep.mubr.bf16.mxu0 0
    %8644 = vmatmul.mubr.bf16.gmra.mxu0 %v8609
    %v8645 = vpop.f32.mrf.mxu0
    %v8646 = vadd.f32 %v8595, %v8645
    %v8647 = vpop.f32.mrf.mxu0
    %v8648 = vpop.f32.mrf.mxu0
    %v8649 = vadd.f32 %v8595, %v8648
    %v8650 = vpop.f32.mrf.mxu0
    %8651 = vdwg.mxu0
    %v8652 = vadd.f32 %v7384, %v8646
    %v8653 = vadd.f32 %v7385, %v8649
    %v8654 = vpack.c.bf16 %v8653, %v8652
    %v8655 = vunpack.c.l.bf16 %v8654
    %v8656 = vunpack.c.h.bf16 %v8654
    %v8657 = vsel %vm262, %v8655, 0.0
    %8658 = vadd.xlane.f32.xlu0 %v8657
    %v8659 = vpop.xlane.xlu0 %8658
    %v8660 = vsel %vm262, %v8656, 0.0
    %8661 = vadd.xlane.f32.xlu0 %v8660
    %v8662 = vpop.xlane.xlu0 %8661
    %v8663 = vmul.f32 %v8659, %v269
    %v8664 = vmul.f32 %v8662, %v269
    %v8665 = vsub.f32 %v8655, %v8663
    %v8666 = vsub.f32 %v8656, %v8664
    %v8667 = vmul.f32 %v8665, %v8665
    %v8668 = vmul.f32 %v8666, %v8666
    %v8669 = vsel %vm262, %v8667, 0.0
    %8670 = vadd.xlane.f32.xlu0 %v8669
    %v8671 = vpop.xlane.xlu0 %8670
    %v8672 = vsel %vm262, %v8668, 0.0
    %8673 = vadd.xlane.f32.xlu0 %v8672
    %v8674 = vpop.xlane.xlu0 %8673
    %v8675 = vmul.f32 %v8671, %v269
    %v8676 = vmul.f32 %v8674, %v269
    %v8677 = vadd.f32 %v8675, 1e-05
    %v8678 = vadd.f32 %v8676, 1e-05
    %v8679 = vrsqrt.pop %v8677
    %v8680 = vrsqrt.pop %v8678
    %v8681 = vmul.f32 %v8665, %v8679
    %v8682 = vmul.f32 %v8666, %v8680
    %v8683 = vld [vmem:[#allocation5 + $0x130] sm:$0x1]
    %v8684 = vlaneseq
    %v8685 = vshrl.u32 %v8684, 7
    %v8686 = vsub.s32 0, %v8685
    %v8687 = vrot.slane %v8683, %v8686
    %v8688 = vmul.f32 %v8681, %v8687
    %v8689 = vmul.f32 %v8682, %v8687
    %v8690 = vld [vmem:[#allocation5 + $0x138] sm:$0x1]
    %v8691 = vlaneseq
    %v8692 = vshrl.u32 %v8691, 7
    %v8693 = vsub.s32 0, %v8692
    %v8694 = vrot.slane %v8690, %v8693
    %v8695 = vadd.f32 %v8688, %v8694
    %v8696 = vadd.f32 %v8689, %v8694
    %v8697 = vpack.c.bf16 %v8696, %v8695
    %v8698 = vld [vmem:[#allocation2 + $0x628] sm:$0xf]
    %v8699 = vld [vmem:[#allocation2 + $0x62c] sm:$0xf]
    %v8700 = vld [vmem:[#allocation2 + $0x630] sm:$0xf]
    %v8701 = vld [vmem:[#allocation2 + $0x634] sm:$0xf]
    %v8702 = vld [vmem:[#allocation5 + $0x140] sm:$0x1]
    %v8703 = vlaneseq
    %v8704 = vshrl.u32 %v8703, 7
    %v8705 = vsub.s32 0, %v8704
    %v8706 = vrot.slane %v8702, %v8705
    %v8711 = vunpack.c.l.b16 %v8698
    %v8712 = vunpack.c.l.b16 %v8699
    %v8713 = vunpack.c.l.b16 %v8700
    %v8714 = vunpack.c.l.b16 %v8701
    %v8715 = vpack.c.b16 %v8712, %v8711
    %v8716 = vpack.c.b16 %v8714, %v8713
    %v8720 = vsel %vm262, %v8697, 0
    %8722 = vmatprep.subr.bf16.mxu0 0
    %8723 = vmatpush1.bf16.msra.mxu0 0
    %8724 = vmatprep.subr.bf16.mxu0 0
    %8725 = vmatpush1.bf16.msra.mxu0 0
    %8726 = vmatprep.subr.bf16.mxu0 0
    %8727 = vmatpush1.bf16.msra.mxu0 0
    %8728 = vmatprep.subr.bf16.mxu0 0
    %8729 = vmatpush1.bf16.msra.mxu0 0
    %8730 = vmatprep.subr.bf16.mxu0 0
    %8731 = vmatpush1.bf16.msra.mxu0 0
    %8732 = vmatprep.subr.bf16.mxu0 0
    %8733 = vmatpush1.bf16.msra.mxu0 0
    %8734 = vmatprep.subr.bf16.mxu0 0
    %8735 = vmatpush1.bf16.msra.mxu0 %v8716
    %8736 = vmatprep.subr.bf16.mxu0 0
    %8737 = vmatpush1.bf16.msra.mxu0 %v8715
    %8738 = vmatprep.subr.bf16.mxu0 0
    %8739 = vmatpush2.bf16.msra.mxu0 0
    %8740 = vmatprep.subr.bf16.mxu0 0
    %8741 = vmatpush2.bf16.msra.mxu0 0
    %8742 = vmatprep.subr.bf16.mxu0 0
    %8743 = vmatpush2.bf16.msra.mxu0 0
    %8744 = vmatprep.subr.bf16.mxu0 0
    %8745 = vmatpush2.bf16.msra.mxu0 0
    %8746 = vmatprep.subr.bf16.mxu0 0
    %8747 = vmatpush2.bf16.msra.mxu0 0
    %8748 = vmatprep.subr.bf16.mxu0 0
    %8749 = vmatpush2.bf16.msra.mxu0 0
    %8750 = vmatprep.subr.bf16.mxu0 0
    %8751 = vmatpush2.bf16.msra.mxu0 0
    %8752 = vmatprep.subr.bf16.mxu0 0
    %8753 = vmatpush2.bf16.msra.mxu0 0
    %8754 = vmatprep.mubr.bf16.mxu0 0
    %8755 = vmatmul.mubr.bf16.gmra.mxu0 %v8720
    %v8756 = vpop.f32.mrf.mxu0
    %v8757 = vadd.f32 %v8706, %v8756
    %v8758 = vpop.f32.mrf.mxu0
    %v8759 = vpop.f32.mrf.mxu0
    %v8760 = vadd.f32 %v8706, %v8759
    %v8761 = vpop.f32.mrf.mxu0
    %8762 = vdwg.mxu0
    %v8763 = vmul.f32 %v8757, 0.5
    %v8764 = vmul.f32 %v8760, 0.5
    %v8765 = vmul.f32 %v8757, 0.044715
    %v8766 = vmul.f32 %v8760, 0.044715
    %v8767 = vmul.f32 %v8765, %v8757
    %v8768 = vmul.f32 %v8766, %v8760
    %v8769 = vmul.f32 %v8767, %v8757
    %v8770 = vmul.f32 %v8768, %v8760
    %v8771 = vadd.f32 %v8757, %v8769
    %v8772 = vadd.f32 %v8760, %v8770
    %v8773 = vmul.f32 %v8771, 0.7978846
    %v8774 = vmul.f32 %v8772, 0.7978846
    %v8775 = vtanh.pop %v8773
    %v8776 = vtanh.pop %v8774
    %v8777 = vadd.f32 %v8775, 1.0
    %v8778 = vadd.f32 %v8776, 1.0
    %v8779 = vmul.f32 %v8763, %v8777
    %v8780 = vmul.f32 %v8764, %v8778
    %v8781 = vpack.c.bf16 %v8780, %v8779
    %v8782 = vld [vmem:[#allocation2 + $0x638] sm:$0xf]
    %v8783 = vld [vmem:[#allocation2 + $0x63c] sm:$0xf]
    %v8784 = vld [vmem:[#allocation2 + $0x640] sm:$0xf]
    %v8785 = vld [vmem:[#allocation2 + $0x644] sm:$0xf]
    %v8786 = vld [vmem:[#allocation2 + $0x648] sm:$0xf]
    %v8787 = vld [vmem:[#allocation2 + $0x64c] sm:$0xf]
    %v8788 = vld [vmem:[#allocation2 + $0x650] sm:$0xf]
    %v8789 = vld [vmem:[#allocation2 + $0x654] sm:$0xf]
    %v8790 = vld [vmem:[#allocation2 + $0x658] sm:$0xf]
    %v8791 = vld [vmem:[#allocation2 + $0x65c] sm:$0xf]
    %v8792 = vld [vmem:[#allocation2 + $0x660] sm:$0xf]
    %v8793 = vld [vmem:[#allocation2 + $0x664] sm:$0xf]
    %v8794 = vld [vmem:[#allocation2 + $0x668] sm:$0xf]
    %v8795 = vld [vmem:[#allocation2 + $0x66c] sm:$0xf]
    %v8796 = vld [vmem:[#allocation2 + $0x670] sm:$0xf]
    %v8797 = vld [vmem:[#allocation2 + $0x674] sm:$0xf]
    %v8798 = vld [vmem:[#allocation5 + $0x148] sm:$0x1]
    %v8799 = vlaneseq
    %v8800 = vshrl.u32 %v8799, 7
    %v8801 = vsub.s32 0, %v8800
    %v8802 = vrot.slane %v8798, %v8801
    %v8819 = vunpack.c.l.b16 %v8782
    %v8820 = vunpack.c.l.b16 %v8783
    %v8821 = vunpack.c.l.b16 %v8784
    %v8822 = vunpack.c.l.b16 %v8785
    %v8823 = vunpack.c.l.b16 %v8786
    %v8824 = vunpack.c.l.b16 %v8787
    %v8825 = vunpack.c.l.b16 %v8788
    %v8826 = vunpack.c.l.b16 %v8789
    %v8827 = vunpack.c.l.b16 %v8790
    %v8828 = vunpack.c.l.b16 %v8791
    %v8829 = vunpack.c.l.b16 %v8792
    %v8830 = vunpack.c.l.b16 %v8793
    %v8831 = vunpack.c.l.b16 %v8794
    %v8832 = vunpack.c.l.b16 %v8795
    %v8833 = vunpack.c.l.b16 %v8796
    %v8834 = vunpack.c.l.b16 %v8797
    %v8835 = vpack.c.b16 %v8820, %v8819
    %v8836 = vpack.c.b16 %v8822, %v8821
    %v8837 = vpack.c.b16 %v8824, %v8823
    %v8838 = vpack.c.b16 %v8826, %v8825
    %v8839 = vpack.c.b16 %v8828, %v8827
    %v8840 = vpack.c.b16 %v8830, %v8829
    %v8841 = vpack.c.b16 %v8832, %v8831
    %v8842 = vpack.c.b16 %v8834, %v8833
    %8851 = vmatprep.subr.bf16.mxu0 0
    %8852 = vmatpush1.bf16.msra.mxu0 %v8842
    %8853 = vmatprep.subr.bf16.mxu0 0
    %8854 = vmatpush1.bf16.msra.mxu0 %v8841
    %8855 = vmatprep.subr.bf16.mxu0 0
    %8856 = vmatpush1.bf16.msra.mxu0 %v8840
    %8857 = vmatprep.subr.bf16.mxu0 0
    %8858 = vmatpush1.bf16.msra.mxu0 %v8839
    %8859 = vmatprep.subr.bf16.mxu0 0
    %8860 = vmatpush1.bf16.msra.mxu0 %v8838
    %8861 = vmatprep.subr.bf16.mxu0 0
    %8862 = vmatpush1.bf16.msra.mxu0 %v8837
    %8863 = vmatprep.subr.bf16.mxu0 0
    %8864 = vmatpush1.bf16.msra.mxu0 %v8836
    %8865 = vmatprep.subr.bf16.mxu0 0
    %8866 = vmatpush1.bf16.msra.mxu0 %v8835
    %8867 = vmatprep.subr.bf16.mxu0 0
    %8868 = vmatpush2.bf16.msra.mxu0 0
    %8869 = vmatprep.subr.bf16.mxu0 0
    %8870 = vmatpush2.bf16.msra.mxu0 0
    %8871 = vmatprep.subr.bf16.mxu0 0
    %8872 = vmatpush2.bf16.msra.mxu0 0
    %8873 = vmatprep.subr.bf16.mxu0 0
    %8874 = vmatpush2.bf16.msra.mxu0 0
    %8875 = vmatprep.subr.bf16.mxu0 0
    %8876 = vmatpush2.bf16.msra.mxu0 0
    %8877 = vmatprep.subr.bf16.mxu0 0
    %8878 = vmatpush2.bf16.msra.mxu0 0
    %8879 = vmatprep.subr.bf16.mxu0 0
    %8880 = vmatpush2.bf16.msra.mxu0 0
    %8881 = vmatprep.subr.bf16.mxu0 0
    %8882 = vmatpush2.bf16.msra.mxu0 0
    %8883 = vmatprep.mubr.bf16.mxu0 0
    %8884 = vmatmul.mubr.bf16.gmra.mxu0 %v8781
    %v8885 = vpop.f32.mrf.mxu0
    %v8886 = vadd.f32 %v8802, %v8885
    %v8887 = vpop.f32.mrf.mxu0
    %v8888 = vpop.f32.mrf.mxu0
    %v8889 = vadd.f32 %v8802, %v8888
    %v8890 = vpop.f32.mrf.mxu0
    %8891 = vdwg.mxu0
    %v8892 = vadd.f32 %v8655, %v8886
    %v8893 = vadd.f32 %v8656, %v8889
    %v8894 = vpack.c.bf16 %v8893, %v8892
    %v8895 = vunpack.c.l.bf16 %v8894
    %v8896 = vunpack.c.h.bf16 %v8894
    %v8897 = vsel %vm262, %v8895, 0.0
    %8898 = vadd.xlane.f32.xlu0 %v8897
    %v8899 = vpop.xlane.xlu0 %8898
    %v8900 = vsel %vm262, %v8896, 0.0
    %8901 = vadd.xlane.f32.xlu0 %v8900
    %v8902 = vpop.xlane.xlu0 %8901
    %v8903 = vmul.f32 %v8899, %v269
    %v8904 = vmul.f32 %v8902, %v269
    %v8905 = vsub.f32 %v8895, %v8903
    %v8906 = vsub.f32 %v8896, %v8904
    %v8907 = vmul.f32 %v8905, %v8905
    %v8908 = vmul.f32 %v8906, %v8906
    %v8909 = vsel %vm262, %v8907, 0.0
    %8910 = vadd.xlane.f32.xlu0 %v8909
    %v8911 = vpop.xlane.xlu0 %8910
    %v8912 = vsel %vm262, %v8908, 0.0
    %8913 = vadd.xlane.f32.xlu0 %v8912
    %v8914 = vpop.xlane.xlu0 %8913
    %v8915 = vmul.f32 %v8911, %v269
    %v8916 = vmul.f32 %v8914, %v269
    %v8917 = vadd.f32 %v8915, 1e-05
    %v8918 = vadd.f32 %v8916, 1e-05
    %v8919 = vrsqrt.pop %v8917
    %v8920 = vrsqrt.pop %v8918
    %v8921 = vmul.f32 %v8905, %v8919
    %v8922 = vmul.f32 %v8906, %v8920
    %v8923 = vld [vmem:[#allocation5 + $0x150] sm:$0x1]
    %v8924 = vlaneseq
    %v8925 = vshrl.u32 %v8924, 7
    %v8926 = vsub.s32 0, %v8925
    %v8927 = vrot.slane %v8923, %v8926
    %v8928 = vmul.f32 %v8921, %v8927
    %v8929 = vmul.f32 %v8922, %v8927
    %v8930 = vld [vmem:[#allocation5 + $0x158] sm:$0x1]
    %v8931 = vlaneseq
    %v8932 = vshrl.u32 %v8931, 7
    %v8933 = vsub.s32 0, %v8932
    %v8934 = vrot.slane %v8930, %v8933
    %v8935 = vadd.f32 %v8928, %v8934
    %v8936 = vadd.f32 %v8929, %v8934
    %v8937 = vpack.c.bf16 %v8936, %v8935
    %v8938 = vld [vmem:[#allocation2 + $0x48] sm:$0xf]
    %v8939 = vld [vmem:[#allocation2 + $0x4c] sm:$0xf]
    %v8940 = vld [vmem:[#allocation2 + $0x50] sm:$0xf]
    %v8941 = vld [vmem:[#allocation2 + $0x54] sm:$0xf]
    %v8942 = vld [vmem:[#allocation5 + $0x28] sm:$0x1]
    %v8943 = vlaneseq
    %v8944 = vshrl.u32 %v8943, 7
    %v8945 = vsub.s32 0, %v8944
    %v8946 = vrot.slane %v8942, %v8945
    %v8951 = vunpack.c.l.b16 %v8938
    %v8952 = vunpack.c.l.b16 %v8939
    %v8953 = vunpack.c.l.b16 %v8940
    %v8954 = vunpack.c.l.b16 %v8941
    %v8955 = vpack.c.b16 %v8952, %v8951
    %v8956 = vpack.c.b16 %v8954, %v8953
    %v8960 = vsel %vm262, %v8937, 0
    %8962 = vmatprep.subr.bf16.mxu0 0
    %8963 = vmatpush1.bf16.msra.mxu0 0
    %8964 = vmatprep.subr.bf16.mxu0 0
    %8965 = vmatpush1.bf16.msra.mxu0 0
    %8966 = vmatprep.subr.bf16.mxu0 0
    %8967 = vmatpush1.bf16.msra.mxu0 0
    %8968 = vmatprep.subr.bf16.mxu0 0
    %8969 = vmatpush1.bf16.msra.mxu0 0
    %8970 = vmatprep.subr.bf16.mxu0 0
    %8971 = vmatpush1.bf16.msra.mxu0 0
    %8972 = vmatprep.subr.bf16.mxu0 0
    %8973 = vmatpush1.bf16.msra.mxu0 0
    %8974 = vmatprep.subr.bf16.mxu0 0
    %8975 = vmatpush1.bf16.msra.mxu0 %v8956
    %8976 = vmatprep.subr.bf16.mxu0 0
    %8977 = vmatpush1.bf16.msra.mxu0 %v8955
    %8978 = vmatprep.subr.bf16.mxu0 0
    %8979 = vmatpush2.bf16.msra.mxu0 0
    %8980 = vmatprep.subr.bf16.mxu0 0
    %8981 = vmatpush2.bf16.msra.mxu0 0
    %8982 = vmatprep.subr.bf16.mxu0 0
    %8983 = vmatpush2.bf16.msra.mxu0 0
    %8984 = vmatprep.subr.bf16.mxu0 0
    %8985 = vmatpush2.bf16.msra.mxu0 0
    %8986 = vmatprep.subr.bf16.mxu0 0
    %8987 = vmatpush2.bf16.msra.mxu0 0
    %8988 = vmatprep.subr.bf16.mxu0 0
    %8989 = vmatpush2.bf16.msra.mxu0 0
    %8990 = vmatprep.subr.bf16.mxu0 0
    %8991 = vmatpush2.bf16.msra.mxu0 0
    %8992 = vmatprep.subr.bf16.mxu0 0
    %8993 = vmatpush2.bf16.msra.mxu0 0
    %8994 = vmatprep.mubr.bf16.mxu0 0
    %8995 = vmatmul.mubr.bf16.gmra.mxu0 %v8960
    %v8996 = vpop.f32.mrf.mxu0
    %v8997 = vadd.f32 %v8946, %v8996
    %v8998 = vpop.f32.mrf.mxu0
    %v8999 = vpop.f32.mrf.mxu0
    %v9000 = vadd.f32 %v8946, %v8999
    %v9001 = vpop.f32.mrf.mxu0
    %9002 = vdwg.mxu0
    %9003 = vst [vmem:[%s6] sm:$0xff] %v8997
    %9004 = vst [vmem:[%s6 + $0x8] sm:$0xff] %v9000
    %v9005 = vld [vmem:[#allocation2 + $0x18] sm:$0xf]
    %v9006 = vld [vmem:[#allocation2 + $0x1c] sm:$0xf]
    %v9007 = vld [vmem:[#allocation2 + $0x20] sm:$0xf]
    %v9008 = vld [vmem:[#allocation2 + $0x24] sm:$0xf]
    %v9009 = vld [vmem:[#allocation5 + $0x18] sm:$0x1]
    %v9010 = vlaneseq
    %v9011 = vshrl.u32 %v9010, 7
    %v9012 = vsub.s32 0, %v9011
    %v9013 = vrot.slane %v9009, %v9012
    %v9018 = vunpack.c.l.b16 %v9005
    %v9019 = vunpack.c.l.b16 %v9006
    %v9020 = vunpack.c.l.b16 %v9007
    %v9021 = vunpack.c.l.b16 %v9008
    %v9022 = vpack.c.b16 %v9019, %v9018
    %v9023 = vpack.c.b16 %v9021, %v9020
    %v9027 = vsel %vm262, %v64, 0
    %9029 = vmatprep.subr.bf16.mxu0 0
    %9030 = vmatpush1.bf16.msra.mxu0 0
    %9031 = vmatprep.subr.bf16.mxu0 0
    %9032 = vmatpush1.bf16.msra.mxu0 0
    %9033 = vmatprep.subr.bf16.mxu0 0
    %9034 = vmatpush1.bf16.msra.mxu0 0
    %9035 = vmatprep.subr.bf16.mxu0 0
    %9036 = vmatpush1.bf16.msra.mxu0 0
    %9037 = vmatprep.subr.bf16.mxu0 0
    %9038 = vmatpush1.bf16.msra.mxu0 0
    %9039 = vmatprep.subr.bf16.mxu0 0
    %9040 = vmatpush1.bf16.msra.mxu0 0
    %9041 = vmatprep.subr.bf16.mxu0 0
    %9042 = vmatpush1.bf16.msra.mxu0 %v9023
    %9043 = vmatprep.subr.bf16.mxu0 0
    %9044 = vmatpush1.bf16.msra.mxu0 %v9022
    %9045 = vmatprep.subr.bf16.mxu0 0
    %9046 = vmatpush2.bf16.msra.mxu0 0
    %9047 = vmatprep.subr.bf16.mxu0 0
    %9048 = vmatpush2.bf16.msra.mxu0 0
    %9049 = vmatprep.subr.bf16.mxu0 0
    %9050 = vmatpush2.bf16.msra.mxu0 0
    %9051 = vmatprep.subr.bf16.mxu0 0
    %9052 = vmatpush2.bf16.msra.mxu0 0
    %9053 = vmatprep.subr.bf16.mxu0 0
    %9054 = vmatpush2.bf16.msra.mxu0 0
    %9055 = vmatprep.subr.bf16.mxu0 0
    %9056 = vmatpush2.bf16.msra.mxu0 0
    %9057 = vmatprep.subr.bf16.mxu0 0
    %9058 = vmatpush2.bf16.msra.mxu0 0
    %9059 = vmatprep.subr.bf16.mxu0 0
    %9060 = vmatpush2.bf16.msra.mxu0 0
    %9061 = vmatprep.mubr.bf16.mxu0 0
    %9062 = vmatmul.mubr.bf16.gmra.mxu0 %v9027
    %v9063 = vpop.f32.mrf.mxu0
    %v9064 = vadd.f32 %v9013, %v9063
    %v9065 = vpop.f32.mrf.mxu0
    %v9066 = vpop.f32.mrf.mxu0
    %v9067 = vpop.f32.mrf.mxu0
    %9068 = vdwg.mxu0
    %v9069 = vmax.f32 %v9064, 0.0
    %v9070 = vand.u32 2147483647, %v9064
    %v9071 = vsub.f32 0.0, %v9070
    %v9072 = vmul.f32 %v9071, 1.442695
    %v9073 = vpow.pop %v9072
    %v9074 = vadd.f32 %v9073, 1.0
    %v9075 = vlog2.pop %v9074
    %v9076 = vmul.f32 %v9075, 0.6931472
    %v9077 = vadd.f32 %v9069, %v9076
    %v9078 = vtanh.pop %v9077
    %v9079 = vmul.f32 %v9064, %v9078
    %v9080 = vpack.c.bf16 %v9079, %v9079
    %v9081 = vld [vmem:[#allocation2 + $0x28] sm:$0xf]
    %v9082 = vld [vmem:[#allocation2 + $0x2c] sm:$0xf]
    %v9083 = vld [vmem:[#allocation2 + $0x30] sm:$0xf]
    %v9084 = vld [vmem:[#allocation2 + $0x34] sm:$0xf]
    %v9085 = vld [vmem:[#allocation2 + $0x38] sm:$0xf]
    %v9086 = vld [vmem:[#allocation2 + $0x3c] sm:$0xf]
    %v9087 = vld [vmem:[#allocation2 + $0x40] sm:$0xf]
    %v9088 = vld [vmem:[#allocation2 + $0x44] sm:$0xf]
    %v9089 = vld [vmem:[#allocation5 + $0x20] sm:$0x1]
    %v9090 = vlaneseq
    %v9091 = vshrl.u32 %v9090, 7
    %v9092 = vsub.s32 0, %v9091
    %v9093 = vrot.slane %v9089, %v9092
    %v9102 = vunpack.c.l.b16 %v9081
    %v9103 = vunpack.c.l.b16 %v9082
    %v9104 = vunpack.c.l.b16 %v9083
    %v9105 = vunpack.c.l.b16 %v9084
    %v9106 = vunpack.c.l.b16 %v9085
    %v9107 = vunpack.c.l.b16 %v9086
    %v9108 = vunpack.c.l.b16 %v9087
    %v9109 = vunpack.c.l.b16 %v9088
    %v9110 = vpack.c.b16 %v9103, %v9102
    %v9111 = vpack.c.b16 %v9105, %v9104
    %v9112 = vpack.c.b16 %v9107, %v9106
    %v9113 = vpack.c.b16 %v9109, %v9108
    %vm9118 = vcmask 523264
    %v9120 = vsel %vm9118, %v9080, 0
    %9122 = vmatprep.subr.bf16.mxu0 0
    %9123 = vmatpush1.bf16.msra.mxu0 0
    %9124 = vmatprep.subr.bf16.mxu0 0
    %9125 = vmatpush1.bf16.msra.mxu0 0
    %9126 = vmatprep.subr.bf16.mxu0 0
    %9127 = vmatpush1.bf16.msra.mxu0 0
    %9128 = vmatprep.subr.bf16.mxu0 0
    %9129 = vmatpush1.bf16.msra.mxu0 0
    %9130 = vmatprep.subr.bf16.mxu0 0
    %9131 = vmatpush1.bf16.msra.mxu0 %v9113
    %9132 = vmatprep.subr.bf16.mxu0 0
    %9133 = vmatpush1.bf16.msra.mxu0 %v9112
    %9134 = vmatprep.subr.bf16.mxu0 0
    %9135 = vmatpush1.bf16.msra.mxu0 %v9111
    %9136 = vmatprep.subr.bf16.mxu0 0
    %9137 = vmatpush1.bf16.msra.mxu0 %v9110
    %9138 = vmatprep.subr.bf16.mxu0 0
    %9139 = vmatpush2.bf16.msra.mxu0 0
    %9140 = vmatprep.subr.bf16.mxu0 0
    %9141 = vmatpush2.bf16.msra.mxu0 0
    %9142 = vmatprep.subr.bf16.mxu0 0
    %9143 = vmatpush2.bf16.msra.mxu0 0
    %9144 = vmatprep.subr.bf16.mxu0 0
    %9145 = vmatpush2.bf16.msra.mxu0 0
    %9146 = vmatprep.subr.bf16.mxu0 0
    %9147 = vmatpush2.bf16.msra.mxu0 0
    %9148 = vmatprep.subr.bf16.mxu0 0
    %9149 = vmatpush2.bf16.msra.mxu0 0
    %9150 = vmatprep.subr.bf16.mxu0 0
    %9151 = vmatpush2.bf16.msra.mxu0 0
    %9152 = vmatprep.subr.bf16.mxu0 0
    %9153 = vmatpush2.bf16.msra.mxu0 0
    %9154 = vmatprep.mubr.bf16.mxu0 0
    %9155 = vmatmul.mubr.bf16.gmra.mxu0 %v9120
    %v9156 = vpop.f32.mrf.mxu0
    %v9157 = vadd.f32 %v9093, %v9156
    %v9158 = vpop.f32.mrf.mxu0
    %v9159 = vpop.f32.mrf.mxu0
    %v9160 = vpop.f32.mrf.mxu0
    %9161 = vdwg.mxu0
    %9162 = vst [vmem:[#allocation7] sm:$0x3] %v9157
    // Predicated region
    $region34: #{mdt_forward.1} parent=1 // pred_check
      _
    $region35: #{mdt_forward.1} parent=1 // pred_check_branch
      %9164 = sbr.rel (0) target = $region37
    $region36: #{mdt_forward.1} parent=1 // pred_region
      _
    $region37: #{mdt_forward.1} parent=1 // pred_fallthru
      _
    // Predicated region
    $region38: #{mdt_forward.1} parent=1 // pred_check
      _
    $region39: #{mdt_forward.1} parent=1 // pred_check_branch
      %9166 = sbr.rel (0) target = $region41
    $region40: #{mdt_forward.1} parent=1 // pred_region
      %s9168 = ssub.s32 32, 32
      %9169 = vsyncadd [#allocation4], %s9168
      %s9171 = sshll.u32 [#allocation7], 4
      %s9172 = int_to_ptr.vmem [resolvable:$true] %s9171
      %9174 = dma.vmem_to_hbm [thread:$0]  %s9172, 32, %s7, [#allocation4]
    $region41: #{mdt_forward.1} parent=1 // pred_fallthru
      _
    // Predicated region
    $region42: #{mdt_forward.1} parent=1 // pred_check
      _
    $region43: #{mdt_forward.1} parent=1 // pred_check_branch
      %9176 = sbr.rel (0) target = $region45
    $region44: #{mdt_forward.1} parent=1 // pred_region
      _
    $region45: #{mdt_forward.1} parent=1 // pred_fallthru
      _
    // Predicated region
    $region46: #{mdt_forward.1} parent=1 // pred_check
      _
    $region47: #{mdt_forward.1} parent=1 // pred_check_branch
      %9178 = sbr.rel (0) target = $region49
    $region48: #{mdt_forward.1} parent=1 // pred_region
      %9179 = dma.done [#allocation4], 32
    $region49: #{mdt_forward.1} parent=1 // pred_fallthru
      _
    %9180 = vsyncpa [#allocation3], 1
    %9181 = vsyncpa [#allocation6], 1
    %9182 = vsyncpa [#allocation4], 1

</llo_original>
